<compile_context>
chip_gen: v7x
topology: tpu7x:2x2x1
jax: 0.10.0
libtpu: 0.0.40
codegen_flags: <defaults>
</compile_context>

<pallas_src>
import functools

import numpy as np

import jax
import jax.numpy as jnp
from jax.experimental import pallas as pl
from jax.experimental.pallas import tpu as pltpu


def _round_up(x, m):
    return (x + m - 1) // m * m


def _pick_tile(m, cap):
    """Pick an M tile: full m if it fits, else the largest dividing multiple of
    16 <= cap, else pad m up to a multiple of cap. Returns (tile, m_padded)."""
    if m <= cap:
        return m, m
    t = (cap // 16) * 16
    while t >= 16:
        if m % t == 0:
            return t, m
        t -= 16
    return cap, _round_up(m, cap)


# ----------------------------------------------------------------------------
# Pallas kernel 1: tiled matmul + bias + ReLU (all convs as im2col GEMM)
# ----------------------------------------------------------------------------
def _mm_bias_relu_kernel(x_ref, w_ref, b_ref, o_ref):
    acc = jnp.dot(x_ref[...], w_ref[...], preferred_element_type=jnp.float32)
    acc = acc + b_ref[...]
    o_ref[...] = jnp.maximum(acc, 0.0).astype(o_ref.dtype)


def matmul_bias_relu(x, w, b_row, *, out_dtype=jnp.bfloat16, cap=512):
    """relu(x @ w + b): x (M,K) bf16, w (K,N) bf16, b_row (1,N) f32 -> (M,N)."""
    M, K = x.shape
    Kw, N = w.shape
    assert K == Kw and b_row.shape == (1, N)

    TM, Mpad = _pick_tile(M, cap)
    if Mpad != M:
        x = jnp.pad(x, ((0, Mpad - M), (0, 0)))

    out = pl.pallas_call(
        _mm_bias_relu_kernel,
        out_shape=jax.ShapeDtypeStruct((Mpad, N), out_dtype),
        grid=(Mpad // TM,),
        in_specs=[
            pl.BlockSpec((TM, K), lambda i: (i, 0)),
            pl.BlockSpec((K, N), lambda i: (0, 0)),
            pl.BlockSpec((1, N), lambda i: (0, 0)),
        ],
        out_specs=pl.BlockSpec((TM, N), lambda i: (i, 0)),
        compiler_params=pltpu.CompilerParams(
            dimension_semantics=("parallel",),
            vmem_limit_bytes=32 * 1024 * 1024,
        ),
    )(x, w, b_row)
    return out[:M] if Mpad != M else out


# ----------------------------------------------------------------------------
# Pallas kernel 2: fused dueling head (fc1_adv|fc1_val, fc2_adv|fc2_val, combine)
#   hidden = relu(feat @ W1 + b1)          (B, 1024)  adv 512 | val 512
#   z      = hidden @ W2 + b2              (B, 128)   adv cols [0,A), val col A
#   out128 = z + (val - mean(adv))         lane-dense store, sliced in wrapper
# ----------------------------------------------------------------------------
def _dueling_head_kernel(feat_ref, w1_ref, b1_ref, w2_ref, b2_ref, o_ref, *,
                         num_actions):
    hidden = jnp.dot(feat_ref[...], w1_ref[...],
                     preferred_element_type=jnp.float32)
    hidden = jnp.maximum(hidden + b1_ref[...], 0.0)
    z = jnp.dot(hidden.astype(jnp.bfloat16), w2_ref[...],
                preferred_element_type=jnp.float32) + b2_ref[...]
    lane = jax.lax.broadcasted_iota(jnp.int32, z.shape, 1)
    adv_mean = jnp.sum(jnp.where(lane < num_actions, z, 0.0),
                       axis=1, keepdims=True) / num_actions
    val = jnp.sum(jnp.where(lane == num_actions, z, 0.0),
                  axis=1, keepdims=True)
    o_ref[...] = (z + (val - adv_mean)).astype(o_ref.dtype)


def dueling_head(feat, w1, b1, w2, b2, num_actions, *, batch_cap=128):
    B, K = feat.shape
    H = w1.shape[1]          # 1024
    Np = w2.shape[1]         # 128 (adv | val | zero padding)
    assert w1.shape[0] == K and b1.shape == (1, H) and b2.shape == (1, Np)

    TB, Bpad = _pick_tile(B, batch_cap)
    if Bpad != B:
        feat = jnp.pad(feat, ((0, Bpad - B), (0, 0)))

    kernel = functools.partial(_dueling_head_kernel, num_actions=num_actions)
    out = pl.pallas_call(
        kernel,
        out_shape=jax.ShapeDtypeStruct((Bpad, Np), jnp.float32),
        grid=(Bpad // TB,),
        in_specs=[
            pl.BlockSpec((TB, K), lambda b: (b, 0)),
            pl.BlockSpec((K, H), lambda b: (0, 0)),   # resident across batch tiles
            pl.BlockSpec((1, H), lambda b: (0, 0)),
            pl.BlockSpec((H, Np), lambda b: (0, 0)),
            pl.BlockSpec((1, Np), lambda b: (0, 0)),
        ],
        out_specs=pl.BlockSpec((TB, Np), lambda b: (b, 0)),
        compiler_params=pltpu.CompilerParams(
            dimension_semantics=("parallel",),
            vmem_limit_bytes=32 * 1024 * 1024,
        ),
    )(feat, w1, b1, w2, b2)
    return out[:B, :num_actions]


# ----------------------------------------------------------------------------
# Conv = im2col (XLA glue, real input channels) + Pallas GEMM (128-wide output)
# ----------------------------------------------------------------------------
def conv_block(x, w_mat, b_row, ksize, stride, dimension_numbers):
    patches = jax.lax.conv_general_dilated_patches(
        x, (ksize, ksize), (stride, stride), "VALID",
        dimension_numbers=dimension_numbers)
    B, Ho, Wo, K = patches.shape                     # features ordered (C, kh, kw)
    assert K == w_mat.shape[0], (K, w_mat.shape)
    y = matmul_bias_relu(patches.reshape(B * Ho * Wo, K), w_mat, b_row)
    return y.reshape(B, Ho, Wo, w_mat.shape[1])      # NHWC, lane-dense 128 cols


# ----------------------------------------------------------------------------
# Parameter preparation (one-time, outside the hot path)
# ----------------------------------------------------------------------------
def prepare_params(p, num_actions):
    assert num_actions < 128
    bf, f32 = jnp.bfloat16, jnp.float32

    def prep_conv(w, b):
        cout = w.shape[0]
        assert cout <= 128
        wm = w.reshape(cout, -1).T                          # (cin*kh*kw, cout), (c,kh,kw) rows
        wm = jnp.pad(wm, ((0, 0), (0, 128 - cout))).astype(bf)
        bm = jnp.pad(b, (0, 128 - cout)).astype(f32).reshape(1, 128)
        return wm, bm

    c1_w, c1_b = prep_conv(p["conv1_w"], p["conv1_b"])      # K=256
    c2_w, c2_b = prep_conv(p["conv2_w"], p["conv2_b"])      # K=512
    c3_w, c3_b = prep_conv(p["conv3_w"], p["conv3_b"])      # K=576

    # fc1 rows are in PyTorch NCHW-flatten order (c,h,w) -> permute to the
    # NHWC-flatten order (h,w,c) produced by the conv chain.
    def prep_fc1(w):                                        # (3136, 512)
        return w.reshape(64, 7, 7, 512).transpose(1, 2, 0, 3).reshape(3136, 512)

    w1 = jnp.concatenate([prep_fc1(p["fc1_adv_w"]),
                          prep_fc1(p["fc1_val_w"])], axis=1).astype(bf)   # (3136,1024)
    b1 = jnp.concatenate([p["fc1_adv_b"], p["fc1_val_b"]]).astype(f32).reshape(1, 1024)

    # fc2: block-diagonal fused weight, lane-padded to 128 output columns.
    A = num_actions
    w2 = jnp.zeros((1024, 128), f32)
    w2 = w2.at[:512, :A].set(p["fc2_adv_w"])
    w2 = w2.at[512:, A:A + 1].set(p["fc2_val_w"])
    b2 = jnp.zeros((128,), f32).at[:A].set(p["fc2_adv_b"]).at[A].set(p["fc2_val_b"][0])

    return {
        "c1_w": c1_w, "c1_b": c1_b,
        "c2_w": c2_w, "c2_b": c2_b,
        "c3_w": c3_w, "c3_b": c3_b,
        "w1": w1, "b1": b1,
        "w2": w2.astype(bf), "b2": b2.reshape(1, 128),
    }


# ----------------------------------------------------------------------------
# Full forward pass
# ----------------------------------------------------------------------------
def dueling_dqn_forward(pp, x, *, num_actions):
    # x: NCHW f32.  The NCHW->NHWC relayout happens inside conv1's patch
    # extraction (dimension_numbers), no standalone transpose pass.
    x = x.astype(jnp.bfloat16)
    y = conv_block(x, pp["c1_w"], pp["c1_b"], 8, 4,
                   ("NCHW", "OIHW", "NHWC"))                 # (B,20,20,128)
    y = conv_block(y[..., :32], pp["c2_w"], pp["c2_b"], 4, 2,
                   ("NHWC", "HWIO", "NHWC"))                 # (B, 9, 9,128)
    y = conv_block(y[..., :64], pp["c3_w"], pp["c3_b"], 3, 1,
                   ("NHWC", "HWIO", "NHWC"))                 # (B, 7, 7,128)
    B = y.shape[0]
    feat = y[..., :64].reshape(B, 7 * 7 * 64)                # (B,3136) (h,w,c) order
    # TODO(synk): fuse the conv3 GEMM into the head kernel (feat kept in VMEM)
    # to drop one HBM round trip + launch; skipped to avoid an in-kernel
    # (B*49,64)->(B,3136) relayout.
    return dueling_head(feat, pp["w1"], pp["b1"], pp["w2"], pp["b2"], num_actions)


# ----------------------------------------------------------------------------
# PyTorch-style parameter init (deterministic) + pure-JAX f32 reference
# ----------------------------------------------------------------------------
def init_params(key, in_channels, num_actions):
    ks = jax.random.split(key, 14)

    def u(k, shape, fan_in):
        bound = 1.0 / float(fan_in) ** 0.5
        return jax.random.uniform(k, shape, jnp.float32, -bound, bound)

    return {
        "conv1_w": u(ks[0], (32, in_channels, 8, 8), in_channels * 8 * 8),
        "conv1_b": u(ks[1], (32,), in_channels * 8 * 8),
        "conv2_w": u(ks[2], (64, 32, 4, 4), 32 * 4 * 4),
        "conv2_b": u(ks[3], (64,), 32 * 4 * 4),
        "conv3_w": u(ks[4], (64, 64, 3, 3), 64 * 3 * 3),
        "conv3_b": u(ks[5], (64,), 64 * 3 * 3),
        # Linear weights stored as (in, out) for direct x @ W.
        "fc1_adv_w": u(ks[6], (7 * 7 * 64, 512), 7 * 7 * 64),
        "fc1_adv_b": u(ks[7], (512,), 7 * 7 * 64),
        "fc1_val_w": u(ks[8], (7 * 7 * 64, 512), 7 * 7 * 64),
        "fc1_val_b": u(ks[9], (512,), 7 * 7 * 64),
        "fc2_adv_w": u(ks[10], (512, num_actions), 512),
        "fc2_adv_b": u(ks[11], (num_actions,), 512),
        "fc2_val_w": u(ks[12], (512, 1), 512),
        "fc2_val_b": u(ks[13], (1,), 512),
    }


def reference_forward(p, x, num_actions):
    """Pure-JAX f32 reference matching the PyTorch module semantics."""
    def conv(y, w, b, stride):
        y = jax.lax.conv_general_dilated(
            y, w, (stride, stride), "VALID",
            dimension_numbers=("NCHW", "OIHW", "NCHW"))
        return jax.nn.relu(y + b.reshape(1, -1, 1, 1))

    y = conv(x, p["conv1_w"], p["conv1_b"], 4)
    y = conv(y, p["conv2_w"], p["conv2_b"], 2)
    y = conv(y, p["conv3_w"], p["conv3_b"], 1)
    f = y.reshape(y.shape[0], -1)                            # NCHW flatten (c,h,w)
    adv = jax.nn.relu(f @ p["fc1_adv_w"] + p["fc1_adv_b"])
    val = jax.nn.relu(f @ p["fc1_val_w"] + p["fc1_val_b"])
    adv = adv @ p["fc2_adv_w"] + p["fc2_adv_b"]
    val = val @ p["fc2_val_w"] + p["fc2_val_b"]
    return val + adv - adv.mean(axis=1, keepdims=True)


if __name__ == "__main__":
    B, C, H, W = 2, 4, 84, 84          # 84x84 required so conv3 -> 7x7x64 = 3136
    num_actions = 6

    key = jax.random.PRNGKey(0)
    k_x, k_p = jax.random.split(key)
    x = jax.random.uniform(k_x, (B, C, H, W), jnp.float32)
    params = init_params(k_p, C, num_actions)
    pp = prepare_params(params, num_actions)   # one-time bf16 packing / fusion

    fwd = jax.jit(functools.partial(dueling_dqn_forward, num_actions=num_actions))
    out = jax.block_until_ready(fwd(pp, x))
    assert out.shape == (B, num_actions) and out.dtype == jnp.float32

    # One-time numerical check vs. a pure-JAX f32 reference (validates the
    # patch feature ordering, weight packing and the dueling combine).
    ref = jax.block_until_ready(reference_forward(params, x, num_actions))
    np.testing.assert_allclose(np.asarray(out), np.asarray(ref), rtol=0.0, atol=2e-2)

    print("KERNEL_OK")
</pallas_src>

<mosaic_0001>
module attributes {stable_mosaic.version = 11 : i64} {
  func.func @_mm_bias_relu_kernel(%arg0: i32, %arg1: memref<400x256xbf16, #tpu.memory_space<vmem>>, %arg2: memref<256x128xbf16, #tpu.memory_space<vmem>>, %arg3: memref<1x128xf32, #tpu.memory_space<vmem>>, %arg4: memref<400x128xbf16, #tpu.memory_space<vmem>>) attributes {dimension_semantics = [#tpu.dimension_semantics<parallel>], iteration_bounds = array<i64: 2>, scalar_prefetch = 0 : i64, scratch_operands = 0 : i64, tpu.core_type = #tpu.core_type<tc>, window_params = [{transform_indices = @transform_0, window_bounds = array<i64: 400, 256>}, {pipeline_mode = #tpu.pipeline_mode<synchronous>, transform_indices = @transform_1, window_bounds = array<i64: 256, 128>}, {pipeline_mode = #tpu.pipeline_mode<synchronous>, transform_indices = @transform_2, window_bounds = array<i64: 1, 128>}, {transform_indices = @transform_3, window_bounds = array<i64: 400, 128>}]} {
    %c0 = arith.constant 0 : index
    %c0_0 = arith.constant 0 : index
    %0 = vector.load %arg1[%c0, %c0_0] : memref<400x256xbf16, #tpu.memory_space<vmem>>, vector<400x256xbf16>
    %c0_1 = arith.constant 0 : index
    %c0_2 = arith.constant 0 : index
    %1 = vector.load %arg2[%c0_1, %c0_2] : memref<256x128xbf16, #tpu.memory_space<vmem>>, vector<256x128xbf16>
    %cst = arith.constant dense<0.000000e+00> : vector<400x128xf32>
    %2 = tpu.matmul %0, %1, %cst {dimension_numbers = #tpu.dot_dimension_numbers<[1], [0], [0], [1], [0, 0, 1, 1], [], []>} : vector<400x256xbf16>, vector<256x128xbf16>, vector<400x128xf32> -> vector<400x128xf32>
    %c0_3 = arith.constant 0 : index
    %c0_4 = arith.constant 0 : index
    %3 = vector.load %arg3[%c0_3, %c0_4] : memref<1x128xf32, #tpu.memory_space<vmem>>, vector<1x128xf32>
    %4 = vector.broadcast %3 : vector<1x128xf32> to vector<400x128xf32>
    %5 = arith.addf %2, %4 : vector<400x128xf32>
    %cst_5 = arith.constant 0.000000e+00 : f32
    %6 = vector.broadcast %cst_5 : f32 to vector<400x128xf32>
    %7 = arith.maximumf %5, %6 : vector<400x128xf32>
    %8 = arith.truncf %7 : vector<400x128xf32> to vector<400x128xbf16>
    %c0_6 = arith.constant 0 : index
    %c0_7 = arith.constant 0 : index
    %9 = vector.load %arg4[%c0_6, %c0_7] : memref<400x128xbf16, #tpu.memory_space<vmem>>, vector<400x128xbf16>
    tpu.vector_store %arg4[%c0_6, %c0_7], %8 {strides = array<i32>} : memref<400x128xbf16, #tpu.memory_space<vmem>>, vector<400x128xbf16>,
    return
  }
  func.func @transform_0(%arg0: i32) -> (i32, i32) {
    %c0_i32 = arith.constant 0 : i32
    %c0_i32_0 = arith.constant 0 : i32
    return %arg0, %c0_i32 : i32, i32
  }
  func.func @transform_1(%arg0: i32) -> (i32, i32) {
    %c0_i32 = arith.constant 0 : i32
    %c0_i32_0 = arith.constant 0 : i32
    %c0_i32_1 = arith.constant 0 : i32
    return %c0_i32, %c0_i32_0 : i32, i32
  }
  func.func @transform_2(%arg0: i32) -> (i32, i32) {
    %c0_i32 = arith.constant 0 : i32
    %c0_i32_0 = arith.constant 0 : i32
    %c0_i32_1 = arith.constant 0 : i32
    return %c0_i32, %c0_i32_0 : i32, i32
  }
  func.func @transform_3(%arg0: i32) -> (i32, i32) {
    %c0_i32 = arith.constant 0 : i32
    %c0_i32_0 = arith.constant 0 : i32
    return %arg0, %c0_i32 : i32, i32
  }
}

module attributes {stable_mosaic.version = 11 : i64} {
  func.func @_mm_bias_relu_kernel(%arg0: i32, %arg1: memref<162x512xbf16, #tpu.memory_space<vmem>>, %arg2: memref<512x128xbf16, #tpu.memory_space<vmem>>, %arg3: memref<1x128xf32, #tpu.memory_space<vmem>>, %arg4: memref<162x128xbf16, #tpu.memory_space<vmem>>) attributes {dimension_semantics = [#tpu.dimension_semantics<parallel>], iteration_bounds = array<i64: 1>, scalar_prefetch = 0 : i64, scratch_operands = 0 : i64, tpu.core_type = #tpu.core_type<tc>, window_params = [{transform_indices = @transform_0, window_bounds = array<i64: 162, 512>}, {pipeline_mode = #tpu.pipeline_mode<synchronous>, transform_indices = @transform_1, window_bounds = array<i64: 512, 128>}, {pipeline_mode = #tpu.pipeline_mode<synchronous>, transform_indices = @transform_2, window_bounds = array<i64: 1, 128>}, {transform_indices = @transform_3, window_bounds = array<i64: 162, 128>}]} {
    %c0 = arith.constant 0 : index
    %c0_0 = arith.constant 0 : index
    %0 = vector.load %arg1[%c0, %c0_0] : memref<162x512xbf16, #tpu.memory_space<vmem>>, vector<162x512xbf16>
    %c0_1 = arith.constant 0 : index
    %c0_2 = arith.constant 0 : index
    %1 = vector.load %arg2[%c0_1, %c0_2] : memref<512x128xbf16, #tpu.memory_space<vmem>>, vector<512x128xbf16>
    %cst = arith.constant dense<0.000000e+00> : vector<162x128xf32>
    %2 = tpu.matmul %0, %1, %cst {dimension_numbers = #tpu.dot_dimension_numbers<[1], [0], [0], [1], [0, 0, 1, 1], [], []>} : vector<162x512xbf16>, vector<512x128xbf16>, vector<162x128xf32> -> vector<162x128xf32>
    %c0_3 = arith.constant 0 : index
    %c0_4 = arith.constant 0 : index
    %3 = vector.load %arg3[%c0_3, %c0_4] : memref<1x128xf32, #tpu.memory_space<vmem>>, vector<1x128xf32>
    %4 = vector.broadcast %3 : vector<1x128xf32> to vector<162x128xf32>
    %5 = arith.addf %2, %4 : vector<162x128xf32>
    %cst_5 = arith.constant 0.000000e+00 : f32
    %6 = vector.broadcast %cst_5 : f32 to vector<162x128xf32>
    %7 = arith.maximumf %5, %6 : vector<162x128xf32>
    %8 = arith.truncf %7 : vector<162x128xf32> to vector<162x128xbf16>
    %c0_6 = arith.constant 0 : index
    %c0_7 = arith.constant 0 : index
    %9 = vector.load %arg4[%c0_6, %c0_7] : memref<162x128xbf16, #tpu.memory_space<vmem>>, vector<162x128xbf16>
    tpu.vector_store %arg4[%c0_6, %c0_7], %8 {strides = array<i32>} : memref<162x128xbf16, #tpu.memory_space<vmem>>, vector<162x128xbf16>,
    return
  }
  func.func @transform_0(%arg0: i32) -> (i32, i32) {
    %c0_i32 = arith.constant 0 : i32
    %c0_i32_0 = arith.constant 0 : i32
    return %arg0, %c0_i32 : i32, i32
  }
  func.func @transform_1(%arg0: i32) -> (i32, i32) {
    %c0_i32 = arith.constant 0 : i32
    %c0_i32_0 = arith.constant 0 : i32
    %c0_i32_1 = arith.constant 0 : i32
    return %c0_i32, %c0_i32_0 : i32, i32
  }
  func.func @transform_2(%arg0: i32) -> (i32, i32) {
    %c0_i32 = arith.constant 0 : i32
    %c0_i32_0 = arith.constant 0 : i32
    %c0_i32_1 = arith.constant 0 : i32
    return %c0_i32, %c0_i32_0 : i32, i32
  }
  func.func @transform_3(%arg0: i32) -> (i32, i32) {
    %c0_i32 = arith.constant 0 : i32
    %c0_i32_0 = arith.constant 0 : i32
    return %arg0, %c0_i32 : i32, i32
  }
}

module attributes {stable_mosaic.version = 11 : i64} {
  func.func @_mm_bias_relu_kernel(%arg0: i32, %arg1: memref<98x576xbf16, #tpu.memory_space<vmem>>, %arg2: memref<576x128xbf16, #tpu.memory_space<vmem>>, %arg3: memref<1x128xf32, #tpu.memory_space<vmem>>, %arg4: memref<98x128xbf16, #tpu.memory_space<vmem>>) attributes {dimension_semantics = [#tpu.dimension_semantics<parallel>], iteration_bounds = array<i64: 1>, scalar_prefetch = 0 : i64, scratch_operands = 0 : i64, tpu.core_type = #tpu.core_type<tc>, window_params = [{transform_indices = @transform_0, window_bounds = array<i64: 98, 576>}, {pipeline_mode = #tpu.pipeline_mode<synchronous>, transform_indices = @transform_1, window_bounds = array<i64: 576, 128>}, {pipeline_mode = #tpu.pipeline_mode<synchronous>, transform_indices = @transform_2, window_bounds = array<i64: 1, 128>}, {transform_indices = @transform_3, window_bounds = array<i64: 98, 128>}]} {
    %c0 = arith.constant 0 : index
    %c0_0 = arith.constant 0 : index
    %0 = vector.load %arg1[%c0, %c0_0] : memref<98x576xbf16, #tpu.memory_space<vmem>>, vector<98x576xbf16>
    %c0_1 = arith.constant 0 : index
    %c0_2 = arith.constant 0 : index
    %1 = vector.load %arg2[%c0_1, %c0_2] : memref<576x128xbf16, #tpu.memory_space<vmem>>, vector<576x128xbf16>
    %cst = arith.constant dense<0.000000e+00> : vector<98x128xf32>
    %2 = tpu.matmul %0, %1, %cst {dimension_numbers = #tpu.dot_dimension_numbers<[1], [0], [0], [1], [0, 0, 1, 1], [], []>} : vector<98x576xbf16>, vector<576x128xbf16>, vector<98x128xf32> -> vector<98x128xf32>
    %c0_3 = arith.constant 0 : index
    %c0_4 = arith.constant 0 : index
    %3 = vector.load %arg3[%c0_3, %c0_4] : memref<1x128xf32, #tpu.memory_space<vmem>>, vector<1x128xf32>
    %4 = vector.broadcast %3 : vector<1x128xf32> to vector<98x128xf32>
    %5 = arith.addf %2, %4 : vector<98x128xf32>
    %cst_5 = arith.constant 0.000000e+00 : f32
    %6 = vector.broadcast %cst_5 : f32 to vector<98x128xf32>
    %7 = arith.maximumf %5, %6 : vector<98x128xf32>
    %8 = arith.truncf %7 : vector<98x128xf32> to vector<98x128xbf16>
    %c0_6 = arith.constant 0 : index
    %c0_7 = arith.constant 0 : index
    %9 = vector.load %arg4[%c0_6, %c0_7] : memref<98x128xbf16, #tpu.memory_space<vmem>>, vector<98x128xbf16>
    tpu.vector_store %arg4[%c0_6, %c0_7], %8 {strides = array<i32>} : memref<98x128xbf16, #tpu.memory_space<vmem>>, vector<98x128xbf16>,
    return
  }
  func.func @transform_0(%arg0: i32) -> (i32, i32) {
    %c0_i32 = arith.constant 0 : i32
    %c0_i32_0 = arith.constant 0 : i32
    return %arg0, %c0_i32 : i32, i32
  }
  func.func @transform_1(%arg0: i32) -> (i32, i32) {
    %c0_i32 = arith.constant 0 : i32
    %c0_i32_0 = arith.constant 0 : i32
    %c0_i32_1 = arith.constant 0 : i32
    return %c0_i32, %c0_i32_0 : i32, i32
  }
  func.func @transform_2(%arg0: i32) -> (i32, i32) {
    %c0_i32 = arith.constant 0 : i32
    %c0_i32_0 = arith.constant 0 : i32
    %c0_i32_1 = arith.constant 0 : i32
    return %c0_i32, %c0_i32_0 : i32, i32
  }
  func.func @transform_3(%arg0: i32) -> (i32, i32) {
    %c0_i32 = arith.constant 0 : i32
    %c0_i32_0 = arith.constant 0 : i32
    return %arg0, %c0_i32 : i32, i32
  }
}

module attributes {stable_mosaic.version = 11 : i64} {
  func.func @_dueling_head_kernel(%arg0: i32, %arg1: memref<2x3136xbf16, #tpu.memory_space<vmem>>, %arg2: memref<3136x1024xbf16, #tpu.memory_space<vmem>>, %arg3: memref<1x1024xf32, #tpu.memory_space<vmem>>, %arg4: memref<1024x128xbf16, #tpu.memory_space<vmem>>, %arg5: memref<1x128xf32, #tpu.memory_space<vmem>>, %arg6: memref<2x128xf32, #tpu.memory_space<vmem>>) attributes {dimension_semantics = [#tpu.dimension_semantics<parallel>], iteration_bounds = array<i64: 1>, scalar_prefetch = 0 : i64, scratch_operands = 0 : i64, tpu.core_type = #tpu.core_type<tc>, window_params = [{transform_indices = @transform_0, window_bounds = array<i64: 2, 3136>}, {pipeline_mode = #tpu.pipeline_mode<synchronous>, transform_indices = @transform_1, window_bounds = array<i64: 3136, 1024>}, {pipeline_mode = #tpu.pipeline_mode<synchronous>, transform_indices = @transform_2, window_bounds = array<i64: 1, 1024>}, {pipeline_mode = #tpu.pipeline_mode<synchronous>, transform_indices = @transform_3, window_bounds = array<i64: 1024, 128>}, {pipeline_mode = #tpu.pipeline_mode<synchronous>, transform_indices = @transform_4, window_bounds = array<i64: 1, 128>}, {transform_indices = @transform_5, window_bounds = array<i64: 2, 128>}]} {
    %c0 = arith.constant 0 : index
    %c0_0 = arith.constant 0 : index
    %0 = vector.load %arg1[%c0, %c0_0] : memref<2x3136xbf16, #tpu.memory_space<vmem>>, vector<2x3136xbf16>
    %c0_1 = arith.constant 0 : index
    %c0_2 = arith.constant 0 : index
    %1 = vector.load %arg2[%c0_1, %c0_2] : memref<3136x1024xbf16, #tpu.memory_space<vmem>>, vector<3136x1024xbf16>
    %cst = arith.constant dense<0.000000e+00> : vector<2x1024xf32>
    %2 = tpu.matmul %0, %1, %cst {dimension_numbers = #tpu.dot_dimension_numbers<[1], [0], [0], [1], [0, 0, 1, 1], [], []>} : vector<2x3136xbf16>, vector<3136x1024xbf16>, vector<2x1024xf32> -> vector<2x1024xf32>
    %c0_3 = arith.constant 0 : index
    %c0_4 = arith.constant 0 : index
    %3 = vector.load %arg3[%c0_3, %c0_4] : memref<1x1024xf32, #tpu.memory_space<vmem>>, vector<1x1024xf32>
    %4 = vector.broadcast %3 : vector<1x1024xf32> to vector<2x1024xf32>
    %5 = arith.addf %2, %4 : vector<2x1024xf32>
    %cst_5 = arith.constant 0.000000e+00 : f32
    %6 = vector.broadcast %cst_5 : f32 to vector<2x1024xf32>
    %7 = arith.maximumf %5, %6 : vector<2x1024xf32>
    %8 = arith.truncf %7 : vector<2x1024xf32> to vector<2x1024xbf16>
    %c0_6 = arith.constant 0 : index
    %c0_7 = arith.constant 0 : index
    %9 = vector.load %arg4[%c0_6, %c0_7] : memref<1024x128xbf16, #tpu.memory_space<vmem>>, vector<1024x128xbf16>
    %cst_8 = arith.constant dense<0.000000e+00> : vector<2x128xf32>
    %10 = tpu.matmul %8, %9, %cst_8 {dimension_numbers = #tpu.dot_dimension_numbers<[1], [0], [0], [1], [0, 0, 1, 1], [], []>} : vector<2x1024xbf16>, vector<1024x128xbf16>, vector<2x128xf32> -> vector<2x128xf32>
    %c0_9 = arith.constant 0 : index
    %c0_10 = arith.constant 0 : index
    %11 = vector.load %arg5[%c0_9, %c0_10] : memref<1x128xf32, #tpu.memory_space<vmem>>, vector<1x128xf32>
    %12 = vector.broadcast %11 : vector<1x128xf32> to vector<2x128xf32>
    %13 = arith.addf %10, %12 : vector<2x128xf32>
    %14 = tpu.iota {dimensions = array<i32: 1>} : vector<2x128xi32>
    %c6_i32 = arith.constant 6 : i32
    %15 = vector.broadcast %c6_i32 : i32 to vector<2x128xi32>
    %16 = arith.cmpi slt, %14, %15 : vector<2x128xi32>
    %cst_11 = arith.constant 0.000000e+00 : f32
    %17 = vector.broadcast %cst_11 : f32 to vector<2x128xf32>
    %18 = arith.select %16, %13, %17 : vector<2x128xi1>, vector<2x128xf32>
    %cst_12 = arith.constant dense<0.000000e+00> : vector<2xf32>
    %19 = vector.multi_reduction <add>, %18, %cst_12 [1] : vector<2x128xf32> to vector<2xf32>
    %20 = vector.shape_cast %19 : vector<2xf32> to vector<2x1xf32>
    %cst_13 = arith.constant 6.000000e+00 : f32
    %21 = vector.broadcast %cst_13 : f32 to vector<2x1xf32>
    %22 = arith.divf %20, %21 : vector<2x1xf32>
    %c6_i32_14 = arith.constant 6 : i32
    %23 = vector.broadcast %c6_i32_14 : i32 to vector<2x128xi32>
    %24 = arith.cmpi eq, %14, %23 : vector<2x128xi32>
    %cst_15 = arith.constant 0.000000e+00 : f32
    %25 = vector.broadcast %cst_15 : f32 to vector<2x128xf32>
    %26 = arith.select %24, %13, %25 : vector<2x128xi1>, vector<2x128xf32>
    %cst_16 = arith.constant dense<0.000000e+00> : vector<2xf32>
    %27 = vector.multi_reduction <add>, %26, %cst_16 [1] : vector<2x128xf32> to vector<2xf32>
    %28 = vector.shape_cast %27 : vector<2xf32> to vector<2x1xf32>
    %29 = arith.subf %28, %22 : vector<2x1xf32>
    %30 = vector.broadcast %29 : vector<2x1xf32> to vector<2x128xf32>
    %31 = arith.addf %13, %30 : vector<2x128xf32>
    %c0_17 = arith.constant 0 : index
    %c0_18 = arith.constant 0 : index
    %32 = vector.load %arg6[%c0_17, %c0_18] : memref<2x128xf32, #tpu.memory_space<vmem>>, vector<2x128xf32>
    tpu.vector_store %arg6[%c0_17, %c0_18], %31 {strides = array<i32>} : memref<2x128xf32, #tpu.memory_space<vmem>>, vector<2x128xf32>,
    return
  }
  func.func @transform_0(%arg0: i32) -> (i32, i32) {
    %c0_i32 = arith.constant 0 : i32
    %c0_i32_0 = arith.constant 0 : i32
    return %arg0, %c0_i32 : i32, i32
  }
  func.func @transform_1(%arg0: i32) -> (i32, i32) {
    %c0_i32 = arith.constant 0 : i32
    %c0_i32_0 = arith.constant 0 : i32
    %c0_i32_1 = arith.constant 0 : i32
    return %c0_i32, %c0_i32_0 : i32, i32
  }
  func.func @transform_2(%arg0: i32) -> (i32, i32) {
    %c0_i32 = arith.constant 0 : i32
    %c0_i32_0 = arith.constant 0 : i32
    %c0_i32_1 = arith.constant 0 : i32
    return %c0_i32, %c0_i32_0 : i32, i32
  }
  func.func @transform_3(%arg0: i32) -> (i32, i32) {
    %c0_i32 = arith.constant 0 : i32
    %c0_i32_0 = arith.constant 0 : i32
    %c0_i32_1 = arith.constant 0 : i32
    return %c0_i32, %c0_i32_0 : i32, i32
  }
  func.func @transform_4(%arg0: i32) -> (i32, i32) {
    %c0_i32 = arith.constant 0 : i32
    %c0_i32_0 = arith.constant 0 : i32
    %c0_i32_1 = arith.constant 0 : i32
    return %c0_i32, %c0_i32_0 : i32, i32
  }
  func.func @transform_5(%arg0: i32) -> (i32, i32) {
    %c0_i32 = arith.constant 0 : i32
    %c0_i32_0 = arith.constant 0 : i32
    return %arg0, %c0_i32 : i32, i32
  }
}

</mosaic_0001>

<llo_original>
// kernel: dueling_dqn_forward.4
$region0: #{dueling_dqn_forward.4}
  #allocation0 [shape = 'u32[]', space=smem, size = 0x4, offset = 0x4, fixed_abs, tag = 'smem constant byte address 0x4 - core index']
  #allocation1 [shape = 'u32[144,128]{1,0:T(1,128)}', space=vmem, size = 0x12000, scoped, tag = 'internal scratch']
  %s0 = inlined_call_operand.vmem [shape: bf16[800,256], index: 0, kind: input, shape index: {}]
  %s1 = inlined_call_operand.vmem [shape: bf16[256,128], index: 1, kind: input, shape index: {}]
  %s2 = inlined_call_operand.vmem [shape: f32[1,128], index: 2, kind: input, shape index: {}]
  %s3 = inlined_call_operand.vmem [shape: bf16[800,128], index: 3, kind: output, shape index: {}]
  %s4 = sld [smem:[#allocation0]]
  $region45: #{dueling_dqn_forward.4} parent=0
    _
  %s6 = ssub.s32 1, %s4
  %s7 = scalar_select 0, %s6, %s4
  loop: start=0, step=1, limit=4
  $region2: #{dueling_dqn_forward.4} parent=0 // loop_pre_header
    _
  $region3: #{dueling_dqn_forward.4} parent=0 // loop_header
    %s9 = sphi 0, %s13
    %p10 = scmp.ge.s32.totalorder %s9, 4
    %s19 = sphi 0, %s21
    %s22 = sphi 0, %s19
    %s23 = sphi 0, %s22
    %s39 = sphi 0, %s23
    %s43 = sphi 0, %s43
    %s45 = sphi 0, %s43
    %s46 = sphi 0, %s45
    %s60 = sphi 0, %s46
    %s64 = sphi 0, %s64
    %s66 = sphi 0, %s64
    %s67 = sphi 0, %s66
    %s81 = sphi 0, %s67
    %s87 = sphi 0, %s89
    %s90 = sphi 0, %s87
    %s91 = sphi 0, %s90
    %s107 = sphi 0, %s91
  $region4: #{dueling_dqn_forward.4} parent=0 // loop_header_branch
    %12 = sbr.rel (%p10) target = $region8
  $region5: #{dueling_dqn_forward.4} parent=0 // loop_body
    %s14 = ssub.s32 %s9, 1
    %s15 = ssub.s32 %s9, 2
    %s16 = sadd.s32 %s9, 1
    %s17 = ssub.s32 %s9, %s16
    %p18 = scmp.eq.s32.totalorder %s17, 0
    %s20 = sadd.s32 %s19, 1
    %s21 = scalar_select %p18, %s19, %s20
    %p24 = pneg %p18
    %p25 = scmp.eq.s32.totalorder %s9, 1
    %p26 = por %p24, %p25
    %p27 = scmp.ne.s32.totalorder %s19, %s22
    %p28 = scmp.eq.s32.totalorder %s9, 0
    %p29 = por %p27, %p28
    %p30 = scmp.ne.s32.totalorder %s19, %s22
    %p31 = scmp.eq.s32.totalorder %s14, 1
    %p32 = por %p30, %p31
    %p33 = scmp.ne.s32.totalorder %s22, %s23
    %p34 = scmp.eq.s32.totalorder %s14, 0
    %p35 = por %p33, %p34
    %p36 = scmp.ne.s32.totalorder %s22, %s23
    %p37 = scmp.eq.s32.totalorder %s15, 1
    %p38 = por %p36, %p37
    %p40 = scmp.ne.s32.totalorder %s23, %s39
    %p41 = scmp.eq.s32.totalorder %s15, 0
    %p42 = por %p40, %p41
    %s44 = sadd.s32 %s43, 1
    %p47 = scmp.eq.s32.totalorder %s9, 1
    %p48 = scmp.ne.s32.totalorder %s43, %s45
    %p49 = scmp.eq.s32.totalorder %s9, 0
    %p50 = por %p48, %p49
    %p51 = scmp.ne.s32.totalorder %s43, %s45
    %p52 = scmp.eq.s32.totalorder %s14, 1
    %p53 = por %p51, %p52
    %p54 = scmp.ne.s32.totalorder %s45, %s46
    %p55 = scmp.eq.s32.totalorder %s14, 0
    %p56 = por %p54, %p55
    %p57 = scmp.ne.s32.totalorder %s45, %s46
    %p58 = scmp.eq.s32.totalorder %s15, 1
    %p59 = por %p57, %p58
    %p61 = scmp.ne.s32.totalorder %s46, %s60
    %p62 = scmp.eq.s32.totalorder %s15, 0
    %p63 = por %p61, %p62
    %s65 = sadd.s32 %s64, 1
    %p68 = scmp.eq.s32.totalorder %s9, 1
    %p69 = scmp.ne.s32.totalorder %s64, %s66
    %p70 = scmp.eq.s32.totalorder %s9, 0
    %p71 = por %p69, %p70
    %p72 = scmp.ne.s32.totalorder %s64, %s66
    %p73 = scmp.eq.s32.totalorder %s14, 1
    %p74 = por %p72, %p73
    %p75 = scmp.ne.s32.totalorder %s66, %s67
    %p76 = scmp.eq.s32.totalorder %s14, 0
    %p77 = por %p75, %p76
    %p78 = scmp.ne.s32.totalorder %s66, %s67
    %p79 = scmp.eq.s32.totalorder %s15, 1
    %p80 = por %p78, %p79
    %p82 = scmp.ne.s32.totalorder %s67, %s81
    %p83 = scmp.eq.s32.totalorder %s15, 0
    %p84 = por %p82, %p83
    %s85 = ssub.s32 %s9, %s16
    %p86 = scmp.eq.s32.totalorder %s85, 0
    %s88 = sadd.s32 %s87, 1
    %s89 = scalar_select %p86, %s87, %s88
    %p92 = pneg %p86
    %p93 = scmp.eq.s32.totalorder %s9, 1
    %p94 = por %p92, %p93
    %p95 = scmp.ne.s32.totalorder %s87, %s90
    %p96 = scmp.eq.s32.totalorder %s9, 0
    %p97 = por %p95, %p96
    %p98 = scmp.ne.s32.totalorder %s87, %s90
    %p99 = scmp.eq.s32.totalorder %s14, 1
    %p100 = por %p98, %p99
    %p101 = scmp.ne.s32.totalorder %s90, %s91
    %p102 = scmp.eq.s32.totalorder %s14, 0
    %p103 = por %p101, %p102
    %p104 = scmp.ne.s32.totalorder %s90, %s91
    %p105 = scmp.eq.s32.totalorder %s15, 1
    %p106 = por %p104, %p105
    %p108 = scmp.ne.s32.totalorder %s91, %s107
    %p109 = scmp.eq.s32.totalorder %s15, 0
    %p110 = por %p108, %p109
    %p111 = scmp.le.s32.totalorder 1, %s9
    %p112 = scmp.lt.s32.totalorder %s9, 3
    %p113 = pnand %p111, %p112
    %p114 = pneg %p113
    // Predicated region
    $region9: #{dueling_dqn_forward.4} parent=5 // pred_check
      _
    $region10: #{dueling_dqn_forward.4} parent=5 // pred_check_branch
      %116 = sbr.rel (%p113) target = $region12
    $region11: #{dueling_dqn_forward.4} parent=5 // pred_region
      %s117 = ssub.s32 %s9, 1
      // Predicated region
      $region13: #{dueling_dqn_forward.4} parent=11 // pred_check
        %p118 = pneg %p56
      $region14: #{dueling_dqn_forward.4} parent=11 // pred_check_branch
        %120 = sbr.rel (%p118) target = $region16
      $region15: #{dueling_dqn_forward.4} parent=11 // pred_region
        _
      $region16: #{dueling_dqn_forward.4} parent=11 // pred_fallthru
        _
      // Predicated region
      $region17: #{dueling_dqn_forward.4} parent=11 // pred_check
        %p121 = pneg %p77
      $region18: #{dueling_dqn_forward.4} parent=11 // pred_check_branch
        %123 = sbr.rel (%p121) target = $region20
      $region19: #{dueling_dqn_forward.4} parent=11 // pred_region
        _
      $region20: #{dueling_dqn_forward.4} parent=11 // pred_fallthru
        _
    $region12: #{dueling_dqn_forward.4} parent=5 // pred_fallthru
      _
    %p124 = scmp.lt.s32.totalorder %s9, 2
    // Predicated region
    $region21: #{dueling_dqn_forward.4} parent=5 // pred_check
      %p125 = pneg %p124
    $region22: #{dueling_dqn_forward.4} parent=5 // pred_check_branch
      %127 = sbr.rel (%p125) target = $region24
    $region23: #{dueling_dqn_forward.4} parent=5 // pred_region
      // Predicated region
      $region25: #{dueling_dqn_forward.4} parent=23 // pred_check
        %p128 = pneg %p29
      $region26: #{dueling_dqn_forward.4} parent=23 // pred_check_branch
        %130 = sbr.rel (%p128) target = $region28
      $region27: #{dueling_dqn_forward.4} parent=23 // pred_region
        %s131 = smul.u32 50, %s9
        %p132 = scmp.lt.s32.totalorder %s131, 99
        %s133 = scalar_select %p132, %s131, 99
        %s134 = smul.addr %s133, 2
        %s135 = smul.addr %s134, 4
        %s136 = scalar_lea.vmem %s0, %s135
        %s137 = smul.u32 50, %s9
      $region28: #{dueling_dqn_forward.4} parent=23 // pred_fallthru
        _
    $region24: #{dueling_dqn_forward.4} parent=5 // pred_fallthru
      _
    %p138 = scmp.le.s32.totalorder 1, %s9
    %p139 = scmp.lt.s32.totalorder %s9, 3
    %p140 = pnand %p138, %p139
    %p141 = pneg %p140
    // Predicated region
    $region29: #{dueling_dqn_forward.4} parent=5 // pred_check
      _
    $region30: #{dueling_dqn_forward.4} parent=5 // pred_check_branch
      %143 = sbr.rel (%p140) target = $region32
    $region31: #{dueling_dqn_forward.4} parent=5 // pred_region
      %s144 = ssub.s32 %s9, 1
      %s145 = smul.u32 50, %s14
      %p146 = scmp.lt.s32.totalorder %s145, 99
      %s147 = scalar_select %p146, %s145, 99
      %s148 = smul.addr %s147, 2
      %s149 = smul.addr %s148, 4
      %s150 = scalar_lea.vmem %s0, %s149
      %p151 = pneg %p35
      %p152 = pneg %p32
      %p153 = pneg %p56
      %p154 = pneg %p53
      %p155 = pneg %p77
      %p156 = pneg %p74
      %p157 = pneg %p103
      %p158 = pneg %p100
      %s159 = smul.u32 50, %s14
      %p160 = scmp.lt.s32.totalorder %s159, 99
      %s161 = scalar_select %p160, %s159, 99
      %s162 = smul.addr %s161, 4
      %s163 = scalar_lea.vmem %s3, %s162
      %s164 = smul.u32 50, %s14
      %p165 = scmp.lt.s32.totalorder %s164, 99
      %s166 = scalar_select %p165, %s164, 99
      %s167 = smul.addr %s166, 2
      %s168 = smul.addr %s167, 4
      %s169 = scalar_lea.vmem %s0, %s168
      %s170 = smul.u32 50, %s14
      %s171 = smul.u32 50, %s14
      %p172 = scmp.lt.s32.totalorder %s171, 99
      %s173 = scalar_select %p172, %s171, 99
      %s174 = smul.addr %s173, 4
      %s175 = scalar_lea.vmem %s3, %s174
      %s176 = smul.u32 50, %s14
      %v178 = vld [vmem:[%s169] sm:$0xff]
      %v179 = vld [vmem:[%s169 + $0x8] sm:$0xff]
      %v180 = vld [vmem:[%s169 + $0x10] sm:$0xff]
      %v181 = vld [vmem:[%s169 + $0x18] sm:$0xff]
      %v182 = vld [vmem:[%s169 + $0x20] sm:$0xff]
      %v183 = vld [vmem:[%s169 + $0x28] sm:$0xff]
      %v184 = vld [vmem:[%s169 + $0x30] sm:$0xff]
      %v185 = vld [vmem:[%s169 + $0x38] sm:$0xff]
      %v186 = vld [vmem:[%s169 + $0x40] sm:$0xff]
      %v187 = vld [vmem:[%s169 + $0x48] sm:$0xff]
      %v188 = vld [vmem:[%s169 + $0x50] sm:$0xff]
      %v189 = vld [vmem:[%s169 + $0x58] sm:$0xff]
      %v190 = vld [vmem:[%s169 + $0x60] sm:$0xff]
      %v191 = vld [vmem:[%s169 + $0x68] sm:$0xff]
      %v192 = vld [vmem:[%s169 + $0x70] sm:$0xff]
      %v193 = vld [vmem:[%s169 + $0x78] sm:$0xff]
      %v194 = vld [vmem:[%s169 + $0x80] sm:$0xff]
      %v195 = vld [vmem:[%s169 + $0x88] sm:$0xff]
      %v196 = vld [vmem:[%s169 + $0x90] sm:$0xff]
      %v197 = vld [vmem:[%s169 + $0x98] sm:$0xff]
      %v198 = vld [vmem:[%s169 + $0xa0] sm:$0xff]
      %v199 = vld [vmem:[%s169 + $0xa8] sm:$0xff]
      %v200 = vld [vmem:[%s169 + $0xb0] sm:$0xff]
      %v201 = vld [vmem:[%s169 + $0xb8] sm:$0xff]
      %v202 = vld [vmem:[%s169 + $0xc0] sm:$0xff]
      %v203 = vld [vmem:[%s169 + $0xc8] sm:$0xff]
      %v204 = vld [vmem:[%s169 + $0xd0] sm:$0xff]
      %v205 = vld [vmem:[%s169 + $0xd8] sm:$0xff]
      %v206 = vld [vmem:[%s169 + $0xe0] sm:$0xff]
      %v207 = vld [vmem:[%s169 + $0xe8] sm:$0xff]
      %v208 = vld [vmem:[%s169 + $0xf0] sm:$0xff]
      %v209 = vld [vmem:[%s169 + $0xf8] sm:$0xff]
      %v210 = vld [vmem:[%s169 + $0x100] sm:$0xff]
      %v211 = vld [vmem:[%s169 + $0x108] sm:$0xff]
      %v212 = vld [vmem:[%s169 + $0x110] sm:$0xff]
      %v213 = vld [vmem:[%s169 + $0x118] sm:$0xff]
      %v214 = vld [vmem:[%s169 + $0x120] sm:$0xff]
      %v215 = vld [vmem:[%s169 + $0x128] sm:$0xff]
      %v216 = vld [vmem:[%s169 + $0x130] sm:$0xff]
      %v217 = vld [vmem:[%s169 + $0x138] sm:$0xff]
      %v218 = vld [vmem:[%s169 + $0x140] sm:$0xff]
      %v219 = vld [vmem:[%s169 + $0x148] sm:$0xff]
      %v220 = vld [vmem:[%s169 + $0x150] sm:$0xff]
      %v221 = vld [vmem:[%s169 + $0x158] sm:$0xff]
      %v222 = vld [vmem:[%s169 + $0x160] sm:$0xff]
      %v223 = vld [vmem:[%s169 + $0x168] sm:$0xff]
      %v224 = vld [vmem:[%s169 + $0x170] sm:$0xff]
      %v225 = vld [vmem:[%s169 + $0x178] sm:$0xff]
      %v226 = vld [vmem:[%s169 + $0x180] sm:$0xff]
      %v227 = vld [vmem:[%s169 + $0x188] sm:$0xff]
      %v228 = vld [vmem:[%s1] sm:$0xf]
      %v229 = vld [vmem:[%s1 + $0x4] sm:$0xf]
      %v230 = vld [vmem:[%s1 + $0x8] sm:$0xf]
      %v231 = vld [vmem:[%s1 + $0xc] sm:$0xf]
      %v232 = vld [vmem:[%s1 + $0x10] sm:$0xf]
      %v233 = vld [vmem:[%s1 + $0x14] sm:$0xf]
      %v234 = vld [vmem:[%s1 + $0x18] sm:$0xf]
      %v235 = vld [vmem:[%s1 + $0x1c] sm:$0xf]
      %v236 = vld [vmem:[%s1 + $0x20] sm:$0xf]
      %v237 = vld [vmem:[%s1 + $0x24] sm:$0xf]
      %v238 = vld [vmem:[%s1 + $0x28] sm:$0xf]
      %v239 = vld [vmem:[%s1 + $0x2c] sm:$0xf]
      %v240 = vld [vmem:[%s1 + $0x30] sm:$0xf]
      %v241 = vld [vmem:[%s1 + $0x34] sm:$0xf]
      %v242 = vld [vmem:[%s1 + $0x38] sm:$0xf]
      %v243 = vld [vmem:[%s1 + $0x3c] sm:$0xf]
      %v244 = vld [vmem:[%s1 + $0x40] sm:$0xf]
      %v245 = vld [vmem:[%s1 + $0x44] sm:$0xf]
      %v246 = vld [vmem:[%s1 + $0x48] sm:$0xf]
      %v247 = vld [vmem:[%s1 + $0x4c] sm:$0xf]
      %v248 = vld [vmem:[%s1 + $0x50] sm:$0xf]
      %v249 = vld [vmem:[%s1 + $0x54] sm:$0xf]
      %v250 = vld [vmem:[%s1 + $0x58] sm:$0xf]
      %v251 = vld [vmem:[%s1 + $0x5c] sm:$0xf]
      %v252 = vld [vmem:[%s1 + $0x60] sm:$0xf]
      %v253 = vld [vmem:[%s1 + $0x64] sm:$0xf]
      %v254 = vld [vmem:[%s1 + $0x68] sm:$0xf]
      %v255 = vld [vmem:[%s1 + $0x6c] sm:$0xf]
      %v256 = vld [vmem:[%s1 + $0x70] sm:$0xf]
      %v257 = vld [vmem:[%s1 + $0x74] sm:$0xf]
      %v258 = vld [vmem:[%s1 + $0x78] sm:$0xf]
      %v259 = vld [vmem:[%s1 + $0x7c] sm:$0xf]
      %v260 = vld [vmem:[%s2] sm:$0x1]
      %v262 = vlaneseq
      %v263 = vshrl.u32 %v262, 7
      %v264 = vsub.s32 0, %v263
      %v265 = vrot.slane %v260, %v264
      %v317 = vunpack.c.l.b16 %v178
      %v318 = vunpack.c.h.b16 %v178
      %v319 = vunpack.c.l.b16 %v179
      %v320 = vunpack.c.h.b16 %v179
      %v321 = vunpack.c.l.b16 %v180
      %v322 = vunpack.c.h.b16 %v180
      %v323 = vunpack.c.l.b16 %v181
      %v324 = vunpack.c.h.b16 %v181
      %v325 = vunpack.c.l.b16 %v182
      %v326 = vunpack.c.h.b16 %v182
      %v327 = vunpack.c.l.b16 %v183
      %v328 = vunpack.c.h.b16 %v183
      %v329 = vunpack.c.l.b16 %v184
      %v330 = vunpack.c.h.b16 %v184
      %v331 = vunpack.c.l.b16 %v185
      %v332 = vunpack.c.h.b16 %v185
      %v333 = vunpack.c.l.b16 %v186
      %v334 = vunpack.c.h.b16 %v186
      %v335 = vunpack.c.l.b16 %v187
      %v336 = vunpack.c.h.b16 %v187
      %v337 = vunpack.c.l.b16 %v188
      %v338 = vunpack.c.h.b16 %v188
      %v339 = vunpack.c.l.b16 %v189
      %v340 = vunpack.c.h.b16 %v189
      %v341 = vunpack.c.l.b16 %v190
      %v342 = vunpack.c.h.b16 %v190
      %v343 = vunpack.c.l.b16 %v191
      %v344 = vunpack.c.h.b16 %v191
      %v345 = vunpack.c.l.b16 %v192
      %v346 = vunpack.c.h.b16 %v192
      %v347 = vunpack.c.l.b16 %v193
      %v348 = vunpack.c.h.b16 %v193
      %v349 = vunpack.c.l.b16 %v194
      %v350 = vunpack.c.h.b16 %v194
      %v351 = vunpack.c.l.b16 %v195
      %v352 = vunpack.c.h.b16 %v195
      %v353 = vunpack.c.l.b16 %v196
      %v354 = vunpack.c.h.b16 %v196
      %v355 = vunpack.c.l.b16 %v197
      %v356 = vunpack.c.h.b16 %v197
      %v357 = vunpack.c.l.b16 %v198
      %v358 = vunpack.c.h.b16 %v198
      %v359 = vunpack.c.l.b16 %v199
      %v360 = vunpack.c.h.b16 %v199
      %v361 = vunpack.c.l.b16 %v200
      %v362 = vunpack.c.h.b16 %v200
      %v363 = vunpack.c.l.b16 %v201
      %v364 = vunpack.c.h.b16 %v201
      %v365 = vunpack.c.l.b16 %v202
      %v366 = vunpack.c.h.b16 %v202
      %v367 = vunpack.c.l.b16 %v203
      %v368 = vunpack.c.h.b16 %v203
      %v369 = vunpack.c.l.b16 %v204
      %v370 = vunpack.c.h.b16 %v204
      %v371 = vunpack.c.l.b16 %v205
      %v372 = vunpack.c.h.b16 %v205
      %v373 = vunpack.c.l.b16 %v206
      %v374 = vunpack.c.h.b16 %v206
      %v375 = vunpack.c.l.b16 %v207
      %v376 = vunpack.c.h.b16 %v207
      %v377 = vunpack.c.l.b16 %v208
      %v378 = vunpack.c.h.b16 %v208
      %v379 = vunpack.c.l.b16 %v209
      %v380 = vunpack.c.h.b16 %v209
      %v381 = vunpack.c.l.b16 %v210
      %v382 = vunpack.c.h.b16 %v210
      %v383 = vunpack.c.l.b16 %v211
      %v384 = vunpack.c.h.b16 %v211
      %v385 = vunpack.c.l.b16 %v212
      %v386 = vunpack.c.h.b16 %v212
      %v387 = vunpack.c.l.b16 %v213
      %v388 = vunpack.c.h.b16 %v213
      %v389 = vunpack.c.l.b16 %v214
      %v390 = vunpack.c.h.b16 %v214
      %v391 = vunpack.c.l.b16 %v215
      %v392 = vunpack.c.h.b16 %v215
      %v393 = vunpack.c.l.b16 %v216
      %v394 = vunpack.c.h.b16 %v216
      %v395 = vunpack.c.l.b16 %v217
      %v396 = vunpack.c.h.b16 %v217
      %v397 = vunpack.c.l.b16 %v218
      %v398 = vunpack.c.h.b16 %v218
      %v399 = vunpack.c.l.b16 %v219
      %v400 = vunpack.c.h.b16 %v219
      %v401 = vunpack.c.l.b16 %v220
      %v402 = vunpack.c.h.b16 %v220
      %v403 = vunpack.c.l.b16 %v221
      %v404 = vunpack.c.h.b16 %v221
      %v405 = vunpack.c.l.b16 %v222
      %v406 = vunpack.c.h.b16 %v222
      %v407 = vunpack.c.l.b16 %v223
      %v408 = vunpack.c.h.b16 %v223
      %v409 = vunpack.c.l.b16 %v224
      %v410 = vunpack.c.h.b16 %v224
      %v411 = vunpack.c.l.b16 %v225
      %v412 = vunpack.c.h.b16 %v225
      %v413 = vunpack.c.l.b16 %v226
      %v414 = vunpack.c.h.b16 %v226
      %v415 = vunpack.c.l.b16 %v227
      %v416 = vunpack.c.h.b16 %v227
      %v417 = vpack.c.b16 %v319, %v317
      %v418 = vpack.c.b16 %v320, %v318
      %v419 = vpack.c.b16 %v323, %v321
      %v420 = vpack.c.b16 %v324, %v322
      %v421 = vpack.c.b16 %v327, %v325
      %v422 = vpack.c.b16 %v328, %v326
      %v423 = vpack.c.b16 %v331, %v329
      %v424 = vpack.c.b16 %v332, %v330
      %v425 = vpack.c.b16 %v335, %v333
      %v426 = vpack.c.b16 %v336, %v334
      %v427 = vpack.c.b16 %v339, %v337
      %v428 = vpack.c.b16 %v340, %v338
      %v429 = vpack.c.b16 %v343, %v341
      %v430 = vpack.c.b16 %v344, %v342
      %v431 = vpack.c.b16 %v347, %v345
      %v432 = vpack.c.b16 %v348, %v346
      %v433 = vpack.c.b16 %v351, %v349
      %v434 = vpack.c.b16 %v352, %v350
      %v435 = vpack.c.b16 %v355, %v353
      %v436 = vpack.c.b16 %v356, %v354
      %v437 = vpack.c.b16 %v359, %v357
      %v438 = vpack.c.b16 %v360, %v358
      %v439 = vpack.c.b16 %v363, %v361
      %v440 = vpack.c.b16 %v364, %v362
      %v441 = vpack.c.b16 %v367, %v365
      %v442 = vpack.c.b16 %v368, %v366
      %v443 = vpack.c.b16 %v371, %v369
      %v444 = vpack.c.b16 %v372, %v370
      %v445 = vpack.c.b16 %v375, %v373
      %v446 = vpack.c.b16 %v376, %v374
      %v447 = vpack.c.b16 %v379, %v377
      %v448 = vpack.c.b16 %v380, %v378
      %v449 = vpack.c.b16 %v383, %v381
      %v450 = vpack.c.b16 %v384, %v382
      %v451 = vpack.c.b16 %v387, %v385
      %v452 = vpack.c.b16 %v388, %v386
      %v453 = vpack.c.b16 %v391, %v389
      %v454 = vpack.c.b16 %v392, %v390
      %v455 = vpack.c.b16 %v395, %v393
      %v456 = vpack.c.b16 %v396, %v394
      %v457 = vpack.c.b16 %v399, %v397
      %v458 = vpack.c.b16 %v400, %v398
      %v459 = vpack.c.b16 %v403, %v401
      %v460 = vpack.c.b16 %v404, %v402
      %v461 = vpack.c.b16 %v407, %v405
      %v462 = vpack.c.b16 %v408, %v406
      %v463 = vpack.c.b16 %v411, %v409
      %v464 = vpack.c.b16 %v412, %v410
      %v465 = vpack.c.b16 %v415, %v413
      %v466 = vpack.c.b16 %v416, %v414
      %v549 = vunpack.c.l.b16 %v228
      %v550 = vunpack.c.l.b16 %v229
      %v551 = vunpack.c.l.b16 %v230
      %v552 = vunpack.c.l.b16 %v231
      %v553 = vunpack.c.l.b16 %v232
      %v554 = vunpack.c.l.b16 %v233
      %v555 = vunpack.c.l.b16 %v234
      %v556 = vunpack.c.l.b16 %v235
      %v557 = vunpack.c.l.b16 %v236
      %v558 = vunpack.c.l.b16 %v237
      %v559 = vunpack.c.l.b16 %v238
      %v560 = vunpack.c.l.b16 %v239
      %v561 = vunpack.c.l.b16 %v240
      %v562 = vunpack.c.l.b16 %v241
      %v563 = vunpack.c.l.b16 %v242
      %v564 = vunpack.c.l.b16 %v243
      %v565 = vunpack.c.l.b16 %v244
      %v566 = vunpack.c.l.b16 %v245
      %v567 = vunpack.c.l.b16 %v246
      %v568 = vunpack.c.l.b16 %v247
      %v569 = vunpack.c.l.b16 %v248
      %v570 = vunpack.c.l.b16 %v249
      %v571 = vunpack.c.l.b16 %v250
      %v572 = vunpack.c.l.b16 %v251
      %v573 = vunpack.c.l.b16 %v252
      %v574 = vunpack.c.l.b16 %v253
      %v575 = vunpack.c.l.b16 %v254
      %v576 = vunpack.c.l.b16 %v255
      %v577 = vunpack.c.l.b16 %v256
      %v578 = vunpack.c.l.b16 %v257
      %v579 = vunpack.c.l.b16 %v258
      %v580 = vunpack.c.l.b16 %v259
      %v581 = vpack.c.b16 %v550, %v549
      %v582 = vpack.c.b16 %v552, %v551
      %v583 = vpack.c.b16 %v554, %v553
      %v584 = vpack.c.b16 %v556, %v555
      %v585 = vpack.c.b16 %v558, %v557
      %v586 = vpack.c.b16 %v560, %v559
      %v587 = vpack.c.b16 %v562, %v561
      %v588 = vpack.c.b16 %v564, %v563
      %v589 = vpack.c.b16 %v566, %v565
      %v590 = vpack.c.b16 %v568, %v567
      %v591 = vpack.c.b16 %v570, %v569
      %v592 = vpack.c.b16 %v572, %v571
      %v593 = vpack.c.b16 %v574, %v573
      %v594 = vpack.c.b16 %v576, %v575
      %v595 = vpack.c.b16 %v578, %v577
      %v596 = vpack.c.b16 %v580, %v579
      %613 = vmatprep.subr.bf16.mxu0 0
      %614 = vmatpush1.bf16.msra.mxu0 %v581
      %615 = vmatprep.subr.bf16.mxu0 0
      %616 = vmatpush1.bf16.msra.mxu0 %v582
      %617 = vmatprep.subr.bf16.mxu0 0
      %618 = vmatpush1.bf16.msra.mxu0 %v583
      %619 = vmatprep.subr.bf16.mxu0 0
      %620 = vmatpush1.bf16.msra.mxu0 %v584
      %621 = vmatprep.subr.bf16.mxu0 0
      %622 = vmatpush1.bf16.msra.mxu0 %v585
      %623 = vmatprep.subr.bf16.mxu0 0
      %624 = vmatpush1.bf16.msra.mxu0 %v586
      %625 = vmatprep.subr.bf16.mxu0 0
      %626 = vmatpush1.bf16.msra.mxu0 %v587
      %627 = vmatprep.subr.bf16.mxu0 0
      %628 = vmatpush1.bf16.msra.mxu0 %v588
      %629 = vmatprep.subr.bf16.mxu0 0
      %630 = vmatpush1.bf16.msra.mxu0 %v589
      %631 = vmatprep.subr.bf16.mxu0 0
      %632 = vmatpush1.bf16.msra.mxu0 %v590
      %633 = vmatprep.subr.bf16.mxu0 0
      %634 = vmatpush1.bf16.msra.mxu0 %v591
      %635 = vmatprep.subr.bf16.mxu0 0
      %636 = vmatpush1.bf16.msra.mxu0 %v592
      %637 = vmatprep.subr.bf16.mxu0 0
      %638 = vmatpush1.bf16.msra.mxu0 %v593
      %639 = vmatprep.subr.bf16.mxu0 0
      %640 = vmatpush1.bf16.msra.mxu0 %v594
      %641 = vmatprep.subr.bf16.mxu0 0
      %642 = vmatpush1.bf16.msra.mxu0 %v595
      %643 = vmatprep.subr.bf16.mxu0 0
      %644 = vmatpush1.bf16.msra.mxu0 %v596
      %645 = vmatprep.mubr.bf16.mxu0 %v418
      %646 = vmatmul.mubr.bf16.gmra.mrb[0].mxu0 %v417
      %v647 = vpop.f32.mrb[0].mxu0
      %v648 = vadd.f32 %v265, %v647
      %v649 = vpop.f32.mrb[0].mxu0
      %v650 = vpop.f32.mrb[0].mxu0
      %v651 = vadd.f32 %v265, %v650
      %v652 = vpop.f32.mrb[0].mxu0
      %653 = vmatprep.mubr.bf16.mxu0 %v420
      %654 = vmatmul.mubr.bf16.gmra.mrb[0].mxu0 %v419
      %v655 = vpop.f32.mrb[0].mxu0
      %v656 = vadd.f32 %v265, %v655
      %v657 = vpop.f32.mrb[0].mxu0
      %v658 = vpop.f32.mrb[0].mxu0
      %v659 = vadd.f32 %v265, %v658
      %v660 = vpop.f32.mrb[0].mxu0
      %661 = vmatprep.mubr.bf16.mxu0 %v422
      %662 = vmatmul.mubr.bf16.gmra.mrb[0].mxu0 %v421
      %v663 = vpop.f32.mrb[0].mxu0
      %v664 = vadd.f32 %v265, %v663
      %v665 = vpop.f32.mrb[0].mxu0
      %v666 = vpop.f32.mrb[0].mxu0
      %v667 = vadd.f32 %v265, %v666
      %v668 = vpop.f32.mrb[0].mxu0
      %669 = vmatprep.mubr.bf16.mxu0 %v424
      %670 = vmatmul.mubr.bf16.gmra.mrb[0].mxu0 %v423
      %v671 = vpop.f32.mrb[0].mxu0
      %v672 = vadd.f32 %v265, %v671
      %v673 = vpop.f32.mrb[0].mxu0
      %v674 = vpop.f32.mrb[0].mxu0
      %v675 = vadd.f32 %v265, %v674
      %v676 = vpop.f32.mrb[0].mxu0
      %677 = vmatprep.mubr.bf16.mxu0 %v426
      %678 = vmatmul.mubr.bf16.gmra.mrb[0].mxu0 %v425
      %v679 = vpop.f32.mrb[0].mxu0
      %v680 = vadd.f32 %v265, %v679
      %v681 = vpop.f32.mrb[0].mxu0
      %v682 = vpop.f32.mrb[0].mxu0
      %v683 = vadd.f32 %v265, %v682
      %v684 = vpop.f32.mrb[0].mxu0
      %685 = vmatprep.mubr.bf16.mxu0 %v428
      %686 = vmatmul.mubr.bf16.gmra.mrb[0].mxu0 %v427
      %v687 = vpop.f32.mrb[0].mxu0
      %v688 = vadd.f32 %v265, %v687
      %v689 = vpop.f32.mrb[0].mxu0
      %v690 = vpop.f32.mrb[0].mxu0
      %v691 = vadd.f32 %v265, %v690
      %v692 = vpop.f32.mrb[0].mxu0
      %693 = vmatprep.mubr.bf16.mxu0 %v430
      %694 = vmatmul.mubr.bf16.gmra.mrb[0].mxu0 %v429
      %v695 = vpop.f32.mrb[0].mxu0
      %v696 = vadd.f32 %v265, %v695
      %v697 = vpop.f32.mrb[0].mxu0
      %v698 = vpop.f32.mrb[0].mxu0
      %v699 = vadd.f32 %v265, %v698
      %v700 = vpop.f32.mrb[0].mxu0
      %701 = vmatprep.mubr.bf16.mxu0 %v432
      %702 = vmatmul.mubr.bf16.gmra.mrb[0].mxu0 %v431
      %v703 = vpop.f32.mrb[0].mxu0
      %v704 = vadd.f32 %v265, %v703
      %v705 = vpop.f32.mrb[0].mxu0
      %v706 = vpop.f32.mrb[0].mxu0
      %v707 = vadd.f32 %v265, %v706
      %v708 = vpop.f32.mrb[0].mxu0
      %709 = vmatprep.mubr.bf16.mxu0 %v434
      %710 = vmatmul.mubr.bf16.gmra.mrb[0].mxu0 %v433
      %v711 = vpop.f32.mrb[0].mxu0
      %v712 = vadd.f32 %v265, %v711
      %v713 = vpop.f32.mrb[0].mxu0
      %v714 = vpop.f32.mrb[0].mxu0
      %v715 = vadd.f32 %v265, %v714
      %v716 = vpop.f32.mrb[0].mxu0
      %717 = vmatprep.mubr.bf16.mxu0 %v436
      %718 = vmatmul.mubr.bf16.gmra.mrb[0].mxu0 %v435
      %v719 = vpop.f32.mrb[0].mxu0
      %v720 = vadd.f32 %v265, %v719
      %v721 = vpop.f32.mrb[0].mxu0
      %v722 = vpop.f32.mrb[0].mxu0
      %v723 = vadd.f32 %v265, %v722
      %v724 = vpop.f32.mrb[0].mxu0
      %725 = vmatprep.mubr.bf16.mxu0 %v438
      %726 = vmatmul.mubr.bf16.gmra.mrb[0].mxu0 %v437
      %v727 = vpop.f32.mrb[0].mxu0
      %v728 = vadd.f32 %v265, %v727
      %v729 = vpop.f32.mrb[0].mxu0
      %v730 = vpop.f32.mrb[0].mxu0
      %v731 = vadd.f32 %v265, %v730
      %v732 = vpop.f32.mrb[0].mxu0
      %733 = vmatprep.mubr.bf16.mxu0 %v440
      %734 = vmatmul.mubr.bf16.gmra.mrb[0].mxu0 %v439
      %v735 = vpop.f32.mrb[0].mxu0
      %v736 = vadd.f32 %v265, %v735
      %v737 = vpop.f32.mrb[0].mxu0
      %v738 = vpop.f32.mrb[0].mxu0
      %v739 = vadd.f32 %v265, %v738
      %v740 = vpop.f32.mrb[0].mxu0
      %741 = vmatprep.mubr.bf16.mxu0 %v442
      %742 = vmatmul.mubr.bf16.gmra.mrb[0].mxu0 %v441
      %v743 = vpop.f32.mrb[0].mxu0
      %v744 = vadd.f32 %v265, %v743
      %v745 = vpop.f32.mrb[0].mxu0
      %v746 = vpop.f32.mrb[0].mxu0
      %v747 = vadd.f32 %v265, %v746
      %v748 = vpop.f32.mrb[0].mxu0
      %749 = vmatprep.mubr.bf16.mxu0 %v444
      %750 = vmatmul.mubr.bf16.gmra.mrb[0].mxu0 %v443
      %v751 = vpop.f32.mrb[0].mxu0
      %v752 = vadd.f32 %v265, %v751
      %v753 = vpop.f32.mrb[0].mxu0
      %v754 = vpop.f32.mrb[0].mxu0
      %v755 = vadd.f32 %v265, %v754
      %v756 = vpop.f32.mrb[0].mxu0
      %757 = vmatprep.mubr.bf16.mxu0 %v446
      %758 = vmatmul.mubr.bf16.gmra.mrb[0].mxu0 %v445
      %v759 = vpop.f32.mrb[0].mxu0
      %v760 = vadd.f32 %v265, %v759
      %v761 = vpop.f32.mrb[0].mxu0
      %v762 = vpop.f32.mrb[0].mxu0
      %v763 = vadd.f32 %v265, %v762
      %v764 = vpop.f32.mrb[0].mxu0
      %765 = vmatprep.mubr.bf16.mxu0 %v448
      %766 = vmatmul.mubr.bf16.gmra.mrb[0].mxu0 %v447
      %v767 = vpop.f32.mrb[0].mxu0
      %v768 = vadd.f32 %v265, %v767
      %v769 = vpop.f32.mrb[0].mxu0
      %v770 = vpop.f32.mrb[0].mxu0
      %v771 = vadd.f32 %v265, %v770
      %v772 = vpop.f32.mrb[0].mxu0
      %773 = vmatprep.mubr.bf16.mxu0 %v450
      %774 = vmatmul.mubr.bf16.gmra.mrb[0].mxu0 %v449
      %v775 = vpop.f32.mrb[0].mxu0
      %v776 = vadd.f32 %v265, %v775
      %v777 = vpop.f32.mrb[0].mxu0
      %v778 = vpop.f32.mrb[0].mxu0
      %v779 = vadd.f32 %v265, %v778
      %v780 = vpop.f32.mrb[0].mxu0
      %781 = vmatprep.mubr.bf16.mxu0 %v452
      %782 = vmatmul.mubr.bf16.gmra.mrb[0].mxu0 %v451
      %v783 = vpop.f32.mrb[0].mxu0
      %v784 = vadd.f32 %v265, %v783
      %v785 = vpop.f32.mrb[0].mxu0
      %v786 = vpop.f32.mrb[0].mxu0
      %v787 = vadd.f32 %v265, %v786
      %v788 = vpop.f32.mrb[0].mxu0
      %789 = vmatprep.mubr.bf16.mxu0 %v454
      %790 = vmatmul.mubr.bf16.gmra.mrb[0].mxu0 %v453
      %v791 = vpop.f32.mrb[0].mxu0
      %v792 = vadd.f32 %v265, %v791
      %v793 = vpop.f32.mrb[0].mxu0
      %v794 = vpop.f32.mrb[0].mxu0
      %v795 = vadd.f32 %v265, %v794
      %v796 = vpop.f32.mrb[0].mxu0
      %797 = vmatprep.mubr.bf16.mxu0 %v456
      %798 = vmatmul.mubr.bf16.gmra.mrb[0].mxu0 %v455
      %v799 = vpop.f32.mrb[0].mxu0
      %v800 = vadd.f32 %v265, %v799
      %v801 = vpop.f32.mrb[0].mxu0
      %v802 = vpop.f32.mrb[0].mxu0
      %v803 = vadd.f32 %v265, %v802
      %v804 = vpop.f32.mrb[0].mxu0
      %805 = vmatprep.mubr.bf16.mxu0 %v458
      %806 = vmatmul.mubr.bf16.gmra.mrb[0].mxu0 %v457
      %v807 = vpop.f32.mrb[0].mxu0
      %v808 = vadd.f32 %v265, %v807
      %v809 = vpop.f32.mrb[0].mxu0
      %v810 = vpop.f32.mrb[0].mxu0
      %v811 = vadd.f32 %v265, %v810
      %v812 = vpop.f32.mrb[0].mxu0
      %813 = vmatprep.mubr.bf16.mxu0 %v460
      %814 = vmatmul.mubr.bf16.gmra.mrb[0].mxu0 %v459
      %v815 = vpop.f32.mrb[0].mxu0
      %v816 = vadd.f32 %v265, %v815
      %v817 = vpop.f32.mrb[0].mxu0
      %v818 = vpop.f32.mrb[0].mxu0
      %v819 = vadd.f32 %v265, %v818
      %v820 = vpop.f32.mrb[0].mxu0
      %821 = vmatprep.mubr.bf16.mxu0 %v462
      %822 = vmatmul.mubr.bf16.gmra.mrb[0].mxu0 %v461
      %v823 = vpop.f32.mrb[0].mxu0
      %v824 = vadd.f32 %v265, %v823
      %v825 = vpop.f32.mrb[0].mxu0
      %v826 = vpop.f32.mrb[0].mxu0
      %v827 = vadd.f32 %v265, %v826
      %v828 = vpop.f32.mrb[0].mxu0
      %829 = vmatprep.mubr.bf16.mxu0 %v464
      %830 = vmatmul.mubr.bf16.gmra.mrb[0].mxu0 %v463
      %v831 = vpop.f32.mrb[0].mxu0
      %v832 = vadd.f32 %v265, %v831
      %v833 = vpop.f32.mrb[0].mxu0
      %v834 = vpop.f32.mrb[0].mxu0
      %v835 = vadd.f32 %v265, %v834
      %v836 = vpop.f32.mrb[0].mxu0
      %837 = vmatprep.mubr.bf16.mxu0 %v466
      %838 = vmatmul.mubr.bf16.gmra.mrb[0].mxu0 %v465
      %v839 = vpop.f32.mrb[0].mxu0
      %v840 = vadd.f32 %v265, %v839
      %v841 = vpop.f32.mrb[0].mxu0
      %v842 = vpop.f32.mrb[0].mxu0
      %v843 = vadd.f32 %v265, %v842
      %v844 = vpop.f32.mrb[0].mxu0
      %845 = vdwg.mxu0
      %v846 = vmax.f32 %v648, 0.0
      %v847 = vmax.f32 %v651, 0.0
      %v848 = vmax.f32 %v656, 0.0
      %v849 = vmax.f32 %v659, 0.0
      %v850 = vmax.f32 %v664, 0.0
      %v851 = vmax.f32 %v667, 0.0
      %v852 = vmax.f32 %v672, 0.0
      %v853 = vmax.f32 %v675, 0.0
      %v854 = vmax.f32 %v680, 0.0
      %v855 = vmax.f32 %v683, 0.0
      %v856 = vmax.f32 %v688, 0.0
      %v857 = vmax.f32 %v691, 0.0
      %v858 = vmax.f32 %v696, 0.0
      %v859 = vmax.f32 %v699, 0.0
      %v860 = vmax.f32 %v704, 0.0
      %v861 = vmax.f32 %v707, 0.0
      %v862 = vmax.f32 %v712, 0.0
      %v863 = vmax.f32 %v715, 0.0
      %v864 = vmax.f32 %v720, 0.0
      %v865 = vmax.f32 %v723, 0.0
      %v866 = vmax.f32 %v728, 0.0
      %v867 = vmax.f32 %v731, 0.0
      %v868 = vmax.f32 %v736, 0.0
      %v869 = vmax.f32 %v739, 0.0
      %v870 = vmax.f32 %v744, 0.0
      %v871 = vmax.f32 %v747, 0.0
      %v872 = vmax.f32 %v752, 0.0
      %v873 = vmax.f32 %v755, 0.0
      %v874 = vmax.f32 %v760, 0.0
      %v875 = vmax.f32 %v763, 0.0
      %v876 = vmax.f32 %v768, 0.0
      %v877 = vmax.f32 %v771, 0.0
      %v878 = vmax.f32 %v776, 0.0
      %v879 = vmax.f32 %v779, 0.0
      %v880 = vmax.f32 %v784, 0.0
      %v881 = vmax.f32 %v787, 0.0
      %v882 = vmax.f32 %v792, 0.0
      %v883 = vmax.f32 %v795, 0.0
      %v884 = vmax.f32 %v800, 0.0
      %v885 = vmax.f32 %v803, 0.0
      %v886 = vmax.f32 %v808, 0.0
      %v887 = vmax.f32 %v811, 0.0
      %v888 = vmax.f32 %v816, 0.0
      %v889 = vmax.f32 %v819, 0.0
      %v890 = vmax.f32 %v824, 0.0
      %v891 = vmax.f32 %v827, 0.0
      %v892 = vmax.f32 %v832, 0.0
      %v893 = vmax.f32 %v835, 0.0
      %v894 = vmax.f32 %v840, 0.0
      %v895 = vmax.f32 %v843, 0.0
      %v896 = vpack.c.bf16 %v847, %v846
      %v897 = vpack.c.bf16 %v849, %v848
      %v898 = vpack.c.bf16 %v851, %v850
      %v899 = vpack.c.bf16 %v853, %v852
      %v900 = vpack.c.bf16 %v855, %v854
      %v901 = vpack.c.bf16 %v857, %v856
      %v902 = vpack.c.bf16 %v859, %v858
      %v903 = vpack.c.bf16 %v861, %v860
      %v904 = vpack.c.bf16 %v863, %v862
      %v905 = vpack.c.bf16 %v865, %v864
      %v906 = vpack.c.bf16 %v867, %v866
      %v907 = vpack.c.bf16 %v869, %v868
      %v908 = vpack.c.bf16 %v871, %v870
      %v909 = vpack.c.bf16 %v873, %v872
      %v910 = vpack.c.bf16 %v875, %v874
      %v911 = vpack.c.bf16 %v877, %v876
      %v912 = vpack.c.bf16 %v879, %v878
      %v913 = vpack.c.bf16 %v881, %v880
      %v914 = vpack.c.bf16 %v883, %v882
      %v915 = vpack.c.bf16 %v885, %v884
      %v916 = vpack.c.bf16 %v887, %v886
      %v917 = vpack.c.bf16 %v889, %v888
      %v918 = vpack.c.bf16 %v891, %v890
      %v919 = vpack.c.bf16 %v893, %v892
      %v920 = vpack.c.bf16 %v895, %v894
      %v946 = vunpack.c.l.b16 %v896
      %v947 = vunpack.c.h.b16 %v896
      %v948 = vunpack.c.l.b16 %v897
      %v949 = vunpack.c.h.b16 %v897
      %v950 = vunpack.c.l.b16 %v898
      %v951 = vunpack.c.h.b16 %v898
      %v952 = vunpack.c.l.b16 %v899
      %v953 = vunpack.c.h.b16 %v899
      %v954 = vunpack.c.l.b16 %v900
      %v955 = vunpack.c.h.b16 %v900
      %v956 = vunpack.c.l.b16 %v901
      %v957 = vunpack.c.h.b16 %v901
      %v958 = vunpack.c.l.b16 %v902
      %v959 = vunpack.c.h.b16 %v902
      %v960 = vunpack.c.l.b16 %v903
      %v961 = vunpack.c.h.b16 %v903
      %v962 = vunpack.c.l.b16 %v904
      %v963 = vunpack.c.h.b16 %v904
      %v964 = vunpack.c.l.b16 %v905
      %v965 = vunpack.c.h.b16 %v905
      %v966 = vunpack.c.l.b16 %v906
      %v967 = vunpack.c.h.b16 %v906
      %v968 = vunpack.c.l.b16 %v907
      %v969 = vunpack.c.h.b16 %v907
      %v970 = vunpack.c.l.b16 %v908
      %v971 = vunpack.c.h.b16 %v908
      %v972 = vunpack.c.l.b16 %v909
      %v973 = vunpack.c.h.b16 %v909
      %v974 = vunpack.c.l.b16 %v910
      %v975 = vunpack.c.h.b16 %v910
      %v976 = vunpack.c.l.b16 %v911
      %v977 = vunpack.c.h.b16 %v911
      %v978 = vunpack.c.l.b16 %v912
      %v979 = vunpack.c.h.b16 %v912
      %v980 = vunpack.c.l.b16 %v913
      %v981 = vunpack.c.h.b16 %v913
      %v982 = vunpack.c.l.b16 %v914
      %v983 = vunpack.c.h.b16 %v914
      %v984 = vunpack.c.l.b16 %v915
      %v985 = vunpack.c.h.b16 %v915
      %v986 = vunpack.c.l.b16 %v916
      %v987 = vunpack.c.h.b16 %v916
      %v988 = vunpack.c.l.b16 %v917
      %v989 = vunpack.c.h.b16 %v917
      %v990 = vunpack.c.l.b16 %v918
      %v991 = vunpack.c.h.b16 %v918
      %v992 = vunpack.c.l.b16 %v919
      %v993 = vunpack.c.h.b16 %v919
      %v994 = vunpack.c.l.b16 %v920
      %v995 = vunpack.c.h.b16 %v920
      %v996 = vpack.c.b16 %v946, %v946
      %v997 = vpack.c.b16 %v947, %v947
      %v998 = vpack.c.b16 %v948, %v948
      %v999 = vpack.c.b16 %v949, %v949
      %v1000 = vpack.c.b16 %v950, %v950
      %v1001 = vpack.c.b16 %v951, %v951
      %v1002 = vpack.c.b16 %v952, %v952
      %v1003 = vpack.c.b16 %v953, %v953
      %v1004 = vpack.c.b16 %v954, %v954
      %v1005 = vpack.c.b16 %v955, %v955
      %v1006 = vpack.c.b16 %v956, %v956
      %v1007 = vpack.c.b16 %v957, %v957
      %v1008 = vpack.c.b16 %v958, %v958
      %v1009 = vpack.c.b16 %v959, %v959
      %v1010 = vpack.c.b16 %v960, %v960
      %v1011 = vpack.c.b16 %v961, %v961
      %v1012 = vpack.c.b16 %v962, %v962
      %v1013 = vpack.c.b16 %v963, %v963
      %v1014 = vpack.c.b16 %v964, %v964
      %v1015 = vpack.c.b16 %v965, %v965
      %v1016 = vpack.c.b16 %v966, %v966
      %v1017 = vpack.c.b16 %v967, %v967
      %v1018 = vpack.c.b16 %v968, %v968
      %v1019 = vpack.c.b16 %v969, %v969
      %v1020 = vpack.c.b16 %v970, %v970
      %v1021 = vpack.c.b16 %v971, %v971
      %v1022 = vpack.c.b16 %v972, %v972
      %v1023 = vpack.c.b16 %v973, %v973
      %v1024 = vpack.c.b16 %v974, %v974
      %v1025 = vpack.c.b16 %v975, %v975
      %v1026 = vpack.c.b16 %v976, %v976
      %v1027 = vpack.c.b16 %v977, %v977
      %v1028 = vpack.c.b16 %v978, %v978
      %v1029 = vpack.c.b16 %v979, %v979
      %v1030 = vpack.c.b16 %v980, %v980
      %v1031 = vpack.c.b16 %v981, %v981
      %v1032 = vpack.c.b16 %v982, %v982
      %v1033 = vpack.c.b16 %v983, %v983
      %v1034 = vpack.c.b16 %v984, %v984
      %v1035 = vpack.c.b16 %v985, %v985
      %v1036 = vpack.c.b16 %v986, %v986
      %v1037 = vpack.c.b16 %v987, %v987
      %v1038 = vpack.c.b16 %v988, %v988
      %v1039 = vpack.c.b16 %v989, %v989
      %v1040 = vpack.c.b16 %v990, %v990
      %v1041 = vpack.c.b16 %v991, %v991
      %v1042 = vpack.c.b16 %v992, %v992
      %v1043 = vpack.c.b16 %v993, %v993
      %v1044 = vpack.c.b16 %v994, %v994
      %v1045 = vpack.c.b16 %v995, %v995
      %1096 = vst [vmem:[%s175] sm:$0xf] %v996
      %1097 = vst [vmem:[%s175 + $0x4] sm:$0xf] %v997
      %1098 = vst [vmem:[%s175 + $0x8] sm:$0xf] %v998
      %1099 = vst [vmem:[%s175 + $0xc] sm:$0xf] %v999
      %1100 = vst [vmem:[%s175 + $0x10] sm:$0xf] %v1000
      %1101 = vst [vmem:[%s175 + $0x14] sm:$0xf] %v1001
      %1102 = vst [vmem:[%s175 + $0x18] sm:$0xf] %v1002
      %1103 = vst [vmem:[%s175 + $0x1c] sm:$0xf] %v1003
      %1104 = vst [vmem:[%s175 + $0x20] sm:$0xf] %v1004
      %1105 = vst [vmem:[%s175 + $0x24] sm:$0xf] %v1005
      %1106 = vst [vmem:[%s175 + $0x28] sm:$0xf] %v1006
      %1107 = vst [vmem:[%s175 + $0x2c] sm:$0xf] %v1007
      %1108 = vst [vmem:[%s175 + $0x30] sm:$0xf] %v1008
      %1109 = vst [vmem:[%s175 + $0x34] sm:$0xf] %v1009
      %1110 = vst [vmem:[%s175 + $0x38] sm:$0xf] %v1010
      %1111 = vst [vmem:[%s175 + $0x3c] sm:$0xf] %v1011
      %1112 = vst [vmem:[%s175 + $0x40] sm:$0xf] %v1012
      %1113 = vst [vmem:[%s175 + $0x44] sm:$0xf] %v1013
      %1114 = vst [vmem:[%s175 + $0x48] sm:$0xf] %v1014
      %1115 = vst [vmem:[%s175 + $0x4c] sm:$0xf] %v1015
      %1116 = vst [vmem:[%s175 + $0x50] sm:$0xf] %v1016
      %1117 = vst [vmem:[%s175 + $0x54] sm:$0xf] %v1017
      %1118 = vst [vmem:[%s175 + $0x58] sm:$0xf] %v1018
      %1119 = vst [vmem:[%s175 + $0x5c] sm:$0xf] %v1019
      %1120 = vst [vmem:[%s175 + $0x60] sm:$0xf] %v1020
      %1121 = vst [vmem:[%s175 + $0x64] sm:$0xf] %v1021
      %1122 = vst [vmem:[%s175 + $0x68] sm:$0xf] %v1022
      %1123 = vst [vmem:[%s175 + $0x6c] sm:$0xf] %v1023
      %1124 = vst [vmem:[%s175 + $0x70] sm:$0xf] %v1024
      %1125 = vst [vmem:[%s175 + $0x74] sm:$0xf] %v1025
      %1126 = vst [vmem:[%s175 + $0x78] sm:$0xf] %v1026
      %1127 = vst [vmem:[%s175 + $0x7c] sm:$0xf] %v1027
      %1128 = vst [vmem:[%s175 + $0x80] sm:$0xf] %v1028
      %1129 = vst [vmem:[%s175 + $0x84] sm:$0xf] %v1029
      %1130 = vst [vmem:[%s175 + $0x88] sm:$0xf] %v1030
      %1131 = vst [vmem:[%s175 + $0x8c] sm:$0xf] %v1031
      %1132 = vst [vmem:[%s175 + $0x90] sm:$0xf] %v1032
      %1133 = vst [vmem:[%s175 + $0x94] sm:$0xf] %v1033
      %1134 = vst [vmem:[%s175 + $0x98] sm:$0xf] %v1034
      %1135 = vst [vmem:[%s175 + $0x9c] sm:$0xf] %v1035
      %1136 = vst [vmem:[%s175 + $0xa0] sm:$0xf] %v1036
      %1137 = vst [vmem:[%s175 + $0xa4] sm:$0xf] %v1037
      %1138 = vst [vmem:[%s175 + $0xa8] sm:$0xf] %v1038
      %1139 = vst [vmem:[%s175 + $0xac] sm:$0xf] %v1039
      %1140 = vst [vmem:[%s175 + $0xb0] sm:$0xf] %v1040
      %1141 = vst [vmem:[%s175 + $0xb4] sm:$0xf] %v1041
      %1142 = vst [vmem:[%s175 + $0xb8] sm:$0xf] %v1042
      %1143 = vst [vmem:[%s175 + $0xbc] sm:$0xf] %v1043
      %1144 = vst [vmem:[%s175 + $0xc0] sm:$0xf] %v1044
      %1145 = vst [vmem:[%s175 + $0xc4] sm:$0xf] %v1045
      %s1146 = smul.u32 50, %s14
      %p1147 = scmp.lt.s32.totalorder %s1146, 99
      %s1148 = scalar_select %p1147, %s1146, 99
      %s1149 = smul.addr %s1148, 4
      %s1150 = scalar_lea.vmem %s3, %s1149
      // Predicated region
      $region33: #{dueling_dqn_forward.4} parent=31 // pred_check
        %p1151 = pneg %p100
      $region34: #{dueling_dqn_forward.4} parent=31 // pred_check_branch
        %1153 = sbr.rel (%p1151) target = $region36
      $region35: #{dueling_dqn_forward.4} parent=31 // pred_region
        %s1154 = smul.u32 50, %s14
      $region36: #{dueling_dqn_forward.4} parent=31 // pred_fallthru
        _
    $region32: #{dueling_dqn_forward.4} parent=5 // pred_fallthru
      _
    %p1155 = scmp.le.s32.totalorder 2, %s9
    // Predicated region
    $region37: #{dueling_dqn_forward.4} parent=5 // pred_check
      %p1156 = pneg %p1155
    $region38: #{dueling_dqn_forward.4} parent=5 // pred_check_branch
      %1158 = sbr.rel (%p1156) target = $region40
    $region39: #{dueling_dqn_forward.4} parent=5 // pred_region
      %s1159 = ssub.s32 %s9, 2
      // Predicated region
      $region41: #{dueling_dqn_forward.4} parent=39 // pred_check
        %p1160 = pneg %p106
      $region42: #{dueling_dqn_forward.4} parent=39 // pred_check_branch
        %1162 = sbr.rel (%p1160) target = $region44
      $region43: #{dueling_dqn_forward.4} parent=39 // pred_region
        %s1163 = smul.u32 50, %s15
        %p1164 = scmp.lt.s32.totalorder %s1163, 99
        %s1165 = scalar_select %p1164, %s1163, 99
        %s1166 = smul.addr %s1165, 4
        %s1167 = scalar_lea.vmem %s3, %s1166
      $region44: #{dueling_dqn_forward.4} parent=39 // pred_fallthru
        _
    $region40: #{dueling_dqn_forward.4} parent=5 // pred_fallthru
      _
  $region6: #{dueling_dqn_forward.4} parent=0 // loop_footer
    %s13 = sadd.s32 1, %s9
  $region7: #{dueling_dqn_forward.4} parent=0 // loop_footer_branch
    %8 = sbr.rel target = $region3
  $region8: #{dueling_dqn_forward.4} parent=0 // loop_exit
    _

// kernel: dueling_dqn_forward.5
$region0: #{dueling_dqn_forward.5}
  #allocation0 [shape = 'u32[]', space=smem, size = 0x4, offset = 0x4, fixed_abs, tag = 'smem constant byte address 0x4 - core index']
  #allocation1 [shape = 'u32[144,128]{1,0:T(1,128)}', space=vmem, size = 0x12000, scoped, tag = 'internal scratch']
  %s0 = inlined_call_operand.vmem [shape: bf16[162,512], index: 0, kind: input, shape index: {}]
  %s1 = inlined_call_operand.vmem [shape: bf16[512,128], index: 1, kind: input, shape index: {}]
  %s2 = inlined_call_operand.vmem [shape: f32[1,128], index: 2, kind: input, shape index: {}]
  %s3 = inlined_call_operand.vmem [shape: bf16[162,128], index: 3, kind: output, shape index: {}]
  %s4 = sld [smem:[#allocation0]]
  $region22: #{dueling_dqn_forward.5} parent=0
    _
  %s6 = ssub.s32 1, %s4
  %s7 = scalar_select 0, %s6, %s4
  // Predicated region
  $region2: #{dueling_dqn_forward.5} parent=0 // pred_check
    _
  $region3: #{dueling_dqn_forward.5} parent=0 // pred_check_branch
    %9 = sbr.rel (0) target = $region5
  $region4: #{dueling_dqn_forward.5} parent=0 // pred_region
    _
  $region5: #{dueling_dqn_forward.5} parent=0 // pred_fallthru
    _
  // Predicated region
  $region6: #{dueling_dqn_forward.5} parent=0 // pred_check
    _
  $region7: #{dueling_dqn_forward.5} parent=0 // pred_check_branch
    %11 = sbr.rel (0) target = $region9
  $region8: #{dueling_dqn_forward.5} parent=0 // pred_region
    _
  $region9: #{dueling_dqn_forward.5} parent=0 // pred_fallthru
    _
  // Predicated region
  $region10: #{dueling_dqn_forward.5} parent=0 // pred_check
    _
  $region11: #{dueling_dqn_forward.5} parent=0 // pred_check_branch
    %13 = sbr.rel (0) target = $region13
  $region12: #{dueling_dqn_forward.5} parent=0 // pred_region
    _
  $region13: #{dueling_dqn_forward.5} parent=0 // pred_fallthru
    _
  %v15 = vld [vmem:[%s0] sm:$0xff]
  %v16 = vld [vmem:[%s0 + $0x8] sm:$0xff]
  %v17 = vld [vmem:[%s0 + $0x10] sm:$0xff]
  %v18 = vld [vmem:[%s0 + $0x18] sm:$0xff]
  %v19 = vld [vmem:[%s0 + $0x20] sm:$0xff]
  %v20 = vld [vmem:[%s0 + $0x28] sm:$0xff]
  %v21 = vld [vmem:[%s0 + $0x30] sm:$0xff]
  %v22 = vld [vmem:[%s0 + $0x38] sm:$0xff]
  %v23 = vld [vmem:[%s0 + $0x40] sm:$0xff]
  %v24 = vld [vmem:[%s0 + $0x48] sm:$0xff]
  %v25 = vld [vmem:[%s0 + $0x50] sm:$0xff]
  %v26 = vld [vmem:[%s0 + $0x58] sm:$0xff]
  %v27 = vld [vmem:[%s0 + $0x60] sm:$0xff]
  %v28 = vld [vmem:[%s0 + $0x68] sm:$0xff]
  %v29 = vld [vmem:[%s0 + $0x70] sm:$0xff]
  %v30 = vld [vmem:[%s0 + $0x78] sm:$0xff]
  %v31 = vld [vmem:[%s0 + $0x80] sm:$0xff]
  %v32 = vld [vmem:[%s0 + $0x88] sm:$0xff]
  %v33 = vld [vmem:[%s0 + $0x90] sm:$0xff]
  %v34 = vld [vmem:[%s0 + $0x98] sm:$0xff]
  %v35 = vld [vmem:[%s0 + $0xa0] sm:$0xff]
  %v36 = vld [vmem:[%s0 + $0xa8] sm:$0xff]
  %v37 = vld [vmem:[%s0 + $0xb0] sm:$0xff]
  %v38 = vld [vmem:[%s0 + $0xb8] sm:$0xff]
  %v39 = vld [vmem:[%s0 + $0xc0] sm:$0xff]
  %v40 = vld [vmem:[%s0 + $0xc8] sm:$0xff]
  %v41 = vld [vmem:[%s0 + $0xd0] sm:$0xff]
  %v42 = vld [vmem:[%s0 + $0xd8] sm:$0xff]
  %v43 = vld [vmem:[%s0 + $0xe0] sm:$0xff]
  %v44 = vld [vmem:[%s0 + $0xe8] sm:$0xff]
  %v45 = vld [vmem:[%s0 + $0xf0] sm:$0xff]
  %v46 = vld [vmem:[%s0 + $0xf8] sm:$0xff]
  %v47 = vld [vmem:[%s0 + $0x100] sm:$0xff]
  %v48 = vld [vmem:[%s0 + $0x108] sm:$0xff]
  %v49 = vld [vmem:[%s0 + $0x110] sm:$0xff]
  %v50 = vld [vmem:[%s0 + $0x118] sm:$0xff]
  %v51 = vld [vmem:[%s0 + $0x120] sm:$0xff]
  %v52 = vld [vmem:[%s0 + $0x128] sm:$0xff]
  %v53 = vld [vmem:[%s0 + $0x130] sm:$0xff]
  %v54 = vld [vmem:[%s0 + $0x138] sm:$0xff]
  %v55 = vld [vmem:[%s0 + $0x140] sm:$0x11]
  %v56 = vld [vmem:[%s0 + $0x148] sm:$0x11]
  %v57 = vld [vmem:[%s1] sm:$0xf]
  %v58 = vld [vmem:[%s1 + $0x4] sm:$0xf]
  %v59 = vld [vmem:[%s1 + $0x8] sm:$0xf]
  %v60 = vld [vmem:[%s1 + $0xc] sm:$0xf]
  %v61 = vld [vmem:[%s1 + $0x10] sm:$0xf]
  %v62 = vld [vmem:[%s1 + $0x14] sm:$0xf]
  %v63 = vld [vmem:[%s1 + $0x18] sm:$0xf]
  %v64 = vld [vmem:[%s1 + $0x1c] sm:$0xf]
  %v65 = vld [vmem:[%s1 + $0x20] sm:$0xf]
  %v66 = vld [vmem:[%s1 + $0x24] sm:$0xf]
  %v67 = vld [vmem:[%s1 + $0x28] sm:$0xf]
  %v68 = vld [vmem:[%s1 + $0x2c] sm:$0xf]
  %v69 = vld [vmem:[%s1 + $0x30] sm:$0xf]
  %v70 = vld [vmem:[%s1 + $0x34] sm:$0xf]
  %v71 = vld [vmem:[%s1 + $0x38] sm:$0xf]
  %v72 = vld [vmem:[%s1 + $0x3c] sm:$0xf]
  %v73 = vld [vmem:[%s1 + $0x40] sm:$0xf]
  %v74 = vld [vmem:[%s1 + $0x44] sm:$0xf]
  %v75 = vld [vmem:[%s1 + $0x48] sm:$0xf]
  %v76 = vld [vmem:[%s1 + $0x4c] sm:$0xf]
  %v77 = vld [vmem:[%s1 + $0x50] sm:$0xf]
  %v78 = vld [vmem:[%s1 + $0x54] sm:$0xf]
  %v79 = vld [vmem:[%s1 + $0x58] sm:$0xf]
  %v80 = vld [vmem:[%s1 + $0x5c] sm:$0xf]
  %v81 = vld [vmem:[%s1 + $0x60] sm:$0xf]
  %v82 = vld [vmem:[%s1 + $0x64] sm:$0xf]
  %v83 = vld [vmem:[%s1 + $0x68] sm:$0xf]
  %v84 = vld [vmem:[%s1 + $0x6c] sm:$0xf]
  %v85 = vld [vmem:[%s1 + $0x70] sm:$0xf]
  %v86 = vld [vmem:[%s1 + $0x74] sm:$0xf]
  %v87 = vld [vmem:[%s1 + $0x78] sm:$0xf]
  %v88 = vld [vmem:[%s1 + $0x7c] sm:$0xf]
  %v89 = vld [vmem:[%s1 + $0x80] sm:$0xf]
  %v90 = vld [vmem:[%s1 + $0x84] sm:$0xf]
  %v91 = vld [vmem:[%s1 + $0x88] sm:$0xf]
  %v92 = vld [vmem:[%s1 + $0x8c] sm:$0xf]
  %v93 = vld [vmem:[%s1 + $0x90] sm:$0xf]
  %v94 = vld [vmem:[%s1 + $0x94] sm:$0xf]
  %v95 = vld [vmem:[%s1 + $0x98] sm:$0xf]
  %v96 = vld [vmem:[%s1 + $0x9c] sm:$0xf]
  %v97 = vld [vmem:[%s1 + $0xa0] sm:$0xf]
  %v98 = vld [vmem:[%s1 + $0xa4] sm:$0xf]
  %v99 = vld [vmem:[%s1 + $0xa8] sm:$0xf]
  %v100 = vld [vmem:[%s1 + $0xac] sm:$0xf]
  %v101 = vld [vmem:[%s1 + $0xb0] sm:$0xf]
  %v102 = vld [vmem:[%s1 + $0xb4] sm:$0xf]
  %v103 = vld [vmem:[%s1 + $0xb8] sm:$0xf]
  %v104 = vld [vmem:[%s1 + $0xbc] sm:$0xf]
  %v105 = vld [vmem:[%s1 + $0xc0] sm:$0xf]
  %v106 = vld [vmem:[%s1 + $0xc4] sm:$0xf]
  %v107 = vld [vmem:[%s1 + $0xc8] sm:$0xf]
  %v108 = vld [vmem:[%s1 + $0xcc] sm:$0xf]
  %v109 = vld [vmem:[%s1 + $0xd0] sm:$0xf]
  %v110 = vld [vmem:[%s1 + $0xd4] sm:$0xf]
  %v111 = vld [vmem:[%s1 + $0xd8] sm:$0xf]
  %v112 = vld [vmem:[%s1 + $0xdc] sm:$0xf]
  %v113 = vld [vmem:[%s1 + $0xe0] sm:$0xf]
  %v114 = vld [vmem:[%s1 + $0xe4] sm:$0xf]
  %v115 = vld [vmem:[%s1 + $0xe8] sm:$0xf]
  %v116 = vld [vmem:[%s1 + $0xec] sm:$0xf]
  %v117 = vld [vmem:[%s1 + $0xf0] sm:$0xf]
  %v118 = vld [vmem:[%s1 + $0xf4] sm:$0xf]
  %v119 = vld [vmem:[%s1 + $0xf8] sm:$0xf]
  %v120 = vld [vmem:[%s1 + $0xfc] sm:$0xf]
  %v121 = vld [vmem:[%s2] sm:$0x1]
  %v123 = vlaneseq
  %v124 = vshrl.u32 %v123, 7
  %v125 = vsub.s32 0, %v124
  %v126 = vrot.slane %v121, %v125
  %v170 = vunpack.c.l.b16 %v15
  %v171 = vunpack.c.h.b16 %v15
  %v172 = vunpack.c.l.b16 %v16
  %v173 = vunpack.c.h.b16 %v16
  %v174 = vunpack.c.l.b16 %v17
  %v175 = vunpack.c.h.b16 %v17
  %v176 = vunpack.c.l.b16 %v18
  %v177 = vunpack.c.h.b16 %v18
  %v178 = vunpack.c.l.b16 %v19
  %v179 = vunpack.c.h.b16 %v19
  %v180 = vunpack.c.l.b16 %v20
  %v181 = vunpack.c.h.b16 %v20
  %v182 = vunpack.c.l.b16 %v21
  %v183 = vunpack.c.h.b16 %v21
  %v184 = vunpack.c.l.b16 %v22
  %v185 = vunpack.c.h.b16 %v22
  %v186 = vunpack.c.l.b16 %v23
  %v187 = vunpack.c.h.b16 %v23
  %v188 = vunpack.c.l.b16 %v24
  %v189 = vunpack.c.h.b16 %v24
  %v190 = vunpack.c.l.b16 %v25
  %v191 = vunpack.c.h.b16 %v25
  %v192 = vunpack.c.l.b16 %v26
  %v193 = vunpack.c.h.b16 %v26
  %v194 = vunpack.c.l.b16 %v27
  %v195 = vunpack.c.h.b16 %v27
  %v196 = vunpack.c.l.b16 %v28
  %v197 = vunpack.c.h.b16 %v28
  %v198 = vunpack.c.l.b16 %v29
  %v199 = vunpack.c.h.b16 %v29
  %v200 = vunpack.c.l.b16 %v30
  %v201 = vunpack.c.h.b16 %v30
  %v202 = vunpack.c.l.b16 %v31
  %v203 = vunpack.c.h.b16 %v31
  %v204 = vunpack.c.l.b16 %v32
  %v205 = vunpack.c.h.b16 %v32
  %v206 = vunpack.c.l.b16 %v33
  %v207 = vunpack.c.h.b16 %v33
  %v208 = vunpack.c.l.b16 %v34
  %v209 = vunpack.c.h.b16 %v34
  %v210 = vunpack.c.l.b16 %v35
  %v211 = vunpack.c.h.b16 %v35
  %v212 = vunpack.c.l.b16 %v36
  %v213 = vunpack.c.h.b16 %v36
  %v214 = vunpack.c.l.b16 %v37
  %v215 = vunpack.c.h.b16 %v37
  %v216 = vunpack.c.l.b16 %v38
  %v217 = vunpack.c.h.b16 %v38
  %v218 = vunpack.c.l.b16 %v39
  %v219 = vunpack.c.h.b16 %v39
  %v220 = vunpack.c.l.b16 %v40
  %v221 = vunpack.c.h.b16 %v40
  %v222 = vunpack.c.l.b16 %v41
  %v223 = vunpack.c.h.b16 %v41
  %v224 = vunpack.c.l.b16 %v42
  %v225 = vunpack.c.h.b16 %v42
  %v226 = vunpack.c.l.b16 %v43
  %v227 = vunpack.c.h.b16 %v43
  %v228 = vunpack.c.l.b16 %v44
  %v229 = vunpack.c.h.b16 %v44
  %v230 = vunpack.c.l.b16 %v45
  %v231 = vunpack.c.h.b16 %v45
  %v232 = vunpack.c.l.b16 %v46
  %v233 = vunpack.c.h.b16 %v46
  %v234 = vunpack.c.l.b16 %v47
  %v235 = vunpack.c.h.b16 %v47
  %v236 = vunpack.c.l.b16 %v48
  %v237 = vunpack.c.h.b16 %v48
  %v238 = vunpack.c.l.b16 %v49
  %v239 = vunpack.c.h.b16 %v49
  %v240 = vunpack.c.l.b16 %v50
  %v241 = vunpack.c.h.b16 %v50
  %v242 = vunpack.c.l.b16 %v51
  %v243 = vunpack.c.h.b16 %v51
  %v244 = vunpack.c.l.b16 %v52
  %v245 = vunpack.c.h.b16 %v52
  %v246 = vunpack.c.l.b16 %v53
  %v247 = vunpack.c.h.b16 %v53
  %v248 = vunpack.c.l.b16 %v54
  %v249 = vunpack.c.h.b16 %v54
  %v250 = vunpack.c.l.b16 %v55
  %v251 = vunpack.c.h.b16 %v55
  %v252 = vunpack.c.l.b16 %v56
  %v253 = vunpack.c.h.b16 %v56
  %v254 = vpack.c.b16 %v174, %v170
  %v255 = vpack.c.b16 %v175, %v171
  %v256 = vpack.c.b16 %v176, %v172
  %v257 = vpack.c.b16 %v177, %v173
  %v258 = vpack.c.b16 %v182, %v178
  %v259 = vpack.c.b16 %v183, %v179
  %v260 = vpack.c.b16 %v184, %v180
  %v261 = vpack.c.b16 %v185, %v181
  %v262 = vpack.c.b16 %v190, %v186
  %v263 = vpack.c.b16 %v191, %v187
  %v264 = vpack.c.b16 %v192, %v188
  %v265 = vpack.c.b16 %v193, %v189
  %v266 = vpack.c.b16 %v198, %v194
  %v267 = vpack.c.b16 %v199, %v195
  %v268 = vpack.c.b16 %v200, %v196
  %v269 = vpack.c.b16 %v201, %v197
  %v270 = vpack.c.b16 %v206, %v202
  %v271 = vpack.c.b16 %v207, %v203
  %v272 = vpack.c.b16 %v208, %v204
  %v273 = vpack.c.b16 %v209, %v205
  %v274 = vpack.c.b16 %v214, %v210
  %v275 = vpack.c.b16 %v215, %v211
  %v276 = vpack.c.b16 %v216, %v212
  %v277 = vpack.c.b16 %v217, %v213
  %v278 = vpack.c.b16 %v222, %v218
  %v279 = vpack.c.b16 %v223, %v219
  %v280 = vpack.c.b16 %v224, %v220
  %v281 = vpack.c.b16 %v225, %v221
  %v282 = vpack.c.b16 %v230, %v226
  %v283 = vpack.c.b16 %v231, %v227
  %v284 = vpack.c.b16 %v232, %v228
  %v285 = vpack.c.b16 %v233, %v229
  %v286 = vpack.c.b16 %v238, %v234
  %v287 = vpack.c.b16 %v239, %v235
  %v288 = vpack.c.b16 %v240, %v236
  %v289 = vpack.c.b16 %v241, %v237
  %v290 = vpack.c.b16 %v246, %v242
  %v291 = vpack.c.b16 %v247, %v243
  %v292 = vpack.c.b16 %v248, %v244
  %v293 = vpack.c.b16 %v249, %v245
  %v294 = vpack.c.b16 %v250, %v250
  %v295 = vpack.c.b16 %v251, %v251
  %v296 = vpack.c.b16 %v252, %v252
  %v297 = vpack.c.b16 %v253, %v253
  %v406 = vunpack.c.l.b16 %v57
  %v407 = vunpack.c.l.b16 %v58
  %v408 = vunpack.c.l.b16 %v59
  %v409 = vunpack.c.l.b16 %v60
  %v410 = vunpack.c.l.b16 %v61
  %v411 = vunpack.c.l.b16 %v62
  %v412 = vunpack.c.l.b16 %v63
  %v413 = vunpack.c.l.b16 %v64
  %v414 = vunpack.c.l.b16 %v65
  %v415 = vunpack.c.l.b16 %v66
  %v416 = vunpack.c.l.b16 %v67
  %v417 = vunpack.c.l.b16 %v68
  %v418 = vunpack.c.l.b16 %v69
  %v419 = vunpack.c.l.b16 %v70
  %v420 = vunpack.c.l.b16 %v71
  %v421 = vunpack.c.l.b16 %v72
  %v422 = vunpack.c.l.b16 %v73
  %v423 = vunpack.c.l.b16 %v74
  %v424 = vunpack.c.l.b16 %v75
  %v425 = vunpack.c.l.b16 %v76
  %v426 = vunpack.c.l.b16 %v77
  %v427 = vunpack.c.l.b16 %v78
  %v428 = vunpack.c.l.b16 %v79
  %v429 = vunpack.c.l.b16 %v80
  %v430 = vunpack.c.l.b16 %v81
  %v431 = vunpack.c.l.b16 %v82
  %v432 = vunpack.c.l.b16 %v83
  %v433 = vunpack.c.l.b16 %v84
  %v434 = vunpack.c.l.b16 %v85
  %v435 = vunpack.c.l.b16 %v86
  %v436 = vunpack.c.l.b16 %v87
  %v437 = vunpack.c.l.b16 %v88
  %v438 = vunpack.c.l.b16 %v89
  %v439 = vunpack.c.l.b16 %v90
  %v440 = vunpack.c.l.b16 %v91
  %v441 = vunpack.c.l.b16 %v92
  %v442 = vunpack.c.l.b16 %v93
  %v443 = vunpack.c.l.b16 %v94
  %v444 = vunpack.c.l.b16 %v95
  %v445 = vunpack.c.l.b16 %v96
  %v446 = vunpack.c.l.b16 %v97
  %v447 = vunpack.c.l.b16 %v98
  %v448 = vunpack.c.l.b16 %v99
  %v449 = vunpack.c.l.b16 %v100
  %v450 = vunpack.c.l.b16 %v101
  %v451 = vunpack.c.l.b16 %v102
  %v452 = vunpack.c.l.b16 %v103
  %v453 = vunpack.c.l.b16 %v104
  %v454 = vunpack.c.l.b16 %v105
  %v455 = vunpack.c.l.b16 %v106
  %v456 = vunpack.c.l.b16 %v107
  %v457 = vunpack.c.l.b16 %v108
  %v458 = vunpack.c.l.b16 %v109
  %v459 = vunpack.c.l.b16 %v110
  %v460 = vunpack.c.l.b16 %v111
  %v461 = vunpack.c.l.b16 %v112
  %v462 = vunpack.c.l.b16 %v113
  %v463 = vunpack.c.l.b16 %v114
  %v464 = vunpack.c.l.b16 %v115
  %v465 = vunpack.c.l.b16 %v116
  %v466 = vunpack.c.l.b16 %v117
  %v467 = vunpack.c.l.b16 %v118
  %v468 = vunpack.c.l.b16 %v119
  %v469 = vunpack.c.l.b16 %v120
  %v470 = vpack.c.b16 %v407, %v406
  %v471 = vpack.c.b16 %v409, %v408
  %v472 = vpack.c.b16 %v411, %v410
  %v473 = vpack.c.b16 %v413, %v412
  %v474 = vpack.c.b16 %v415, %v414
  %v475 = vpack.c.b16 %v417, %v416
  %v476 = vpack.c.b16 %v419, %v418
  %v477 = vpack.c.b16 %v421, %v420
  %v478 = vpack.c.b16 %v423, %v422
  %v479 = vpack.c.b16 %v425, %v424
  %v480 = vpack.c.b16 %v427, %v426
  %v481 = vpack.c.b16 %v429, %v428
  %v482 = vpack.c.b16 %v431, %v430
  %v483 = vpack.c.b16 %v433, %v432
  %v484 = vpack.c.b16 %v435, %v434
  %v485 = vpack.c.b16 %v437, %v436
  %v486 = vpack.c.b16 %v439, %v438
  %v487 = vpack.c.b16 %v441, %v440
  %v488 = vpack.c.b16 %v443, %v442
  %v489 = vpack.c.b16 %v445, %v444
  %v490 = vpack.c.b16 %v447, %v446
  %v491 = vpack.c.b16 %v449, %v448
  %v492 = vpack.c.b16 %v451, %v450
  %v493 = vpack.c.b16 %v453, %v452
  %v494 = vpack.c.b16 %v455, %v454
  %v495 = vpack.c.b16 %v457, %v456
  %v496 = vpack.c.b16 %v459, %v458
  %v497 = vpack.c.b16 %v461, %v460
  %v498 = vpack.c.b16 %v463, %v462
  %v499 = vpack.c.b16 %v465, %v464
  %v500 = vpack.c.b16 %v467, %v466
  %v501 = vpack.c.b16 %v469, %v468
  %534 = vmatprep.subr.bf16.mxu0 0
  %535 = vmatpush1.bf16.msra.mxu0 %v470
  %536 = vmatprep.subr.bf16.mxu0 0
  %537 = vmatpush1.bf16.msra.mxu0 %v471
  %538 = vmatprep.subr.bf16.mxu0 0
  %539 = vmatpush1.bf16.msra.mxu0 %v472
  %540 = vmatprep.subr.bf16.mxu0 0
  %541 = vmatpush1.bf16.msra.mxu0 %v473
  %542 = vmatprep.subr.bf16.mxu0 0
  %543 = vmatpush1.bf16.msra.mxu0 %v474
  %544 = vmatprep.subr.bf16.mxu0 0
  %545 = vmatpush1.bf16.msra.mxu0 %v475
  %546 = vmatprep.subr.bf16.mxu0 0
  %547 = vmatpush1.bf16.msra.mxu0 %v476
  %548 = vmatprep.subr.bf16.mxu0 0
  %549 = vmatpush1.bf16.msra.mxu0 %v477
  %550 = vmatprep.subr.bf16.mxu0 0
  %551 = vmatpush1.bf16.msra.mxu0 %v478
  %552 = vmatprep.subr.bf16.mxu0 0
  %553 = vmatpush1.bf16.msra.mxu0 %v479
  %554 = vmatprep.subr.bf16.mxu0 0
  %555 = vmatpush1.bf16.msra.mxu0 %v480
  %556 = vmatprep.subr.bf16.mxu0 0
  %557 = vmatpush1.bf16.msra.mxu0 %v481
  %558 = vmatprep.subr.bf16.mxu0 0
  %559 = vmatpush1.bf16.msra.mxu0 %v482
  %560 = vmatprep.subr.bf16.mxu0 0
  %561 = vmatpush1.bf16.msra.mxu0 %v483
  %562 = vmatprep.subr.bf16.mxu0 0
  %563 = vmatpush1.bf16.msra.mxu0 %v484
  %564 = vmatprep.subr.bf16.mxu0 0
  %565 = vmatpush1.bf16.msra.mxu0 %v485
  %566 = vmatprep.mubr.bf16.mxu0 %v255
  %567 = vmatmul.mubr.bf16.gmra.mrb[0].mxu0 %v254
  %v568 = vpop.f32.mrb[0].mxu0
  %v569 = vadd.f32 %v126, %v568
  %v570 = vpop.f32.mrb[0].mxu0
  %v571 = vpop.f32.mrb[0].mxu0
  %v572 = vadd.f32 %v126, %v571
  %v573 = vpop.f32.mrb[0].mxu0
  %574 = vmatprep.mubr.bf16.mxu0 %v259
  %575 = vmatmul.mubr.bf16.gmra.mrb[0].mxu0 %v258
  %v576 = vpop.f32.mrb[0].mxu0
  %v577 = vadd.f32 %v126, %v576
  %v578 = vpop.f32.mrb[0].mxu0
  %v579 = vpop.f32.mrb[0].mxu0
  %v580 = vadd.f32 %v126, %v579
  %v581 = vpop.f32.mrb[0].mxu0
  %582 = vmatprep.mubr.bf16.mxu0 %v263
  %583 = vmatmul.mubr.bf16.gmra.mrb[0].mxu0 %v262
  %v584 = vpop.f32.mrb[0].mxu0
  %v585 = vadd.f32 %v126, %v584
  %v586 = vpop.f32.mrb[0].mxu0
  %v587 = vpop.f32.mrb[0].mxu0
  %v588 = vadd.f32 %v126, %v587
  %v589 = vpop.f32.mrb[0].mxu0
  %590 = vmatprep.mubr.bf16.mxu0 %v267
  %591 = vmatmul.mubr.bf16.gmra.mrb[0].mxu0 %v266
  %v592 = vpop.f32.mrb[0].mxu0
  %v593 = vadd.f32 %v126, %v592
  %v594 = vpop.f32.mrb[0].mxu0
  %v595 = vpop.f32.mrb[0].mxu0
  %v596 = vadd.f32 %v126, %v595
  %v597 = vpop.f32.mrb[0].mxu0
  %598 = vmatprep.mubr.bf16.mxu0 %v271
  %599 = vmatmul.mubr.bf16.gmra.mrb[0].mxu0 %v270
  %v600 = vpop.f32.mrb[0].mxu0
  %v601 = vadd.f32 %v126, %v600
  %v602 = vpop.f32.mrb[0].mxu0
  %v603 = vpop.f32.mrb[0].mxu0
  %v604 = vadd.f32 %v126, %v603
  %v605 = vpop.f32.mrb[0].mxu0
  %606 = vmatprep.mubr.bf16.mxu0 %v275
  %607 = vmatmul.mubr.bf16.gmra.mrb[0].mxu0 %v274
  %v608 = vpop.f32.mrb[0].mxu0
  %v609 = vadd.f32 %v126, %v608
  %v610 = vpop.f32.mrb[0].mxu0
  %v611 = vpop.f32.mrb[0].mxu0
  %v612 = vadd.f32 %v126, %v611
  %v613 = vpop.f32.mrb[0].mxu0
  %614 = vmatprep.mubr.bf16.mxu0 %v279
  %615 = vmatmul.mubr.bf16.gmra.mrb[0].mxu0 %v278
  %v616 = vpop.f32.mrb[0].mxu0
  %v617 = vadd.f32 %v126, %v616
  %v618 = vpop.f32.mrb[0].mxu0
  %v619 = vpop.f32.mrb[0].mxu0
  %v620 = vadd.f32 %v126, %v619
  %v621 = vpop.f32.mrb[0].mxu0
  %622 = vmatprep.mubr.bf16.mxu0 %v283
  %623 = vmatmul.mubr.bf16.gmra.mrb[0].mxu0 %v282
  %v624 = vpop.f32.mrb[0].mxu0
  %v625 = vadd.f32 %v126, %v624
  %v626 = vpop.f32.mrb[0].mxu0
  %v627 = vpop.f32.mrb[0].mxu0
  %v628 = vadd.f32 %v126, %v627
  %v629 = vpop.f32.mrb[0].mxu0
  %630 = vmatprep.mubr.bf16.mxu0 %v287
  %631 = vmatmul.mubr.bf16.gmra.mrb[0].mxu0 %v286
  %v632 = vpop.f32.mrb[0].mxu0
  %v633 = vadd.f32 %v126, %v632
  %v634 = vpop.f32.mrb[0].mxu0
  %v635 = vpop.f32.mrb[0].mxu0
  %v636 = vadd.f32 %v126, %v635
  %v637 = vpop.f32.mrb[0].mxu0
  %638 = vmatprep.mubr.bf16.mxu0 %v291
  %639 = vmatmul.mubr.bf16.gmra.mrb[0].mxu0 %v290
  %v640 = vpop.f32.mrb[0].mxu0
  %v641 = vadd.f32 %v126, %v640
  %v642 = vpop.f32.mrb[0].mxu0
  %v643 = vpop.f32.mrb[0].mxu0
  %v644 = vadd.f32 %v126, %v643
  %v645 = vpop.f32.mrb[0].mxu0
  %646 = vmatprep.mubr.bf16.mxu0 %v295
  %647 = vmatmul.mubr.bf16.gmra.mrb[0].mxu0 %v294
  %v648 = vpop.f32.mrb[0].mxu0
  %v649 = vadd.f32 %v126, %v648
  %v650 = vpop.f32.mrb[0].mxu0
  %v651 = vpop.f32.mrb[0].mxu0
  %v652 = vpop.f32.mrb[0].mxu0
  %653 = vdwg.mxu0
  %654 = vmatprep.subr.bf16.mxu0 0
  %655 = vmatpush1.bf16.msra.mxu0 %v486
  %656 = vmatprep.subr.bf16.mxu0 0
  %657 = vmatpush1.bf16.msra.mxu0 %v487
  %658 = vmatprep.subr.bf16.mxu0 0
  %659 = vmatpush1.bf16.msra.mxu0 %v488
  %660 = vmatprep.subr.bf16.mxu0 0
  %661 = vmatpush1.bf16.msra.mxu0 %v489
  %662 = vmatprep.subr.bf16.mxu0 0
  %663 = vmatpush1.bf16.msra.mxu0 %v490
  %664 = vmatprep.subr.bf16.mxu0 0
  %665 = vmatpush1.bf16.msra.mxu0 %v491
  %666 = vmatprep.subr.bf16.mxu0 0
  %667 = vmatpush1.bf16.msra.mxu0 %v492
  %668 = vmatprep.subr.bf16.mxu0 0
  %669 = vmatpush1.bf16.msra.mxu0 %v493
  %670 = vmatprep.subr.bf16.mxu0 0
  %671 = vmatpush1.bf16.msra.mxu0 %v494
  %672 = vmatprep.subr.bf16.mxu0 0
  %673 = vmatpush1.bf16.msra.mxu0 %v495
  %674 = vmatprep.subr.bf16.mxu0 0
  %675 = vmatpush1.bf16.msra.mxu0 %v496
  %676 = vmatprep.subr.bf16.mxu0 0
  %677 = vmatpush1.bf16.msra.mxu0 %v497
  %678 = vmatprep.subr.bf16.mxu0 0
  %679 = vmatpush1.bf16.msra.mxu0 %v498
  %680 = vmatprep.subr.bf16.mxu0 0
  %681 = vmatpush1.bf16.msra.mxu0 %v499
  %682 = vmatprep.subr.bf16.mxu0 0
  %683 = vmatpush1.bf16.msra.mxu0 %v500
  %684 = vmatprep.subr.bf16.mxu0 0
  %685 = vmatpush1.bf16.msra.mxu0 %v501
  %686 = vmatprep.mubr.bf16.mxu0 %v257
  %687 = vmatmul.mubr.bf16.gmra.mrb[0].mxu0 %v256
  %v688 = vpop.f32.mrb[0].mxu0
  %v689 = vadd.f32 %v569, %v688
  %v690 = vpop.f32.mrb[0].mxu0
  %v691 = vpop.f32.mrb[0].mxu0
  %v692 = vadd.f32 %v572, %v691
  %v693 = vpop.f32.mrb[0].mxu0
  %694 = vmatprep.mubr.bf16.mxu0 %v261
  %695 = vmatmul.mubr.bf16.gmra.mrb[0].mxu0 %v260
  %v696 = vpop.f32.mrb[0].mxu0
  %v697 = vadd.f32 %v577, %v696
  %v698 = vpop.f32.mrb[0].mxu0
  %v699 = vpop.f32.mrb[0].mxu0
  %v700 = vadd.f32 %v580, %v699
  %v701 = vpop.f32.mrb[0].mxu0
  %702 = vmatprep.mubr.bf16.mxu0 %v265
  %703 = vmatmul.mubr.bf16.gmra.mrb[0].mxu0 %v264
  %v704 = vpop.f32.mrb[0].mxu0
  %v705 = vadd.f32 %v585, %v704
  %v706 = vpop.f32.mrb[0].mxu0
  %v707 = vpop.f32.mrb[0].mxu0
  %v708 = vadd.f32 %v588, %v707
  %v709 = vpop.f32.mrb[0].mxu0
  %710 = vmatprep.mubr.bf16.mxu0 %v269
  %711 = vmatmul.mubr.bf16.gmra.mrb[0].mxu0 %v268
  %v712 = vpop.f32.mrb[0].mxu0
  %v713 = vadd.f32 %v593, %v712
  %v714 = vpop.f32.mrb[0].mxu0
  %v715 = vpop.f32.mrb[0].mxu0
  %v716 = vadd.f32 %v596, %v715
  %v717 = vpop.f32.mrb[0].mxu0
  %718 = vmatprep.mubr.bf16.mxu0 %v273
  %719 = vmatmul.mubr.bf16.gmra.mrb[0].mxu0 %v272
  %v720 = vpop.f32.mrb[0].mxu0
  %v721 = vadd.f32 %v601, %v720
  %v722 = vpop.f32.mrb[0].mxu0
  %v723 = vpop.f32.mrb[0].mxu0
  %v724 = vadd.f32 %v604, %v723
  %v725 = vpop.f32.mrb[0].mxu0
  %726 = vmatprep.mubr.bf16.mxu0 %v277
  %727 = vmatmul.mubr.bf16.gmra.mrb[0].mxu0 %v276
  %v728 = vpop.f32.mrb[0].mxu0
  %v729 = vadd.f32 %v609, %v728
  %v730 = vpop.f32.mrb[0].mxu0
  %v731 = vpop.f32.mrb[0].mxu0
  %v732 = vadd.f32 %v612, %v731
  %v733 = vpop.f32.mrb[0].mxu0
  %734 = vmatprep.mubr.bf16.mxu0 %v281
  %735 = vmatmul.mubr.bf16.gmra.mrb[0].mxu0 %v280
  %v736 = vpop.f32.mrb[0].mxu0
  %v737 = vadd.f32 %v617, %v736
  %v738 = vpop.f32.mrb[0].mxu0
  %v739 = vpop.f32.mrb[0].mxu0
  %v740 = vadd.f32 %v620, %v739
  %v741 = vpop.f32.mrb[0].mxu0
  %742 = vmatprep.mubr.bf16.mxu0 %v285
  %743 = vmatmul.mubr.bf16.gmra.mrb[0].mxu0 %v284
  %v744 = vpop.f32.mrb[0].mxu0
  %v745 = vadd.f32 %v625, %v744
  %v746 = vpop.f32.mrb[0].mxu0
  %v747 = vpop.f32.mrb[0].mxu0
  %v748 = vadd.f32 %v628, %v747
  %v749 = vpop.f32.mrb[0].mxu0
  %750 = vmatprep.mubr.bf16.mxu0 %v289
  %751 = vmatmul.mubr.bf16.gmra.mrb[0].mxu0 %v288
  %v752 = vpop.f32.mrb[0].mxu0
  %v753 = vadd.f32 %v633, %v752
  %v754 = vpop.f32.mrb[0].mxu0
  %v755 = vpop.f32.mrb[0].mxu0
  %v756 = vadd.f32 %v636, %v755
  %v757 = vpop.f32.mrb[0].mxu0
  %758 = vmatprep.mubr.bf16.mxu0 %v293
  %759 = vmatmul.mubr.bf16.gmra.mrb[0].mxu0 %v292
  %v760 = vpop.f32.mrb[0].mxu0
  %v761 = vadd.f32 %v641, %v760
  %v762 = vpop.f32.mrb[0].mxu0
  %v763 = vpop.f32.mrb[0].mxu0
  %v764 = vadd.f32 %v644, %v763
  %v765 = vpop.f32.mrb[0].mxu0
  %766 = vmatprep.mubr.bf16.mxu0 %v297
  %767 = vmatmul.mubr.bf16.gmra.mrb[0].mxu0 %v296
  %v768 = vpop.f32.mrb[0].mxu0
  %v769 = vadd.f32 %v649, %v768
  %v770 = vpop.f32.mrb[0].mxu0
  %v771 = vpop.f32.mrb[0].mxu0
  %v772 = vpop.f32.mrb[0].mxu0
  %773 = vdwg.mxu0
  %v774 = vmax.f32 %v689, 0.0
  %v775 = vmax.f32 %v692, 0.0
  %v776 = vmax.f32 %v697, 0.0
  %v777 = vmax.f32 %v700, 0.0
  %v778 = vmax.f32 %v705, 0.0
  %v779 = vmax.f32 %v708, 0.0
  %v780 = vmax.f32 %v713, 0.0
  %v781 = vmax.f32 %v716, 0.0
  %v782 = vmax.f32 %v721, 0.0
  %v783 = vmax.f32 %v724, 0.0
  %v784 = vmax.f32 %v729, 0.0
  %v785 = vmax.f32 %v732, 0.0
  %v786 = vmax.f32 %v737, 0.0
  %v787 = vmax.f32 %v740, 0.0
  %v788 = vmax.f32 %v745, 0.0
  %v789 = vmax.f32 %v748, 0.0
  %v790 = vmax.f32 %v753, 0.0
  %v791 = vmax.f32 %v756, 0.0
  %v792 = vmax.f32 %v761, 0.0
  %v793 = vmax.f32 %v764, 0.0
  %v794 = vmax.f32 %v769, 0.0
  %v795 = vpack.c.bf16 %v775, %v774
  %v796 = vpack.c.bf16 %v777, %v776
  %v797 = vpack.c.bf16 %v779, %v778
  %v798 = vpack.c.bf16 %v781, %v780
  %v799 = vpack.c.bf16 %v783, %v782
  %v800 = vpack.c.bf16 %v785, %v784
  %v801 = vpack.c.bf16 %v787, %v786
  %v802 = vpack.c.bf16 %v789, %v788
  %v803 = vpack.c.bf16 %v791, %v790
  %v804 = vpack.c.bf16 %v793, %v792
  %v805 = vpack.c.bf16 %v794, %v794
  %v817 = vunpack.c.l.b16 %v795
  %v818 = vunpack.c.h.b16 %v795
  %v819 = vunpack.c.l.b16 %v796
  %v820 = vunpack.c.h.b16 %v796
  %v821 = vunpack.c.l.b16 %v797
  %v822 = vunpack.c.h.b16 %v797
  %v823 = vunpack.c.l.b16 %v798
  %v824 = vunpack.c.h.b16 %v798
  %v825 = vunpack.c.l.b16 %v799
  %v826 = vunpack.c.h.b16 %v799
  %v827 = vunpack.c.l.b16 %v800
  %v828 = vunpack.c.h.b16 %v800
  %v829 = vunpack.c.l.b16 %v801
  %v830 = vunpack.c.h.b16 %v801
  %v831 = vunpack.c.l.b16 %v802
  %v832 = vunpack.c.h.b16 %v802
  %v833 = vunpack.c.l.b16 %v803
  %v834 = vunpack.c.h.b16 %v803
  %v835 = vunpack.c.l.b16 %v804
  %v836 = vunpack.c.h.b16 %v804
  %v837 = vunpack.c.l.b16 %v805
  %v838 = vpack.c.b16 %v817, %v817
  %v839 = vpack.c.b16 %v818, %v818
  %v840 = vpack.c.b16 %v819, %v819
  %v841 = vpack.c.b16 %v820, %v820
  %v842 = vpack.c.b16 %v821, %v821
  %v843 = vpack.c.b16 %v822, %v822
  %v844 = vpack.c.b16 %v823, %v823
  %v845 = vpack.c.b16 %v824, %v824
  %v846 = vpack.c.b16 %v825, %v825
  %v847 = vpack.c.b16 %v826, %v826
  %v848 = vpack.c.b16 %v827, %v827
  %v849 = vpack.c.b16 %v828, %v828
  %v850 = vpack.c.b16 %v829, %v829
  %v851 = vpack.c.b16 %v830, %v830
  %v852 = vpack.c.b16 %v831, %v831
  %v853 = vpack.c.b16 %v832, %v832
  %v854 = vpack.c.b16 %v833, %v833
  %v855 = vpack.c.b16 %v834, %v834
  %v856 = vpack.c.b16 %v835, %v835
  %v857 = vpack.c.b16 %v836, %v836
  %v858 = vpack.c.b16 %v837, %v837
  %880 = vst [vmem:[%s3] sm:$0xf] %v838
  %881 = vst [vmem:[%s3 + $0x4] sm:$0xf] %v839
  %882 = vst [vmem:[%s3 + $0x8] sm:$0xf] %v840
  %883 = vst [vmem:[%s3 + $0xc] sm:$0xf] %v841
  %884 = vst [vmem:[%s3 + $0x10] sm:$0xf] %v842
  %885 = vst [vmem:[%s3 + $0x14] sm:$0xf] %v843
  %886 = vst [vmem:[%s3 + $0x18] sm:$0xf] %v844
  %887 = vst [vmem:[%s3 + $0x1c] sm:$0xf] %v845
  %888 = vst [vmem:[%s3 + $0x20] sm:$0xf] %v846
  %889 = vst [vmem:[%s3 + $0x24] sm:$0xf] %v847
  %890 = vst [vmem:[%s3 + $0x28] sm:$0xf] %v848
  %891 = vst [vmem:[%s3 + $0x2c] sm:$0xf] %v849
  %892 = vst [vmem:[%s3 + $0x30] sm:$0xf] %v850
  %893 = vst [vmem:[%s3 + $0x34] sm:$0xf] %v851
  %894 = vst [vmem:[%s3 + $0x38] sm:$0xf] %v852
  %895 = vst [vmem:[%s3 + $0x3c] sm:$0xf] %v853
  %896 = vst [vmem:[%s3 + $0x40] sm:$0xf] %v854
  %897 = vst [vmem:[%s3 + $0x44] sm:$0xf] %v855
  %898 = vst [vmem:[%s3 + $0x48] sm:$0xf] %v856
  %899 = vst [vmem:[%s3 + $0x4c] sm:$0xf] %v857
  %900 = vst [vmem:[%s3 + $0x50] sm:$0x1] %v858
  // Predicated region
  $region14: #{dueling_dqn_forward.5} parent=0 // pred_check
    _
  $region15: #{dueling_dqn_forward.5} parent=0 // pred_check_branch
    %902 = sbr.rel (0) target = $region17
  $region16: #{dueling_dqn_forward.5} parent=0 // pred_region
    _
  $region17: #{dueling_dqn_forward.5} parent=0 // pred_fallthru
    _
  // Predicated region
  $region18: #{dueling_dqn_forward.5} parent=0 // pred_check
    _
  $region19: #{dueling_dqn_forward.5} parent=0 // pred_check_branch
    %904 = sbr.rel (0) target = $region21
  $region20: #{dueling_dqn_forward.5} parent=0 // pred_region
    _
  $region21: #{dueling_dqn_forward.5} parent=0 // pred_fallthru
    _

// kernel: dueling_dqn_forward.6
$region0: #{dueling_dqn_forward.6}
  #allocation0 [shape = 'u32[]', space=smem, size = 0x4, offset = 0x4, fixed_abs, tag = 'smem constant byte address 0x4 - core index']
  #allocation1 [shape = 'u32[144,128]{1,0:T(1,128)}', space=vmem, size = 0x12000, scoped, tag = 'internal scratch']
  %s0 = inlined_call_operand.vmem [shape: bf16[98,576], index: 0, kind: input, shape index: {}]
  %s1 = inlined_call_operand.vmem [shape: bf16[576,128], index: 1, kind: input, shape index: {}]
  %s2 = inlined_call_operand.vmem [shape: f32[1,128], index: 2, kind: input, shape index: {}]
  %s3 = inlined_call_operand.vmem [shape: bf16[98,128], index: 3, kind: output, shape index: {}]
  %s4 = sld [smem:[#allocation0]]
  $region22: #{dueling_dqn_forward.6} parent=0
    _
  %s6 = ssub.s32 1, %s4
  %s7 = scalar_select 0, %s6, %s4
  // Predicated region
  $region2: #{dueling_dqn_forward.6} parent=0 // pred_check
    _
  $region3: #{dueling_dqn_forward.6} parent=0 // pred_check_branch
    %9 = sbr.rel (0) target = $region5
  $region4: #{dueling_dqn_forward.6} parent=0 // pred_region
    _
  $region5: #{dueling_dqn_forward.6} parent=0 // pred_fallthru
    _
  // Predicated region
  $region6: #{dueling_dqn_forward.6} parent=0 // pred_check
    _
  $region7: #{dueling_dqn_forward.6} parent=0 // pred_check_branch
    %11 = sbr.rel (0) target = $region9
  $region8: #{dueling_dqn_forward.6} parent=0 // pred_region
    _
  $region9: #{dueling_dqn_forward.6} parent=0 // pred_fallthru
    _
  // Predicated region
  $region10: #{dueling_dqn_forward.6} parent=0 // pred_check
    _
  $region11: #{dueling_dqn_forward.6} parent=0 // pred_check_branch
    %13 = sbr.rel (0) target = $region13
  $region12: #{dueling_dqn_forward.6} parent=0 // pred_region
    _
  $region13: #{dueling_dqn_forward.6} parent=0 // pred_fallthru
    _
  %v15 = vld [vmem:[%s0] sm:$0xff]
  %v16 = vld [vmem:[%s0 + $0x8] sm:$0xff]
  %v17 = vld [vmem:[%s0 + $0x10] sm:$0xf]
  %v18 = vld [vmem:[%s0 + $0x14] sm:$0xff]
  %v19 = vld [vmem:[%s0 + $0x1c] sm:$0xff]
  %v20 = vld [vmem:[%s0 + $0x24] sm:$0xf]
  %v21 = vld [vmem:[%s0 + $0x28] sm:$0xff]
  %v22 = vld [vmem:[%s0 + $0x30] sm:$0xff]
  %v23 = vld [vmem:[%s0 + $0x38] sm:$0xf]
  %v24 = vld [vmem:[%s0 + $0x3c] sm:$0xff]
  %v25 = vld [vmem:[%s0 + $0x44] sm:$0xff]
  %v26 = vld [vmem:[%s0 + $0x4c] sm:$0xf]
  %v27 = vld [vmem:[%s0 + $0x50] sm:$0xff]
  %v28 = vld [vmem:[%s0 + $0x58] sm:$0xff]
  %v29 = vld [vmem:[%s0 + $0x60] sm:$0xf]
  %v30 = vld [vmem:[%s0 + $0x64] sm:$0xff]
  %v31 = vld [vmem:[%s0 + $0x6c] sm:$0xff]
  %v32 = vld [vmem:[%s0 + $0x74] sm:$0xf]
  %v33 = vld [vmem:[%s0 + $0x78] sm:$0xff]
  %v34 = vld [vmem:[%s0 + $0x80] sm:$0xff]
  %v35 = vld [vmem:[%s0 + $0x88] sm:$0xf]
  %v36 = vld [vmem:[%s0 + $0x8c] sm:$0xff]
  %v37 = vld [vmem:[%s0 + $0x94] sm:$0xff]
  %v38 = vld [vmem:[%s0 + $0x9c] sm:$0xf]
  %v39 = vld [vmem:[%s0 + $0xa0] sm:$0xff]
  %v40 = vld [vmem:[%s0 + $0xa8] sm:$0xff]
  %v41 = vld [vmem:[%s0 + $0xb0] sm:$0xf]
  %v42 = vld [vmem:[%s0 + $0xb4] sm:$0xff]
  %v43 = vld [vmem:[%s0 + $0xbc] sm:$0xff]
  %v44 = vld [vmem:[%s0 + $0xc4] sm:$0xf]
  %v45 = vld [vmem:[%s0 + $0xc8] sm:$0xff]
  %v46 = vld [vmem:[%s0 + $0xd0] sm:$0xff]
  %v47 = vld [vmem:[%s0 + $0xd8] sm:$0xf]
  %v48 = vld [vmem:[%s0 + $0xdc] sm:$0xff]
  %v49 = vld [vmem:[%s0 + $0xe4] sm:$0xff]
  %v50 = vld [vmem:[%s0 + $0xec] sm:$0xf]
  %v51 = vld [vmem:[%s0 + $0xf0] sm:$0x11]
  %v52 = vld [vmem:[%s0 + $0xf8] sm:$0x11]
  %v53 = vld [vmem:[%s0 + $0x100] sm:$0x1]
  %v54 = vld [vmem:[%s1] sm:$0xf]
  %v55 = vld [vmem:[%s1 + $0x4] sm:$0xf]
  %v56 = vld [vmem:[%s1 + $0x8] sm:$0xf]
  %v57 = vld [vmem:[%s1 + $0xc] sm:$0xf]
  %v58 = vld [vmem:[%s1 + $0x10] sm:$0xf]
  %v59 = vld [vmem:[%s1 + $0x14] sm:$0xf]
  %v60 = vld [vmem:[%s1 + $0x18] sm:$0xf]
  %v61 = vld [vmem:[%s1 + $0x1c] sm:$0xf]
  %v62 = vld [vmem:[%s1 + $0x20] sm:$0xf]
  %v63 = vld [vmem:[%s1 + $0x24] sm:$0xf]
  %v64 = vld [vmem:[%s1 + $0x28] sm:$0xf]
  %v65 = vld [vmem:[%s1 + $0x2c] sm:$0xf]
  %v66 = vld [vmem:[%s1 + $0x30] sm:$0xf]
  %v67 = vld [vmem:[%s1 + $0x34] sm:$0xf]
  %v68 = vld [vmem:[%s1 + $0x38] sm:$0xf]
  %v69 = vld [vmem:[%s1 + $0x3c] sm:$0xf]
  %v70 = vld [vmem:[%s1 + $0x40] sm:$0xf]
  %v71 = vld [vmem:[%s1 + $0x44] sm:$0xf]
  %v72 = vld [vmem:[%s1 + $0x48] sm:$0xf]
  %v73 = vld [vmem:[%s1 + $0x4c] sm:$0xf]
  %v74 = vld [vmem:[%s1 + $0x50] sm:$0xf]
  %v75 = vld [vmem:[%s1 + $0x54] sm:$0xf]
  %v76 = vld [vmem:[%s1 + $0x58] sm:$0xf]
  %v77 = vld [vmem:[%s1 + $0x5c] sm:$0xf]
  %v78 = vld [vmem:[%s1 + $0x60] sm:$0xf]
  %v79 = vld [vmem:[%s1 + $0x64] sm:$0xf]
  %v80 = vld [vmem:[%s1 + $0x68] sm:$0xf]
  %v81 = vld [vmem:[%s1 + $0x6c] sm:$0xf]
  %v82 = vld [vmem:[%s1 + $0x70] sm:$0xf]
  %v83 = vld [vmem:[%s1 + $0x74] sm:$0xf]
  %v84 = vld [vmem:[%s1 + $0x78] sm:$0xf]
  %v85 = vld [vmem:[%s1 + $0x7c] sm:$0xf]
  %v86 = vld [vmem:[%s1 + $0x80] sm:$0xf]
  %v87 = vld [vmem:[%s1 + $0x84] sm:$0xf]
  %v88 = vld [vmem:[%s1 + $0x88] sm:$0xf]
  %v89 = vld [vmem:[%s1 + $0x8c] sm:$0xf]
  %v90 = vld [vmem:[%s1 + $0x90] sm:$0xf]
  %v91 = vld [vmem:[%s1 + $0x94] sm:$0xf]
  %v92 = vld [vmem:[%s1 + $0x98] sm:$0xf]
  %v93 = vld [vmem:[%s1 + $0x9c] sm:$0xf]
  %v94 = vld [vmem:[%s1 + $0xa0] sm:$0xf]
  %v95 = vld [vmem:[%s1 + $0xa4] sm:$0xf]
  %v96 = vld [vmem:[%s1 + $0xa8] sm:$0xf]
  %v97 = vld [vmem:[%s1 + $0xac] sm:$0xf]
  %v98 = vld [vmem:[%s1 + $0xb0] sm:$0xf]
  %v99 = vld [vmem:[%s1 + $0xb4] sm:$0xf]
  %v100 = vld [vmem:[%s1 + $0xb8] sm:$0xf]
  %v101 = vld [vmem:[%s1 + $0xbc] sm:$0xf]
  %v102 = vld [vmem:[%s1 + $0xc0] sm:$0xf]
  %v103 = vld [vmem:[%s1 + $0xc4] sm:$0xf]
  %v104 = vld [vmem:[%s1 + $0xc8] sm:$0xf]
  %v105 = vld [vmem:[%s1 + $0xcc] sm:$0xf]
  %v106 = vld [vmem:[%s1 + $0xd0] sm:$0xf]
  %v107 = vld [vmem:[%s1 + $0xd4] sm:$0xf]
  %v108 = vld [vmem:[%s1 + $0xd8] sm:$0xf]
  %v109 = vld [vmem:[%s1 + $0xdc] sm:$0xf]
  %v110 = vld [vmem:[%s1 + $0xe0] sm:$0xf]
  %v111 = vld [vmem:[%s1 + $0xe4] sm:$0xf]
  %v112 = vld [vmem:[%s1 + $0xe8] sm:$0xf]
  %v113 = vld [vmem:[%s1 + $0xec] sm:$0xf]
  %v114 = vld [vmem:[%s1 + $0xf0] sm:$0xf]
  %v115 = vld [vmem:[%s1 + $0xf4] sm:$0xf]
  %v116 = vld [vmem:[%s1 + $0xf8] sm:$0xf]
  %v117 = vld [vmem:[%s1 + $0xfc] sm:$0xf]
  %v118 = vld [vmem:[%s1 + $0x100] sm:$0xf]
  %v119 = vld [vmem:[%s1 + $0x104] sm:$0xf]
  %v120 = vld [vmem:[%s1 + $0x108] sm:$0xf]
  %v121 = vld [vmem:[%s1 + $0x10c] sm:$0xf]
  %v122 = vld [vmem:[%s1 + $0x110] sm:$0xf]
  %v123 = vld [vmem:[%s1 + $0x114] sm:$0xf]
  %v124 = vld [vmem:[%s1 + $0x118] sm:$0xf]
  %v125 = vld [vmem:[%s1 + $0x11c] sm:$0xf]
  %v126 = vld [vmem:[%s2] sm:$0x1]
  %v128 = vlaneseq
  %v129 = vshrl.u32 %v128, 7
  %v130 = vsub.s32 0, %v129
  %v131 = vrot.slane %v126, %v130
  %v172 = vunpack.c.l.b16 %v15
  %v173 = vunpack.c.h.b16 %v15
  %v174 = vunpack.c.l.b16 %v16
  %v175 = vunpack.c.h.b16 %v16
  %v176 = vunpack.c.l.b16 %v17
  %v177 = vunpack.c.l.b16 %v18
  %v178 = vunpack.c.h.b16 %v18
  %v179 = vunpack.c.l.b16 %v19
  %v180 = vunpack.c.h.b16 %v19
  %v181 = vunpack.c.l.b16 %v20
  %v182 = vunpack.c.l.b16 %v21
  %v183 = vunpack.c.h.b16 %v21
  %v184 = vunpack.c.l.b16 %v22
  %v185 = vunpack.c.h.b16 %v22
  %v186 = vunpack.c.l.b16 %v23
  %v187 = vunpack.c.l.b16 %v24
  %v188 = vunpack.c.h.b16 %v24
  %v189 = vunpack.c.l.b16 %v25
  %v190 = vunpack.c.h.b16 %v25
  %v191 = vunpack.c.l.b16 %v26
  %v192 = vunpack.c.l.b16 %v27
  %v193 = vunpack.c.h.b16 %v27
  %v194 = vunpack.c.l.b16 %v28
  %v195 = vunpack.c.h.b16 %v28
  %v196 = vunpack.c.l.b16 %v29
  %v197 = vunpack.c.l.b16 %v30
  %v198 = vunpack.c.h.b16 %v30
  %v199 = vunpack.c.l.b16 %v31
  %v200 = vunpack.c.h.b16 %v31
  %v201 = vunpack.c.l.b16 %v32
  %v202 = vunpack.c.l.b16 %v33
  %v203 = vunpack.c.h.b16 %v33
  %v204 = vunpack.c.l.b16 %v34
  %v205 = vunpack.c.h.b16 %v34
  %v206 = vunpack.c.l.b16 %v35
  %v207 = vunpack.c.l.b16 %v36
  %v208 = vunpack.c.h.b16 %v36
  %v209 = vunpack.c.l.b16 %v37
  %v210 = vunpack.c.h.b16 %v37
  %v211 = vunpack.c.l.b16 %v38
  %v212 = vunpack.c.l.b16 %v39
  %v213 = vunpack.c.h.b16 %v39
  %v214 = vunpack.c.l.b16 %v40
  %v215 = vunpack.c.h.b16 %v40
  %v216 = vunpack.c.l.b16 %v41
  %v217 = vunpack.c.l.b16 %v42
  %v218 = vunpack.c.h.b16 %v42
  %v219 = vunpack.c.l.b16 %v43
  %v220 = vunpack.c.h.b16 %v43
  %v221 = vunpack.c.l.b16 %v44
  %v222 = vunpack.c.l.b16 %v45
  %v223 = vunpack.c.h.b16 %v45
  %v224 = vunpack.c.l.b16 %v46
  %v225 = vunpack.c.h.b16 %v46
  %v226 = vunpack.c.l.b16 %v47
  %v227 = vunpack.c.l.b16 %v48
  %v228 = vunpack.c.h.b16 %v48
  %v229 = vunpack.c.l.b16 %v49
  %v230 = vunpack.c.h.b16 %v49
  %v231 = vunpack.c.l.b16 %v50
  %v232 = vunpack.c.l.b16 %v51
  %v233 = vunpack.c.h.b16 %v51
  %v234 = vunpack.c.l.b16 %v52
  %v235 = vunpack.c.h.b16 %v52
  %v236 = vunpack.c.l.b16 %v53
  %v237 = vpack.c.b16 %v177, %v172
  %v238 = vpack.c.b16 %v178, %v173
  %v239 = vpack.c.b16 %v179, %v174
  %v240 = vpack.c.b16 %v180, %v175
  %v241 = vpack.c.b16 %v181, %v176
  %v242 = vpack.c.b16 %v187, %v182
  %v243 = vpack.c.b16 %v188, %v183
  %v244 = vpack.c.b16 %v189, %v184
  %v245 = vpack.c.b16 %v190, %v185
  %v246 = vpack.c.b16 %v191, %v186
  %v247 = vpack.c.b16 %v197, %v192
  %v248 = vpack.c.b16 %v198, %v193
  %v249 = vpack.c.b16 %v199, %v194
  %v250 = vpack.c.b16 %v200, %v195
  %v251 = vpack.c.b16 %v201, %v196
  %v252 = vpack.c.b16 %v207, %v202
  %v253 = vpack.c.b16 %v208, %v203
  %v254 = vpack.c.b16 %v209, %v204
  %v255 = vpack.c.b16 %v210, %v205
  %v256 = vpack.c.b16 %v211, %v206
  %v257 = vpack.c.b16 %v217, %v212
  %v258 = vpack.c.b16 %v218, %v213
  %v259 = vpack.c.b16 %v219, %v214
  %v260 = vpack.c.b16 %v220, %v215
  %v261 = vpack.c.b16 %v221, %v216
  %v262 = vpack.c.b16 %v227, %v222
  %v263 = vpack.c.b16 %v228, %v223
  %v264 = vpack.c.b16 %v229, %v224
  %v265 = vpack.c.b16 %v230, %v225
  %v266 = vpack.c.b16 %v231, %v226
  %v267 = vpack.c.b16 %v232, %v232
  %v268 = vpack.c.b16 %v233, %v233
  %v269 = vpack.c.b16 %v234, %v234
  %v270 = vpack.c.b16 %v235, %v235
  %v271 = vpack.c.b16 %v236, %v236
  %v372 = vunpack.c.l.b16 %v54
  %v373 = vunpack.c.l.b16 %v55
  %v374 = vunpack.c.l.b16 %v56
  %v375 = vunpack.c.l.b16 %v57
  %v376 = vunpack.c.l.b16 %v58
  %v377 = vunpack.c.l.b16 %v59
  %v378 = vunpack.c.l.b16 %v60
  %v379 = vunpack.c.l.b16 %v61
  %v380 = vunpack.c.l.b16 %v62
  %v381 = vunpack.c.l.b16 %v63
  %v382 = vunpack.c.l.b16 %v64
  %v383 = vunpack.c.l.b16 %v65
  %v384 = vunpack.c.l.b16 %v66
  %v385 = vunpack.c.l.b16 %v67
  %v386 = vunpack.c.l.b16 %v68
  %v387 = vunpack.c.l.b16 %v69
  %v388 = vunpack.c.l.b16 %v70
  %v389 = vunpack.c.l.b16 %v71
  %v390 = vunpack.c.l.b16 %v72
  %v391 = vunpack.c.l.b16 %v73
  %v392 = vunpack.c.l.b16 %v74
  %v393 = vunpack.c.l.b16 %v75
  %v394 = vunpack.c.l.b16 %v76
  %v395 = vunpack.c.l.b16 %v77
  %v396 = vunpack.c.l.b16 %v78
  %v397 = vunpack.c.l.b16 %v79
  %v398 = vunpack.c.l.b16 %v80
  %v399 = vunpack.c.l.b16 %v81
  %v400 = vunpack.c.l.b16 %v82
  %v401 = vunpack.c.l.b16 %v83
  %v402 = vunpack.c.l.b16 %v84
  %v403 = vunpack.c.l.b16 %v85
  %v404 = vunpack.c.l.b16 %v86
  %v405 = vunpack.c.l.b16 %v87
  %v406 = vunpack.c.l.b16 %v88
  %v407 = vunpack.c.l.b16 %v89
  %v408 = vunpack.c.l.b16 %v90
  %v409 = vunpack.c.l.b16 %v91
  %v410 = vunpack.c.l.b16 %v92
  %v411 = vunpack.c.l.b16 %v93
  %v412 = vunpack.c.l.b16 %v94
  %v413 = vunpack.c.l.b16 %v95
  %v414 = vunpack.c.l.b16 %v96
  %v415 = vunpack.c.l.b16 %v97
  %v416 = vunpack.c.l.b16 %v98
  %v417 = vunpack.c.l.b16 %v99
  %v418 = vunpack.c.l.b16 %v100
  %v419 = vunpack.c.l.b16 %v101
  %v420 = vunpack.c.l.b16 %v102
  %v421 = vunpack.c.l.b16 %v103
  %v422 = vunpack.c.l.b16 %v104
  %v423 = vunpack.c.l.b16 %v105
  %v424 = vunpack.c.l.b16 %v106
  %v425 = vunpack.c.l.b16 %v107
  %v426 = vunpack.c.l.b16 %v108
  %v427 = vunpack.c.l.b16 %v109
  %v428 = vunpack.c.l.b16 %v110
  %v429 = vunpack.c.l.b16 %v111
  %v430 = vunpack.c.l.b16 %v112
  %v431 = vunpack.c.l.b16 %v113
  %v432 = vunpack.c.l.b16 %v114
  %v433 = vunpack.c.l.b16 %v115
  %v434 = vunpack.c.l.b16 %v116
  %v435 = vunpack.c.l.b16 %v117
  %v436 = vunpack.c.l.b16 %v118
  %v437 = vunpack.c.l.b16 %v119
  %v438 = vunpack.c.l.b16 %v120
  %v439 = vunpack.c.l.b16 %v121
  %v440 = vunpack.c.l.b16 %v122
  %v441 = vunpack.c.l.b16 %v123
  %v442 = vunpack.c.l.b16 %v124
  %v443 = vunpack.c.l.b16 %v125
  %v444 = vpack.c.b16 %v373, %v372
  %v445 = vpack.c.b16 %v375, %v374
  %v446 = vpack.c.b16 %v377, %v376
  %v447 = vpack.c.b16 %v379, %v378
  %v448 = vpack.c.b16 %v381, %v380
  %v449 = vpack.c.b16 %v383, %v382
  %v450 = vpack.c.b16 %v385, %v384
  %v451 = vpack.c.b16 %v387, %v386
  %v452 = vpack.c.b16 %v389, %v388
  %v453 = vpack.c.b16 %v391, %v390
  %v454 = vpack.c.b16 %v393, %v392
  %v455 = vpack.c.b16 %v395, %v394
  %v456 = vpack.c.b16 %v397, %v396
  %v457 = vpack.c.b16 %v399, %v398
  %v458 = vpack.c.b16 %v401, %v400
  %v459 = vpack.c.b16 %v403, %v402
  %v460 = vpack.c.b16 %v405, %v404
  %v461 = vpack.c.b16 %v407, %v406
  %v462 = vpack.c.b16 %v409, %v408
  %v463 = vpack.c.b16 %v411, %v410
  %v464 = vpack.c.b16 %v413, %v412
  %v465 = vpack.c.b16 %v415, %v414
  %v466 = vpack.c.b16 %v417, %v416
  %v467 = vpack.c.b16 %v419, %v418
  %v468 = vpack.c.b16 %v421, %v420
  %v469 = vpack.c.b16 %v423, %v422
  %v470 = vpack.c.b16 %v425, %v424
  %v471 = vpack.c.b16 %v427, %v426
  %v472 = vpack.c.b16 %v429, %v428
  %v473 = vpack.c.b16 %v431, %v430
  %v474 = vpack.c.b16 %v433, %v432
  %v475 = vpack.c.b16 %v435, %v434
  %v476 = vpack.c.b16 %v437, %v436
  %v477 = vpack.c.b16 %v439, %v438
  %v478 = vpack.c.b16 %v441, %v440
  %v479 = vpack.c.b16 %v443, %v442
  %vm516 = vcmask 523264
  %v518 = vsel %vm516, %v241, 0
  %v521 = vsel %vm516, %v246, 0
  %v524 = vsel %vm516, %v251, 0
  %v527 = vsel %vm516, %v256, 0
  %v530 = vsel %vm516, %v261, 0
  %v533 = vsel %vm516, %v266, 0
  %v536 = vsel %vm516, %v271, 0
  %538 = vmatprep.subr.bf16.mxu0 0
  %539 = vmatpush1.bf16.msra.mxu0 %v444
  %540 = vmatprep.subr.bf16.mxu0 0
  %541 = vmatpush1.bf16.msra.mxu0 %v445
  %542 = vmatprep.subr.bf16.mxu0 0
  %543 = vmatpush1.bf16.msra.mxu0 %v446
  %544 = vmatprep.subr.bf16.mxu0 0
  %545 = vmatpush1.bf16.msra.mxu0 %v447
  %546 = vmatprep.subr.bf16.mxu0 0
  %547 = vmatpush1.bf16.msra.mxu0 %v448
  %548 = vmatprep.subr.bf16.mxu0 0
  %549 = vmatpush1.bf16.msra.mxu0 %v449
  %550 = vmatprep.subr.bf16.mxu0 0
  %551 = vmatpush1.bf16.msra.mxu0 %v450
  %552 = vmatprep.subr.bf16.mxu0 0
  %553 = vmatpush1.bf16.msra.mxu0 %v451
  %554 = vmatprep.subr.bf16.mxu0 0
  %555 = vmatpush1.bf16.msra.mxu0 %v452
  %556 = vmatprep.subr.bf16.mxu0 0
  %557 = vmatpush1.bf16.msra.mxu0 %v453
  %558 = vmatprep.subr.bf16.mxu0 0
  %559 = vmatpush1.bf16.msra.mxu0 %v454
  %560 = vmatprep.subr.bf16.mxu0 0
  %561 = vmatpush1.bf16.msra.mxu0 %v455
  %562 = vmatprep.subr.bf16.mxu0 0
  %563 = vmatpush1.bf16.msra.mxu0 %v456
  %564 = vmatprep.subr.bf16.mxu0 0
  %565 = vmatpush1.bf16.msra.mxu0 %v457
  %566 = vmatprep.subr.bf16.mxu0 0
  %567 = vmatpush1.bf16.msra.mxu0 %v458
  %568 = vmatprep.subr.bf16.mxu0 0
  %569 = vmatpush1.bf16.msra.mxu0 %v459
  %570 = vmatprep.mubr.bf16.mxu0 %v238
  %571 = vmatmul.mubr.bf16.gmra.mrb[0].mxu0 %v237
  %v572 = vpop.f32.mrb[0].mxu0
  %v573 = vadd.f32 %v131, %v572
  %v574 = vpop.f32.mrb[0].mxu0
  %v575 = vpop.f32.mrb[0].mxu0
  %v576 = vadd.f32 %v131, %v575
  %v577 = vpop.f32.mrb[0].mxu0
  %578 = vmatprep.mubr.bf16.mxu0 %v243
  %579 = vmatmul.mubr.bf16.gmra.mrb[0].mxu0 %v242
  %v580 = vpop.f32.mrb[0].mxu0
  %v581 = vadd.f32 %v131, %v580
  %v582 = vpop.f32.mrb[0].mxu0
  %v583 = vpop.f32.mrb[0].mxu0
  %v584 = vadd.f32 %v131, %v583
  %v585 = vpop.f32.mrb[0].mxu0
  %586 = vmatprep.mubr.bf16.mxu0 %v248
  %587 = vmatmul.mubr.bf16.gmra.mrb[0].mxu0 %v247
  %v588 = vpop.f32.mrb[0].mxu0
  %v589 = vadd.f32 %v131, %v588
  %v590 = vpop.f32.mrb[0].mxu0
  %v591 = vpop.f32.mrb[0].mxu0
  %v592 = vadd.f32 %v131, %v591
  %v593 = vpop.f32.mrb[0].mxu0
  %594 = vmatprep.mubr.bf16.mxu0 %v253
  %595 = vmatmul.mubr.bf16.gmra.mrb[0].mxu0 %v252
  %v596 = vpop.f32.mrb[0].mxu0
  %v597 = vadd.f32 %v131, %v596
  %v598 = vpop.f32.mrb[0].mxu0
  %v599 = vpop.f32.mrb[0].mxu0
  %v600 = vadd.f32 %v131, %v599
  %v601 = vpop.f32.mrb[0].mxu0
  %602 = vmatprep.mubr.bf16.mxu0 %v258
  %603 = vmatmul.mubr.bf16.gmra.mrb[0].mxu0 %v257
  %v604 = vpop.f32.mrb[0].mxu0
  %v605 = vadd.f32 %v131, %v604
  %v606 = vpop.f32.mrb[0].mxu0
  %v607 = vpop.f32.mrb[0].mxu0
  %v608 = vadd.f32 %v131, %v607
  %v609 = vpop.f32.mrb[0].mxu0
  %610 = vmatprep.mubr.bf16.mxu0 %v263
  %611 = vmatmul.mubr.bf16.gmra.mrb[0].mxu0 %v262
  %v612 = vpop.f32.mrb[0].mxu0
  %v613 = vadd.f32 %v131, %v612
  %v614 = vpop.f32.mrb[0].mxu0
  %v615 = vpop.f32.mrb[0].mxu0
  %v616 = vadd.f32 %v131, %v615
  %v617 = vpop.f32.mrb[0].mxu0
  %618 = vmatprep.mubr.bf16.mxu0 %v268
  %619 = vmatmul.mubr.bf16.gmra.mrb[0].mxu0 %v267
  %v620 = vpop.f32.mrb[0].mxu0
  %v621 = vadd.f32 %v131, %v620
  %v622 = vpop.f32.mrb[0].mxu0
  %v623 = vpop.f32.mrb[0].mxu0
  %v624 = vpop.f32.mrb[0].mxu0
  %625 = vdwg.mxu0
  %626 = vmatprep.subr.bf16.mxu0 0
  %627 = vmatpush1.bf16.msra.mxu0 %v460
  %628 = vmatprep.subr.bf16.mxu0 0
  %629 = vmatpush1.bf16.msra.mxu0 %v461
  %630 = vmatprep.subr.bf16.mxu0 0
  %631 = vmatpush1.bf16.msra.mxu0 %v462
  %632 = vmatprep.subr.bf16.mxu0 0
  %633 = vmatpush1.bf16.msra.mxu0 %v463
  %634 = vmatprep.subr.bf16.mxu0 0
  %635 = vmatpush1.bf16.msra.mxu0 %v464
  %636 = vmatprep.subr.bf16.mxu0 0
  %637 = vmatpush1.bf16.msra.mxu0 %v465
  %638 = vmatprep.subr.bf16.mxu0 0
  %639 = vmatpush1.bf16.msra.mxu0 %v466
  %640 = vmatprep.subr.bf16.mxu0 0
  %641 = vmatpush1.bf16.msra.mxu0 %v467
  %642 = vmatprep.subr.bf16.mxu0 0
  %643 = vmatpush1.bf16.msra.mxu0 %v468
  %644 = vmatprep.subr.bf16.mxu0 0
  %645 = vmatpush1.bf16.msra.mxu0 %v469
  %646 = vmatprep.subr.bf16.mxu0 0
  %647 = vmatpush1.bf16.msra.mxu0 %v470
  %648 = vmatprep.subr.bf16.mxu0 0
  %649 = vmatpush1.bf16.msra.mxu0 %v471
  %650 = vmatprep.subr.bf16.mxu0 0
  %651 = vmatpush1.bf16.msra.mxu0 %v472
  %652 = vmatprep.subr.bf16.mxu0 0
  %653 = vmatpush1.bf16.msra.mxu0 %v473
  %654 = vmatprep.subr.bf16.mxu0 0
  %655 = vmatpush1.bf16.msra.mxu0 %v474
  %656 = vmatprep.subr.bf16.mxu0 0
  %657 = vmatpush1.bf16.msra.mxu0 %v475
  %658 = vmatprep.mubr.bf16.mxu0 %v240
  %659 = vmatmul.mubr.bf16.gmra.mrb[0].mxu0 %v239
  %v660 = vpop.f32.mrb[0].mxu0
  %v661 = vadd.f32 %v573, %v660
  %v662 = vpop.f32.mrb[0].mxu0
  %v663 = vpop.f32.mrb[0].mxu0
  %v664 = vadd.f32 %v576, %v663
  %v665 = vpop.f32.mrb[0].mxu0
  %666 = vmatprep.mubr.bf16.mxu0 %v245
  %667 = vmatmul.mubr.bf16.gmra.mrb[0].mxu0 %v244
  %v668 = vpop.f32.mrb[0].mxu0
  %v669 = vadd.f32 %v581, %v668
  %v670 = vpop.f32.mrb[0].mxu0
  %v671 = vpop.f32.mrb[0].mxu0
  %v672 = vadd.f32 %v584, %v671
  %v673 = vpop.f32.mrb[0].mxu0
  %674 = vmatprep.mubr.bf16.mxu0 %v250
  %675 = vmatmul.mubr.bf16.gmra.mrb[0].mxu0 %v249
  %v676 = vpop.f32.mrb[0].mxu0
  %v677 = vadd.f32 %v589, %v676
  %v678 = vpop.f32.mrb[0].mxu0
  %v679 = vpop.f32.mrb[0].mxu0
  %v680 = vadd.f32 %v592, %v679
  %v681 = vpop.f32.mrb[0].mxu0
  %682 = vmatprep.mubr.bf16.mxu0 %v255
  %683 = vmatmul.mubr.bf16.gmra.mrb[0].mxu0 %v254
  %v684 = vpop.f32.mrb[0].mxu0
  %v685 = vadd.f32 %v597, %v684
  %v686 = vpop.f32.mrb[0].mxu0
  %v687 = vpop.f32.mrb[0].mxu0
  %v688 = vadd.f32 %v600, %v687
  %v689 = vpop.f32.mrb[0].mxu0
  %690 = vmatprep.mubr.bf16.mxu0 %v260
  %691 = vmatmul.mubr.bf16.gmra.mrb[0].mxu0 %v259
  %v692 = vpop.f32.mrb[0].mxu0
  %v693 = vadd.f32 %v605, %v692
  %v694 = vpop.f32.mrb[0].mxu0
  %v695 = vpop.f32.mrb[0].mxu0
  %v696 = vadd.f32 %v608, %v695
  %v697 = vpop.f32.mrb[0].mxu0
  %698 = vmatprep.mubr.bf16.mxu0 %v265
  %699 = vmatmul.mubr.bf16.gmra.mrb[0].mxu0 %v264
  %v700 = vpop.f32.mrb[0].mxu0
  %v701 = vadd.f32 %v613, %v700
  %v702 = vpop.f32.mrb[0].mxu0
  %v703 = vpop.f32.mrb[0].mxu0
  %v704 = vadd.f32 %v616, %v703
  %v705 = vpop.f32.mrb[0].mxu0
  %706 = vmatprep.mubr.bf16.mxu0 %v270
  %707 = vmatmul.mubr.bf16.gmra.mrb[0].mxu0 %v269
  %v708 = vpop.f32.mrb[0].mxu0
  %v709 = vadd.f32 %v621, %v708
  %v710 = vpop.f32.mrb[0].mxu0
  %v711 = vpop.f32.mrb[0].mxu0
  %v712 = vpop.f32.mrb[0].mxu0
  %713 = vdwg.mxu0
  %714 = vmatprep.subr.bf16.mxu0 0
  %715 = vmatpush1.bf16.msra.mxu0 %v476
  %716 = vmatprep.subr.bf16.mxu0 0
  %717 = vmatpush1.bf16.msra.mxu0 %v477
  %718 = vmatprep.subr.bf16.mxu0 0
  %719 = vmatpush1.bf16.msra.mxu0 %v478
  %720 = vmatprep.subr.bf16.mxu0 0
  %721 = vmatpush1.bf16.msra.mxu0 %v479
  %722 = vmatprep.subr.bf16.mxu0 0
  %723 = vmatpush1.bf16.msra.mxu0 0
  %724 = vmatprep.subr.bf16.mxu0 0
  %725 = vmatpush1.bf16.msra.mxu0 0
  %726 = vmatprep.subr.bf16.mxu0 0
  %727 = vmatpush1.bf16.msra.mxu0 0
  %728 = vmatprep.subr.bf16.mxu0 0
  %729 = vmatpush1.bf16.msra.mxu0 0
  %730 = vmatprep.subr.bf16.mxu0 0
  %731 = vmatpush1.bf16.msra.mxu0 0
  %732 = vmatprep.subr.bf16.mxu0 0
  %733 = vmatpush1.bf16.msra.mxu0 0
  %734 = vmatprep.subr.bf16.mxu0 0
  %735 = vmatpush1.bf16.msra.mxu0 0
  %736 = vmatprep.subr.bf16.mxu0 0
  %737 = vmatpush1.bf16.msra.mxu0 0
  %738 = vmatprep.subr.bf16.mxu0 0
  %739 = vmatpush1.bf16.msra.mxu0 0
  %740 = vmatprep.subr.bf16.mxu0 0
  %741 = vmatpush1.bf16.msra.mxu0 0
  %742 = vmatprep.subr.bf16.mxu0 0
  %743 = vmatpush1.bf16.msra.mxu0 0
  %744 = vmatprep.subr.bf16.mxu0 0
  %745 = vmatpush1.bf16.msra.mxu0 0
  %746 = vmatprep.mubr.bf16.mxu0 0
  %747 = vmatmul.mubr.bf16.gmra.mrb[0].mxu0 %v518
  %v748 = vpop.f32.mrb[0].mxu0
  %v749 = vadd.f32 %v661, %v748
  %v750 = vpop.f32.mrb[0].mxu0
  %v751 = vpop.f32.mrb[0].mxu0
  %v752 = vadd.f32 %v664, %v751
  %v753 = vpop.f32.mrb[0].mxu0
  %754 = vmatprep.mubr.bf16.mxu0 0
  %755 = vmatmul.mubr.bf16.gmra.mrb[0].mxu0 %v521
  %v756 = vpop.f32.mrb[0].mxu0
  %v757 = vadd.f32 %v669, %v756
  %v758 = vpop.f32.mrb[0].mxu0
  %v759 = vpop.f32.mrb[0].mxu0
  %v760 = vadd.f32 %v672, %v759
  %v761 = vpop.f32.mrb[0].mxu0
  %762 = vmatprep.mubr.bf16.mxu0 0
  %763 = vmatmul.mubr.bf16.gmra.mrb[0].mxu0 %v524
  %v764 = vpop.f32.mrb[0].mxu0
  %v765 = vadd.f32 %v677, %v764
  %v766 = vpop.f32.mrb[0].mxu0
  %v767 = vpop.f32.mrb[0].mxu0
  %v768 = vadd.f32 %v680, %v767
  %v769 = vpop.f32.mrb[0].mxu0
  %770 = vmatprep.mubr.bf16.mxu0 0
  %771 = vmatmul.mubr.bf16.gmra.mrb[0].mxu0 %v527
  %v772 = vpop.f32.mrb[0].mxu0
  %v773 = vadd.f32 %v685, %v772
  %v774 = vpop.f32.mrb[0].mxu0
  %v775 = vpop.f32.mrb[0].mxu0
  %v776 = vadd.f32 %v688, %v775
  %v777 = vpop.f32.mrb[0].mxu0
  %778 = vmatprep.mubr.bf16.mxu0 0
  %779 = vmatmul.mubr.bf16.gmra.mrb[0].mxu0 %v530
  %v780 = vpop.f32.mrb[0].mxu0
  %v781 = vadd.f32 %v693, %v780
  %v782 = vpop.f32.mrb[0].mxu0
  %v783 = vpop.f32.mrb[0].mxu0
  %v784 = vadd.f32 %v696, %v783
  %v785 = vpop.f32.mrb[0].mxu0
  %786 = vmatprep.mubr.bf16.mxu0 0
  %787 = vmatmul.mubr.bf16.gmra.mrb[0].mxu0 %v533
  %v788 = vpop.f32.mrb[0].mxu0
  %v789 = vadd.f32 %v701, %v788
  %v790 = vpop.f32.mrb[0].mxu0
  %v791 = vpop.f32.mrb[0].mxu0
  %v792 = vadd.f32 %v704, %v791
  %v793 = vpop.f32.mrb[0].mxu0
  %794 = vmatprep.mubr.bf16.mxu0 0
  %795 = vmatmul.mubr.bf16.gmra.mrb[0].mxu0 %v536
  %v796 = vpop.f32.mrb[0].mxu0
  %v797 = vadd.f32 %v709, %v796
  %v798 = vpop.f32.mrb[0].mxu0
  %v799 = vpop.f32.mrb[0].mxu0
  %v800 = vpop.f32.mrb[0].mxu0
  %801 = vdwg.mxu0
  %v802 = vmax.f32 %v749, 0.0
  %v803 = vmax.f32 %v752, 0.0
  %v804 = vmax.f32 %v757, 0.0
  %v805 = vmax.f32 %v760, 0.0
  %v806 = vmax.f32 %v765, 0.0
  %v807 = vmax.f32 %v768, 0.0
  %v808 = vmax.f32 %v773, 0.0
  %v809 = vmax.f32 %v776, 0.0
  %v810 = vmax.f32 %v781, 0.0
  %v811 = vmax.f32 %v784, 0.0
  %v812 = vmax.f32 %v789, 0.0
  %v813 = vmax.f32 %v792, 0.0
  %v814 = vmax.f32 %v797, 0.0
  %v815 = vpack.c.bf16 %v803, %v802
  %v816 = vpack.c.bf16 %v805, %v804
  %v817 = vpack.c.bf16 %v807, %v806
  %v818 = vpack.c.bf16 %v809, %v808
  %v819 = vpack.c.bf16 %v811, %v810
  %v820 = vpack.c.bf16 %v813, %v812
  %v821 = vpack.c.bf16 %v814, %v814
  %v829 = vunpack.c.l.b16 %v815
  %v830 = vunpack.c.h.b16 %v815
  %v831 = vunpack.c.l.b16 %v816
  %v832 = vunpack.c.h.b16 %v816
  %v833 = vunpack.c.l.b16 %v817
  %v834 = vunpack.c.h.b16 %v817
  %v835 = vunpack.c.l.b16 %v818
  %v836 = vunpack.c.h.b16 %v818
  %v837 = vunpack.c.l.b16 %v819
  %v838 = vunpack.c.h.b16 %v819
  %v839 = vunpack.c.l.b16 %v820
  %v840 = vunpack.c.h.b16 %v820
  %v841 = vunpack.c.l.b16 %v821
  %v842 = vpack.c.b16 %v829, %v829
  %v843 = vpack.c.b16 %v830, %v830
  %v844 = vpack.c.b16 %v831, %v831
  %v845 = vpack.c.b16 %v832, %v832
  %v846 = vpack.c.b16 %v833, %v833
  %v847 = vpack.c.b16 %v834, %v834
  %v848 = vpack.c.b16 %v835, %v835
  %v849 = vpack.c.b16 %v836, %v836
  %v850 = vpack.c.b16 %v837, %v837
  %v851 = vpack.c.b16 %v838, %v838
  %v852 = vpack.c.b16 %v839, %v839
  %v853 = vpack.c.b16 %v840, %v840
  %v854 = vpack.c.b16 %v841, %v841
  %868 = vst [vmem:[%s3] sm:$0xf] %v842
  %869 = vst [vmem:[%s3 + $0x4] sm:$0xf] %v843
  %870 = vst [vmem:[%s3 + $0x8] sm:$0xf] %v844
  %871 = vst [vmem:[%s3 + $0xc] sm:$0xf] %v845
  %872 = vst [vmem:[%s3 + $0x10] sm:$0xf] %v846
  %873 = vst [vmem:[%s3 + $0x14] sm:$0xf] %v847
  %874 = vst [vmem:[%s3 + $0x18] sm:$0xf] %v848
  %875 = vst [vmem:[%s3 + $0x1c] sm:$0xf] %v849
  %876 = vst [vmem:[%s3 + $0x20] sm:$0xf] %v850
  %877 = vst [vmem:[%s3 + $0x24] sm:$0xf] %v851
  %878 = vst [vmem:[%s3 + $0x28] sm:$0xf] %v852
  %879 = vst [vmem:[%s3 + $0x2c] sm:$0xf] %v853
  %880 = vst [vmem:[%s3 + $0x30] sm:$0x1] %v854
  // Predicated region
  $region14: #{dueling_dqn_forward.6} parent=0 // pred_check
    _
  $region15: #{dueling_dqn_forward.6} parent=0 // pred_check_branch
    %882 = sbr.rel (0) target = $region17
  $region16: #{dueling_dqn_forward.6} parent=0 // pred_region
    _
  $region17: #{dueling_dqn_forward.6} parent=0 // pred_fallthru
    _
  // Predicated region
  $region18: #{dueling_dqn_forward.6} parent=0 // pred_check
    _
  $region19: #{dueling_dqn_forward.6} parent=0 // pred_check_branch
    %884 = sbr.rel (0) target = $region21
  $region20: #{dueling_dqn_forward.6} parent=0 // pred_region
    _
  $region21: #{dueling_dqn_forward.6} parent=0 // pred_fallthru
    _

// kernel: dueling_dqn_forward.7
$region0: #{dueling_dqn_forward.7}
  #allocation0 [shape = 'u32[]', space=smem, size = 0x4, offset = 0x4, fixed_abs, tag = 'smem constant byte address 0x4 - core index']
  #allocation1 [shape = 'u32[144,128]{1,0:T(1,128)}', space=vmem, size = 0x12000, scoped, tag = 'internal scratch']
  %s0 = inlined_call_operand.vmem [shape: bf16[2,3136], index: 0, kind: input, shape index: {}]
  %s1 = inlined_call_operand.vmem [shape: bf16[3136,1024], index: 1, kind: input, shape index: {}]
  %s2 = inlined_call_operand.vmem [shape: f32[1,1024], index: 2, kind: input, shape index: {}]
  %s3 = inlined_call_operand.vmem [shape: bf16[1024,128], index: 3, kind: input, shape index: {}]
  %s4 = inlined_call_operand.vmem [shape: f32[1,128], index: 4, kind: input, shape index: {}]
  %s5 = inlined_call_operand.hbm [shape: f32[2,128], index: 5, kind: output, shape index: {}]
  %s6 = sld [smem:[#allocation0]]
  $region30: #{dueling_dqn_forward.7} parent=0
    _
  %s8 = ssub.s32 1, %s6
  %s9 = scalar_select 0, %s8, %s6
  $region1: #{dueling_dqn_forward.7} parent=0
    #allocation2 [shape = 'u8[1024]{0}', space=vmem, size = 0x400, scoped, tag = 'output window, operand 0, single buffered']
    #allocation3 [shape = 's32[1]{0}', space=sflag, size = 0x4, scoped, tag = 'scoped memory for dueling_dqn_forward.7']
    %10 = vsyncpa [#allocation3], 0
    // Predicated region
    $region2: #{dueling_dqn_forward.7} parent=1 // pred_check
      _
    $region3: #{dueling_dqn_forward.7} parent=1 // pred_check_branch
      %12 = sbr.rel (0) target = $region5
    $region4: #{dueling_dqn_forward.7} parent=1 // pred_region
      _
    $region5: #{dueling_dqn_forward.7} parent=1 // pred_fallthru
      _
    // Predicated region
    $region6: #{dueling_dqn_forward.7} parent=1 // pred_check
      _
    $region7: #{dueling_dqn_forward.7} parent=1 // pred_check_branch
      %14 = sbr.rel (0) target = $region9
    $region8: #{dueling_dqn_forward.7} parent=1 // pred_region
      _
    $region9: #{dueling_dqn_forward.7} parent=1 // pred_fallthru
      _
    // Predicated region
    $region10: #{dueling_dqn_forward.7} parent=1 // pred_check
      _
    $region11: #{dueling_dqn_forward.7} parent=1 // pred_check_branch
      %16 = sbr.rel (0) target = $region13
    $region12: #{dueling_dqn_forward.7} parent=1 // pred_region
      _
    $region13: #{dueling_dqn_forward.7} parent=1 // pred_fallthru
      _
    // Predicated region
    $region14: #{dueling_dqn_forward.7} parent=1 // pred_check
      _
    $region15: #{dueling_dqn_forward.7} parent=1 // pred_check_branch
      %18 = sbr.rel (0) target = $region17
    $region16: #{dueling_dqn_forward.7} parent=1 // pred_region
      _
    $region17: #{dueling_dqn_forward.7} parent=1 // pred_fallthru
      _
    // Predicated region
    $region18: #{dueling_dqn_forward.7} parent=1 // pred_check
      _
    $region19: #{dueling_dqn_forward.7} parent=1 // pred_check_branch
      %20 = sbr.rel (0) target = $region21
    $region20: #{dueling_dqn_forward.7} parent=1 // pred_region
      _
    $region21: #{dueling_dqn_forward.7} parent=1 // pred_fallthru
      _
    %v22 = vld [vmem:[%s0] sm:$0xff]
    %v23 = vld [vmem:[%s0 + $0x8] sm:$0xff]
    %v24 = vld [vmem:[%s0 + $0x10] sm:$0xff]
    %v25 = vld [vmem:[%s0 + $0x18] sm:$0x1]
    %v26 = vld [vmem:[%s1] sm:$0xff]
    %v27 = vld [vmem:[%s1 + $0x8] sm:$0xff]
    %v28 = vld [vmem:[%s1 + $0x10] sm:$0xff]
    %v29 = vld [vmem:[%s1 + $0x18] sm:$0xff]
    %v30 = vld [vmem:[%s1 + $0x20] sm:$0xff]
    %v31 = vld [vmem:[%s1 + $0x28] sm:$0xff]
    %v32 = vld [vmem:[%s1 + $0x30] sm:$0xff]
    %v33 = vld [vmem:[%s1 + $0x38] sm:$0xff]
    %v34 = vld [vmem:[%s1 + $0x40] sm:$0xff]
    %v35 = vld [vmem:[%s1 + $0x48] sm:$0xff]
    %v36 = vld [vmem:[%s1 + $0x50] sm:$0xff]
    %v37 = vld [vmem:[%s1 + $0x58] sm:$0xff]
    %v38 = vld [vmem:[%s1 + $0x60] sm:$0xff]
    %v39 = vld [vmem:[%s1 + $0x68] sm:$0xff]
    %v40 = vld [vmem:[%s1 + $0x70] sm:$0xff]
    %v41 = vld [vmem:[%s1 + $0x78] sm:$0xff]
    %v42 = vld [vmem:[%s1 + $0x80] sm:$0xff]
    %v43 = vld [vmem:[%s1 + $0x88] sm:$0xff]
    %v44 = vld [vmem:[%s1 + $0x90] sm:$0xff]
    %v45 = vld [vmem:[%s1 + $0x98] sm:$0xff]
    %v46 = vld [vmem:[%s1 + $0xa0] sm:$0xff]
    %v47 = vld [vmem:[%s1 + $0xa8] sm:$0xff]
    %v48 = vld [vmem:[%s1 + $0xb0] sm:$0xff]
    %v49 = vld [vmem:[%s1 + $0xb8] sm:$0xff]
    %v50 = vld [vmem:[%s1 + $0xc0] sm:$0xff]
    %v51 = vld [vmem:[%s1 + $0xc8] sm:$0xff]
    %v52 = vld [vmem:[%s1 + $0xd0] sm:$0xff]
    %v53 = vld [vmem:[%s1 + $0xd8] sm:$0xff]
    %v54 = vld [vmem:[%s1 + $0xe0] sm:$0xff]
    %v55 = vld [vmem:[%s1 + $0xe8] sm:$0xff]
    %v56 = vld [vmem:[%s1 + $0xf0] sm:$0xff]
    %v57 = vld [vmem:[%s1 + $0xf8] sm:$0xff]
    %v58 = vld [vmem:[%s1 + $0x100] sm:$0xff]
    %v59 = vld [vmem:[%s1 + $0x108] sm:$0xff]
    %v60 = vld [vmem:[%s1 + $0x110] sm:$0xff]
    %v61 = vld [vmem:[%s1 + $0x118] sm:$0xff]
    %v62 = vld [vmem:[%s1 + $0x120] sm:$0xff]
    %v63 = vld [vmem:[%s1 + $0x128] sm:$0xff]
    %v64 = vld [vmem:[%s1 + $0x130] sm:$0xff]
    %v65 = vld [vmem:[%s1 + $0x138] sm:$0xff]
    %v66 = vld [vmem:[%s1 + $0x140] sm:$0xff]
    %v67 = vld [vmem:[%s1 + $0x148] sm:$0xff]
    %v68 = vld [vmem:[%s1 + $0x150] sm:$0xff]
    %v69 = vld [vmem:[%s1 + $0x158] sm:$0xff]
    %v70 = vld [vmem:[%s1 + $0x160] sm:$0xff]
    %v71 = vld [vmem:[%s1 + $0x168] sm:$0xff]
    %v72 = vld [vmem:[%s1 + $0x170] sm:$0xff]
    %v73 = vld [vmem:[%s1 + $0x178] sm:$0xff]
    %v74 = vld [vmem:[%s1 + $0x180] sm:$0xff]
    %v75 = vld [vmem:[%s1 + $0x188] sm:$0xff]
    %v76 = vld [vmem:[%s1 + $0x190] sm:$0xff]
    %v77 = vld [vmem:[%s1 + $0x198] sm:$0xff]
    %v78 = vld [vmem:[%s1 + $0x1a0] sm:$0xff]
    %v79 = vld [vmem:[%s1 + $0x1a8] sm:$0xff]
    %v80 = vld [vmem:[%s1 + $0x1b0] sm:$0xff]
    %v81 = vld [vmem:[%s1 + $0x1b8] sm:$0xff]
    %v82 = vld [vmem:[%s1 + $0x1c0] sm:$0xff]
    %v83 = vld [vmem:[%s1 + $0x1c8] sm:$0xff]
    %v84 = vld [vmem:[%s1 + $0x1d0] sm:$0xff]
    %v85 = vld [vmem:[%s1 + $0x1d8] sm:$0xff]
    %v86 = vld [vmem:[%s1 + $0x1e0] sm:$0xff]
    %v87 = vld [vmem:[%s1 + $0x1e8] sm:$0xff]
    %v88 = vld [vmem:[%s1 + $0x1f0] sm:$0xff]
    %v89 = vld [vmem:[%s1 + $0x1f8] sm:$0xff]
    %v90 = vld [vmem:[%s1 + $0x200] sm:$0xff]
    %v91 = vld [vmem:[%s1 + $0x208] sm:$0xff]
    %v92 = vld [vmem:[%s1 + $0x210] sm:$0xff]
    %v93 = vld [vmem:[%s1 + $0x218] sm:$0xff]
    %v94 = vld [vmem:[%s1 + $0x220] sm:$0xff]
    %v95 = vld [vmem:[%s1 + $0x228] sm:$0xff]
    %v96 = vld [vmem:[%s1 + $0x230] sm:$0xff]
    %v97 = vld [vmem:[%s1 + $0x238] sm:$0xff]
    %v98 = vld [vmem:[%s1 + $0x240] sm:$0xff]
    %v99 = vld [vmem:[%s1 + $0x248] sm:$0xff]
    %v100 = vld [vmem:[%s1 + $0x250] sm:$0xff]
    %v101 = vld [vmem:[%s1 + $0x258] sm:$0xff]
    %v102 = vld [vmem:[%s1 + $0x260] sm:$0xff]
    %v103 = vld [vmem:[%s1 + $0x268] sm:$0xff]
    %v104 = vld [vmem:[%s1 + $0x270] sm:$0xff]
    %v105 = vld [vmem:[%s1 + $0x278] sm:$0xff]
    %v106 = vld [vmem:[%s1 + $0x280] sm:$0xff]
    %v107 = vld [vmem:[%s1 + $0x288] sm:$0xff]
    %v108 = vld [vmem:[%s1 + $0x290] sm:$0xff]
    %v109 = vld [vmem:[%s1 + $0x298] sm:$0xff]
    %v110 = vld [vmem:[%s1 + $0x2a0] sm:$0xff]
    %v111 = vld [vmem:[%s1 + $0x2a8] sm:$0xff]
    %v112 = vld [vmem:[%s1 + $0x2b0] sm:$0xff]
    %v113 = vld [vmem:[%s1 + $0x2b8] sm:$0xff]
    %v114 = vld [vmem:[%s1 + $0x2c0] sm:$0xff]
    %v115 = vld [vmem:[%s1 + $0x2c8] sm:$0xff]
    %v116 = vld [vmem:[%s1 + $0x2d0] sm:$0xff]
    %v117 = vld [vmem:[%s1 + $0x2d8] sm:$0xff]
    %v118 = vld [vmem:[%s1 + $0x2e0] sm:$0xff]
    %v119 = vld [vmem:[%s1 + $0x2e8] sm:$0xff]
    %v120 = vld [vmem:[%s1 + $0x2f0] sm:$0xff]
    %v121 = vld [vmem:[%s1 + $0x2f8] sm:$0xff]
    %v122 = vld [vmem:[%s1 + $0x300] sm:$0xff]
    %v123 = vld [vmem:[%s1 + $0x308] sm:$0xff]
    %v124 = vld [vmem:[%s1 + $0x310] sm:$0xff]
    %v125 = vld [vmem:[%s1 + $0x318] sm:$0xff]
    %v126 = vld [vmem:[%s1 + $0x320] sm:$0xff]
    %v127 = vld [vmem:[%s1 + $0x328] sm:$0xff]
    %v128 = vld [vmem:[%s1 + $0x330] sm:$0xff]
    %v129 = vld [vmem:[%s1 + $0x338] sm:$0xff]
    %v130 = vld [vmem:[%s1 + $0x340] sm:$0xff]
    %v131 = vld [vmem:[%s1 + $0x348] sm:$0xff]
    %v132 = vld [vmem:[%s1 + $0x350] sm:$0xff]
    %v133 = vld [vmem:[%s1 + $0x358] sm:$0xff]
    %v134 = vld [vmem:[%s1 + $0x360] sm:$0xff]
    %v135 = vld [vmem:[%s1 + $0x368] sm:$0xff]
    %v136 = vld [vmem:[%s1 + $0x370] sm:$0xff]
    %v137 = vld [vmem:[%s1 + $0x378] sm:$0xff]
    %v138 = vld [vmem:[%s1 + $0x380] sm:$0xff]
    %v139 = vld [vmem:[%s1 + $0x388] sm:$0xff]
    %v140 = vld [vmem:[%s1 + $0x390] sm:$0xff]
    %v141 = vld [vmem:[%s1 + $0x398] sm:$0xff]
    %v142 = vld [vmem:[%s1 + $0x3a0] sm:$0xff]
    %v143 = vld [vmem:[%s1 + $0x3a8] sm:$0xff]
    %v144 = vld [vmem:[%s1 + $0x3b0] sm:$0xff]
    %v145 = vld [vmem:[%s1 + $0x3b8] sm:$0xff]
    %v146 = vld [vmem:[%s1 + $0x3c0] sm:$0xff]
    %v147 = vld [vmem:[%s1 + $0x3c8] sm:$0xff]
    %v148 = vld [vmem:[%s1 + $0x3d0] sm:$0xff]
    %v149 = vld [vmem:[%s1 + $0x3d8] sm:$0xff]
    %v150 = vld [vmem:[%s1 + $0x3e0] sm:$0xff]
    %v151 = vld [vmem:[%s1 + $0x3e8] sm:$0xff]
    %v152 = vld [vmem:[%s1 + $0x3f0] sm:$0xff]
    %v153 = vld [vmem:[%s1 + $0x3f8] sm:$0xff]
    %v154 = vld [vmem:[%s1 + $0x400] sm:$0xff]
    %v155 = vld [vmem:[%s1 + $0x408] sm:$0xff]
    %v156 = vld [vmem:[%s1 + $0x410] sm:$0xff]
    %v157 = vld [vmem:[%s1 + $0x418] sm:$0xff]
    %v158 = vld [vmem:[%s1 + $0x420] sm:$0xff]
    %v159 = vld [vmem:[%s1 + $0x428] sm:$0xff]
    %v160 = vld [vmem:[%s1 + $0x430] sm:$0xff]
    %v161 = vld [vmem:[%s1 + $0x438] sm:$0xff]
    %v162 = vld [vmem:[%s1 + $0x440] sm:$0xff]
    %v163 = vld [vmem:[%s1 + $0x448] sm:$0xff]
    %v164 = vld [vmem:[%s1 + $0x450] sm:$0xff]
    %v165 = vld [vmem:[%s1 + $0x458] sm:$0xff]
    %v166 = vld [vmem:[%s1 + $0x460] sm:$0xff]
    %v167 = vld [vmem:[%s1 + $0x468] sm:$0xff]
    %v168 = vld [vmem:[%s1 + $0x470] sm:$0xff]
    %v169 = vld [vmem:[%s1 + $0x478] sm:$0xff]
    %v170 = vld [vmem:[%s1 + $0x480] sm:$0xff]
    %v171 = vld [vmem:[%s1 + $0x488] sm:$0xff]
    %v172 = vld [vmem:[%s1 + $0x490] sm:$0xff]
    %v173 = vld [vmem:[%s1 + $0x498] sm:$0xff]
    %v174 = vld [vmem:[%s1 + $0x4a0] sm:$0xff]
    %v175 = vld [vmem:[%s1 + $0x4a8] sm:$0xff]
    %v176 = vld [vmem:[%s1 + $0x4b0] sm:$0xff]
    %v177 = vld [vmem:[%s1 + $0x4b8] sm:$0xff]
    %v178 = vld [vmem:[%s1 + $0x4c0] sm:$0xff]
    %v179 = vld [vmem:[%s1 + $0x4c8] sm:$0xff]
    %v180 = vld [vmem:[%s1 + $0x4d0] sm:$0xff]
    %v181 = vld [vmem:[%s1 + $0x4d8] sm:$0xff]
    %v182 = vld [vmem:[%s1 + $0x4e0] sm:$0xff]
    %v183 = vld [vmem:[%s1 + $0x4e8] sm:$0xff]
    %v184 = vld [vmem:[%s1 + $0x4f0] sm:$0xff]
    %v185 = vld [vmem:[%s1 + $0x4f8] sm:$0xff]
    %v186 = vld [vmem:[%s1 + $0x500] sm:$0xff]
    %v187 = vld [vmem:[%s1 + $0x508] sm:$0xff]
    %v188 = vld [vmem:[%s1 + $0x510] sm:$0xff]
    %v189 = vld [vmem:[%s1 + $0x518] sm:$0xff]
    %v190 = vld [vmem:[%s1 + $0x520] sm:$0xff]
    %v191 = vld [vmem:[%s1 + $0x528] sm:$0xff]
    %v192 = vld [vmem:[%s1 + $0x530] sm:$0xff]
    %v193 = vld [vmem:[%s1 + $0x538] sm:$0xff]
    %v194 = vld [vmem:[%s1 + $0x540] sm:$0xff]
    %v195 = vld [vmem:[%s1 + $0x548] sm:$0xff]
    %v196 = vld [vmem:[%s1 + $0x550] sm:$0xff]
    %v197 = vld [vmem:[%s1 + $0x558] sm:$0xff]
    %v198 = vld [vmem:[%s1 + $0x560] sm:$0xff]
    %v199 = vld [vmem:[%s1 + $0x568] sm:$0xff]
    %v200 = vld [vmem:[%s1 + $0x570] sm:$0xff]
    %v201 = vld [vmem:[%s1 + $0x578] sm:$0xff]
    %v202 = vld [vmem:[%s1 + $0x580] sm:$0xff]
    %v203 = vld [vmem:[%s1 + $0x588] sm:$0xff]
    %v204 = vld [vmem:[%s1 + $0x590] sm:$0xff]
    %v205 = vld [vmem:[%s1 + $0x598] sm:$0xff]
    %v206 = vld [vmem:[%s1 + $0x5a0] sm:$0xff]
    %v207 = vld [vmem:[%s1 + $0x5a8] sm:$0xff]
    %v208 = vld [vmem:[%s1 + $0x5b0] sm:$0xff]
    %v209 = vld [vmem:[%s1 + $0x5b8] sm:$0xff]
    %v210 = vld [vmem:[%s1 + $0x5c0] sm:$0xff]
    %v211 = vld [vmem:[%s1 + $0x5c8] sm:$0xff]
    %v212 = vld [vmem:[%s1 + $0x5d0] sm:$0xff]
    %v213 = vld [vmem:[%s1 + $0x5d8] sm:$0xff]
    %v214 = vld [vmem:[%s1 + $0x5e0] sm:$0xff]
    %v215 = vld [vmem:[%s1 + $0x5e8] sm:$0xff]
    %v216 = vld [vmem:[%s1 + $0x5f0] sm:$0xff]
    %v217 = vld [vmem:[%s1 + $0x5f8] sm:$0xff]
    %v218 = vld [vmem:[%s1 + $0x600] sm:$0xff]
    %v219 = vld [vmem:[%s1 + $0x608] sm:$0xff]
    %v220 = vld [vmem:[%s1 + $0x610] sm:$0xff]
    %v221 = vld [vmem:[%s1 + $0x618] sm:$0xff]
    %v222 = vld [vmem:[%s1 + $0x620] sm:$0xff]
    %v223 = vld [vmem:[%s1 + $0x628] sm:$0xff]
    %v224 = vld [vmem:[%s1 + $0x630] sm:$0xff]
    %v225 = vld [vmem:[%s1 + $0x638] sm:$0xff]
    %v226 = vld [vmem:[%s1 + $0x640] sm:$0xff]
    %v227 = vld [vmem:[%s1 + $0x648] sm:$0xff]
    %v228 = vld [vmem:[%s1 + $0x650] sm:$0xff]
    %v229 = vld [vmem:[%s1 + $0x658] sm:$0xff]
    %v230 = vld [vmem:[%s1 + $0x660] sm:$0xff]
    %v231 = vld [vmem:[%s1 + $0x668] sm:$0xff]
    %v232 = vld [vmem:[%s1 + $0x670] sm:$0xff]
    %v233 = vld [vmem:[%s1 + $0x678] sm:$0xff]
    %v234 = vld [vmem:[%s1 + $0x680] sm:$0xff]
    %v235 = vld [vmem:[%s1 + $0x688] sm:$0xff]
    %v236 = vld [vmem:[%s1 + $0x690] sm:$0xff]
    %v237 = vld [vmem:[%s1 + $0x698] sm:$0xff]
    %v238 = vld [vmem:[%s1 + $0x6a0] sm:$0xff]
    %v239 = vld [vmem:[%s1 + $0x6a8] sm:$0xff]
    %v240 = vld [vmem:[%s1 + $0x6b0] sm:$0xff]
    %v241 = vld [vmem:[%s1 + $0x6b8] sm:$0xff]
    %v242 = vld [vmem:[%s1 + $0x6c0] sm:$0xff]
    %v243 = vld [vmem:[%s1 + $0x6c8] sm:$0xff]
    %v244 = vld [vmem:[%s1 + $0x6d0] sm:$0xff]
    %v245 = vld [vmem:[%s1 + $0x6d8] sm:$0xff]
    %v246 = vld [vmem:[%s1 + $0x6e0] sm:$0xff]
    %v247 = vld [vmem:[%s1 + $0x6e8] sm:$0xff]
    %v248 = vld [vmem:[%s1 + $0x6f0] sm:$0xff]
    %v249 = vld [vmem:[%s1 + $0x6f8] sm:$0xff]
    %v250 = vld [vmem:[%s1 + $0x700] sm:$0xff]
    %v251 = vld [vmem:[%s1 + $0x708] sm:$0xff]
    %v252 = vld [vmem:[%s1 + $0x710] sm:$0xff]
    %v253 = vld [vmem:[%s1 + $0x718] sm:$0xff]
    %v254 = vld [vmem:[%s1 + $0x720] sm:$0xff]
    %v255 = vld [vmem:[%s1 + $0x728] sm:$0xff]
    %v256 = vld [vmem:[%s1 + $0x730] sm:$0xff]
    %v257 = vld [vmem:[%s1 + $0x738] sm:$0xff]
    %v258 = vld [vmem:[%s1 + $0x740] sm:$0xff]
    %v259 = vld [vmem:[%s1 + $0x748] sm:$0xff]
    %v260 = vld [vmem:[%s1 + $0x750] sm:$0xff]
    %v261 = vld [vmem:[%s1 + $0x758] sm:$0xff]
    %v262 = vld [vmem:[%s1 + $0x760] sm:$0xff]
    %v263 = vld [vmem:[%s1 + $0x768] sm:$0xff]
    %v264 = vld [vmem:[%s1 + $0x770] sm:$0xff]
    %v265 = vld [vmem:[%s1 + $0x778] sm:$0xff]
    %v266 = vld [vmem:[%s1 + $0x780] sm:$0xff]
    %v267 = vld [vmem:[%s1 + $0x788] sm:$0xff]
    %v268 = vld [vmem:[%s1 + $0x790] sm:$0xff]
    %v269 = vld [vmem:[%s1 + $0x798] sm:$0xff]
    %v270 = vld [vmem:[%s1 + $0x7a0] sm:$0xff]
    %v271 = vld [vmem:[%s1 + $0x7a8] sm:$0xff]
    %v272 = vld [vmem:[%s1 + $0x7b0] sm:$0xff]
    %v273 = vld [vmem:[%s1 + $0x7b8] sm:$0xff]
    %v274 = vld [vmem:[%s1 + $0x7c0] sm:$0xff]
    %v275 = vld [vmem:[%s1 + $0x7c8] sm:$0xff]
    %v276 = vld [vmem:[%s1 + $0x7d0] sm:$0xff]
    %v277 = vld [vmem:[%s1 + $0x7d8] sm:$0xff]
    %v278 = vld [vmem:[%s1 + $0x7e0] sm:$0xff]
    %v279 = vld [vmem:[%s1 + $0x7e8] sm:$0xff]
    %v280 = vld [vmem:[%s1 + $0x7f0] sm:$0xff]
    %v281 = vld [vmem:[%s1 + $0x7f8] sm:$0xff]
    %v282 = vld [vmem:[%s1 + $0x800] sm:$0xff]
    %v283 = vld [vmem:[%s1 + $0x808] sm:$0xff]
    %v284 = vld [vmem:[%s1 + $0x810] sm:$0xff]
    %v285 = vld [vmem:[%s1 + $0x818] sm:$0xff]
    %v286 = vld [vmem:[%s1 + $0x820] sm:$0xff]
    %v287 = vld [vmem:[%s1 + $0x828] sm:$0xff]
    %v288 = vld [vmem:[%s1 + $0x830] sm:$0xff]
    %v289 = vld [vmem:[%s1 + $0x838] sm:$0xff]
    %v290 = vld [vmem:[%s1 + $0x840] sm:$0xff]
    %v291 = vld [vmem:[%s1 + $0x848] sm:$0xff]
    %v292 = vld [vmem:[%s1 + $0x850] sm:$0xff]
    %v293 = vld [vmem:[%s1 + $0x858] sm:$0xff]
    %v294 = vld [vmem:[%s1 + $0x860] sm:$0xff]
    %v295 = vld [vmem:[%s1 + $0x868] sm:$0xff]
    %v296 = vld [vmem:[%s1 + $0x870] sm:$0xff]
    %v297 = vld [vmem:[%s1 + $0x878] sm:$0xff]
    %v298 = vld [vmem:[%s1 + $0x880] sm:$0xff]
    %v299 = vld [vmem:[%s1 + $0x888] sm:$0xff]
    %v300 = vld [vmem:[%s1 + $0x890] sm:$0xff]
    %v301 = vld [vmem:[%s1 + $0x898] sm:$0xff]
    %v302 = vld [vmem:[%s1 + $0x8a0] sm:$0xff]
    %v303 = vld [vmem:[%s1 + $0x8a8] sm:$0xff]
    %v304 = vld [vmem:[%s1 + $0x8b0] sm:$0xff]
    %v305 = vld [vmem:[%s1 + $0x8b8] sm:$0xff]
    %v306 = vld [vmem:[%s1 + $0x8c0] sm:$0xff]
    %v307 = vld [vmem:[%s1 + $0x8c8] sm:$0xff]
    %v308 = vld [vmem:[%s1 + $0x8d0] sm:$0xff]
    %v309 = vld [vmem:[%s1 + $0x8d8] sm:$0xff]
    %v310 = vld [vmem:[%s1 + $0x8e0] sm:$0xff]
    %v311 = vld [vmem:[%s1 + $0x8e8] sm:$0xff]
    %v312 = vld [vmem:[%s1 + $0x8f0] sm:$0xff]
    %v313 = vld [vmem:[%s1 + $0x8f8] sm:$0xff]
    %v314 = vld [vmem:[%s1 + $0x900] sm:$0xff]
    %v315 = vld [vmem:[%s1 + $0x908] sm:$0xff]
    %v316 = vld [vmem:[%s1 + $0x910] sm:$0xff]
    %v317 = vld [vmem:[%s1 + $0x918] sm:$0xff]
    %v318 = vld [vmem:[%s1 + $0x920] sm:$0xff]
    %v319 = vld [vmem:[%s1 + $0x928] sm:$0xff]
    %v320 = vld [vmem:[%s1 + $0x930] sm:$0xff]
    %v321 = vld [vmem:[%s1 + $0x938] sm:$0xff]
    %v322 = vld [vmem:[%s1 + $0x940] sm:$0xff]
    %v323 = vld [vmem:[%s1 + $0x948] sm:$0xff]
    %v324 = vld [vmem:[%s1 + $0x950] sm:$0xff]
    %v325 = vld [vmem:[%s1 + $0x958] sm:$0xff]
    %v326 = vld [vmem:[%s1 + $0x960] sm:$0xff]
    %v327 = vld [vmem:[%s1 + $0x968] sm:$0xff]
    %v328 = vld [vmem:[%s1 + $0x970] sm:$0xff]
    %v329 = vld [vmem:[%s1 + $0x978] sm:$0xff]
    %v330 = vld [vmem:[%s1 + $0x980] sm:$0xff]
    %v331 = vld [vmem:[%s1 + $0x988] sm:$0xff]
    %v332 = vld [vmem:[%s1 + $0x990] sm:$0xff]
    %v333 = vld [vmem:[%s1 + $0x998] sm:$0xff]
    %v334 = vld [vmem:[%s1 + $0x9a0] sm:$0xff]
    %v335 = vld [vmem:[%s1 + $0x9a8] sm:$0xff]
    %v336 = vld [vmem:[%s1 + $0x9b0] sm:$0xff]
    %v337 = vld [vmem:[%s1 + $0x9b8] sm:$0xff]
    %v338 = vld [vmem:[%s1 + $0x9c0] sm:$0xff]
    %v339 = vld [vmem:[%s1 + $0x9c8] sm:$0xff]
    %v340 = vld [vmem:[%s1 + $0x9d0] sm:$0xff]
    %v341 = vld [vmem:[%s1 + $0x9d8] sm:$0xff]
    %v342 = vld [vmem:[%s1 + $0x9e0] sm:$0xff]
    %v343 = vld [vmem:[%s1 + $0x9e8] sm:$0xff]
    %v344 = vld [vmem:[%s1 + $0x9f0] sm:$0xff]
    %v345 = vld [vmem:[%s1 + $0x9f8] sm:$0xff]
    %v346 = vld [vmem:[%s1 + $0xa00] sm:$0xff]
    %v347 = vld [vmem:[%s1 + $0xa08] sm:$0xff]
    %v348 = vld [vmem:[%s1 + $0xa10] sm:$0xff]
    %v349 = vld [vmem:[%s1 + $0xa18] sm:$0xff]
    %v350 = vld [vmem:[%s1 + $0xa20] sm:$0xff]
    %v351 = vld [vmem:[%s1 + $0xa28] sm:$0xff]
    %v352 = vld [vmem:[%s1 + $0xa30] sm:$0xff]
    %v353 = vld [vmem:[%s1 + $0xa38] sm:$0xff]
    %v354 = vld [vmem:[%s1 + $0xa40] sm:$0xff]
    %v355 = vld [vmem:[%s1 + $0xa48] sm:$0xff]
    %v356 = vld [vmem:[%s1 + $0xa50] sm:$0xff]
    %v357 = vld [vmem:[%s1 + $0xa58] sm:$0xff]
    %v358 = vld [vmem:[%s1 + $0xa60] sm:$0xff]
    %v359 = vld [vmem:[%s1 + $0xa68] sm:$0xff]
    %v360 = vld [vmem:[%s1 + $0xa70] sm:$0xff]
    %v361 = vld [vmem:[%s1 + $0xa78] sm:$0xff]
    %v362 = vld [vmem:[%s1 + $0xa80] sm:$0xff]
    %v363 = vld [vmem:[%s1 + $0xa88] sm:$0xff]
    %v364 = vld [vmem:[%s1 + $0xa90] sm:$0xff]
    %v365 = vld [vmem:[%s1 + $0xa98] sm:$0xff]
    %v366 = vld [vmem:[%s1 + $0xaa0] sm:$0xff]
    %v367 = vld [vmem:[%s1 + $0xaa8] sm:$0xff]
    %v368 = vld [vmem:[%s1 + $0xab0] sm:$0xff]
    %v369 = vld [vmem:[%s1 + $0xab8] sm:$0xff]
    %v370 = vld [vmem:[%s1 + $0xac0] sm:$0xff]
    %v371 = vld [vmem:[%s1 + $0xac8] sm:$0xff]
    %v372 = vld [vmem:[%s1 + $0xad0] sm:$0xff]
    %v373 = vld [vmem:[%s1 + $0xad8] sm:$0xff]
    %v374 = vld [vmem:[%s1 + $0xae0] sm:$0xff]
    %v375 = vld [vmem:[%s1 + $0xae8] sm:$0xff]
    %v376 = vld [vmem:[%s1 + $0xaf0] sm:$0xff]
    %v377 = vld [vmem:[%s1 + $0xaf8] sm:$0xff]
    %v378 = vld [vmem:[%s1 + $0xb00] sm:$0xff]
    %v379 = vld [vmem:[%s1 + $0xb08] sm:$0xff]
    %v380 = vld [vmem:[%s1 + $0xb10] sm:$0xff]
    %v381 = vld [vmem:[%s1 + $0xb18] sm:$0xff]
    %v382 = vld [vmem:[%s1 + $0xb20] sm:$0xff]
    %v383 = vld [vmem:[%s1 + $0xb28] sm:$0xff]
    %v384 = vld [vmem:[%s1 + $0xb30] sm:$0xff]
    %v385 = vld [vmem:[%s1 + $0xb38] sm:$0xff]
    %v386 = vld [vmem:[%s1 + $0xb40] sm:$0xff]
    %v387 = vld [vmem:[%s1 + $0xb48] sm:$0xff]
    %v388 = vld [vmem:[%s1 + $0xb50] sm:$0xff]
    %v389 = vld [vmem:[%s1 + $0xb58] sm:$0xff]
    %v390 = vld [vmem:[%s1 + $0xb60] sm:$0xff]
    %v391 = vld [vmem:[%s1 + $0xb68] sm:$0xff]
    %v392 = vld [vmem:[%s1 + $0xb70] sm:$0xff]
    %v393 = vld [vmem:[%s1 + $0xb78] sm:$0xff]
    %v394 = vld [vmem:[%s1 + $0xb80] sm:$0xff]
    %v395 = vld [vmem:[%s1 + $0xb88] sm:$0xff]
    %v396 = vld [vmem:[%s1 + $0xb90] sm:$0xff]
    %v397 = vld [vmem:[%s1 + $0xb98] sm:$0xff]
    %v398 = vld [vmem:[%s1 + $0xba0] sm:$0xff]
    %v399 = vld [vmem:[%s1 + $0xba8] sm:$0xff]
    %v400 = vld [vmem:[%s1 + $0xbb0] sm:$0xff]
    %v401 = vld [vmem:[%s1 + $0xbb8] sm:$0xff]
    %v402 = vld [vmem:[%s1 + $0xbc0] sm:$0xff]
    %v403 = vld [vmem:[%s1 + $0xbc8] sm:$0xff]
    %v404 = vld [vmem:[%s1 + $0xbd0] sm:$0xff]
    %v405 = vld [vmem:[%s1 + $0xbd8] sm:$0xff]
    %v406 = vld [vmem:[%s1 + $0xbe0] sm:$0xff]
    %v407 = vld [vmem:[%s1 + $0xbe8] sm:$0xff]
    %v408 = vld [vmem:[%s1 + $0xbf0] sm:$0xff]
    %v409 = vld [vmem:[%s1 + $0xbf8] sm:$0xff]
    %v410 = vld [vmem:[%s1 + $0xc00] sm:$0xff]
    %v411 = vld [vmem:[%s1 + $0xc08] sm:$0xff]
    %v412 = vld [vmem:[%s1 + $0xc10] sm:$0xff]
    %v413 = vld [vmem:[%s1 + $0xc18] sm:$0xff]
    %v414 = vld [vmem:[%s1 + $0xc20] sm:$0xff]
    %v415 = vld [vmem:[%s1 + $0xc28] sm:$0xff]
    %v416 = vld [vmem:[%s1 + $0xc30] sm:$0xff]
    %v417 = vld [vmem:[%s1 + $0xc38] sm:$0xff]
    %v418 = vld [vmem:[%s1 + $0xc40] sm:$0xff]
    %v419 = vld [vmem:[%s1 + $0xc48] sm:$0xff]
    %v420 = vld [vmem:[%s1 + $0xc50] sm:$0xff]
    %v421 = vld [vmem:[%s1 + $0xc58] sm:$0xff]
    %v422 = vld [vmem:[%s1 + $0xc60] sm:$0xff]
    %v423 = vld [vmem:[%s1 + $0xc68] sm:$0xff]
    %v424 = vld [vmem:[%s1 + $0xc70] sm:$0xff]
    %v425 = vld [vmem:[%s1 + $0xc78] sm:$0xff]
    %v426 = vld [vmem:[%s1 + $0xc80] sm:$0xff]
    %v427 = vld [vmem:[%s1 + $0xc88] sm:$0xff]
    %v428 = vld [vmem:[%s1 + $0xc90] sm:$0xff]
    %v429 = vld [vmem:[%s1 + $0xc98] sm:$0xff]
    %v430 = vld [vmem:[%s1 + $0xca0] sm:$0xff]
    %v431 = vld [vmem:[%s1 + $0xca8] sm:$0xff]
    %v432 = vld [vmem:[%s1 + $0xcb0] sm:$0xff]
    %v433 = vld [vmem:[%s1 + $0xcb8] sm:$0xff]
    %v434 = vld [vmem:[%s1 + $0xcc0] sm:$0xff]
    %v435 = vld [vmem:[%s1 + $0xcc8] sm:$0xff]
    %v436 = vld [vmem:[%s1 + $0xcd0] sm:$0xff]
    %v437 = vld [vmem:[%s1 + $0xcd8] sm:$0xff]
    %v438 = vld [vmem:[%s1 + $0xce0] sm:$0xff]
    %v439 = vld [vmem:[%s1 + $0xce8] sm:$0xff]
    %v440 = vld [vmem:[%s1 + $0xcf0] sm:$0xff]
    %v441 = vld [vmem:[%s1 + $0xcf8] sm:$0xff]
    %v442 = vld [vmem:[%s1 + $0xd00] sm:$0xff]
    %v443 = vld [vmem:[%s1 + $0xd08] sm:$0xff]
    %v444 = vld [vmem:[%s1 + $0xd10] sm:$0xff]
    %v445 = vld [vmem:[%s1 + $0xd18] sm:$0xff]
    %v446 = vld [vmem:[%s1 + $0xd20] sm:$0xff]
    %v447 = vld [vmem:[%s1 + $0xd28] sm:$0xff]
    %v448 = vld [vmem:[%s1 + $0xd30] sm:$0xff]
    %v449 = vld [vmem:[%s1 + $0xd38] sm:$0xff]
    %v450 = vld [vmem:[%s1 + $0xd40] sm:$0xff]
    %v451 = vld [vmem:[%s1 + $0xd48] sm:$0xff]
    %v452 = vld [vmem:[%s1 + $0xd50] sm:$0xff]
    %v453 = vld [vmem:[%s1 + $0xd58] sm:$0xff]
    %v454 = vld [vmem:[%s1 + $0xd60] sm:$0xff]
    %v455 = vld [vmem:[%s1 + $0xd68] sm:$0xff]
    %v456 = vld [vmem:[%s1 + $0xd70] sm:$0xff]
    %v457 = vld [vmem:[%s1 + $0xd78] sm:$0xff]
    %v458 = vld [vmem:[%s1 + $0xd80] sm:$0xff]
    %v459 = vld [vmem:[%s1 + $0xd88] sm:$0xff]
    %v460 = vld [vmem:[%s1 + $0xd90] sm:$0xff]
    %v461 = vld [vmem:[%s1 + $0xd98] sm:$0xff]
    %v462 = vld [vmem:[%s1 + $0xda0] sm:$0xff]
    %v463 = vld [vmem:[%s1 + $0xda8] sm:$0xff]
    %v464 = vld [vmem:[%s1 + $0xdb0] sm:$0xff]
    %v465 = vld [vmem:[%s1 + $0xdb8] sm:$0xff]
    %v466 = vld [vmem:[%s1 + $0xdc0] sm:$0xff]
    %v467 = vld [vmem:[%s1 + $0xdc8] sm:$0xff]
    %v468 = vld [vmem:[%s1 + $0xdd0] sm:$0xff]
    %v469 = vld [vmem:[%s1 + $0xdd8] sm:$0xff]
    %v470 = vld [vmem:[%s1 + $0xde0] sm:$0xff]
    %v471 = vld [vmem:[%s1 + $0xde8] sm:$0xff]
    %v472 = vld [vmem:[%s1 + $0xdf0] sm:$0xff]
    %v473 = vld [vmem:[%s1 + $0xdf8] sm:$0xff]
    %v474 = vld [vmem:[%s1 + $0xe00] sm:$0xff]
    %v475 = vld [vmem:[%s1 + $0xe08] sm:$0xff]
    %v476 = vld [vmem:[%s1 + $0xe10] sm:$0xff]
    %v477 = vld [vmem:[%s1 + $0xe18] sm:$0xff]
    %v478 = vld [vmem:[%s1 + $0xe20] sm:$0xff]
    %v479 = vld [vmem:[%s1 + $0xe28] sm:$0xff]
    %v480 = vld [vmem:[%s1 + $0xe30] sm:$0xff]
    %v481 = vld [vmem:[%s1 + $0xe38] sm:$0xff]
    %v482 = vld [vmem:[%s1 + $0xe40] sm:$0xff]
    %v483 = vld [vmem:[%s1 + $0xe48] sm:$0xff]
    %v484 = vld [vmem:[%s1 + $0xe50] sm:$0xff]
    %v485 = vld [vmem:[%s1 + $0xe58] sm:$0xff]
    %v486 = vld [vmem:[%s1 + $0xe60] sm:$0xff]
    %v487 = vld [vmem:[%s1 + $0xe68] sm:$0xff]
    %v488 = vld [vmem:[%s1 + $0xe70] sm:$0xff]
    %v489 = vld [vmem:[%s1 + $0xe78] sm:$0xff]
    %v490 = vld [vmem:[%s1 + $0xe80] sm:$0xff]
    %v491 = vld [vmem:[%s1 + $0xe88] sm:$0xff]
    %v492 = vld [vmem:[%s1 + $0xe90] sm:$0xff]
    %v493 = vld [vmem:[%s1 + $0xe98] sm:$0xff]
    %v494 = vld [vmem:[%s1 + $0xea0] sm:$0xff]
    %v495 = vld [vmem:[%s1 + $0xea8] sm:$0xff]
    %v496 = vld [vmem:[%s1 + $0xeb0] sm:$0xff]
    %v497 = vld [vmem:[%s1 + $0xeb8] sm:$0xff]
    %v498 = vld [vmem:[%s1 + $0xec0] sm:$0xff]
    %v499 = vld [vmem:[%s1 + $0xec8] sm:$0xff]
    %v500 = vld [vmem:[%s1 + $0xed0] sm:$0xff]
    %v501 = vld [vmem:[%s1 + $0xed8] sm:$0xff]
    %v502 = vld [vmem:[%s1 + $0xee0] sm:$0xff]
    %v503 = vld [vmem:[%s1 + $0xee8] sm:$0xff]
    %v504 = vld [vmem:[%s1 + $0xef0] sm:$0xff]
    %v505 = vld [vmem:[%s1 + $0xef8] sm:$0xff]
    %v506 = vld [vmem:[%s1 + $0xf00] sm:$0xff]
    %v507 = vld [vmem:[%s1 + $0xf08] sm:$0xff]
    %v508 = vld [vmem:[%s1 + $0xf10] sm:$0xff]
    %v509 = vld [vmem:[%s1 + $0xf18] sm:$0xff]
    %v510 = vld [vmem:[%s1 + $0xf20] sm:$0xff]
    %v511 = vld [vmem:[%s1 + $0xf28] sm:$0xff]
    %v512 = vld [vmem:[%s1 + $0xf30] sm:$0xff]
    %v513 = vld [vmem:[%s1 + $0xf38] sm:$0xff]
    %v514 = vld [vmem:[%s1 + $0xf40] sm:$0xff]
    %v515 = vld [vmem:[%s1 + $0xf48] sm:$0xff]
    %v516 = vld [vmem:[%s1 + $0xf50] sm:$0xff]
    %v517 = vld [vmem:[%s1 + $0xf58] sm:$0xff]
    %v518 = vld [vmem:[%s1 + $0xf60] sm:$0xff]
    %v519 = vld [vmem:[%s1 + $0xf68] sm:$0xff]
    %v520 = vld [vmem:[%s1 + $0xf70] sm:$0xff]
    %v521 = vld [vmem:[%s1 + $0xf78] sm:$0xff]
    %v522 = vld [vmem:[%s1 + $0xf80] sm:$0xff]
    %v523 = vld [vmem:[%s1 + $0xf88] sm:$0xff]
    %v524 = vld [vmem:[%s1 + $0xf90] sm:$0xff]
    %v525 = vld [vmem:[%s1 + $0xf98] sm:$0xff]
    %v526 = vld [vmem:[%s1 + $0xfa0] sm:$0xff]
    %v527 = vld [vmem:[%s1 + $0xfa8] sm:$0xff]
    %v528 = vld [vmem:[%s1 + $0xfb0] sm:$0xff]
    %v529 = vld [vmem:[%s1 + $0xfb8] sm:$0xff]
    %v530 = vld [vmem:[%s1 + $0xfc0] sm:$0xff]
    %v531 = vld [vmem:[%s1 + $0xfc8] sm:$0xff]
    %v532 = vld [vmem:[%s1 + $0xfd0] sm:$0xff]
    %v533 = vld [vmem:[%s1 + $0xfd8] sm:$0xff]
    %v534 = vld [vmem:[%s1 + $0xfe0] sm:$0xff]
    %v535 = vld [vmem:[%s1 + $0xfe8] sm:$0xff]
    %v536 = vld [vmem:[%s1 + $0xff0] sm:$0xff]
    %v537 = vld [vmem:[%s1 + $0xff8] sm:$0xff]
    %v538 = vld [vmem:[%s1 + $0x1000] sm:$0xff]
    %v539 = vld [vmem:[%s1 + $0x1008] sm:$0xff]
    %v540 = vld [vmem:[%s1 + $0x1010] sm:$0xff]
    %v541 = vld [vmem:[%s1 + $0x1018] sm:$0xff]
    %v542 = vld [vmem:[%s1 + $0x1020] sm:$0xff]
    %v543 = vld [vmem:[%s1 + $0x1028] sm:$0xff]
    %v544 = vld [vmem:[%s1 + $0x1030] sm:$0xff]
    %v545 = vld [vmem:[%s1 + $0x1038] sm:$0xff]
    %v546 = vld [vmem:[%s1 + $0x1040] sm:$0xff]
    %v547 = vld [vmem:[%s1 + $0x1048] sm:$0xff]
    %v548 = vld [vmem:[%s1 + $0x1050] sm:$0xff]
    %v549 = vld [vmem:[%s1 + $0x1058] sm:$0xff]
    %v550 = vld [vmem:[%s1 + $0x1060] sm:$0xff]
    %v551 = vld [vmem:[%s1 + $0x1068] sm:$0xff]
    %v552 = vld [vmem:[%s1 + $0x1070] sm:$0xff]
    %v553 = vld [vmem:[%s1 + $0x1078] sm:$0xff]
    %v554 = vld [vmem:[%s1 + $0x1080] sm:$0xff]
    %v555 = vld [vmem:[%s1 + $0x1088] sm:$0xff]
    %v556 = vld [vmem:[%s1 + $0x1090] sm:$0xff]
    %v557 = vld [vmem:[%s1 + $0x1098] sm:$0xff]
    %v558 = vld [vmem:[%s1 + $0x10a0] sm:$0xff]
    %v559 = vld [vmem:[%s1 + $0x10a8] sm:$0xff]
    %v560 = vld [vmem:[%s1 + $0x10b0] sm:$0xff]
    %v561 = vld [vmem:[%s1 + $0x10b8] sm:$0xff]
    %v562 = vld [vmem:[%s1 + $0x10c0] sm:$0xff]
    %v563 = vld [vmem:[%s1 + $0x10c8] sm:$0xff]
    %v564 = vld [vmem:[%s1 + $0x10d0] sm:$0xff]
    %v565 = vld [vmem:[%s1 + $0x10d8] sm:$0xff]
    %v566 = vld [vmem:[%s1 + $0x10e0] sm:$0xff]
    %v567 = vld [vmem:[%s1 + $0x10e8] sm:$0xff]
    %v568 = vld [vmem:[%s1 + $0x10f0] sm:$0xff]
    %v569 = vld [vmem:[%s1 + $0x10f8] sm:$0xff]
    %v570 = vld [vmem:[%s1 + $0x1100] sm:$0xff]
    %v571 = vld [vmem:[%s1 + $0x1108] sm:$0xff]
    %v572 = vld [vmem:[%s1 + $0x1110] sm:$0xff]
    %v573 = vld [vmem:[%s1 + $0x1118] sm:$0xff]
    %v574 = vld [vmem:[%s1 + $0x1120] sm:$0xff]
    %v575 = vld [vmem:[%s1 + $0x1128] sm:$0xff]
    %v576 = vld [vmem:[%s1 + $0x1130] sm:$0xff]
    %v577 = vld [vmem:[%s1 + $0x1138] sm:$0xff]
    %v578 = vld [vmem:[%s1 + $0x1140] sm:$0xff]
    %v579 = vld [vmem:[%s1 + $0x1148] sm:$0xff]
    %v580 = vld [vmem:[%s1 + $0x1150] sm:$0xff]
    %v581 = vld [vmem:[%s1 + $0x1158] sm:$0xff]
    %v582 = vld [vmem:[%s1 + $0x1160] sm:$0xff]
    %v583 = vld [vmem:[%s1 + $0x1168] sm:$0xff]
    %v584 = vld [vmem:[%s1 + $0x1170] sm:$0xff]
    %v585 = vld [vmem:[%s1 + $0x1178] sm:$0xff]
    %v586 = vld [vmem:[%s1 + $0x1180] sm:$0xff]
    %v587 = vld [vmem:[%s1 + $0x1188] sm:$0xff]
    %v588 = vld [vmem:[%s1 + $0x1190] sm:$0xff]
    %v589 = vld [vmem:[%s1 + $0x1198] sm:$0xff]
    %v590 = vld [vmem:[%s1 + $0x11a0] sm:$0xff]
    %v591 = vld [vmem:[%s1 + $0x11a8] sm:$0xff]
    %v592 = vld [vmem:[%s1 + $0x11b0] sm:$0xff]
    %v593 = vld [vmem:[%s1 + $0x11b8] sm:$0xff]
    %v594 = vld [vmem:[%s1 + $0x11c0] sm:$0xff]
    %v595 = vld [vmem:[%s1 + $0x11c8] sm:$0xff]
    %v596 = vld [vmem:[%s1 + $0x11d0] sm:$0xff]
    %v597 = vld [vmem:[%s1 + $0x11d8] sm:$0xff]
    %v598 = vld [vmem:[%s1 + $0x11e0] sm:$0xff]
    %v599 = vld [vmem:[%s1 + $0x11e8] sm:$0xff]
    %v600 = vld [vmem:[%s1 + $0x11f0] sm:$0xff]
    %v601 = vld [vmem:[%s1 + $0x11f8] sm:$0xff]
    %v602 = vld [vmem:[%s1 + $0x1200] sm:$0xff]
    %v603 = vld [vmem:[%s1 + $0x1208] sm:$0xff]
    %v604 = vld [vmem:[%s1 + $0x1210] sm:$0xff]
    %v605 = vld [vmem:[%s1 + $0x1218] sm:$0xff]
    %v606 = vld [vmem:[%s1 + $0x1220] sm:$0xff]
    %v607 = vld [vmem:[%s1 + $0x1228] sm:$0xff]
    %v608 = vld [vmem:[%s1 + $0x1230] sm:$0xff]
    %v609 = vld [vmem:[%s1 + $0x1238] sm:$0xff]
    %v610 = vld [vmem:[%s1 + $0x1240] sm:$0xff]
    %v611 = vld [vmem:[%s1 + $0x1248] sm:$0xff]
    %v612 = vld [vmem:[%s1 + $0x1250] sm:$0xff]
    %v613 = vld [vmem:[%s1 + $0x1258] sm:$0xff]
    %v614 = vld [vmem:[%s1 + $0x1260] sm:$0xff]
    %v615 = vld [vmem:[%s1 + $0x1268] sm:$0xff]
    %v616 = vld [vmem:[%s1 + $0x1270] sm:$0xff]
    %v617 = vld [vmem:[%s1 + $0x1278] sm:$0xff]
    %v618 = vld [vmem:[%s1 + $0x1280] sm:$0xff]
    %v619 = vld [vmem:[%s1 + $0x1288] sm:$0xff]
    %v620 = vld [vmem:[%s1 + $0x1290] sm:$0xff]
    %v621 = vld [vmem:[%s1 + $0x1298] sm:$0xff]
    %v622 = vld [vmem:[%s1 + $0x12a0] sm:$0xff]
    %v623 = vld [vmem:[%s1 + $0x12a8] sm:$0xff]
    %v624 = vld [vmem:[%s1 + $0x12b0] sm:$0xff]
    %v625 = vld [vmem:[%s1 + $0x12b8] sm:$0xff]
    %v626 = vld [vmem:[%s1 + $0x12c0] sm:$0xff]
    %v627 = vld [vmem:[%s1 + $0x12c8] sm:$0xff]
    %v628 = vld [vmem:[%s1 + $0x12d0] sm:$0xff]
    %v629 = vld [vmem:[%s1 + $0x12d8] sm:$0xff]
    %v630 = vld [vmem:[%s1 + $0x12e0] sm:$0xff]
    %v631 = vld [vmem:[%s1 + $0x12e8] sm:$0xff]
    %v632 = vld [vmem:[%s1 + $0x12f0] sm:$0xff]
    %v633 = vld [vmem:[%s1 + $0x12f8] sm:$0xff]
    %v634 = vld [vmem:[%s1 + $0x1300] sm:$0xff]
    %v635 = vld [vmem:[%s1 + $0x1308] sm:$0xff]
    %v636 = vld [vmem:[%s1 + $0x1310] sm:$0xff]
    %v637 = vld [vmem:[%s1 + $0x1318] sm:$0xff]
    %v638 = vld [vmem:[%s1 + $0x1320] sm:$0xff]
    %v639 = vld [vmem:[%s1 + $0x1328] sm:$0xff]
    %v640 = vld [vmem:[%s1 + $0x1330] sm:$0xff]
    %v641 = vld [vmem:[%s1 + $0x1338] sm:$0xff]
    %v642 = vld [vmem:[%s1 + $0x1340] sm:$0xff]
    %v643 = vld [vmem:[%s1 + $0x1348] sm:$0xff]
    %v644 = vld [vmem:[%s1 + $0x1350] sm:$0xff]
    %v645 = vld [vmem:[%s1 + $0x1358] sm:$0xff]
    %v646 = vld [vmem:[%s1 + $0x1360] sm:$0xff]
    %v647 = vld [vmem:[%s1 + $0x1368] sm:$0xff]
    %v648 = vld [vmem:[%s1 + $0x1370] sm:$0xff]
    %v649 = vld [vmem:[%s1 + $0x1378] sm:$0xff]
    %v650 = vld [vmem:[%s1 + $0x1380] sm:$0xff]
    %v651 = vld [vmem:[%s1 + $0x1388] sm:$0xff]
    %v652 = vld [vmem:[%s1 + $0x1390] sm:$0xff]
    %v653 = vld [vmem:[%s1 + $0x1398] sm:$0xff]
    %v654 = vld [vmem:[%s1 + $0x13a0] sm:$0xff]
    %v655 = vld [vmem:[%s1 + $0x13a8] sm:$0xff]
    %v656 = vld [vmem:[%s1 + $0x13b0] sm:$0xff]
    %v657 = vld [vmem:[%s1 + $0x13b8] sm:$0xff]
    %v658 = vld [vmem:[%s1 + $0x13c0] sm:$0xff]
    %v659 = vld [vmem:[%s1 + $0x13c8] sm:$0xff]
    %v660 = vld [vmem:[%s1 + $0x13d0] sm:$0xff]
    %v661 = vld [vmem:[%s1 + $0x13d8] sm:$0xff]
    %v662 = vld [vmem:[%s1 + $0x13e0] sm:$0xff]
    %v663 = vld [vmem:[%s1 + $0x13e8] sm:$0xff]
    %v664 = vld [vmem:[%s1 + $0x13f0] sm:$0xff]
    %v665 = vld [vmem:[%s1 + $0x13f8] sm:$0xff]
    %v666 = vld [vmem:[%s1 + $0x1400] sm:$0xff]
    %v667 = vld [vmem:[%s1 + $0x1408] sm:$0xff]
    %v668 = vld [vmem:[%s1 + $0x1410] sm:$0xff]
    %v669 = vld [vmem:[%s1 + $0x1418] sm:$0xff]
    %v670 = vld [vmem:[%s1 + $0x1420] sm:$0xff]
    %v671 = vld [vmem:[%s1 + $0x1428] sm:$0xff]
    %v672 = vld [vmem:[%s1 + $0x1430] sm:$0xff]
    %v673 = vld [vmem:[%s1 + $0x1438] sm:$0xff]
    %v674 = vld [vmem:[%s1 + $0x1440] sm:$0xff]
    %v675 = vld [vmem:[%s1 + $0x1448] sm:$0xff]
    %v676 = vld [vmem:[%s1 + $0x1450] sm:$0xff]
    %v677 = vld [vmem:[%s1 + $0x1458] sm:$0xff]
    %v678 = vld [vmem:[%s1 + $0x1460] sm:$0xff]
    %v679 = vld [vmem:[%s1 + $0x1468] sm:$0xff]
    %v680 = vld [vmem:[%s1 + $0x1470] sm:$0xff]
    %v681 = vld [vmem:[%s1 + $0x1478] sm:$0xff]
    %v682 = vld [vmem:[%s1 + $0x1480] sm:$0xff]
    %v683 = vld [vmem:[%s1 + $0x1488] sm:$0xff]
    %v684 = vld [vmem:[%s1 + $0x1490] sm:$0xff]
    %v685 = vld [vmem:[%s1 + $0x1498] sm:$0xff]
    %v686 = vld [vmem:[%s1 + $0x14a0] sm:$0xff]
    %v687 = vld [vmem:[%s1 + $0x14a8] sm:$0xff]
    %v688 = vld [vmem:[%s1 + $0x14b0] sm:$0xff]
    %v689 = vld [vmem:[%s1 + $0x14b8] sm:$0xff]
    %v690 = vld [vmem:[%s1 + $0x14c0] sm:$0xff]
    %v691 = vld [vmem:[%s1 + $0x14c8] sm:$0xff]
    %v692 = vld [vmem:[%s1 + $0x14d0] sm:$0xff]
    %v693 = vld [vmem:[%s1 + $0x14d8] sm:$0xff]
    %v694 = vld [vmem:[%s1 + $0x14e0] sm:$0xff]
    %v695 = vld [vmem:[%s1 + $0x14e8] sm:$0xff]
    %v696 = vld [vmem:[%s1 + $0x14f0] sm:$0xff]
    %v697 = vld [vmem:[%s1 + $0x14f8] sm:$0xff]
    %v698 = vld [vmem:[%s1 + $0x1500] sm:$0xff]
    %v699 = vld [vmem:[%s1 + $0x1508] sm:$0xff]
    %v700 = vld [vmem:[%s1 + $0x1510] sm:$0xff]
    %v701 = vld [vmem:[%s1 + $0x1518] sm:$0xff]
    %v702 = vld [vmem:[%s1 + $0x1520] sm:$0xff]
    %v703 = vld [vmem:[%s1 + $0x1528] sm:$0xff]
    %v704 = vld [vmem:[%s1 + $0x1530] sm:$0xff]
    %v705 = vld [vmem:[%s1 + $0x1538] sm:$0xff]
    %v706 = vld [vmem:[%s1 + $0x1540] sm:$0xff]
    %v707 = vld [vmem:[%s1 + $0x1548] sm:$0xff]
    %v708 = vld [vmem:[%s1 + $0x1550] sm:$0xff]
    %v709 = vld [vmem:[%s1 + $0x1558] sm:$0xff]
    %v710 = vld [vmem:[%s1 + $0x1560] sm:$0xff]
    %v711 = vld [vmem:[%s1 + $0x1568] sm:$0xff]
    %v712 = vld [vmem:[%s1 + $0x1570] sm:$0xff]
    %v713 = vld [vmem:[%s1 + $0x1578] sm:$0xff]
    %v714 = vld [vmem:[%s1 + $0x1580] sm:$0xff]
    %v715 = vld [vmem:[%s1 + $0x1588] sm:$0xff]
    %v716 = vld [vmem:[%s1 + $0x1590] sm:$0xff]
    %v717 = vld [vmem:[%s1 + $0x1598] sm:$0xff]
    %v718 = vld [vmem:[%s1 + $0x15a0] sm:$0xff]
    %v719 = vld [vmem:[%s1 + $0x15a8] sm:$0xff]
    %v720 = vld [vmem:[%s1 + $0x15b0] sm:$0xff]
    %v721 = vld [vmem:[%s1 + $0x15b8] sm:$0xff]
    %v722 = vld [vmem:[%s1 + $0x15c0] sm:$0xff]
    %v723 = vld [vmem:[%s1 + $0x15c8] sm:$0xff]
    %v724 = vld [vmem:[%s1 + $0x15d0] sm:$0xff]
    %v725 = vld [vmem:[%s1 + $0x15d8] sm:$0xff]
    %v726 = vld [vmem:[%s1 + $0x15e0] sm:$0xff]
    %v727 = vld [vmem:[%s1 + $0x15e8] sm:$0xff]
    %v728 = vld [vmem:[%s1 + $0x15f0] sm:$0xff]
    %v729 = vld [vmem:[%s1 + $0x15f8] sm:$0xff]
    %v730 = vld [vmem:[%s1 + $0x1600] sm:$0xff]
    %v731 = vld [vmem:[%s1 + $0x1608] sm:$0xff]
    %v732 = vld [vmem:[%s1 + $0x1610] sm:$0xff]
    %v733 = vld [vmem:[%s1 + $0x1618] sm:$0xff]
    %v734 = vld [vmem:[%s1 + $0x1620] sm:$0xff]
    %v735 = vld [vmem:[%s1 + $0x1628] sm:$0xff]
    %v736 = vld [vmem:[%s1 + $0x1630] sm:$0xff]
    %v737 = vld [vmem:[%s1 + $0x1638] sm:$0xff]
    %v738 = vld [vmem:[%s1 + $0x1640] sm:$0xff]
    %v739 = vld [vmem:[%s1 + $0x1648] sm:$0xff]
    %v740 = vld [vmem:[%s1 + $0x1650] sm:$0xff]
    %v741 = vld [vmem:[%s1 + $0x1658] sm:$0xff]
    %v742 = vld [vmem:[%s1 + $0x1660] sm:$0xff]
    %v743 = vld [vmem:[%s1 + $0x1668] sm:$0xff]
    %v744 = vld [vmem:[%s1 + $0x1670] sm:$0xff]
    %v745 = vld [vmem:[%s1 + $0x1678] sm:$0xff]
    %v746 = vld [vmem:[%s1 + $0x1680] sm:$0xff]
    %v747 = vld [vmem:[%s1 + $0x1688] sm:$0xff]
    %v748 = vld [vmem:[%s1 + $0x1690] sm:$0xff]
    %v749 = vld [vmem:[%s1 + $0x1698] sm:$0xff]
    %v750 = vld [vmem:[%s1 + $0x16a0] sm:$0xff]
    %v751 = vld [vmem:[%s1 + $0x16a8] sm:$0xff]
    %v752 = vld [vmem:[%s1 + $0x16b0] sm:$0xff]
    %v753 = vld [vmem:[%s1 + $0x16b8] sm:$0xff]
    %v754 = vld [vmem:[%s1 + $0x16c0] sm:$0xff]
    %v755 = vld [vmem:[%s1 + $0x16c8] sm:$0xff]
    %v756 = vld [vmem:[%s1 + $0x16d0] sm:$0xff]
    %v757 = vld [vmem:[%s1 + $0x16d8] sm:$0xff]
    %v758 = vld [vmem:[%s1 + $0x16e0] sm:$0xff]
    %v759 = vld [vmem:[%s1 + $0x16e8] sm:$0xff]
    %v760 = vld [vmem:[%s1 + $0x16f0] sm:$0xff]
    %v761 = vld [vmem:[%s1 + $0x16f8] sm:$0xff]
    %v762 = vld [vmem:[%s1 + $0x1700] sm:$0xff]
    %v763 = vld [vmem:[%s1 + $0x1708] sm:$0xff]
    %v764 = vld [vmem:[%s1 + $0x1710] sm:$0xff]
    %v765 = vld [vmem:[%s1 + $0x1718] sm:$0xff]
    %v766 = vld [vmem:[%s1 + $0x1720] sm:$0xff]
    %v767 = vld [vmem:[%s1 + $0x1728] sm:$0xff]
    %v768 = vld [vmem:[%s1 + $0x1730] sm:$0xff]
    %v769 = vld [vmem:[%s1 + $0x1738] sm:$0xff]
    %v770 = vld [vmem:[%s1 + $0x1740] sm:$0xff]
    %v771 = vld [vmem:[%s1 + $0x1748] sm:$0xff]
    %v772 = vld [vmem:[%s1 + $0x1750] sm:$0xff]
    %v773 = vld [vmem:[%s1 + $0x1758] sm:$0xff]
    %v774 = vld [vmem:[%s1 + $0x1760] sm:$0xff]
    %v775 = vld [vmem:[%s1 + $0x1768] sm:$0xff]
    %v776 = vld [vmem:[%s1 + $0x1770] sm:$0xff]
    %v777 = vld [vmem:[%s1 + $0x1778] sm:$0xff]
    %v778 = vld [vmem:[%s1 + $0x1780] sm:$0xff]
    %v779 = vld [vmem:[%s1 + $0x1788] sm:$0xff]
    %v780 = vld [vmem:[%s1 + $0x1790] sm:$0xff]
    %v781 = vld [vmem:[%s1 + $0x1798] sm:$0xff]
    %v782 = vld [vmem:[%s1 + $0x17a0] sm:$0xff]
    %v783 = vld [vmem:[%s1 + $0x17a8] sm:$0xff]
    %v784 = vld [vmem:[%s1 + $0x17b0] sm:$0xff]
    %v785 = vld [vmem:[%s1 + $0x17b8] sm:$0xff]
    %v786 = vld [vmem:[%s1 + $0x17c0] sm:$0xff]
    %v787 = vld [vmem:[%s1 + $0x17c8] sm:$0xff]
    %v788 = vld [vmem:[%s1 + $0x17d0] sm:$0xff]
    %v789 = vld [vmem:[%s1 + $0x17d8] sm:$0xff]
    %v790 = vld [vmem:[%s1 + $0x17e0] sm:$0xff]
    %v791 = vld [vmem:[%s1 + $0x17e8] sm:$0xff]
    %v792 = vld [vmem:[%s1 + $0x17f0] sm:$0xff]
    %v793 = vld [vmem:[%s1 + $0x17f8] sm:$0xff]
    %v794 = vld [vmem:[%s1 + $0x1800] sm:$0xff]
    %v795 = vld [vmem:[%s1 + $0x1808] sm:$0xff]
    %v796 = vld [vmem:[%s1 + $0x1810] sm:$0xff]
    %v797 = vld [vmem:[%s1 + $0x1818] sm:$0xff]
    %v798 = vld [vmem:[%s1 + $0x1820] sm:$0xff]
    %v799 = vld [vmem:[%s1 + $0x1828] sm:$0xff]
    %v800 = vld [vmem:[%s1 + $0x1830] sm:$0xff]
    %v801 = vld [vmem:[%s1 + $0x1838] sm:$0xff]
    %v802 = vld [vmem:[%s1 + $0x1840] sm:$0xff]
    %v803 = vld [vmem:[%s1 + $0x1848] sm:$0xff]
    %v804 = vld [vmem:[%s1 + $0x1850] sm:$0xff]
    %v805 = vld [vmem:[%s1 + $0x1858] sm:$0xff]
    %v806 = vld [vmem:[%s1 + $0x1860] sm:$0xff]
    %v807 = vld [vmem:[%s1 + $0x1868] sm:$0xff]
    %v808 = vld [vmem:[%s1 + $0x1870] sm:$0xff]
    %v809 = vld [vmem:[%s1 + $0x1878] sm:$0xff]
    %v810 = vld [vmem:[%s1 + $0x1880] sm:$0xff]
    %v811 = vld [vmem:[%s1 + $0x1888] sm:$0xff]
    %v812 = vld [vmem:[%s1 + $0x1890] sm:$0xff]
    %v813 = vld [vmem:[%s1 + $0x1898] sm:$0xff]
    %v814 = vld [vmem:[%s1 + $0x18a0] sm:$0xff]
    %v815 = vld [vmem:[%s1 + $0x18a8] sm:$0xff]
    %v816 = vld [vmem:[%s1 + $0x18b0] sm:$0xff]
    %v817 = vld [vmem:[%s1 + $0x18b8] sm:$0xff]
    %v818 = vld [vmem:[%s1 + $0x18c0] sm:$0xff]
    %v819 = vld [vmem:[%s1 + $0x18c8] sm:$0xff]
    %v820 = vld [vmem:[%s1 + $0x18d0] sm:$0xff]
    %v821 = vld [vmem:[%s1 + $0x18d8] sm:$0xff]
    %v822 = vld [vmem:[%s1 + $0x18e0] sm:$0xff]
    %v823 = vld [vmem:[%s1 + $0x18e8] sm:$0xff]
    %v824 = vld [vmem:[%s1 + $0x18f0] sm:$0xff]
    %v825 = vld [vmem:[%s1 + $0x18f8] sm:$0xff]
    %v826 = vld [vmem:[%s1 + $0x1900] sm:$0xff]
    %v827 = vld [vmem:[%s1 + $0x1908] sm:$0xff]
    %v828 = vld [vmem:[%s1 + $0x1910] sm:$0xff]
    %v829 = vld [vmem:[%s1 + $0x1918] sm:$0xff]
    %v830 = vld [vmem:[%s1 + $0x1920] sm:$0xff]
    %v831 = vld [vmem:[%s1 + $0x1928] sm:$0xff]
    %v832 = vld [vmem:[%s1 + $0x1930] sm:$0xff]
    %v833 = vld [vmem:[%s1 + $0x1938] sm:$0xff]
    %v834 = vld [vmem:[%s1 + $0x1940] sm:$0xff]
    %v835 = vld [vmem:[%s1 + $0x1948] sm:$0xff]
    %v836 = vld [vmem:[%s1 + $0x1950] sm:$0xff]
    %v837 = vld [vmem:[%s1 + $0x1958] sm:$0xff]
    %v838 = vld [vmem:[%s1 + $0x1960] sm:$0xff]
    %v839 = vld [vmem:[%s1 + $0x1968] sm:$0xff]
    %v840 = vld [vmem:[%s1 + $0x1970] sm:$0xff]
    %v841 = vld [vmem:[%s1 + $0x1978] sm:$0xff]
    %v842 = vld [vmem:[%s1 + $0x1980] sm:$0xff]
    %v843 = vld [vmem:[%s1 + $0x1988] sm:$0xff]
    %v844 = vld [vmem:[%s1 + $0x1990] sm:$0xff]
    %v845 = vld [vmem:[%s1 + $0x1998] sm:$0xff]
    %v846 = vld [vmem:[%s1 + $0x19a0] sm:$0xff]
    %v847 = vld [vmem:[%s1 + $0x19a8] sm:$0xff]
    %v848 = vld [vmem:[%s1 + $0x19b0] sm:$0xff]
    %v849 = vld [vmem:[%s1 + $0x19b8] sm:$0xff]
    %v850 = vld [vmem:[%s1 + $0x19c0] sm:$0xff]
    %v851 = vld [vmem:[%s1 + $0x19c8] sm:$0xff]
    %v852 = vld [vmem:[%s1 + $0x19d0] sm:$0xff]
    %v853 = vld [vmem:[%s1 + $0x19d8] sm:$0xff]
    %v854 = vld [vmem:[%s1 + $0x19e0] sm:$0xff]
    %v855 = vld [vmem:[%s1 + $0x19e8] sm:$0xff]
    %v856 = vld [vmem:[%s1 + $0x19f0] sm:$0xff]
    %v857 = vld [vmem:[%s1 + $0x19f8] sm:$0xff]
    %v858 = vld [vmem:[%s1 + $0x1a00] sm:$0xff]
    %v859 = vld [vmem:[%s1 + $0x1a08] sm:$0xff]
    %v860 = vld [vmem:[%s1 + $0x1a10] sm:$0xff]
    %v861 = vld [vmem:[%s1 + $0x1a18] sm:$0xff]
    %v862 = vld [vmem:[%s1 + $0x1a20] sm:$0xff]
    %v863 = vld [vmem:[%s1 + $0x1a28] sm:$0xff]
    %v864 = vld [vmem:[%s1 + $0x1a30] sm:$0xff]
    %v865 = vld [vmem:[%s1 + $0x1a38] sm:$0xff]
    %v866 = vld [vmem:[%s1 + $0x1a40] sm:$0xff]
    %v867 = vld [vmem:[%s1 + $0x1a48] sm:$0xff]
    %v868 = vld [vmem:[%s1 + $0x1a50] sm:$0xff]
    %v869 = vld [vmem:[%s1 + $0x1a58] sm:$0xff]
    %v870 = vld [vmem:[%s1 + $0x1a60] sm:$0xff]
    %v871 = vld [vmem:[%s1 + $0x1a68] sm:$0xff]
    %v872 = vld [vmem:[%s1 + $0x1a70] sm:$0xff]
    %v873 = vld [vmem:[%s1 + $0x1a78] sm:$0xff]
    %v874 = vld [vmem:[%s1 + $0x1a80] sm:$0xff]
    %v875 = vld [vmem:[%s1 + $0x1a88] sm:$0xff]
    %v876 = vld [vmem:[%s1 + $0x1a90] sm:$0xff]
    %v877 = vld [vmem:[%s1 + $0x1a98] sm:$0xff]
    %v878 = vld [vmem:[%s1 + $0x1aa0] sm:$0xff]
    %v879 = vld [vmem:[%s1 + $0x1aa8] sm:$0xff]
    %v880 = vld [vmem:[%s1 + $0x1ab0] sm:$0xff]
    %v881 = vld [vmem:[%s1 + $0x1ab8] sm:$0xff]
    %v882 = vld [vmem:[%s1 + $0x1ac0] sm:$0xff]
    %v883 = vld [vmem:[%s1 + $0x1ac8] sm:$0xff]
    %v884 = vld [vmem:[%s1 + $0x1ad0] sm:$0xff]
    %v885 = vld [vmem:[%s1 + $0x1ad8] sm:$0xff]
    %v886 = vld [vmem:[%s1 + $0x1ae0] sm:$0xff]
    %v887 = vld [vmem:[%s1 + $0x1ae8] sm:$0xff]
    %v888 = vld [vmem:[%s1 + $0x1af0] sm:$0xff]
    %v889 = vld [vmem:[%s1 + $0x1af8] sm:$0xff]
    %v890 = vld [vmem:[%s1 + $0x1b00] sm:$0xff]
    %v891 = vld [vmem:[%s1 + $0x1b08] sm:$0xff]
    %v892 = vld [vmem:[%s1 + $0x1b10] sm:$0xff]
    %v893 = vld [vmem:[%s1 + $0x1b18] sm:$0xff]
    %v894 = vld [vmem:[%s1 + $0x1b20] sm:$0xff]
    %v895 = vld [vmem:[%s1 + $0x1b28] sm:$0xff]
    %v896 = vld [vmem:[%s1 + $0x1b30] sm:$0xff]
    %v897 = vld [vmem:[%s1 + $0x1b38] sm:$0xff]
    %v898 = vld [vmem:[%s1 + $0x1b40] sm:$0xff]
    %v899 = vld [vmem:[%s1 + $0x1b48] sm:$0xff]
    %v900 = vld [vmem:[%s1 + $0x1b50] sm:$0xff]
    %v901 = vld [vmem:[%s1 + $0x1b58] sm:$0xff]
    %v902 = vld [vmem:[%s1 + $0x1b60] sm:$0xff]
    %v903 = vld [vmem:[%s1 + $0x1b68] sm:$0xff]
    %v904 = vld [vmem:[%s1 + $0x1b70] sm:$0xff]
    %v905 = vld [vmem:[%s1 + $0x1b78] sm:$0xff]
    %v906 = vld [vmem:[%s1 + $0x1b80] sm:$0xff]
    %v907 = vld [vmem:[%s1 + $0x1b88] sm:$0xff]
    %v908 = vld [vmem:[%s1 + $0x1b90] sm:$0xff]
    %v909 = vld [vmem:[%s1 + $0x1b98] sm:$0xff]
    %v910 = vld [vmem:[%s1 + $0x1ba0] sm:$0xff]
    %v911 = vld [vmem:[%s1 + $0x1ba8] sm:$0xff]
    %v912 = vld [vmem:[%s1 + $0x1bb0] sm:$0xff]
    %v913 = vld [vmem:[%s1 + $0x1bb8] sm:$0xff]
    %v914 = vld [vmem:[%s1 + $0x1bc0] sm:$0xff]
    %v915 = vld [vmem:[%s1 + $0x1bc8] sm:$0xff]
    %v916 = vld [vmem:[%s1 + $0x1bd0] sm:$0xff]
    %v917 = vld [vmem:[%s1 + $0x1bd8] sm:$0xff]
    %v918 = vld [vmem:[%s1 + $0x1be0] sm:$0xff]
    %v919 = vld [vmem:[%s1 + $0x1be8] sm:$0xff]
    %v920 = vld [vmem:[%s1 + $0x1bf0] sm:$0xff]
    %v921 = vld [vmem:[%s1 + $0x1bf8] sm:$0xff]
    %v922 = vld [vmem:[%s1 + $0x1c00] sm:$0xff]
    %v923 = vld [vmem:[%s1 + $0x1c08] sm:$0xff]
    %v924 = vld [vmem:[%s1 + $0x1c10] sm:$0xff]
    %v925 = vld [vmem:[%s1 + $0x1c18] sm:$0xff]
    %v926 = vld [vmem:[%s1 + $0x1c20] sm:$0xff]
    %v927 = vld [vmem:[%s1 + $0x1c28] sm:$0xff]
    %v928 = vld [vmem:[%s1 + $0x1c30] sm:$0xff]
    %v929 = vld [vmem:[%s1 + $0x1c38] sm:$0xff]
    %v930 = vld [vmem:[%s1 + $0x1c40] sm:$0xff]
    %v931 = vld [vmem:[%s1 + $0x1c48] sm:$0xff]
    %v932 = vld [vmem:[%s1 + $0x1c50] sm:$0xff]
    %v933 = vld [vmem:[%s1 + $0x1c58] sm:$0xff]
    %v934 = vld [vmem:[%s1 + $0x1c60] sm:$0xff]
    %v935 = vld [vmem:[%s1 + $0x1c68] sm:$0xff]
    %v936 = vld [vmem:[%s1 + $0x1c70] sm:$0xff]
    %v937 = vld [vmem:[%s1 + $0x1c78] sm:$0xff]
    %v938 = vld [vmem:[%s1 + $0x1c80] sm:$0xff]
    %v939 = vld [vmem:[%s1 + $0x1c88] sm:$0xff]
    %v940 = vld [vmem:[%s1 + $0x1c90] sm:$0xff]
    %v941 = vld [vmem:[%s1 + $0x1c98] sm:$0xff]
    %v942 = vld [vmem:[%s1 + $0x1ca0] sm:$0xff]
    %v943 = vld [vmem:[%s1 + $0x1ca8] sm:$0xff]
    %v944 = vld [vmem:[%s1 + $0x1cb0] sm:$0xff]
    %v945 = vld [vmem:[%s1 + $0x1cb8] sm:$0xff]
    %v946 = vld [vmem:[%s1 + $0x1cc0] sm:$0xff]
    %v947 = vld [vmem:[%s1 + $0x1cc8] sm:$0xff]
    %v948 = vld [vmem:[%s1 + $0x1cd0] sm:$0xff]
    %v949 = vld [vmem:[%s1 + $0x1cd8] sm:$0xff]
    %v950 = vld [vmem:[%s1 + $0x1ce0] sm:$0xff]
    %v951 = vld [vmem:[%s1 + $0x1ce8] sm:$0xff]
    %v952 = vld [vmem:[%s1 + $0x1cf0] sm:$0xff]
    %v953 = vld [vmem:[%s1 + $0x1cf8] sm:$0xff]
    %v954 = vld [vmem:[%s1 + $0x1d00] sm:$0xff]
    %v955 = vld [vmem:[%s1 + $0x1d08] sm:$0xff]
    %v956 = vld [vmem:[%s1 + $0x1d10] sm:$0xff]
    %v957 = vld [vmem:[%s1 + $0x1d18] sm:$0xff]
    %v958 = vld [vmem:[%s1 + $0x1d20] sm:$0xff]
    %v959 = vld [vmem:[%s1 + $0x1d28] sm:$0xff]
    %v960 = vld [vmem:[%s1 + $0x1d30] sm:$0xff]
    %v961 = vld [vmem:[%s1 + $0x1d38] sm:$0xff]
    %v962 = vld [vmem:[%s1 + $0x1d40] sm:$0xff]
    %v963 = vld [vmem:[%s1 + $0x1d48] sm:$0xff]
    %v964 = vld [vmem:[%s1 + $0x1d50] sm:$0xff]
    %v965 = vld [vmem:[%s1 + $0x1d58] sm:$0xff]
    %v966 = vld [vmem:[%s1 + $0x1d60] sm:$0xff]
    %v967 = vld [vmem:[%s1 + $0x1d68] sm:$0xff]
    %v968 = vld [vmem:[%s1 + $0x1d70] sm:$0xff]
    %v969 = vld [vmem:[%s1 + $0x1d78] sm:$0xff]
    %v970 = vld [vmem:[%s1 + $0x1d80] sm:$0xff]
    %v971 = vld [vmem:[%s1 + $0x1d88] sm:$0xff]
    %v972 = vld [vmem:[%s1 + $0x1d90] sm:$0xff]
    %v973 = vld [vmem:[%s1 + $0x1d98] sm:$0xff]
    %v974 = vld [vmem:[%s1 + $0x1da0] sm:$0xff]
    %v975 = vld [vmem:[%s1 + $0x1da8] sm:$0xff]
    %v976 = vld [vmem:[%s1 + $0x1db0] sm:$0xff]
    %v977 = vld [vmem:[%s1 + $0x1db8] sm:$0xff]
    %v978 = vld [vmem:[%s1 + $0x1dc0] sm:$0xff]
    %v979 = vld [vmem:[%s1 + $0x1dc8] sm:$0xff]
    %v980 = vld [vmem:[%s1 + $0x1dd0] sm:$0xff]
    %v981 = vld [vmem:[%s1 + $0x1dd8] sm:$0xff]
    %v982 = vld [vmem:[%s1 + $0x1de0] sm:$0xff]
    %v983 = vld [vmem:[%s1 + $0x1de8] sm:$0xff]
    %v984 = vld [vmem:[%s1 + $0x1df0] sm:$0xff]
    %v985 = vld [vmem:[%s1 + $0x1df8] sm:$0xff]
    %v986 = vld [vmem:[%s1 + $0x1e00] sm:$0xff]
    %v987 = vld [vmem:[%s1 + $0x1e08] sm:$0xff]
    %v988 = vld [vmem:[%s1 + $0x1e10] sm:$0xff]
    %v989 = vld [vmem:[%s1 + $0x1e18] sm:$0xff]
    %v990 = vld [vmem:[%s1 + $0x1e20] sm:$0xff]
    %v991 = vld [vmem:[%s1 + $0x1e28] sm:$0xff]
    %v992 = vld [vmem:[%s1 + $0x1e30] sm:$0xff]
    %v993 = vld [vmem:[%s1 + $0x1e38] sm:$0xff]
    %v994 = vld [vmem:[%s1 + $0x1e40] sm:$0xff]
    %v995 = vld [vmem:[%s1 + $0x1e48] sm:$0xff]
    %v996 = vld [vmem:[%s1 + $0x1e50] sm:$0xff]
    %v997 = vld [vmem:[%s1 + $0x1e58] sm:$0xff]
    %v998 = vld [vmem:[%s1 + $0x1e60] sm:$0xff]
    %v999 = vld [vmem:[%s1 + $0x1e68] sm:$0xff]
    %v1000 = vld [vmem:[%s1 + $0x1e70] sm:$0xff]
    %v1001 = vld [vmem:[%s1 + $0x1e78] sm:$0xff]
    %v1002 = vld [vmem:[%s1 + $0x1e80] sm:$0xff]
    %v1003 = vld [vmem:[%s1 + $0x1e88] sm:$0xff]
    %v1004 = vld [vmem:[%s1 + $0x1e90] sm:$0xff]
    %v1005 = vld [vmem:[%s1 + $0x1e98] sm:$0xff]
    %v1006 = vld [vmem:[%s1 + $0x1ea0] sm:$0xff]
    %v1007 = vld [vmem:[%s1 + $0x1ea8] sm:$0xff]
    %v1008 = vld [vmem:[%s1 + $0x1eb0] sm:$0xff]
    %v1009 = vld [vmem:[%s1 + $0x1eb8] sm:$0xff]
    %v1010 = vld [vmem:[%s1 + $0x1ec0] sm:$0xff]
    %v1011 = vld [vmem:[%s1 + $0x1ec8] sm:$0xff]
    %v1012 = vld [vmem:[%s1 + $0x1ed0] sm:$0xff]
    %v1013 = vld [vmem:[%s1 + $0x1ed8] sm:$0xff]
    %v1014 = vld [vmem:[%s1 + $0x1ee0] sm:$0xff]
    %v1015 = vld [vmem:[%s1 + $0x1ee8] sm:$0xff]
    %v1016 = vld [vmem:[%s1 + $0x1ef0] sm:$0xff]
    %v1017 = vld [vmem:[%s1 + $0x1ef8] sm:$0xff]
    %v1018 = vld [vmem:[%s1 + $0x1f00] sm:$0xff]
    %v1019 = vld [vmem:[%s1 + $0x1f08] sm:$0xff]
    %v1020 = vld [vmem:[%s1 + $0x1f10] sm:$0xff]
    %v1021 = vld [vmem:[%s1 + $0x1f18] sm:$0xff]
    %v1022 = vld [vmem:[%s1 + $0x1f20] sm:$0xff]
    %v1023 = vld [vmem:[%s1 + $0x1f28] sm:$0xff]
    %v1024 = vld [vmem:[%s1 + $0x1f30] sm:$0xff]
    %v1025 = vld [vmem:[%s1 + $0x1f38] sm:$0xff]
    %v1026 = vld [vmem:[%s1 + $0x1f40] sm:$0xff]
    %v1027 = vld [vmem:[%s1 + $0x1f48] sm:$0xff]
    %v1028 = vld [vmem:[%s1 + $0x1f50] sm:$0xff]
    %v1029 = vld [vmem:[%s1 + $0x1f58] sm:$0xff]
    %v1030 = vld [vmem:[%s1 + $0x1f60] sm:$0xff]
    %v1031 = vld [vmem:[%s1 + $0x1f68] sm:$0xff]
    %v1032 = vld [vmem:[%s1 + $0x1f70] sm:$0xff]
    %v1033 = vld [vmem:[%s1 + $0x1f78] sm:$0xff]
    %v1034 = vld [vmem:[%s1 + $0x1f80] sm:$0xff]
    %v1035 = vld [vmem:[%s1 + $0x1f88] sm:$0xff]
    %v1036 = vld [vmem:[%s1 + $0x1f90] sm:$0xff]
    %v1037 = vld [vmem:[%s1 + $0x1f98] sm:$0xff]
    %v1038 = vld [vmem:[%s1 + $0x1fa0] sm:$0xff]
    %v1039 = vld [vmem:[%s1 + $0x1fa8] sm:$0xff]
    %v1040 = vld [vmem:[%s1 + $0x1fb0] sm:$0xff]
    %v1041 = vld [vmem:[%s1 + $0x1fb8] sm:$0xff]
    %v1042 = vld [vmem:[%s1 + $0x1fc0] sm:$0xff]
    %v1043 = vld [vmem:[%s1 + $0x1fc8] sm:$0xff]
    %v1044 = vld [vmem:[%s1 + $0x1fd0] sm:$0xff]
    %v1045 = vld [vmem:[%s1 + $0x1fd8] sm:$0xff]
    %v1046 = vld [vmem:[%s1 + $0x1fe0] sm:$0xff]
    %v1047 = vld [vmem:[%s1 + $0x1fe8] sm:$0xff]
    %v1048 = vld [vmem:[%s1 + $0x1ff0] sm:$0xff]
    %v1049 = vld [vmem:[%s1 + $0x1ff8] sm:$0xff]
    %v1050 = vld [vmem:[%s1 + $0x2000] sm:$0xff]
    %v1051 = vld [vmem:[%s1 + $0x2008] sm:$0xff]
    %v1052 = vld [vmem:[%s1 + $0x2010] sm:$0xff]
    %v1053 = vld [vmem:[%s1 + $0x2018] sm:$0xff]
    %v1054 = vld [vmem:[%s1 + $0x2020] sm:$0xff]
    %v1055 = vld [vmem:[%s1 + $0x2028] sm:$0xff]
    %v1056 = vld [vmem:[%s1 + $0x2030] sm:$0xff]
    %v1057 = vld [vmem:[%s1 + $0x2038] sm:$0xff]
    %v1058 = vld [vmem:[%s1 + $0x2040] sm:$0xff]
    %v1059 = vld [vmem:[%s1 + $0x2048] sm:$0xff]
    %v1060 = vld [vmem:[%s1 + $0x2050] sm:$0xff]
    %v1061 = vld [vmem:[%s1 + $0x2058] sm:$0xff]
    %v1062 = vld [vmem:[%s1 + $0x2060] sm:$0xff]
    %v1063 = vld [vmem:[%s1 + $0x2068] sm:$0xff]
    %v1064 = vld [vmem:[%s1 + $0x2070] sm:$0xff]
    %v1065 = vld [vmem:[%s1 + $0x2078] sm:$0xff]
    %v1066 = vld [vmem:[%s1 + $0x2080] sm:$0xff]
    %v1067 = vld [vmem:[%s1 + $0x2088] sm:$0xff]
    %v1068 = vld [vmem:[%s1 + $0x2090] sm:$0xff]
    %v1069 = vld [vmem:[%s1 + $0x2098] sm:$0xff]
    %v1070 = vld [vmem:[%s1 + $0x20a0] sm:$0xff]
    %v1071 = vld [vmem:[%s1 + $0x20a8] sm:$0xff]
    %v1072 = vld [vmem:[%s1 + $0x20b0] sm:$0xff]
    %v1073 = vld [vmem:[%s1 + $0x20b8] sm:$0xff]
    %v1074 = vld [vmem:[%s1 + $0x20c0] sm:$0xff]
    %v1075 = vld [vmem:[%s1 + $0x20c8] sm:$0xff]
    %v1076 = vld [vmem:[%s1 + $0x20d0] sm:$0xff]
    %v1077 = vld [vmem:[%s1 + $0x20d8] sm:$0xff]
    %v1078 = vld [vmem:[%s1 + $0x20e0] sm:$0xff]
    %v1079 = vld [vmem:[%s1 + $0x20e8] sm:$0xff]
    %v1080 = vld [vmem:[%s1 + $0x20f0] sm:$0xff]
    %v1081 = vld [vmem:[%s1 + $0x20f8] sm:$0xff]
    %v1082 = vld [vmem:[%s1 + $0x2100] sm:$0xff]
    %v1083 = vld [vmem:[%s1 + $0x2108] sm:$0xff]
    %v1084 = vld [vmem:[%s1 + $0x2110] sm:$0xff]
    %v1085 = vld [vmem:[%s1 + $0x2118] sm:$0xff]
    %v1086 = vld [vmem:[%s1 + $0x2120] sm:$0xff]
    %v1087 = vld [vmem:[%s1 + $0x2128] sm:$0xff]
    %v1088 = vld [vmem:[%s1 + $0x2130] sm:$0xff]
    %v1089 = vld [vmem:[%s1 + $0x2138] sm:$0xff]
    %v1090 = vld [vmem:[%s1 + $0x2140] sm:$0xff]
    %v1091 = vld [vmem:[%s1 + $0x2148] sm:$0xff]
    %v1092 = vld [vmem:[%s1 + $0x2150] sm:$0xff]
    %v1093 = vld [vmem:[%s1 + $0x2158] sm:$0xff]
    %v1094 = vld [vmem:[%s1 + $0x2160] sm:$0xff]
    %v1095 = vld [vmem:[%s1 + $0x2168] sm:$0xff]
    %v1096 = vld [vmem:[%s1 + $0x2170] sm:$0xff]
    %v1097 = vld [vmem:[%s1 + $0x2178] sm:$0xff]
    %v1098 = vld [vmem:[%s1 + $0x2180] sm:$0xff]
    %v1099 = vld [vmem:[%s1 + $0x2188] sm:$0xff]
    %v1100 = vld [vmem:[%s1 + $0x2190] sm:$0xff]
    %v1101 = vld [vmem:[%s1 + $0x2198] sm:$0xff]
    %v1102 = vld [vmem:[%s1 + $0x21a0] sm:$0xff]
    %v1103 = vld [vmem:[%s1 + $0x21a8] sm:$0xff]
    %v1104 = vld [vmem:[%s1 + $0x21b0] sm:$0xff]
    %v1105 = vld [vmem:[%s1 + $0x21b8] sm:$0xff]
    %v1106 = vld [vmem:[%s1 + $0x21c0] sm:$0xff]
    %v1107 = vld [vmem:[%s1 + $0x21c8] sm:$0xff]
    %v1108 = vld [vmem:[%s1 + $0x21d0] sm:$0xff]
    %v1109 = vld [vmem:[%s1 + $0x21d8] sm:$0xff]
    %v1110 = vld [vmem:[%s1 + $0x21e0] sm:$0xff]
    %v1111 = vld [vmem:[%s1 + $0x21e8] sm:$0xff]
    %v1112 = vld [vmem:[%s1 + $0x21f0] sm:$0xff]
    %v1113 = vld [vmem:[%s1 + $0x21f8] sm:$0xff]
    %v1114 = vld [vmem:[%s1 + $0x2200] sm:$0xff]
    %v1115 = vld [vmem:[%s1 + $0x2208] sm:$0xff]
    %v1116 = vld [vmem:[%s1 + $0x2210] sm:$0xff]
    %v1117 = vld [vmem:[%s1 + $0x2218] sm:$0xff]
    %v1118 = vld [vmem:[%s1 + $0x2220] sm:$0xff]
    %v1119 = vld [vmem:[%s1 + $0x2228] sm:$0xff]
    %v1120 = vld [vmem:[%s1 + $0x2230] sm:$0xff]
    %v1121 = vld [vmem:[%s1 + $0x2238] sm:$0xff]
    %v1122 = vld [vmem:[%s1 + $0x2240] sm:$0xff]
    %v1123 = vld [vmem:[%s1 + $0x2248] sm:$0xff]
    %v1124 = vld [vmem:[%s1 + $0x2250] sm:$0xff]
    %v1125 = vld [vmem:[%s1 + $0x2258] sm:$0xff]
    %v1126 = vld [vmem:[%s1 + $0x2260] sm:$0xff]
    %v1127 = vld [vmem:[%s1 + $0x2268] sm:$0xff]
    %v1128 = vld [vmem:[%s1 + $0x2270] sm:$0xff]
    %v1129 = vld [vmem:[%s1 + $0x2278] sm:$0xff]
    %v1130 = vld [vmem:[%s1 + $0x2280] sm:$0xff]
    %v1131 = vld [vmem:[%s1 + $0x2288] sm:$0xff]
    %v1132 = vld [vmem:[%s1 + $0x2290] sm:$0xff]
    %v1133 = vld [vmem:[%s1 + $0x2298] sm:$0xff]
    %v1134 = vld [vmem:[%s1 + $0x22a0] sm:$0xff]
    %v1135 = vld [vmem:[%s1 + $0x22a8] sm:$0xff]
    %v1136 = vld [vmem:[%s1 + $0x22b0] sm:$0xff]
    %v1137 = vld [vmem:[%s1 + $0x22b8] sm:$0xff]
    %v1138 = vld [vmem:[%s1 + $0x22c0] sm:$0xff]
    %v1139 = vld [vmem:[%s1 + $0x22c8] sm:$0xff]
    %v1140 = vld [vmem:[%s1 + $0x22d0] sm:$0xff]
    %v1141 = vld [vmem:[%s1 + $0x22d8] sm:$0xff]
    %v1142 = vld [vmem:[%s1 + $0x22e0] sm:$0xff]
    %v1143 = vld [vmem:[%s1 + $0x22e8] sm:$0xff]
    %v1144 = vld [vmem:[%s1 + $0x22f0] sm:$0xff]
    %v1145 = vld [vmem:[%s1 + $0x22f8] sm:$0xff]
    %v1146 = vld [vmem:[%s1 + $0x2300] sm:$0xff]
    %v1147 = vld [vmem:[%s1 + $0x2308] sm:$0xff]
    %v1148 = vld [vmem:[%s1 + $0x2310] sm:$0xff]
    %v1149 = vld [vmem:[%s1 + $0x2318] sm:$0xff]
    %v1150 = vld [vmem:[%s1 + $0x2320] sm:$0xff]
    %v1151 = vld [vmem:[%s1 + $0x2328] sm:$0xff]
    %v1152 = vld [vmem:[%s1 + $0x2330] sm:$0xff]
    %v1153 = vld [vmem:[%s1 + $0x2338] sm:$0xff]
    %v1154 = vld [vmem:[%s1 + $0x2340] sm:$0xff]
    %v1155 = vld [vmem:[%s1 + $0x2348] sm:$0xff]
    %v1156 = vld [vmem:[%s1 + $0x2350] sm:$0xff]
    %v1157 = vld [vmem:[%s1 + $0x2358] sm:$0xff]
    %v1158 = vld [vmem:[%s1 + $0x2360] sm:$0xff]
    %v1159 = vld [vmem:[%s1 + $0x2368] sm:$0xff]
    %v1160 = vld [vmem:[%s1 + $0x2370] sm:$0xff]
    %v1161 = vld [vmem:[%s1 + $0x2378] sm:$0xff]
    %v1162 = vld [vmem:[%s1 + $0x2380] sm:$0xff]
    %v1163 = vld [vmem:[%s1 + $0x2388] sm:$0xff]
    %v1164 = vld [vmem:[%s1 + $0x2390] sm:$0xff]
    %v1165 = vld [vmem:[%s1 + $0x2398] sm:$0xff]
    %v1166 = vld [vmem:[%s1 + $0x23a0] sm:$0xff]
    %v1167 = vld [vmem:[%s1 + $0x23a8] sm:$0xff]
    %v1168 = vld [vmem:[%s1 + $0x23b0] sm:$0xff]
    %v1169 = vld [vmem:[%s1 + $0x23b8] sm:$0xff]
    %v1170 = vld [vmem:[%s1 + $0x23c0] sm:$0xff]
    %v1171 = vld [vmem:[%s1 + $0x23c8] sm:$0xff]
    %v1172 = vld [vmem:[%s1 + $0x23d0] sm:$0xff]
    %v1173 = vld [vmem:[%s1 + $0x23d8] sm:$0xff]
    %v1174 = vld [vmem:[%s1 + $0x23e0] sm:$0xff]
    %v1175 = vld [vmem:[%s1 + $0x23e8] sm:$0xff]
    %v1176 = vld [vmem:[%s1 + $0x23f0] sm:$0xff]
    %v1177 = vld [vmem:[%s1 + $0x23f8] sm:$0xff]
    %v1178 = vld [vmem:[%s1 + $0x2400] sm:$0xff]
    %v1179 = vld [vmem:[%s1 + $0x2408] sm:$0xff]
    %v1180 = vld [vmem:[%s1 + $0x2410] sm:$0xff]
    %v1181 = vld [vmem:[%s1 + $0x2418] sm:$0xff]
    %v1182 = vld [vmem:[%s1 + $0x2420] sm:$0xff]
    %v1183 = vld [vmem:[%s1 + $0x2428] sm:$0xff]
    %v1184 = vld [vmem:[%s1 + $0x2430] sm:$0xff]
    %v1185 = vld [vmem:[%s1 + $0x2438] sm:$0xff]
    %v1186 = vld [vmem:[%s1 + $0x2440] sm:$0xff]
    %v1187 = vld [vmem:[%s1 + $0x2448] sm:$0xff]
    %v1188 = vld [vmem:[%s1 + $0x2450] sm:$0xff]
    %v1189 = vld [vmem:[%s1 + $0x2458] sm:$0xff]
    %v1190 = vld [vmem:[%s1 + $0x2460] sm:$0xff]
    %v1191 = vld [vmem:[%s1 + $0x2468] sm:$0xff]
    %v1192 = vld [vmem:[%s1 + $0x2470] sm:$0xff]
    %v1193 = vld [vmem:[%s1 + $0x2478] sm:$0xff]
    %v1194 = vld [vmem:[%s1 + $0x2480] sm:$0xff]
    %v1195 = vld [vmem:[%s1 + $0x2488] sm:$0xff]
    %v1196 = vld [vmem:[%s1 + $0x2490] sm:$0xff]
    %v1197 = vld [vmem:[%s1 + $0x2498] sm:$0xff]
    %v1198 = vld [vmem:[%s1 + $0x24a0] sm:$0xff]
    %v1199 = vld [vmem:[%s1 + $0x24a8] sm:$0xff]
    %v1200 = vld [vmem:[%s1 + $0x24b0] sm:$0xff]
    %v1201 = vld [vmem:[%s1 + $0x24b8] sm:$0xff]
    %v1202 = vld [vmem:[%s1 + $0x24c0] sm:$0xff]
    %v1203 = vld [vmem:[%s1 + $0x24c8] sm:$0xff]
    %v1204 = vld [vmem:[%s1 + $0x24d0] sm:$0xff]
    %v1205 = vld [vmem:[%s1 + $0x24d8] sm:$0xff]
    %v1206 = vld [vmem:[%s1 + $0x24e0] sm:$0xff]
    %v1207 = vld [vmem:[%s1 + $0x24e8] sm:$0xff]
    %v1208 = vld [vmem:[%s1 + $0x24f0] sm:$0xff]
    %v1209 = vld [vmem:[%s1 + $0x24f8] sm:$0xff]
    %v1210 = vld [vmem:[%s1 + $0x2500] sm:$0xff]
    %v1211 = vld [vmem:[%s1 + $0x2508] sm:$0xff]
    %v1212 = vld [vmem:[%s1 + $0x2510] sm:$0xff]
    %v1213 = vld [vmem:[%s1 + $0x2518] sm:$0xff]
    %v1214 = vld [vmem:[%s1 + $0x2520] sm:$0xff]
    %v1215 = vld [vmem:[%s1 + $0x2528] sm:$0xff]
    %v1216 = vld [vmem:[%s1 + $0x2530] sm:$0xff]
    %v1217 = vld [vmem:[%s1 + $0x2538] sm:$0xff]
    %v1218 = vld [vmem:[%s1 + $0x2540] sm:$0xff]
    %v1219 = vld [vmem:[%s1 + $0x2548] sm:$0xff]
    %v1220 = vld [vmem:[%s1 + $0x2550] sm:$0xff]
    %v1221 = vld [vmem:[%s1 + $0x2558] sm:$0xff]
    %v1222 = vld [vmem:[%s1 + $0x2560] sm:$0xff]
    %v1223 = vld [vmem:[%s1 + $0x2568] sm:$0xff]
    %v1224 = vld [vmem:[%s1 + $0x2570] sm:$0xff]
    %v1225 = vld [vmem:[%s1 + $0x2578] sm:$0xff]
    %v1226 = vld [vmem:[%s1 + $0x2580] sm:$0xff]
    %v1227 = vld [vmem:[%s1 + $0x2588] sm:$0xff]
    %v1228 = vld [vmem:[%s1 + $0x2590] sm:$0xff]
    %v1229 = vld [vmem:[%s1 + $0x2598] sm:$0xff]
    %v1230 = vld [vmem:[%s1 + $0x25a0] sm:$0xff]
    %v1231 = vld [vmem:[%s1 + $0x25a8] sm:$0xff]
    %v1232 = vld [vmem:[%s1 + $0x25b0] sm:$0xff]
    %v1233 = vld [vmem:[%s1 + $0x25b8] sm:$0xff]
    %v1234 = vld [vmem:[%s1 + $0x25c0] sm:$0xff]
    %v1235 = vld [vmem:[%s1 + $0x25c8] sm:$0xff]
    %v1236 = vld [vmem:[%s1 + $0x25d0] sm:$0xff]
    %v1237 = vld [vmem:[%s1 + $0x25d8] sm:$0xff]
    %v1238 = vld [vmem:[%s1 + $0x25e0] sm:$0xff]
    %v1239 = vld [vmem:[%s1 + $0x25e8] sm:$0xff]
    %v1240 = vld [vmem:[%s1 + $0x25f0] sm:$0xff]
    %v1241 = vld [vmem:[%s1 + $0x25f8] sm:$0xff]
    %v1242 = vld [vmem:[%s1 + $0x2600] sm:$0xff]
    %v1243 = vld [vmem:[%s1 + $0x2608] sm:$0xff]
    %v1244 = vld [vmem:[%s1 + $0x2610] sm:$0xff]
    %v1245 = vld [vmem:[%s1 + $0x2618] sm:$0xff]
    %v1246 = vld [vmem:[%s1 + $0x2620] sm:$0xff]
    %v1247 = vld [vmem:[%s1 + $0x2628] sm:$0xff]
    %v1248 = vld [vmem:[%s1 + $0x2630] sm:$0xff]
    %v1249 = vld [vmem:[%s1 + $0x2638] sm:$0xff]
    %v1250 = vld [vmem:[%s1 + $0x2640] sm:$0xff]
    %v1251 = vld [vmem:[%s1 + $0x2648] sm:$0xff]
    %v1252 = vld [vmem:[%s1 + $0x2650] sm:$0xff]
    %v1253 = vld [vmem:[%s1 + $0x2658] sm:$0xff]
    %v1254 = vld [vmem:[%s1 + $0x2660] sm:$0xff]
    %v1255 = vld [vmem:[%s1 + $0x2668] sm:$0xff]
    %v1256 = vld [vmem:[%s1 + $0x2670] sm:$0xff]
    %v1257 = vld [vmem:[%s1 + $0x2678] sm:$0xff]
    %v1258 = vld [vmem:[%s1 + $0x2680] sm:$0xff]
    %v1259 = vld [vmem:[%s1 + $0x2688] sm:$0xff]
    %v1260 = vld [vmem:[%s1 + $0x2690] sm:$0xff]
    %v1261 = vld [vmem:[%s1 + $0x2698] sm:$0xff]
    %v1262 = vld [vmem:[%s1 + $0x26a0] sm:$0xff]
    %v1263 = vld [vmem:[%s1 + $0x26a8] sm:$0xff]
    %v1264 = vld [vmem:[%s1 + $0x26b0] sm:$0xff]
    %v1265 = vld [vmem:[%s1 + $0x26b8] sm:$0xff]
    %v1266 = vld [vmem:[%s1 + $0x26c0] sm:$0xff]
    %v1267 = vld [vmem:[%s1 + $0x26c8] sm:$0xff]
    %v1268 = vld [vmem:[%s1 + $0x26d0] sm:$0xff]
    %v1269 = vld [vmem:[%s1 + $0x26d8] sm:$0xff]
    %v1270 = vld [vmem:[%s1 + $0x26e0] sm:$0xff]
    %v1271 = vld [vmem:[%s1 + $0x26e8] sm:$0xff]
    %v1272 = vld [vmem:[%s1 + $0x26f0] sm:$0xff]
    %v1273 = vld [vmem:[%s1 + $0x26f8] sm:$0xff]
    %v1274 = vld [vmem:[%s1 + $0x2700] sm:$0xff]
    %v1275 = vld [vmem:[%s1 + $0x2708] sm:$0xff]
    %v1276 = vld [vmem:[%s1 + $0x2710] sm:$0xff]
    %v1277 = vld [vmem:[%s1 + $0x2718] sm:$0xff]
    %v1278 = vld [vmem:[%s1 + $0x2720] sm:$0xff]
    %v1279 = vld [vmem:[%s1 + $0x2728] sm:$0xff]
    %v1280 = vld [vmem:[%s1 + $0x2730] sm:$0xff]
    %v1281 = vld [vmem:[%s1 + $0x2738] sm:$0xff]
    %v1282 = vld [vmem:[%s1 + $0x2740] sm:$0xff]
    %v1283 = vld [vmem:[%s1 + $0x2748] sm:$0xff]
    %v1284 = vld [vmem:[%s1 + $0x2750] sm:$0xff]
    %v1285 = vld [vmem:[%s1 + $0x2758] sm:$0xff]
    %v1286 = vld [vmem:[%s1 + $0x2760] sm:$0xff]
    %v1287 = vld [vmem:[%s1 + $0x2768] sm:$0xff]
    %v1288 = vld [vmem:[%s1 + $0x2770] sm:$0xff]
    %v1289 = vld [vmem:[%s1 + $0x2778] sm:$0xff]
    %v1290 = vld [vmem:[%s1 + $0x2780] sm:$0xff]
    %v1291 = vld [vmem:[%s1 + $0x2788] sm:$0xff]
    %v1292 = vld [vmem:[%s1 + $0x2790] sm:$0xff]
    %v1293 = vld [vmem:[%s1 + $0x2798] sm:$0xff]
    %v1294 = vld [vmem:[%s1 + $0x27a0] sm:$0xff]
    %v1295 = vld [vmem:[%s1 + $0x27a8] sm:$0xff]
    %v1296 = vld [vmem:[%s1 + $0x27b0] sm:$0xff]
    %v1297 = vld [vmem:[%s1 + $0x27b8] sm:$0xff]
    %v1298 = vld [vmem:[%s1 + $0x27c0] sm:$0xff]
    %v1299 = vld [vmem:[%s1 + $0x27c8] sm:$0xff]
    %v1300 = vld [vmem:[%s1 + $0x27d0] sm:$0xff]
    %v1301 = vld [vmem:[%s1 + $0x27d8] sm:$0xff]
    %v1302 = vld [vmem:[%s1 + $0x27e0] sm:$0xff]
    %v1303 = vld [vmem:[%s1 + $0x27e8] sm:$0xff]
    %v1304 = vld [vmem:[%s1 + $0x27f0] sm:$0xff]
    %v1305 = vld [vmem:[%s1 + $0x27f8] sm:$0xff]
    %v1306 = vld [vmem:[%s1 + $0x2800] sm:$0xff]
    %v1307 = vld [vmem:[%s1 + $0x2808] sm:$0xff]
    %v1308 = vld [vmem:[%s1 + $0x2810] sm:$0xff]
    %v1309 = vld [vmem:[%s1 + $0x2818] sm:$0xff]
    %v1310 = vld [vmem:[%s1 + $0x2820] sm:$0xff]
    %v1311 = vld [vmem:[%s1 + $0x2828] sm:$0xff]
    %v1312 = vld [vmem:[%s1 + $0x2830] sm:$0xff]
    %v1313 = vld [vmem:[%s1 + $0x2838] sm:$0xff]
    %v1314 = vld [vmem:[%s1 + $0x2840] sm:$0xff]
    %v1315 = vld [vmem:[%s1 + $0x2848] sm:$0xff]
    %v1316 = vld [vmem:[%s1 + $0x2850] sm:$0xff]
    %v1317 = vld [vmem:[%s1 + $0x2858] sm:$0xff]
    %v1318 = vld [vmem:[%s1 + $0x2860] sm:$0xff]
    %v1319 = vld [vmem:[%s1 + $0x2868] sm:$0xff]
    %v1320 = vld [vmem:[%s1 + $0x2870] sm:$0xff]
    %v1321 = vld [vmem:[%s1 + $0x2878] sm:$0xff]
    %v1322 = vld [vmem:[%s1 + $0x2880] sm:$0xff]
    %v1323 = vld [vmem:[%s1 + $0x2888] sm:$0xff]
    %v1324 = vld [vmem:[%s1 + $0x2890] sm:$0xff]
    %v1325 = vld [vmem:[%s1 + $0x2898] sm:$0xff]
    %v1326 = vld [vmem:[%s1 + $0x28a0] sm:$0xff]
    %v1327 = vld [vmem:[%s1 + $0x28a8] sm:$0xff]
    %v1328 = vld [vmem:[%s1 + $0x28b0] sm:$0xff]
    %v1329 = vld [vmem:[%s1 + $0x28b8] sm:$0xff]
    %v1330 = vld [vmem:[%s1 + $0x28c0] sm:$0xff]
    %v1331 = vld [vmem:[%s1 + $0x28c8] sm:$0xff]
    %v1332 = vld [vmem:[%s1 + $0x28d0] sm:$0xff]
    %v1333 = vld [vmem:[%s1 + $0x28d8] sm:$0xff]
    %v1334 = vld [vmem:[%s1 + $0x28e0] sm:$0xff]
    %v1335 = vld [vmem:[%s1 + $0x28e8] sm:$0xff]
    %v1336 = vld [vmem:[%s1 + $0x28f0] sm:$0xff]
    %v1337 = vld [vmem:[%s1 + $0x28f8] sm:$0xff]
    %v1338 = vld [vmem:[%s1 + $0x2900] sm:$0xff]
    %v1339 = vld [vmem:[%s1 + $0x2908] sm:$0xff]
    %v1340 = vld [vmem:[%s1 + $0x2910] sm:$0xff]
    %v1341 = vld [vmem:[%s1 + $0x2918] sm:$0xff]
    %v1342 = vld [vmem:[%s1 + $0x2920] sm:$0xff]
    %v1343 = vld [vmem:[%s1 + $0x2928] sm:$0xff]
    %v1344 = vld [vmem:[%s1 + $0x2930] sm:$0xff]
    %v1345 = vld [vmem:[%s1 + $0x2938] sm:$0xff]
    %v1346 = vld [vmem:[%s1 + $0x2940] sm:$0xff]
    %v1347 = vld [vmem:[%s1 + $0x2948] sm:$0xff]
    %v1348 = vld [vmem:[%s1 + $0x2950] sm:$0xff]
    %v1349 = vld [vmem:[%s1 + $0x2958] sm:$0xff]
    %v1350 = vld [vmem:[%s1 + $0x2960] sm:$0xff]
    %v1351 = vld [vmem:[%s1 + $0x2968] sm:$0xff]
    %v1352 = vld [vmem:[%s1 + $0x2970] sm:$0xff]
    %v1353 = vld [vmem:[%s1 + $0x2978] sm:$0xff]
    %v1354 = vld [vmem:[%s1 + $0x2980] sm:$0xff]
    %v1355 = vld [vmem:[%s1 + $0x2988] sm:$0xff]
    %v1356 = vld [vmem:[%s1 + $0x2990] sm:$0xff]
    %v1357 = vld [vmem:[%s1 + $0x2998] sm:$0xff]
    %v1358 = vld [vmem:[%s1 + $0x29a0] sm:$0xff]
    %v1359 = vld [vmem:[%s1 + $0x29a8] sm:$0xff]
    %v1360 = vld [vmem:[%s1 + $0x29b0] sm:$0xff]
    %v1361 = vld [vmem:[%s1 + $0x29b8] sm:$0xff]
    %v1362 = vld [vmem:[%s1 + $0x29c0] sm:$0xff]
    %v1363 = vld [vmem:[%s1 + $0x29c8] sm:$0xff]
    %v1364 = vld [vmem:[%s1 + $0x29d0] sm:$0xff]
    %v1365 = vld [vmem:[%s1 + $0x29d8] sm:$0xff]
    %v1366 = vld [vmem:[%s1 + $0x29e0] sm:$0xff]
    %v1367 = vld [vmem:[%s1 + $0x29e8] sm:$0xff]
    %v1368 = vld [vmem:[%s1 + $0x29f0] sm:$0xff]
    %v1369 = vld [vmem:[%s1 + $0x29f8] sm:$0xff]
    %v1370 = vld [vmem:[%s1 + $0x2a00] sm:$0xff]
    %v1371 = vld [vmem:[%s1 + $0x2a08] sm:$0xff]
    %v1372 = vld [vmem:[%s1 + $0x2a10] sm:$0xff]
    %v1373 = vld [vmem:[%s1 + $0x2a18] sm:$0xff]
    %v1374 = vld [vmem:[%s1 + $0x2a20] sm:$0xff]
    %v1375 = vld [vmem:[%s1 + $0x2a28] sm:$0xff]
    %v1376 = vld [vmem:[%s1 + $0x2a30] sm:$0xff]
    %v1377 = vld [vmem:[%s1 + $0x2a38] sm:$0xff]
    %v1378 = vld [vmem:[%s1 + $0x2a40] sm:$0xff]
    %v1379 = vld [vmem:[%s1 + $0x2a48] sm:$0xff]
    %v1380 = vld [vmem:[%s1 + $0x2a50] sm:$0xff]
    %v1381 = vld [vmem:[%s1 + $0x2a58] sm:$0xff]
    %v1382 = vld [vmem:[%s1 + $0x2a60] sm:$0xff]
    %v1383 = vld [vmem:[%s1 + $0x2a68] sm:$0xff]
    %v1384 = vld [vmem:[%s1 + $0x2a70] sm:$0xff]
    %v1385 = vld [vmem:[%s1 + $0x2a78] sm:$0xff]
    %v1386 = vld [vmem:[%s1 + $0x2a80] sm:$0xff]
    %v1387 = vld [vmem:[%s1 + $0x2a88] sm:$0xff]
    %v1388 = vld [vmem:[%s1 + $0x2a90] sm:$0xff]
    %v1389 = vld [vmem:[%s1 + $0x2a98] sm:$0xff]
    %v1390 = vld [vmem:[%s1 + $0x2aa0] sm:$0xff]
    %v1391 = vld [vmem:[%s1 + $0x2aa8] sm:$0xff]
    %v1392 = vld [vmem:[%s1 + $0x2ab0] sm:$0xff]
    %v1393 = vld [vmem:[%s1 + $0x2ab8] sm:$0xff]
    %v1394 = vld [vmem:[%s1 + $0x2ac0] sm:$0xff]
    %v1395 = vld [vmem:[%s1 + $0x2ac8] sm:$0xff]
    %v1396 = vld [vmem:[%s1 + $0x2ad0] sm:$0xff]
    %v1397 = vld [vmem:[%s1 + $0x2ad8] sm:$0xff]
    %v1398 = vld [vmem:[%s1 + $0x2ae0] sm:$0xff]
    %v1399 = vld [vmem:[%s1 + $0x2ae8] sm:$0xff]
    %v1400 = vld [vmem:[%s1 + $0x2af0] sm:$0xff]
    %v1401 = vld [vmem:[%s1 + $0x2af8] sm:$0xff]
    %v1402 = vld [vmem:[%s1 + $0x2b00] sm:$0xff]
    %v1403 = vld [vmem:[%s1 + $0x2b08] sm:$0xff]
    %v1404 = vld [vmem:[%s1 + $0x2b10] sm:$0xff]
    %v1405 = vld [vmem:[%s1 + $0x2b18] sm:$0xff]
    %v1406 = vld [vmem:[%s1 + $0x2b20] sm:$0xff]
    %v1407 = vld [vmem:[%s1 + $0x2b28] sm:$0xff]
    %v1408 = vld [vmem:[%s1 + $0x2b30] sm:$0xff]
    %v1409 = vld [vmem:[%s1 + $0x2b38] sm:$0xff]
    %v1410 = vld [vmem:[%s1 + $0x2b40] sm:$0xff]
    %v1411 = vld [vmem:[%s1 + $0x2b48] sm:$0xff]
    %v1412 = vld [vmem:[%s1 + $0x2b50] sm:$0xff]
    %v1413 = vld [vmem:[%s1 + $0x2b58] sm:$0xff]
    %v1414 = vld [vmem:[%s1 + $0x2b60] sm:$0xff]
    %v1415 = vld [vmem:[%s1 + $0x2b68] sm:$0xff]
    %v1416 = vld [vmem:[%s1 + $0x2b70] sm:$0xff]
    %v1417 = vld [vmem:[%s1 + $0x2b78] sm:$0xff]
    %v1418 = vld [vmem:[%s1 + $0x2b80] sm:$0xff]
    %v1419 = vld [vmem:[%s1 + $0x2b88] sm:$0xff]
    %v1420 = vld [vmem:[%s1 + $0x2b90] sm:$0xff]
    %v1421 = vld [vmem:[%s1 + $0x2b98] sm:$0xff]
    %v1422 = vld [vmem:[%s1 + $0x2ba0] sm:$0xff]
    %v1423 = vld [vmem:[%s1 + $0x2ba8] sm:$0xff]
    %v1424 = vld [vmem:[%s1 + $0x2bb0] sm:$0xff]
    %v1425 = vld [vmem:[%s1 + $0x2bb8] sm:$0xff]
    %v1426 = vld [vmem:[%s1 + $0x2bc0] sm:$0xff]
    %v1427 = vld [vmem:[%s1 + $0x2bc8] sm:$0xff]
    %v1428 = vld [vmem:[%s1 + $0x2bd0] sm:$0xff]
    %v1429 = vld [vmem:[%s1 + $0x2bd8] sm:$0xff]
    %v1430 = vld [vmem:[%s1 + $0x2be0] sm:$0xff]
    %v1431 = vld [vmem:[%s1 + $0x2be8] sm:$0xff]
    %v1432 = vld [vmem:[%s1 + $0x2bf0] sm:$0xff]
    %v1433 = vld [vmem:[%s1 + $0x2bf8] sm:$0xff]
    %v1434 = vld [vmem:[%s1 + $0x2c00] sm:$0xff]
    %v1435 = vld [vmem:[%s1 + $0x2c08] sm:$0xff]
    %v1436 = vld [vmem:[%s1 + $0x2c10] sm:$0xff]
    %v1437 = vld [vmem:[%s1 + $0x2c18] sm:$0xff]
    %v1438 = vld [vmem:[%s1 + $0x2c20] sm:$0xff]
    %v1439 = vld [vmem:[%s1 + $0x2c28] sm:$0xff]
    %v1440 = vld [vmem:[%s1 + $0x2c30] sm:$0xff]
    %v1441 = vld [vmem:[%s1 + $0x2c38] sm:$0xff]
    %v1442 = vld [vmem:[%s1 + $0x2c40] sm:$0xff]
    %v1443 = vld [vmem:[%s1 + $0x2c48] sm:$0xff]
    %v1444 = vld [vmem:[%s1 + $0x2c50] sm:$0xff]
    %v1445 = vld [vmem:[%s1 + $0x2c58] sm:$0xff]
    %v1446 = vld [vmem:[%s1 + $0x2c60] sm:$0xff]
    %v1447 = vld [vmem:[%s1 + $0x2c68] sm:$0xff]
    %v1448 = vld [vmem:[%s1 + $0x2c70] sm:$0xff]
    %v1449 = vld [vmem:[%s1 + $0x2c78] sm:$0xff]
    %v1450 = vld [vmem:[%s1 + $0x2c80] sm:$0xff]
    %v1451 = vld [vmem:[%s1 + $0x2c88] sm:$0xff]
    %v1452 = vld [vmem:[%s1 + $0x2c90] sm:$0xff]
    %v1453 = vld [vmem:[%s1 + $0x2c98] sm:$0xff]
    %v1454 = vld [vmem:[%s1 + $0x2ca0] sm:$0xff]
    %v1455 = vld [vmem:[%s1 + $0x2ca8] sm:$0xff]
    %v1456 = vld [vmem:[%s1 + $0x2cb0] sm:$0xff]
    %v1457 = vld [vmem:[%s1 + $0x2cb8] sm:$0xff]
    %v1458 = vld [vmem:[%s1 + $0x2cc0] sm:$0xff]
    %v1459 = vld [vmem:[%s1 + $0x2cc8] sm:$0xff]
    %v1460 = vld [vmem:[%s1 + $0x2cd0] sm:$0xff]
    %v1461 = vld [vmem:[%s1 + $0x2cd8] sm:$0xff]
    %v1462 = vld [vmem:[%s1 + $0x2ce0] sm:$0xff]
    %v1463 = vld [vmem:[%s1 + $0x2ce8] sm:$0xff]
    %v1464 = vld [vmem:[%s1 + $0x2cf0] sm:$0xff]
    %v1465 = vld [vmem:[%s1 + $0x2cf8] sm:$0xff]
    %v1466 = vld [vmem:[%s1 + $0x2d00] sm:$0xff]
    %v1467 = vld [vmem:[%s1 + $0x2d08] sm:$0xff]
    %v1468 = vld [vmem:[%s1 + $0x2d10] sm:$0xff]
    %v1469 = vld [vmem:[%s1 + $0x2d18] sm:$0xff]
    %v1470 = vld [vmem:[%s1 + $0x2d20] sm:$0xff]
    %v1471 = vld [vmem:[%s1 + $0x2d28] sm:$0xff]
    %v1472 = vld [vmem:[%s1 + $0x2d30] sm:$0xff]
    %v1473 = vld [vmem:[%s1 + $0x2d38] sm:$0xff]
    %v1474 = vld [vmem:[%s1 + $0x2d40] sm:$0xff]
    %v1475 = vld [vmem:[%s1 + $0x2d48] sm:$0xff]
    %v1476 = vld [vmem:[%s1 + $0x2d50] sm:$0xff]
    %v1477 = vld [vmem:[%s1 + $0x2d58] sm:$0xff]
    %v1478 = vld [vmem:[%s1 + $0x2d60] sm:$0xff]
    %v1479 = vld [vmem:[%s1 + $0x2d68] sm:$0xff]
    %v1480 = vld [vmem:[%s1 + $0x2d70] sm:$0xff]
    %v1481 = vld [vmem:[%s1 + $0x2d78] sm:$0xff]
    %v1482 = vld [vmem:[%s1 + $0x2d80] sm:$0xff]
    %v1483 = vld [vmem:[%s1 + $0x2d88] sm:$0xff]
    %v1484 = vld [vmem:[%s1 + $0x2d90] sm:$0xff]
    %v1485 = vld [vmem:[%s1 + $0x2d98] sm:$0xff]
    %v1486 = vld [vmem:[%s1 + $0x2da0] sm:$0xff]
    %v1487 = vld [vmem:[%s1 + $0x2da8] sm:$0xff]
    %v1488 = vld [vmem:[%s1 + $0x2db0] sm:$0xff]
    %v1489 = vld [vmem:[%s1 + $0x2db8] sm:$0xff]
    %v1490 = vld [vmem:[%s1 + $0x2dc0] sm:$0xff]
    %v1491 = vld [vmem:[%s1 + $0x2dc8] sm:$0xff]
    %v1492 = vld [vmem:[%s1 + $0x2dd0] sm:$0xff]
    %v1493 = vld [vmem:[%s1 + $0x2dd8] sm:$0xff]
    %v1494 = vld [vmem:[%s1 + $0x2de0] sm:$0xff]
    %v1495 = vld [vmem:[%s1 + $0x2de8] sm:$0xff]
    %v1496 = vld [vmem:[%s1 + $0x2df0] sm:$0xff]
    %v1497 = vld [vmem:[%s1 + $0x2df8] sm:$0xff]
    %v1498 = vld [vmem:[%s1 + $0x2e00] sm:$0xff]
    %v1499 = vld [vmem:[%s1 + $0x2e08] sm:$0xff]
    %v1500 = vld [vmem:[%s1 + $0x2e10] sm:$0xff]
    %v1501 = vld [vmem:[%s1 + $0x2e18] sm:$0xff]
    %v1502 = vld [vmem:[%s1 + $0x2e20] sm:$0xff]
    %v1503 = vld [vmem:[%s1 + $0x2e28] sm:$0xff]
    %v1504 = vld [vmem:[%s1 + $0x2e30] sm:$0xff]
    %v1505 = vld [vmem:[%s1 + $0x2e38] sm:$0xff]
    %v1506 = vld [vmem:[%s1 + $0x2e40] sm:$0xff]
    %v1507 = vld [vmem:[%s1 + $0x2e48] sm:$0xff]
    %v1508 = vld [vmem:[%s1 + $0x2e50] sm:$0xff]
    %v1509 = vld [vmem:[%s1 + $0x2e58] sm:$0xff]
    %v1510 = vld [vmem:[%s1 + $0x2e60] sm:$0xff]
    %v1511 = vld [vmem:[%s1 + $0x2e68] sm:$0xff]
    %v1512 = vld [vmem:[%s1 + $0x2e70] sm:$0xff]
    %v1513 = vld [vmem:[%s1 + $0x2e78] sm:$0xff]
    %v1514 = vld [vmem:[%s1 + $0x2e80] sm:$0xff]
    %v1515 = vld [vmem:[%s1 + $0x2e88] sm:$0xff]
    %v1516 = vld [vmem:[%s1 + $0x2e90] sm:$0xff]
    %v1517 = vld [vmem:[%s1 + $0x2e98] sm:$0xff]
    %v1518 = vld [vmem:[%s1 + $0x2ea0] sm:$0xff]
    %v1519 = vld [vmem:[%s1 + $0x2ea8] sm:$0xff]
    %v1520 = vld [vmem:[%s1 + $0x2eb0] sm:$0xff]
    %v1521 = vld [vmem:[%s1 + $0x2eb8] sm:$0xff]
    %v1522 = vld [vmem:[%s1 + $0x2ec0] sm:$0xff]
    %v1523 = vld [vmem:[%s1 + $0x2ec8] sm:$0xff]
    %v1524 = vld [vmem:[%s1 + $0x2ed0] sm:$0xff]
    %v1525 = vld [vmem:[%s1 + $0x2ed8] sm:$0xff]
    %v1526 = vld [vmem:[%s1 + $0x2ee0] sm:$0xff]
    %v1527 = vld [vmem:[%s1 + $0x2ee8] sm:$0xff]
    %v1528 = vld [vmem:[%s1 + $0x2ef0] sm:$0xff]
    %v1529 = vld [vmem:[%s1 + $0x2ef8] sm:$0xff]
    %v1530 = vld [vmem:[%s1 + $0x2f00] sm:$0xff]
    %v1531 = vld [vmem:[%s1 + $0x2f08] sm:$0xff]
    %v1532 = vld [vmem:[%s1 + $0x2f10] sm:$0xff]
    %v1533 = vld [vmem:[%s1 + $0x2f18] sm:$0xff]
    %v1534 = vld [vmem:[%s1 + $0x2f20] sm:$0xff]
    %v1535 = vld [vmem:[%s1 + $0x2f28] sm:$0xff]
    %v1536 = vld [vmem:[%s1 + $0x2f30] sm:$0xff]
    %v1537 = vld [vmem:[%s1 + $0x2f38] sm:$0xff]
    %v1538 = vld [vmem:[%s1 + $0x2f40] sm:$0xff]
    %v1539 = vld [vmem:[%s1 + $0x2f48] sm:$0xff]
    %v1540 = vld [vmem:[%s1 + $0x2f50] sm:$0xff]
    %v1541 = vld [vmem:[%s1 + $0x2f58] sm:$0xff]
    %v1542 = vld [vmem:[%s1 + $0x2f60] sm:$0xff]
    %v1543 = vld [vmem:[%s1 + $0x2f68] sm:$0xff]
    %v1544 = vld [vmem:[%s1 + $0x2f70] sm:$0xff]
    %v1545 = vld [vmem:[%s1 + $0x2f78] sm:$0xff]
    %v1546 = vld [vmem:[%s1 + $0x2f80] sm:$0xff]
    %v1547 = vld [vmem:[%s1 + $0x2f88] sm:$0xff]
    %v1548 = vld [vmem:[%s1 + $0x2f90] sm:$0xff]
    %v1549 = vld [vmem:[%s1 + $0x2f98] sm:$0xff]
    %v1550 = vld [vmem:[%s1 + $0x2fa0] sm:$0xff]
    %v1551 = vld [vmem:[%s1 + $0x2fa8] sm:$0xff]
    %v1552 = vld [vmem:[%s1 + $0x2fb0] sm:$0xff]
    %v1553 = vld [vmem:[%s1 + $0x2fb8] sm:$0xff]
    %v1554 = vld [vmem:[%s1 + $0x2fc0] sm:$0xff]
    %v1555 = vld [vmem:[%s1 + $0x2fc8] sm:$0xff]
    %v1556 = vld [vmem:[%s1 + $0x2fd0] sm:$0xff]
    %v1557 = vld [vmem:[%s1 + $0x2fd8] sm:$0xff]
    %v1558 = vld [vmem:[%s1 + $0x2fe0] sm:$0xff]
    %v1559 = vld [vmem:[%s1 + $0x2fe8] sm:$0xff]
    %v1560 = vld [vmem:[%s1 + $0x2ff0] sm:$0xff]
    %v1561 = vld [vmem:[%s1 + $0x2ff8] sm:$0xff]
    %v1562 = vld [vmem:[%s1 + $0x3000] sm:$0xff]
    %v1563 = vld [vmem:[%s1 + $0x3008] sm:$0xff]
    %v1564 = vld [vmem:[%s1 + $0x3010] sm:$0xff]
    %v1565 = vld [vmem:[%s1 + $0x3018] sm:$0xff]
    %v1566 = vld [vmem:[%s1 + $0x3020] sm:$0xff]
    %v1567 = vld [vmem:[%s1 + $0x3028] sm:$0xff]
    %v1568 = vld [vmem:[%s1 + $0x3030] sm:$0xff]
    %v1569 = vld [vmem:[%s1 + $0x3038] sm:$0xff]
    %v1570 = vld [vmem:[%s1 + $0x3040] sm:$0xff]
    %v1571 = vld [vmem:[%s1 + $0x3048] sm:$0xff]
    %v1572 = vld [vmem:[%s1 + $0x3050] sm:$0xff]
    %v1573 = vld [vmem:[%s1 + $0x3058] sm:$0xff]
    %v1574 = vld [vmem:[%s1 + $0x3060] sm:$0xff]
    %v1575 = vld [vmem:[%s1 + $0x3068] sm:$0xff]
    %v1576 = vld [vmem:[%s1 + $0x3070] sm:$0xff]
    %v1577 = vld [vmem:[%s1 + $0x3078] sm:$0xff]
    %v1578 = vld [vmem:[%s1 + $0x3080] sm:$0xff]
    %v1579 = vld [vmem:[%s1 + $0x3088] sm:$0xff]
    %v1580 = vld [vmem:[%s1 + $0x3090] sm:$0xff]
    %v1581 = vld [vmem:[%s1 + $0x3098] sm:$0xff]
    %v1582 = vld [vmem:[%s1 + $0x30a0] sm:$0xff]
    %v1583 = vld [vmem:[%s1 + $0x30a8] sm:$0xff]
    %v1584 = vld [vmem:[%s1 + $0x30b0] sm:$0xff]
    %v1585 = vld [vmem:[%s1 + $0x30b8] sm:$0xff]
    %v1586 = vld [vmem:[%s1 + $0x30c0] sm:$0xff]
    %v1587 = vld [vmem:[%s1 + $0x30c8] sm:$0xff]
    %v1588 = vld [vmem:[%s1 + $0x30d0] sm:$0xff]
    %v1589 = vld [vmem:[%s1 + $0x30d8] sm:$0xff]
    %v1590 = vld [vmem:[%s1 + $0x30e0] sm:$0xff]
    %v1591 = vld [vmem:[%s1 + $0x30e8] sm:$0xff]
    %v1592 = vld [vmem:[%s1 + $0x30f0] sm:$0xff]
    %v1593 = vld [vmem:[%s1 + $0x30f8] sm:$0xff]
    %v1594 = vld [vmem:[%s2] sm:$0xff]
    %v1596 = vlaneseq
    %v1597 = vshrl.u32 %v1596, 7
    %v1598 = vsub.s32 0, %v1597
    %v1599 = vrot.slane %v1594, %v1598
    %v1600 = vlaneseq
    %v1601 = vshrl.u32 %v1600, 7
    %v1602 = vsub.s32 1, %v1601
    %v1603 = vrot.slane %v1594, %v1602
    %v1604 = vlaneseq
    %v1605 = vshrl.u32 %v1604, 7
    %v1606 = vsub.s32 2, %v1605
    %v1607 = vrot.slane %v1594, %v1606
    %v1608 = vlaneseq
    %v1609 = vshrl.u32 %v1608, 7
    %v1610 = vsub.s32 3, %v1609
    %v1611 = vrot.slane %v1594, %v1610
    %v1612 = vlaneseq
    %v1613 = vshrl.u32 %v1612, 7
    %v1614 = vsub.s32 4, %v1613
    %v1615 = vrot.slane %v1594, %v1614
    %v1616 = vlaneseq
    %v1617 = vshrl.u32 %v1616, 7
    %v1618 = vsub.s32 5, %v1617
    %v1619 = vrot.slane %v1594, %v1618
    %v1620 = vlaneseq
    %v1621 = vshrl.u32 %v1620, 7
    %v1622 = vsub.s32 6, %v1621
    %v1623 = vrot.slane %v1594, %v1622
    %v1624 = vlaneseq
    %v1625 = vshrl.u32 %v1624, 7
    %v1626 = vsub.s32 7, %v1625
    %v1627 = vrot.slane %v1594, %v1626
    %v1640 = vcombine.high %v22, %v22
    %v1642 = vunpack.c.l.s4 1966171168
    %v1643 = vunpack.c.0.s8 %v1642
    %v1644 = vlaneseq
    %v1645 = vshrl.u32 %v1644, 7
    %v1646 = vsub.s32 %v1643, %v1645
    %v1647 = vrot.slane %v22, %v1646
    %v1649 = vunpack.c.l.s4 1966171168
    %v1650 = vunpack.c.0.s8 %v1649
    %v1651 = vlaneseq
    %v1652 = vshrl.u32 %v1651, 7
    %v1653 = vsub.s32 %v1650, %v1652
    %v1654 = vrot.slane %v1640, %v1653
    %v1655 = vcombine.high %v1647, %v1647
    %v1656 = vcombine.high %v1654, %v1654
    %v1658 = vunpack.c.l.s4 1966171168
    %v1659 = vunpack.c.0.s8 %v1658
    %v1660 = vlaneseq
    %v1661 = vshrl.u32 %v1660, 7
    %v1662 = vsub.s32 %v1659, %v1661
    %v1663 = vrot.slane %v1647, %v1662
    %v1665 = vunpack.c.l.s4 1966171168
    %v1666 = vunpack.c.0.s8 %v1665
    %v1667 = vlaneseq
    %v1668 = vshrl.u32 %v1667, 7
    %v1669 = vsub.s32 %v1666, %v1668
    %v1670 = vrot.slane %v1654, %v1669
    %v1672 = vunpack.c.l.s4 1966171168
    %v1673 = vunpack.c.0.s8 %v1672
    %v1674 = vlaneseq
    %v1675 = vshrl.u32 %v1674, 7
    %v1676 = vsub.s32 %v1673, %v1675
    %v1677 = vrot.slane %v1655, %v1676
    %v1679 = vunpack.c.l.s4 1966171168
    %v1680 = vunpack.c.0.s8 %v1679
    %v1681 = vlaneseq
    %v1682 = vshrl.u32 %v1681, 7
    %v1683 = vsub.s32 %v1680, %v1682
    %v1684 = vrot.slane %v1656, %v1683
    %v1685 = vcombine.high %v1663, %v1663
    %v1686 = vcombine.high %v1670, %v1670
    %v1687 = vcombine.high %v1677, %v1677
    %v1688 = vcombine.high %v1684, %v1684
    %v1689 = vcombine.high %v23, %v23
    %v1691 = vunpack.c.l.s4 1966171168
    %v1692 = vunpack.c.0.s8 %v1691
    %v1693 = vlaneseq
    %v1694 = vshrl.u32 %v1693, 7
    %v1695 = vsub.s32 %v1692, %v1694
    %v1696 = vrot.slane %v23, %v1695
    %v1698 = vunpack.c.l.s4 1966171168
    %v1699 = vunpack.c.0.s8 %v1698
    %v1700 = vlaneseq
    %v1701 = vshrl.u32 %v1700, 7
    %v1702 = vsub.s32 %v1699, %v1701
    %v1703 = vrot.slane %v1689, %v1702
    %v1704 = vcombine.high %v1696, %v1696
    %v1705 = vcombine.high %v1703, %v1703
    %v1707 = vunpack.c.l.s4 1966171168
    %v1708 = vunpack.c.0.s8 %v1707
    %v1709 = vlaneseq
    %v1710 = vshrl.u32 %v1709, 7
    %v1711 = vsub.s32 %v1708, %v1710
    %v1712 = vrot.slane %v1696, %v1711
    %v1714 = vunpack.c.l.s4 1966171168
    %v1715 = vunpack.c.0.s8 %v1714
    %v1716 = vlaneseq
    %v1717 = vshrl.u32 %v1716, 7
    %v1718 = vsub.s32 %v1715, %v1717
    %v1719 = vrot.slane %v1703, %v1718
    %v1721 = vunpack.c.l.s4 1966171168
    %v1722 = vunpack.c.0.s8 %v1721
    %v1723 = vlaneseq
    %v1724 = vshrl.u32 %v1723, 7
    %v1725 = vsub.s32 %v1722, %v1724
    %v1726 = vrot.slane %v1704, %v1725
    %v1728 = vunpack.c.l.s4 1966171168
    %v1729 = vunpack.c.0.s8 %v1728
    %v1730 = vlaneseq
    %v1731 = vshrl.u32 %v1730, 7
    %v1732 = vsub.s32 %v1729, %v1731
    %v1733 = vrot.slane %v1705, %v1732
    %v1734 = vcombine.high %v1712, %v1712
    %v1735 = vcombine.high %v1719, %v1719
    %v1736 = vcombine.high %v1726, %v1726
    %v1737 = vcombine.high %v1733, %v1733
    %v1738 = vcombine.high %v24, %v24
    %v1740 = vunpack.c.l.s4 1966171168
    %v1741 = vunpack.c.0.s8 %v1740
    %v1742 = vlaneseq
    %v1743 = vshrl.u32 %v1742, 7
    %v1744 = vsub.s32 %v1741, %v1743
    %v1745 = vrot.slane %v24, %v1744
    %v1747 = vunpack.c.l.s4 1966171168
    %v1748 = vunpack.c.0.s8 %v1747
    %v1749 = vlaneseq
    %v1750 = vshrl.u32 %v1749, 7
    %v1751 = vsub.s32 %v1748, %v1750
    %v1752 = vrot.slane %v1738, %v1751
    %v1753 = vcombine.high %v1745, %v1745
    %v1754 = vcombine.high %v1752, %v1752
    %v1756 = vunpack.c.l.s4 1966171168
    %v1757 = vunpack.c.0.s8 %v1756
    %v1758 = vlaneseq
    %v1759 = vshrl.u32 %v1758, 7
    %v1760 = vsub.s32 %v1757, %v1759
    %v1761 = vrot.slane %v1745, %v1760
    %v1763 = vunpack.c.l.s4 1966171168
    %v1764 = vunpack.c.0.s8 %v1763
    %v1765 = vlaneseq
    %v1766 = vshrl.u32 %v1765, 7
    %v1767 = vsub.s32 %v1764, %v1766
    %v1768 = vrot.slane %v1752, %v1767
    %v1770 = vunpack.c.l.s4 1966171168
    %v1771 = vunpack.c.0.s8 %v1770
    %v1772 = vlaneseq
    %v1773 = vshrl.u32 %v1772, 7
    %v1774 = vsub.s32 %v1771, %v1773
    %v1775 = vrot.slane %v1753, %v1774
    %v1777 = vunpack.c.l.s4 1966171168
    %v1778 = vunpack.c.0.s8 %v1777
    %v1779 = vlaneseq
    %v1780 = vshrl.u32 %v1779, 7
    %v1781 = vsub.s32 %v1778, %v1780
    %v1782 = vrot.slane %v1754, %v1781
    %v1783 = vcombine.high %v1761, %v1761
    %v1784 = vcombine.high %v1768, %v1768
    %v1785 = vcombine.high %v1775, %v1775
    %v1786 = vcombine.high %v1782, %v1782
    %v1788 = vunpack.c.l.s4 1966171168
    %v1789 = vunpack.c.0.s8 %v1788
    %v1790 = vlaneseq
    %v1791 = vshrl.u32 %v1790, 7
    %v1792 = vsub.s32 %v1789, %v1791
    %v1793 = vrot.slane %v25, %v1792
    %v1795 = vunpack.c.l.s4 1966171168
    %v1796 = vunpack.c.0.s8 %v1795
    %v1797 = vlaneseq
    %v1798 = vshrl.u32 %v1797, 7
    %v1799 = vsub.s32 %v1796, %v1798
    %v1800 = vrot.slane %v1793, %v1799
    %v3393 = vunpack.c.l.b16 %v26
    %v3394 = vunpack.c.h.b16 %v26
    %v3395 = vunpack.c.l.b16 %v27
    %v3396 = vunpack.c.h.b16 %v27
    %v3397 = vunpack.c.l.b16 %v28
    %v3398 = vunpack.c.h.b16 %v28
    %v3399 = vunpack.c.l.b16 %v29
    %v3400 = vunpack.c.h.b16 %v29
    %v3401 = vunpack.c.l.b16 %v30
    %v3402 = vunpack.c.h.b16 %v30
    %v3403 = vunpack.c.l.b16 %v31
    %v3404 = vunpack.c.h.b16 %v31
    %v3405 = vunpack.c.l.b16 %v32
    %v3406 = vunpack.c.h.b16 %v32
    %v3407 = vunpack.c.l.b16 %v33
    %v3408 = vunpack.c.h.b16 %v33
    %v3409 = vunpack.c.l.b16 %v34
    %v3410 = vunpack.c.h.b16 %v34
    %v3411 = vunpack.c.l.b16 %v35
    %v3412 = vunpack.c.h.b16 %v35
    %v3413 = vunpack.c.l.b16 %v36
    %v3414 = vunpack.c.h.b16 %v36
    %v3415 = vunpack.c.l.b16 %v37
    %v3416 = vunpack.c.h.b16 %v37
    %v3417 = vunpack.c.l.b16 %v38
    %v3418 = vunpack.c.h.b16 %v38
    %v3419 = vunpack.c.l.b16 %v39
    %v3420 = vunpack.c.h.b16 %v39
    %v3421 = vunpack.c.l.b16 %v40
    %v3422 = vunpack.c.h.b16 %v40
    %v3423 = vunpack.c.l.b16 %v41
    %v3424 = vunpack.c.h.b16 %v41
    %v3425 = vunpack.c.l.b16 %v42
    %v3426 = vunpack.c.h.b16 %v42
    %v3427 = vunpack.c.l.b16 %v43
    %v3428 = vunpack.c.h.b16 %v43
    %v3429 = vunpack.c.l.b16 %v44
    %v3430 = vunpack.c.h.b16 %v44
    %v3431 = vunpack.c.l.b16 %v45
    %v3432 = vunpack.c.h.b16 %v45
    %v3433 = vunpack.c.l.b16 %v46
    %v3434 = vunpack.c.h.b16 %v46
    %v3435 = vunpack.c.l.b16 %v47
    %v3436 = vunpack.c.h.b16 %v47
    %v3437 = vunpack.c.l.b16 %v48
    %v3438 = vunpack.c.h.b16 %v48
    %v3439 = vunpack.c.l.b16 %v49
    %v3440 = vunpack.c.h.b16 %v49
    %v3441 = vunpack.c.l.b16 %v50
    %v3442 = vunpack.c.h.b16 %v50
    %v3443 = vunpack.c.l.b16 %v51
    %v3444 = vunpack.c.h.b16 %v51
    %v3445 = vunpack.c.l.b16 %v52
    %v3446 = vunpack.c.h.b16 %v52
    %v3447 = vunpack.c.l.b16 %v53
    %v3448 = vunpack.c.h.b16 %v53
    %v3449 = vunpack.c.l.b16 %v54
    %v3450 = vunpack.c.h.b16 %v54
    %v3451 = vunpack.c.l.b16 %v55
    %v3452 = vunpack.c.h.b16 %v55
    %v3453 = vunpack.c.l.b16 %v56
    %v3454 = vunpack.c.h.b16 %v56
    %v3455 = vunpack.c.l.b16 %v57
    %v3456 = vunpack.c.h.b16 %v57
    %v3457 = vunpack.c.l.b16 %v58
    %v3458 = vunpack.c.h.b16 %v58
    %v3459 = vunpack.c.l.b16 %v59
    %v3460 = vunpack.c.h.b16 %v59
    %v3461 = vunpack.c.l.b16 %v60
    %v3462 = vunpack.c.h.b16 %v60
    %v3463 = vunpack.c.l.b16 %v61
    %v3464 = vunpack.c.h.b16 %v61
    %v3465 = vunpack.c.l.b16 %v62
    %v3466 = vunpack.c.h.b16 %v62
    %v3467 = vunpack.c.l.b16 %v63
    %v3468 = vunpack.c.h.b16 %v63
    %v3469 = vunpack.c.l.b16 %v64
    %v3470 = vunpack.c.h.b16 %v64
    %v3471 = vunpack.c.l.b16 %v65
    %v3472 = vunpack.c.h.b16 %v65
    %v3473 = vunpack.c.l.b16 %v66
    %v3474 = vunpack.c.h.b16 %v66
    %v3475 = vunpack.c.l.b16 %v67
    %v3476 = vunpack.c.h.b16 %v67
    %v3477 = vunpack.c.l.b16 %v68
    %v3478 = vunpack.c.h.b16 %v68
    %v3479 = vunpack.c.l.b16 %v69
    %v3480 = vunpack.c.h.b16 %v69
    %v3481 = vunpack.c.l.b16 %v70
    %v3482 = vunpack.c.h.b16 %v70
    %v3483 = vunpack.c.l.b16 %v71
    %v3484 = vunpack.c.h.b16 %v71
    %v3485 = vunpack.c.l.b16 %v72
    %v3486 = vunpack.c.h.b16 %v72
    %v3487 = vunpack.c.l.b16 %v73
    %v3488 = vunpack.c.h.b16 %v73
    %v3489 = vunpack.c.l.b16 %v74
    %v3490 = vunpack.c.h.b16 %v74
    %v3491 = vunpack.c.l.b16 %v75
    %v3492 = vunpack.c.h.b16 %v75
    %v3493 = vunpack.c.l.b16 %v76
    %v3494 = vunpack.c.h.b16 %v76
    %v3495 = vunpack.c.l.b16 %v77
    %v3496 = vunpack.c.h.b16 %v77
    %v3497 = vunpack.c.l.b16 %v78
    %v3498 = vunpack.c.h.b16 %v78
    %v3499 = vunpack.c.l.b16 %v79
    %v3500 = vunpack.c.h.b16 %v79
    %v3501 = vunpack.c.l.b16 %v80
    %v3502 = vunpack.c.h.b16 %v80
    %v3503 = vunpack.c.l.b16 %v81
    %v3504 = vunpack.c.h.b16 %v81
    %v3505 = vunpack.c.l.b16 %v82
    %v3506 = vunpack.c.h.b16 %v82
    %v3507 = vunpack.c.l.b16 %v83
    %v3508 = vunpack.c.h.b16 %v83
    %v3509 = vunpack.c.l.b16 %v84
    %v3510 = vunpack.c.h.b16 %v84
    %v3511 = vunpack.c.l.b16 %v85
    %v3512 = vunpack.c.h.b16 %v85
    %v3513 = vunpack.c.l.b16 %v86
    %v3514 = vunpack.c.h.b16 %v86
    %v3515 = vunpack.c.l.b16 %v87
    %v3516 = vunpack.c.h.b16 %v87
    %v3517 = vunpack.c.l.b16 %v88
    %v3518 = vunpack.c.h.b16 %v88
    %v3519 = vunpack.c.l.b16 %v89
    %v3520 = vunpack.c.h.b16 %v89
    %v3521 = vunpack.c.l.b16 %v90
    %v3522 = vunpack.c.h.b16 %v90
    %v3523 = vunpack.c.l.b16 %v91
    %v3524 = vunpack.c.h.b16 %v91
    %v3525 = vunpack.c.l.b16 %v92
    %v3526 = vunpack.c.h.b16 %v92
    %v3527 = vunpack.c.l.b16 %v93
    %v3528 = vunpack.c.h.b16 %v93
    %v3529 = vunpack.c.l.b16 %v94
    %v3530 = vunpack.c.h.b16 %v94
    %v3531 = vunpack.c.l.b16 %v95
    %v3532 = vunpack.c.h.b16 %v95
    %v3533 = vunpack.c.l.b16 %v96
    %v3534 = vunpack.c.h.b16 %v96
    %v3535 = vunpack.c.l.b16 %v97
    %v3536 = vunpack.c.h.b16 %v97
    %v3537 = vunpack.c.l.b16 %v98
    %v3538 = vunpack.c.h.b16 %v98
    %v3539 = vunpack.c.l.b16 %v99
    %v3540 = vunpack.c.h.b16 %v99
    %v3541 = vunpack.c.l.b16 %v100
    %v3542 = vunpack.c.h.b16 %v100
    %v3543 = vunpack.c.l.b16 %v101
    %v3544 = vunpack.c.h.b16 %v101
    %v3545 = vunpack.c.l.b16 %v102
    %v3546 = vunpack.c.h.b16 %v102
    %v3547 = vunpack.c.l.b16 %v103
    %v3548 = vunpack.c.h.b16 %v103
    %v3549 = vunpack.c.l.b16 %v104
    %v3550 = vunpack.c.h.b16 %v104
    %v3551 = vunpack.c.l.b16 %v105
    %v3552 = vunpack.c.h.b16 %v105
    %v3553 = vunpack.c.l.b16 %v106
    %v3554 = vunpack.c.h.b16 %v106
    %v3555 = vunpack.c.l.b16 %v107
    %v3556 = vunpack.c.h.b16 %v107
    %v3557 = vunpack.c.l.b16 %v108
    %v3558 = vunpack.c.h.b16 %v108
    %v3559 = vunpack.c.l.b16 %v109
    %v3560 = vunpack.c.h.b16 %v109
    %v3561 = vunpack.c.l.b16 %v110
    %v3562 = vunpack.c.h.b16 %v110
    %v3563 = vunpack.c.l.b16 %v111
    %v3564 = vunpack.c.h.b16 %v111
    %v3565 = vunpack.c.l.b16 %v112
    %v3566 = vunpack.c.h.b16 %v112
    %v3567 = vunpack.c.l.b16 %v113
    %v3568 = vunpack.c.h.b16 %v113
    %v3569 = vunpack.c.l.b16 %v114
    %v3570 = vunpack.c.h.b16 %v114
    %v3571 = vunpack.c.l.b16 %v115
    %v3572 = vunpack.c.h.b16 %v115
    %v3573 = vunpack.c.l.b16 %v116
    %v3574 = vunpack.c.h.b16 %v116
    %v3575 = vunpack.c.l.b16 %v117
    %v3576 = vunpack.c.h.b16 %v117
    %v3577 = vunpack.c.l.b16 %v118
    %v3578 = vunpack.c.h.b16 %v118
    %v3579 = vunpack.c.l.b16 %v119
    %v3580 = vunpack.c.h.b16 %v119
    %v3581 = vunpack.c.l.b16 %v120
    %v3582 = vunpack.c.h.b16 %v120
    %v3583 = vunpack.c.l.b16 %v121
    %v3584 = vunpack.c.h.b16 %v121
    %v3585 = vunpack.c.l.b16 %v122
    %v3586 = vunpack.c.h.b16 %v122
    %v3587 = vunpack.c.l.b16 %v123
    %v3588 = vunpack.c.h.b16 %v123
    %v3589 = vunpack.c.l.b16 %v124
    %v3590 = vunpack.c.h.b16 %v124
    %v3591 = vunpack.c.l.b16 %v125
    %v3592 = vunpack.c.h.b16 %v125
    %v3593 = vunpack.c.l.b16 %v126
    %v3594 = vunpack.c.h.b16 %v126
    %v3595 = vunpack.c.l.b16 %v127
    %v3596 = vunpack.c.h.b16 %v127
    %v3597 = vunpack.c.l.b16 %v128
    %v3598 = vunpack.c.h.b16 %v128
    %v3599 = vunpack.c.l.b16 %v129
    %v3600 = vunpack.c.h.b16 %v129
    %v3601 = vunpack.c.l.b16 %v130
    %v3602 = vunpack.c.h.b16 %v130
    %v3603 = vunpack.c.l.b16 %v131
    %v3604 = vunpack.c.h.b16 %v131
    %v3605 = vunpack.c.l.b16 %v132
    %v3606 = vunpack.c.h.b16 %v132
    %v3607 = vunpack.c.l.b16 %v133
    %v3608 = vunpack.c.h.b16 %v133
    %v3609 = vunpack.c.l.b16 %v134
    %v3610 = vunpack.c.h.b16 %v134
    %v3611 = vunpack.c.l.b16 %v135
    %v3612 = vunpack.c.h.b16 %v135
    %v3613 = vunpack.c.l.b16 %v136
    %v3614 = vunpack.c.h.b16 %v136
    %v3615 = vunpack.c.l.b16 %v137
    %v3616 = vunpack.c.h.b16 %v137
    %v3617 = vunpack.c.l.b16 %v138
    %v3618 = vunpack.c.h.b16 %v138
    %v3619 = vunpack.c.l.b16 %v139
    %v3620 = vunpack.c.h.b16 %v139
    %v3621 = vunpack.c.l.b16 %v140
    %v3622 = vunpack.c.h.b16 %v140
    %v3623 = vunpack.c.l.b16 %v141
    %v3624 = vunpack.c.h.b16 %v141
    %v3625 = vunpack.c.l.b16 %v142
    %v3626 = vunpack.c.h.b16 %v142
    %v3627 = vunpack.c.l.b16 %v143
    %v3628 = vunpack.c.h.b16 %v143
    %v3629 = vunpack.c.l.b16 %v144
    %v3630 = vunpack.c.h.b16 %v144
    %v3631 = vunpack.c.l.b16 %v145
    %v3632 = vunpack.c.h.b16 %v145
    %v3633 = vunpack.c.l.b16 %v146
    %v3634 = vunpack.c.h.b16 %v146
    %v3635 = vunpack.c.l.b16 %v147
    %v3636 = vunpack.c.h.b16 %v147
    %v3637 = vunpack.c.l.b16 %v148
    %v3638 = vunpack.c.h.b16 %v148
    %v3639 = vunpack.c.l.b16 %v149
    %v3640 = vunpack.c.h.b16 %v149
    %v3641 = vunpack.c.l.b16 %v150
    %v3642 = vunpack.c.h.b16 %v150
    %v3643 = vunpack.c.l.b16 %v151
    %v3644 = vunpack.c.h.b16 %v151
    %v3645 = vunpack.c.l.b16 %v152
    %v3646 = vunpack.c.h.b16 %v152
    %v3647 = vunpack.c.l.b16 %v153
    %v3648 = vunpack.c.h.b16 %v153
    %v3649 = vunpack.c.l.b16 %v154
    %v3650 = vunpack.c.h.b16 %v154
    %v3651 = vunpack.c.l.b16 %v155
    %v3652 = vunpack.c.h.b16 %v155
    %v3653 = vunpack.c.l.b16 %v156
    %v3654 = vunpack.c.h.b16 %v156
    %v3655 = vunpack.c.l.b16 %v157
    %v3656 = vunpack.c.h.b16 %v157
    %v3657 = vunpack.c.l.b16 %v158
    %v3658 = vunpack.c.h.b16 %v158
    %v3659 = vunpack.c.l.b16 %v159
    %v3660 = vunpack.c.h.b16 %v159
    %v3661 = vunpack.c.l.b16 %v160
    %v3662 = vunpack.c.h.b16 %v160
    %v3663 = vunpack.c.l.b16 %v161
    %v3664 = vunpack.c.h.b16 %v161
    %v3665 = vunpack.c.l.b16 %v162
    %v3666 = vunpack.c.h.b16 %v162
    %v3667 = vunpack.c.l.b16 %v163
    %v3668 = vunpack.c.h.b16 %v163
    %v3669 = vunpack.c.l.b16 %v164
    %v3670 = vunpack.c.h.b16 %v164
    %v3671 = vunpack.c.l.b16 %v165
    %v3672 = vunpack.c.h.b16 %v165
    %v3673 = vunpack.c.l.b16 %v166
    %v3674 = vunpack.c.h.b16 %v166
    %v3675 = vunpack.c.l.b16 %v167
    %v3676 = vunpack.c.h.b16 %v167
    %v3677 = vunpack.c.l.b16 %v168
    %v3678 = vunpack.c.h.b16 %v168
    %v3679 = vunpack.c.l.b16 %v169
    %v3680 = vunpack.c.h.b16 %v169
    %v3681 = vunpack.c.l.b16 %v170
    %v3682 = vunpack.c.h.b16 %v170
    %v3683 = vunpack.c.l.b16 %v171
    %v3684 = vunpack.c.h.b16 %v171
    %v3685 = vunpack.c.l.b16 %v172
    %v3686 = vunpack.c.h.b16 %v172
    %v3687 = vunpack.c.l.b16 %v173
    %v3688 = vunpack.c.h.b16 %v173
    %v3689 = vunpack.c.l.b16 %v174
    %v3690 = vunpack.c.h.b16 %v174
    %v3691 = vunpack.c.l.b16 %v175
    %v3692 = vunpack.c.h.b16 %v175
    %v3693 = vunpack.c.l.b16 %v176
    %v3694 = vunpack.c.h.b16 %v176
    %v3695 = vunpack.c.l.b16 %v177
    %v3696 = vunpack.c.h.b16 %v177
    %v3697 = vunpack.c.l.b16 %v178
    %v3698 = vunpack.c.h.b16 %v178
    %v3699 = vunpack.c.l.b16 %v179
    %v3700 = vunpack.c.h.b16 %v179
    %v3701 = vunpack.c.l.b16 %v180
    %v3702 = vunpack.c.h.b16 %v180
    %v3703 = vunpack.c.l.b16 %v181
    %v3704 = vunpack.c.h.b16 %v181
    %v3705 = vunpack.c.l.b16 %v182
    %v3706 = vunpack.c.h.b16 %v182
    %v3707 = vunpack.c.l.b16 %v183
    %v3708 = vunpack.c.h.b16 %v183
    %v3709 = vunpack.c.l.b16 %v184
    %v3710 = vunpack.c.h.b16 %v184
    %v3711 = vunpack.c.l.b16 %v185
    %v3712 = vunpack.c.h.b16 %v185
    %v3713 = vunpack.c.l.b16 %v186
    %v3714 = vunpack.c.h.b16 %v186
    %v3715 = vunpack.c.l.b16 %v187
    %v3716 = vunpack.c.h.b16 %v187
    %v3717 = vunpack.c.l.b16 %v188
    %v3718 = vunpack.c.h.b16 %v188
    %v3719 = vunpack.c.l.b16 %v189
    %v3720 = vunpack.c.h.b16 %v189
    %v3721 = vunpack.c.l.b16 %v190
    %v3722 = vunpack.c.h.b16 %v190
    %v3723 = vunpack.c.l.b16 %v191
    %v3724 = vunpack.c.h.b16 %v191
    %v3725 = vunpack.c.l.b16 %v192
    %v3726 = vunpack.c.h.b16 %v192
    %v3727 = vunpack.c.l.b16 %v193
    %v3728 = vunpack.c.h.b16 %v193
    %v3729 = vunpack.c.l.b16 %v194
    %v3730 = vunpack.c.h.b16 %v194
    %v3731 = vunpack.c.l.b16 %v195
    %v3732 = vunpack.c.h.b16 %v195
    %v3733 = vunpack.c.l.b16 %v196
    %v3734 = vunpack.c.h.b16 %v196
    %v3735 = vunpack.c.l.b16 %v197
    %v3736 = vunpack.c.h.b16 %v197
    %v3737 = vunpack.c.l.b16 %v198
    %v3738 = vunpack.c.h.b16 %v198
    %v3739 = vunpack.c.l.b16 %v199
    %v3740 = vunpack.c.h.b16 %v199
    %v3741 = vunpack.c.l.b16 %v200
    %v3742 = vunpack.c.h.b16 %v200
    %v3743 = vunpack.c.l.b16 %v201
    %v3744 = vunpack.c.h.b16 %v201
    %v3745 = vunpack.c.l.b16 %v202
    %v3746 = vunpack.c.h.b16 %v202
    %v3747 = vunpack.c.l.b16 %v203
    %v3748 = vunpack.c.h.b16 %v203
    %v3749 = vunpack.c.l.b16 %v204
    %v3750 = vunpack.c.h.b16 %v204
    %v3751 = vunpack.c.l.b16 %v205
    %v3752 = vunpack.c.h.b16 %v205
    %v3753 = vunpack.c.l.b16 %v206
    %v3754 = vunpack.c.h.b16 %v206
    %v3755 = vunpack.c.l.b16 %v207
    %v3756 = vunpack.c.h.b16 %v207
    %v3757 = vunpack.c.l.b16 %v208
    %v3758 = vunpack.c.h.b16 %v208
    %v3759 = vunpack.c.l.b16 %v209
    %v3760 = vunpack.c.h.b16 %v209
    %v3761 = vunpack.c.l.b16 %v210
    %v3762 = vunpack.c.h.b16 %v210
    %v3763 = vunpack.c.l.b16 %v211
    %v3764 = vunpack.c.h.b16 %v211
    %v3765 = vunpack.c.l.b16 %v212
    %v3766 = vunpack.c.h.b16 %v212
    %v3767 = vunpack.c.l.b16 %v213
    %v3768 = vunpack.c.h.b16 %v213
    %v3769 = vunpack.c.l.b16 %v214
    %v3770 = vunpack.c.h.b16 %v214
    %v3771 = vunpack.c.l.b16 %v215
    %v3772 = vunpack.c.h.b16 %v215
    %v3773 = vunpack.c.l.b16 %v216
    %v3774 = vunpack.c.h.b16 %v216
    %v3775 = vunpack.c.l.b16 %v217
    %v3776 = vunpack.c.h.b16 %v217
    %v3777 = vunpack.c.l.b16 %v218
    %v3778 = vunpack.c.h.b16 %v218
    %v3779 = vunpack.c.l.b16 %v219
    %v3780 = vunpack.c.h.b16 %v219
    %v3781 = vunpack.c.l.b16 %v220
    %v3782 = vunpack.c.h.b16 %v220
    %v3783 = vunpack.c.l.b16 %v221
    %v3784 = vunpack.c.h.b16 %v221
    %v3785 = vunpack.c.l.b16 %v222
    %v3786 = vunpack.c.h.b16 %v222
    %v3787 = vunpack.c.l.b16 %v223
    %v3788 = vunpack.c.h.b16 %v223
    %v3789 = vunpack.c.l.b16 %v224
    %v3790 = vunpack.c.h.b16 %v224
    %v3791 = vunpack.c.l.b16 %v225
    %v3792 = vunpack.c.h.b16 %v225
    %v3793 = vunpack.c.l.b16 %v226
    %v3794 = vunpack.c.h.b16 %v226
    %v3795 = vunpack.c.l.b16 %v227
    %v3796 = vunpack.c.h.b16 %v227
    %v3797 = vunpack.c.l.b16 %v228
    %v3798 = vunpack.c.h.b16 %v228
    %v3799 = vunpack.c.l.b16 %v229
    %v3800 = vunpack.c.h.b16 %v229
    %v3801 = vunpack.c.l.b16 %v230
    %v3802 = vunpack.c.h.b16 %v230
    %v3803 = vunpack.c.l.b16 %v231
    %v3804 = vunpack.c.h.b16 %v231
    %v3805 = vunpack.c.l.b16 %v232
    %v3806 = vunpack.c.h.b16 %v232
    %v3807 = vunpack.c.l.b16 %v233
    %v3808 = vunpack.c.h.b16 %v233
    %v3809 = vunpack.c.l.b16 %v234
    %v3810 = vunpack.c.h.b16 %v234
    %v3811 = vunpack.c.l.b16 %v235
    %v3812 = vunpack.c.h.b16 %v235
    %v3813 = vunpack.c.l.b16 %v236
    %v3814 = vunpack.c.h.b16 %v236
    %v3815 = vunpack.c.l.b16 %v237
    %v3816 = vunpack.c.h.b16 %v237
    %v3817 = vunpack.c.l.b16 %v238
    %v3818 = vunpack.c.h.b16 %v238
    %v3819 = vunpack.c.l.b16 %v239
    %v3820 = vunpack.c.h.b16 %v239
    %v3821 = vunpack.c.l.b16 %v240
    %v3822 = vunpack.c.h.b16 %v240
    %v3823 = vunpack.c.l.b16 %v241
    %v3824 = vunpack.c.h.b16 %v241
    %v3825 = vunpack.c.l.b16 %v242
    %v3826 = vunpack.c.h.b16 %v242
    %v3827 = vunpack.c.l.b16 %v243
    %v3828 = vunpack.c.h.b16 %v243
    %v3829 = vunpack.c.l.b16 %v244
    %v3830 = vunpack.c.h.b16 %v244
    %v3831 = vunpack.c.l.b16 %v245
    %v3832 = vunpack.c.h.b16 %v245
    %v3833 = vunpack.c.l.b16 %v246
    %v3834 = vunpack.c.h.b16 %v246
    %v3835 = vunpack.c.l.b16 %v247
    %v3836 = vunpack.c.h.b16 %v247
    %v3837 = vunpack.c.l.b16 %v248
    %v3838 = vunpack.c.h.b16 %v248
    %v3839 = vunpack.c.l.b16 %v249
    %v3840 = vunpack.c.h.b16 %v249
    %v3841 = vunpack.c.l.b16 %v250
    %v3842 = vunpack.c.h.b16 %v250
    %v3843 = vunpack.c.l.b16 %v251
    %v3844 = vunpack.c.h.b16 %v251
    %v3845 = vunpack.c.l.b16 %v252
    %v3846 = vunpack.c.h.b16 %v252
    %v3847 = vunpack.c.l.b16 %v253
    %v3848 = vunpack.c.h.b16 %v253
    %v3849 = vunpack.c.l.b16 %v254
    %v3850 = vunpack.c.h.b16 %v254
    %v3851 = vunpack.c.l.b16 %v255
    %v3852 = vunpack.c.h.b16 %v255
    %v3853 = vunpack.c.l.b16 %v256
    %v3854 = vunpack.c.h.b16 %v256
    %v3855 = vunpack.c.l.b16 %v257
    %v3856 = vunpack.c.h.b16 %v257
    %v3857 = vunpack.c.l.b16 %v258
    %v3858 = vunpack.c.h.b16 %v258
    %v3859 = vunpack.c.l.b16 %v259
    %v3860 = vunpack.c.h.b16 %v259
    %v3861 = vunpack.c.l.b16 %v260
    %v3862 = vunpack.c.h.b16 %v260
    %v3863 = vunpack.c.l.b16 %v261
    %v3864 = vunpack.c.h.b16 %v261
    %v3865 = vunpack.c.l.b16 %v262
    %v3866 = vunpack.c.h.b16 %v262
    %v3867 = vunpack.c.l.b16 %v263
    %v3868 = vunpack.c.h.b16 %v263
    %v3869 = vunpack.c.l.b16 %v264
    %v3870 = vunpack.c.h.b16 %v264
    %v3871 = vunpack.c.l.b16 %v265
    %v3872 = vunpack.c.h.b16 %v265
    %v3873 = vunpack.c.l.b16 %v266
    %v3874 = vunpack.c.h.b16 %v266
    %v3875 = vunpack.c.l.b16 %v267
    %v3876 = vunpack.c.h.b16 %v267
    %v3877 = vunpack.c.l.b16 %v268
    %v3878 = vunpack.c.h.b16 %v268
    %v3879 = vunpack.c.l.b16 %v269
    %v3880 = vunpack.c.h.b16 %v269
    %v3881 = vunpack.c.l.b16 %v270
    %v3882 = vunpack.c.h.b16 %v270
    %v3883 = vunpack.c.l.b16 %v271
    %v3884 = vunpack.c.h.b16 %v271
    %v3885 = vunpack.c.l.b16 %v272
    %v3886 = vunpack.c.h.b16 %v272
    %v3887 = vunpack.c.l.b16 %v273
    %v3888 = vunpack.c.h.b16 %v273
    %v3889 = vunpack.c.l.b16 %v274
    %v3890 = vunpack.c.h.b16 %v274
    %v3891 = vunpack.c.l.b16 %v275
    %v3892 = vunpack.c.h.b16 %v275
    %v3893 = vunpack.c.l.b16 %v276
    %v3894 = vunpack.c.h.b16 %v276
    %v3895 = vunpack.c.l.b16 %v277
    %v3896 = vunpack.c.h.b16 %v277
    %v3897 = vunpack.c.l.b16 %v278
    %v3898 = vunpack.c.h.b16 %v278
    %v3899 = vunpack.c.l.b16 %v279
    %v3900 = vunpack.c.h.b16 %v279
    %v3901 = vunpack.c.l.b16 %v280
    %v3902 = vunpack.c.h.b16 %v280
    %v3903 = vunpack.c.l.b16 %v281
    %v3904 = vunpack.c.h.b16 %v281
    %v3905 = vunpack.c.l.b16 %v282
    %v3906 = vunpack.c.h.b16 %v282
    %v3907 = vunpack.c.l.b16 %v283
    %v3908 = vunpack.c.h.b16 %v283
    %v3909 = vunpack.c.l.b16 %v284
    %v3910 = vunpack.c.h.b16 %v284
    %v3911 = vunpack.c.l.b16 %v285
    %v3912 = vunpack.c.h.b16 %v285
    %v3913 = vunpack.c.l.b16 %v286
    %v3914 = vunpack.c.h.b16 %v286
    %v3915 = vunpack.c.l.b16 %v287
    %v3916 = vunpack.c.h.b16 %v287
    %v3917 = vunpack.c.l.b16 %v288
    %v3918 = vunpack.c.h.b16 %v288
    %v3919 = vunpack.c.l.b16 %v289
    %v3920 = vunpack.c.h.b16 %v289
    %v3921 = vunpack.c.l.b16 %v290
    %v3922 = vunpack.c.h.b16 %v290
    %v3923 = vunpack.c.l.b16 %v291
    %v3924 = vunpack.c.h.b16 %v291
    %v3925 = vunpack.c.l.b16 %v292
    %v3926 = vunpack.c.h.b16 %v292
    %v3927 = vunpack.c.l.b16 %v293
    %v3928 = vunpack.c.h.b16 %v293
    %v3929 = vunpack.c.l.b16 %v294
    %v3930 = vunpack.c.h.b16 %v294
    %v3931 = vunpack.c.l.b16 %v295
    %v3932 = vunpack.c.h.b16 %v295
    %v3933 = vunpack.c.l.b16 %v296
    %v3934 = vunpack.c.h.b16 %v296
    %v3935 = vunpack.c.l.b16 %v297
    %v3936 = vunpack.c.h.b16 %v297
    %v3937 = vunpack.c.l.b16 %v298
    %v3938 = vunpack.c.h.b16 %v298
    %v3939 = vunpack.c.l.b16 %v299
    %v3940 = vunpack.c.h.b16 %v299
    %v3941 = vunpack.c.l.b16 %v300
    %v3942 = vunpack.c.h.b16 %v300
    %v3943 = vunpack.c.l.b16 %v301
    %v3944 = vunpack.c.h.b16 %v301
    %v3945 = vunpack.c.l.b16 %v302
    %v3946 = vunpack.c.h.b16 %v302
    %v3947 = vunpack.c.l.b16 %v303
    %v3948 = vunpack.c.h.b16 %v303
    %v3949 = vunpack.c.l.b16 %v304
    %v3950 = vunpack.c.h.b16 %v304
    %v3951 = vunpack.c.l.b16 %v305
    %v3952 = vunpack.c.h.b16 %v305
    %v3953 = vunpack.c.l.b16 %v306
    %v3954 = vunpack.c.h.b16 %v306
    %v3955 = vunpack.c.l.b16 %v307
    %v3956 = vunpack.c.h.b16 %v307
    %v3957 = vunpack.c.l.b16 %v308
    %v3958 = vunpack.c.h.b16 %v308
    %v3959 = vunpack.c.l.b16 %v309
    %v3960 = vunpack.c.h.b16 %v309
    %v3961 = vunpack.c.l.b16 %v310
    %v3962 = vunpack.c.h.b16 %v310
    %v3963 = vunpack.c.l.b16 %v311
    %v3964 = vunpack.c.h.b16 %v311
    %v3965 = vunpack.c.l.b16 %v312
    %v3966 = vunpack.c.h.b16 %v312
    %v3967 = vunpack.c.l.b16 %v313
    %v3968 = vunpack.c.h.b16 %v313
    %v3969 = vunpack.c.l.b16 %v314
    %v3970 = vunpack.c.h.b16 %v314
    %v3971 = vunpack.c.l.b16 %v315
    %v3972 = vunpack.c.h.b16 %v315
    %v3973 = vunpack.c.l.b16 %v316
    %v3974 = vunpack.c.h.b16 %v316
    %v3975 = vunpack.c.l.b16 %v317
    %v3976 = vunpack.c.h.b16 %v317
    %v3977 = vunpack.c.l.b16 %v318
    %v3978 = vunpack.c.h.b16 %v318
    %v3979 = vunpack.c.l.b16 %v319
    %v3980 = vunpack.c.h.b16 %v319
    %v3981 = vunpack.c.l.b16 %v320
    %v3982 = vunpack.c.h.b16 %v320
    %v3983 = vunpack.c.l.b16 %v321
    %v3984 = vunpack.c.h.b16 %v321
    %v3985 = vunpack.c.l.b16 %v322
    %v3986 = vunpack.c.h.b16 %v322
    %v3987 = vunpack.c.l.b16 %v323
    %v3988 = vunpack.c.h.b16 %v323
    %v3989 = vunpack.c.l.b16 %v324
    %v3990 = vunpack.c.h.b16 %v324
    %v3991 = vunpack.c.l.b16 %v325
    %v3992 = vunpack.c.h.b16 %v325
    %v3993 = vunpack.c.l.b16 %v326
    %v3994 = vunpack.c.h.b16 %v326
    %v3995 = vunpack.c.l.b16 %v327
    %v3996 = vunpack.c.h.b16 %v327
    %v3997 = vunpack.c.l.b16 %v328
    %v3998 = vunpack.c.h.b16 %v328
    %v3999 = vunpack.c.l.b16 %v329
    %v4000 = vunpack.c.h.b16 %v329
    %v4001 = vunpack.c.l.b16 %v330
    %v4002 = vunpack.c.h.b16 %v330
    %v4003 = vunpack.c.l.b16 %v331
    %v4004 = vunpack.c.h.b16 %v331
    %v4005 = vunpack.c.l.b16 %v332
    %v4006 = vunpack.c.h.b16 %v332
    %v4007 = vunpack.c.l.b16 %v333
    %v4008 = vunpack.c.h.b16 %v333
    %v4009 = vunpack.c.l.b16 %v334
    %v4010 = vunpack.c.h.b16 %v334
    %v4011 = vunpack.c.l.b16 %v335
    %v4012 = vunpack.c.h.b16 %v335
    %v4013 = vunpack.c.l.b16 %v336
    %v4014 = vunpack.c.h.b16 %v336
    %v4015 = vunpack.c.l.b16 %v337
    %v4016 = vunpack.c.h.b16 %v337
    %v4017 = vunpack.c.l.b16 %v338
    %v4018 = vunpack.c.h.b16 %v338
    %v4019 = vunpack.c.l.b16 %v339
    %v4020 = vunpack.c.h.b16 %v339
    %v4021 = vunpack.c.l.b16 %v340
    %v4022 = vunpack.c.h.b16 %v340
    %v4023 = vunpack.c.l.b16 %v341
    %v4024 = vunpack.c.h.b16 %v341
    %v4025 = vunpack.c.l.b16 %v342
    %v4026 = vunpack.c.h.b16 %v342
    %v4027 = vunpack.c.l.b16 %v343
    %v4028 = vunpack.c.h.b16 %v343
    %v4029 = vunpack.c.l.b16 %v344
    %v4030 = vunpack.c.h.b16 %v344
    %v4031 = vunpack.c.l.b16 %v345
    %v4032 = vunpack.c.h.b16 %v345
    %v4033 = vunpack.c.l.b16 %v346
    %v4034 = vunpack.c.h.b16 %v346
    %v4035 = vunpack.c.l.b16 %v347
    %v4036 = vunpack.c.h.b16 %v347
    %v4037 = vunpack.c.l.b16 %v348
    %v4038 = vunpack.c.h.b16 %v348
    %v4039 = vunpack.c.l.b16 %v349
    %v4040 = vunpack.c.h.b16 %v349
    %v4041 = vunpack.c.l.b16 %v350
    %v4042 = vunpack.c.h.b16 %v350
    %v4043 = vunpack.c.l.b16 %v351
    %v4044 = vunpack.c.h.b16 %v351
    %v4045 = vunpack.c.l.b16 %v352
    %v4046 = vunpack.c.h.b16 %v352
    %v4047 = vunpack.c.l.b16 %v353
    %v4048 = vunpack.c.h.b16 %v353
    %v4049 = vunpack.c.l.b16 %v354
    %v4050 = vunpack.c.h.b16 %v354
    %v4051 = vunpack.c.l.b16 %v355
    %v4052 = vunpack.c.h.b16 %v355
    %v4053 = vunpack.c.l.b16 %v356
    %v4054 = vunpack.c.h.b16 %v356
    %v4055 = vunpack.c.l.b16 %v357
    %v4056 = vunpack.c.h.b16 %v357
    %v4057 = vunpack.c.l.b16 %v358
    %v4058 = vunpack.c.h.b16 %v358
    %v4059 = vunpack.c.l.b16 %v359
    %v4060 = vunpack.c.h.b16 %v359
    %v4061 = vunpack.c.l.b16 %v360
    %v4062 = vunpack.c.h.b16 %v360
    %v4063 = vunpack.c.l.b16 %v361
    %v4064 = vunpack.c.h.b16 %v361
    %v4065 = vunpack.c.l.b16 %v362
    %v4066 = vunpack.c.h.b16 %v362
    %v4067 = vunpack.c.l.b16 %v363
    %v4068 = vunpack.c.h.b16 %v363
    %v4069 = vunpack.c.l.b16 %v364
    %v4070 = vunpack.c.h.b16 %v364
    %v4071 = vunpack.c.l.b16 %v365
    %v4072 = vunpack.c.h.b16 %v365
    %v4073 = vunpack.c.l.b16 %v366
    %v4074 = vunpack.c.h.b16 %v366
    %v4075 = vunpack.c.l.b16 %v367
    %v4076 = vunpack.c.h.b16 %v367
    %v4077 = vunpack.c.l.b16 %v368
    %v4078 = vunpack.c.h.b16 %v368
    %v4079 = vunpack.c.l.b16 %v369
    %v4080 = vunpack.c.h.b16 %v369
    %v4081 = vunpack.c.l.b16 %v370
    %v4082 = vunpack.c.h.b16 %v370
    %v4083 = vunpack.c.l.b16 %v371
    %v4084 = vunpack.c.h.b16 %v371
    %v4085 = vunpack.c.l.b16 %v372
    %v4086 = vunpack.c.h.b16 %v372
    %v4087 = vunpack.c.l.b16 %v373
    %v4088 = vunpack.c.h.b16 %v373
    %v4089 = vunpack.c.l.b16 %v374
    %v4090 = vunpack.c.h.b16 %v374
    %v4091 = vunpack.c.l.b16 %v375
    %v4092 = vunpack.c.h.b16 %v375
    %v4093 = vunpack.c.l.b16 %v376
    %v4094 = vunpack.c.h.b16 %v376
    %v4095 = vunpack.c.l.b16 %v377
    %v4096 = vunpack.c.h.b16 %v377
    %v4097 = vunpack.c.l.b16 %v378
    %v4098 = vunpack.c.h.b16 %v378
    %v4099 = vunpack.c.l.b16 %v379
    %v4100 = vunpack.c.h.b16 %v379
    %v4101 = vunpack.c.l.b16 %v380
    %v4102 = vunpack.c.h.b16 %v380
    %v4103 = vunpack.c.l.b16 %v381
    %v4104 = vunpack.c.h.b16 %v381
    %v4105 = vunpack.c.l.b16 %v382
    %v4106 = vunpack.c.h.b16 %v382
    %v4107 = vunpack.c.l.b16 %v383
    %v4108 = vunpack.c.h.b16 %v383
    %v4109 = vunpack.c.l.b16 %v384
    %v4110 = vunpack.c.h.b16 %v384
    %v4111 = vunpack.c.l.b16 %v385
    %v4112 = vunpack.c.h.b16 %v385
    %v4113 = vunpack.c.l.b16 %v386
    %v4114 = vunpack.c.h.b16 %v386
    %v4115 = vunpack.c.l.b16 %v387
    %v4116 = vunpack.c.h.b16 %v387
    %v4117 = vunpack.c.l.b16 %v388
    %v4118 = vunpack.c.h.b16 %v388
    %v4119 = vunpack.c.l.b16 %v389
    %v4120 = vunpack.c.h.b16 %v389
    %v4121 = vunpack.c.l.b16 %v390
    %v4122 = vunpack.c.h.b16 %v390
    %v4123 = vunpack.c.l.b16 %v391
    %v4124 = vunpack.c.h.b16 %v391
    %v4125 = vunpack.c.l.b16 %v392
    %v4126 = vunpack.c.h.b16 %v392
    %v4127 = vunpack.c.l.b16 %v393
    %v4128 = vunpack.c.h.b16 %v393
    %v4129 = vunpack.c.l.b16 %v394
    %v4130 = vunpack.c.h.b16 %v394
    %v4131 = vunpack.c.l.b16 %v395
    %v4132 = vunpack.c.h.b16 %v395
    %v4133 = vunpack.c.l.b16 %v396
    %v4134 = vunpack.c.h.b16 %v396
    %v4135 = vunpack.c.l.b16 %v397
    %v4136 = vunpack.c.h.b16 %v397
    %v4137 = vunpack.c.l.b16 %v398
    %v4138 = vunpack.c.h.b16 %v398
    %v4139 = vunpack.c.l.b16 %v399
    %v4140 = vunpack.c.h.b16 %v399
    %v4141 = vunpack.c.l.b16 %v400
    %v4142 = vunpack.c.h.b16 %v400
    %v4143 = vunpack.c.l.b16 %v401
    %v4144 = vunpack.c.h.b16 %v401
    %v4145 = vunpack.c.l.b16 %v402
    %v4146 = vunpack.c.h.b16 %v402
    %v4147 = vunpack.c.l.b16 %v403
    %v4148 = vunpack.c.h.b16 %v403
    %v4149 = vunpack.c.l.b16 %v404
    %v4150 = vunpack.c.h.b16 %v404
    %v4151 = vunpack.c.l.b16 %v405
    %v4152 = vunpack.c.h.b16 %v405
    %v4153 = vunpack.c.l.b16 %v406
    %v4154 = vunpack.c.h.b16 %v406
    %v4155 = vunpack.c.l.b16 %v407
    %v4156 = vunpack.c.h.b16 %v407
    %v4157 = vunpack.c.l.b16 %v408
    %v4158 = vunpack.c.h.b16 %v408
    %v4159 = vunpack.c.l.b16 %v409
    %v4160 = vunpack.c.h.b16 %v409
    %v4161 = vunpack.c.l.b16 %v410
    %v4162 = vunpack.c.h.b16 %v410
    %v4163 = vunpack.c.l.b16 %v411
    %v4164 = vunpack.c.h.b16 %v411
    %v4165 = vunpack.c.l.b16 %v412
    %v4166 = vunpack.c.h.b16 %v412
    %v4167 = vunpack.c.l.b16 %v413
    %v4168 = vunpack.c.h.b16 %v413
    %v4169 = vunpack.c.l.b16 %v414
    %v4170 = vunpack.c.h.b16 %v414
    %v4171 = vunpack.c.l.b16 %v415
    %v4172 = vunpack.c.h.b16 %v415
    %v4173 = vunpack.c.l.b16 %v416
    %v4174 = vunpack.c.h.b16 %v416
    %v4175 = vunpack.c.l.b16 %v417
    %v4176 = vunpack.c.h.b16 %v417
    %v4177 = vunpack.c.l.b16 %v418
    %v4178 = vunpack.c.h.b16 %v418
    %v4179 = vunpack.c.l.b16 %v419
    %v4180 = vunpack.c.h.b16 %v419
    %v4181 = vunpack.c.l.b16 %v420
    %v4182 = vunpack.c.h.b16 %v420
    %v4183 = vunpack.c.l.b16 %v421
    %v4184 = vunpack.c.h.b16 %v421
    %v4185 = vunpack.c.l.b16 %v422
    %v4186 = vunpack.c.h.b16 %v422
    %v4187 = vunpack.c.l.b16 %v423
    %v4188 = vunpack.c.h.b16 %v423
    %v4189 = vunpack.c.l.b16 %v424
    %v4190 = vunpack.c.h.b16 %v424
    %v4191 = vunpack.c.l.b16 %v425
    %v4192 = vunpack.c.h.b16 %v425
    %v4193 = vunpack.c.l.b16 %v426
    %v4194 = vunpack.c.h.b16 %v426
    %v4195 = vunpack.c.l.b16 %v427
    %v4196 = vunpack.c.h.b16 %v427
    %v4197 = vunpack.c.l.b16 %v428
    %v4198 = vunpack.c.h.b16 %v428
    %v4199 = vunpack.c.l.b16 %v429
    %v4200 = vunpack.c.h.b16 %v429
    %v4201 = vunpack.c.l.b16 %v430
    %v4202 = vunpack.c.h.b16 %v430
    %v4203 = vunpack.c.l.b16 %v431
    %v4204 = vunpack.c.h.b16 %v431
    %v4205 = vunpack.c.l.b16 %v432
    %v4206 = vunpack.c.h.b16 %v432
    %v4207 = vunpack.c.l.b16 %v433
    %v4208 = vunpack.c.h.b16 %v433
    %v4209 = vunpack.c.l.b16 %v434
    %v4210 = vunpack.c.h.b16 %v434
    %v4211 = vunpack.c.l.b16 %v435
    %v4212 = vunpack.c.h.b16 %v435
    %v4213 = vunpack.c.l.b16 %v436
    %v4214 = vunpack.c.h.b16 %v436
    %v4215 = vunpack.c.l.b16 %v437
    %v4216 = vunpack.c.h.b16 %v437
    %v4217 = vunpack.c.l.b16 %v438
    %v4218 = vunpack.c.h.b16 %v438
    %v4219 = vunpack.c.l.b16 %v439
    %v4220 = vunpack.c.h.b16 %v439
    %v4221 = vunpack.c.l.b16 %v440
    %v4222 = vunpack.c.h.b16 %v440
    %v4223 = vunpack.c.l.b16 %v441
    %v4224 = vunpack.c.h.b16 %v441
    %v4225 = vunpack.c.l.b16 %v442
    %v4226 = vunpack.c.h.b16 %v442
    %v4227 = vunpack.c.l.b16 %v443
    %v4228 = vunpack.c.h.b16 %v443
    %v4229 = vunpack.c.l.b16 %v444
    %v4230 = vunpack.c.h.b16 %v444
    %v4231 = vunpack.c.l.b16 %v445
    %v4232 = vunpack.c.h.b16 %v445
    %v4233 = vunpack.c.l.b16 %v446
    %v4234 = vunpack.c.h.b16 %v446
    %v4235 = vunpack.c.l.b16 %v447
    %v4236 = vunpack.c.h.b16 %v447
    %v4237 = vunpack.c.l.b16 %v448
    %v4238 = vunpack.c.h.b16 %v448
    %v4239 = vunpack.c.l.b16 %v449
    %v4240 = vunpack.c.h.b16 %v449
    %v4241 = vunpack.c.l.b16 %v450
    %v4242 = vunpack.c.h.b16 %v450
    %v4243 = vunpack.c.l.b16 %v451
    %v4244 = vunpack.c.h.b16 %v451
    %v4245 = vunpack.c.l.b16 %v452
    %v4246 = vunpack.c.h.b16 %v452
    %v4247 = vunpack.c.l.b16 %v453
    %v4248 = vunpack.c.h.b16 %v453
    %v4249 = vunpack.c.l.b16 %v454
    %v4250 = vunpack.c.h.b16 %v454
    %v4251 = vunpack.c.l.b16 %v455
    %v4252 = vunpack.c.h.b16 %v455
    %v4253 = vunpack.c.l.b16 %v456
    %v4254 = vunpack.c.h.b16 %v456
    %v4255 = vunpack.c.l.b16 %v457
    %v4256 = vunpack.c.h.b16 %v457
    %v4257 = vunpack.c.l.b16 %v458
    %v4258 = vunpack.c.h.b16 %v458
    %v4259 = vunpack.c.l.b16 %v459
    %v4260 = vunpack.c.h.b16 %v459
    %v4261 = vunpack.c.l.b16 %v460
    %v4262 = vunpack.c.h.b16 %v460
    %v4263 = vunpack.c.l.b16 %v461
    %v4264 = vunpack.c.h.b16 %v461
    %v4265 = vunpack.c.l.b16 %v462
    %v4266 = vunpack.c.h.b16 %v462
    %v4267 = vunpack.c.l.b16 %v463
    %v4268 = vunpack.c.h.b16 %v463
    %v4269 = vunpack.c.l.b16 %v464
    %v4270 = vunpack.c.h.b16 %v464
    %v4271 = vunpack.c.l.b16 %v465
    %v4272 = vunpack.c.h.b16 %v465
    %v4273 = vunpack.c.l.b16 %v466
    %v4274 = vunpack.c.h.b16 %v466
    %v4275 = vunpack.c.l.b16 %v467
    %v4276 = vunpack.c.h.b16 %v467
    %v4277 = vunpack.c.l.b16 %v468
    %v4278 = vunpack.c.h.b16 %v468
    %v4279 = vunpack.c.l.b16 %v469
    %v4280 = vunpack.c.h.b16 %v469
    %v4281 = vunpack.c.l.b16 %v470
    %v4282 = vunpack.c.h.b16 %v470
    %v4283 = vunpack.c.l.b16 %v471
    %v4284 = vunpack.c.h.b16 %v471
    %v4285 = vunpack.c.l.b16 %v472
    %v4286 = vunpack.c.h.b16 %v472
    %v4287 = vunpack.c.l.b16 %v473
    %v4288 = vunpack.c.h.b16 %v473
    %v4289 = vunpack.c.l.b16 %v474
    %v4290 = vunpack.c.h.b16 %v474
    %v4291 = vunpack.c.l.b16 %v475
    %v4292 = vunpack.c.h.b16 %v475
    %v4293 = vunpack.c.l.b16 %v476
    %v4294 = vunpack.c.h.b16 %v476
    %v4295 = vunpack.c.l.b16 %v477
    %v4296 = vunpack.c.h.b16 %v477
    %v4297 = vunpack.c.l.b16 %v478
    %v4298 = vunpack.c.h.b16 %v478
    %v4299 = vunpack.c.l.b16 %v479
    %v4300 = vunpack.c.h.b16 %v479
    %v4301 = vunpack.c.l.b16 %v480
    %v4302 = vunpack.c.h.b16 %v480
    %v4303 = vunpack.c.l.b16 %v481
    %v4304 = vunpack.c.h.b16 %v481
    %v4305 = vunpack.c.l.b16 %v482
    %v4306 = vunpack.c.h.b16 %v482
    %v4307 = vunpack.c.l.b16 %v483
    %v4308 = vunpack.c.h.b16 %v483
    %v4309 = vunpack.c.l.b16 %v484
    %v4310 = vunpack.c.h.b16 %v484
    %v4311 = vunpack.c.l.b16 %v485
    %v4312 = vunpack.c.h.b16 %v485
    %v4313 = vunpack.c.l.b16 %v486
    %v4314 = vunpack.c.h.b16 %v486
    %v4315 = vunpack.c.l.b16 %v487
    %v4316 = vunpack.c.h.b16 %v487
    %v4317 = vunpack.c.l.b16 %v488
    %v4318 = vunpack.c.h.b16 %v488
    %v4319 = vunpack.c.l.b16 %v489
    %v4320 = vunpack.c.h.b16 %v489
    %v4321 = vunpack.c.l.b16 %v490
    %v4322 = vunpack.c.h.b16 %v490
    %v4323 = vunpack.c.l.b16 %v491
    %v4324 = vunpack.c.h.b16 %v491
    %v4325 = vunpack.c.l.b16 %v492
    %v4326 = vunpack.c.h.b16 %v492
    %v4327 = vunpack.c.l.b16 %v493
    %v4328 = vunpack.c.h.b16 %v493
    %v4329 = vunpack.c.l.b16 %v494
    %v4330 = vunpack.c.h.b16 %v494
    %v4331 = vunpack.c.l.b16 %v495
    %v4332 = vunpack.c.h.b16 %v495
    %v4333 = vunpack.c.l.b16 %v496
    %v4334 = vunpack.c.h.b16 %v496
    %v4335 = vunpack.c.l.b16 %v497
    %v4336 = vunpack.c.h.b16 %v497
    %v4337 = vunpack.c.l.b16 %v498
    %v4338 = vunpack.c.h.b16 %v498
    %v4339 = vunpack.c.l.b16 %v499
    %v4340 = vunpack.c.h.b16 %v499
    %v4341 = vunpack.c.l.b16 %v500
    %v4342 = vunpack.c.h.b16 %v500
    %v4343 = vunpack.c.l.b16 %v501
    %v4344 = vunpack.c.h.b16 %v501
    %v4345 = vunpack.c.l.b16 %v502
    %v4346 = vunpack.c.h.b16 %v502
    %v4347 = vunpack.c.l.b16 %v503
    %v4348 = vunpack.c.h.b16 %v503
    %v4349 = vunpack.c.l.b16 %v504
    %v4350 = vunpack.c.h.b16 %v504
    %v4351 = vunpack.c.l.b16 %v505
    %v4352 = vunpack.c.h.b16 %v505
    %v4353 = vunpack.c.l.b16 %v506
    %v4354 = vunpack.c.h.b16 %v506
    %v4355 = vunpack.c.l.b16 %v507
    %v4356 = vunpack.c.h.b16 %v507
    %v4357 = vunpack.c.l.b16 %v508
    %v4358 = vunpack.c.h.b16 %v508
    %v4359 = vunpack.c.l.b16 %v509
    %v4360 = vunpack.c.h.b16 %v509
    %v4361 = vunpack.c.l.b16 %v510
    %v4362 = vunpack.c.h.b16 %v510
    %v4363 = vunpack.c.l.b16 %v511
    %v4364 = vunpack.c.h.b16 %v511
    %v4365 = vunpack.c.l.b16 %v512
    %v4366 = vunpack.c.h.b16 %v512
    %v4367 = vunpack.c.l.b16 %v513
    %v4368 = vunpack.c.h.b16 %v513
    %v4369 = vunpack.c.l.b16 %v514
    %v4370 = vunpack.c.h.b16 %v514
    %v4371 = vunpack.c.l.b16 %v515
    %v4372 = vunpack.c.h.b16 %v515
    %v4373 = vunpack.c.l.b16 %v516
    %v4374 = vunpack.c.h.b16 %v516
    %v4375 = vunpack.c.l.b16 %v517
    %v4376 = vunpack.c.h.b16 %v517
    %v4377 = vunpack.c.l.b16 %v518
    %v4378 = vunpack.c.h.b16 %v518
    %v4379 = vunpack.c.l.b16 %v519
    %v4380 = vunpack.c.h.b16 %v519
    %v4381 = vunpack.c.l.b16 %v520
    %v4382 = vunpack.c.h.b16 %v520
    %v4383 = vunpack.c.l.b16 %v521
    %v4384 = vunpack.c.h.b16 %v521
    %v4385 = vunpack.c.l.b16 %v522
    %v4386 = vunpack.c.h.b16 %v522
    %v4387 = vunpack.c.l.b16 %v523
    %v4388 = vunpack.c.h.b16 %v523
    %v4389 = vunpack.c.l.b16 %v524
    %v4390 = vunpack.c.h.b16 %v524
    %v4391 = vunpack.c.l.b16 %v525
    %v4392 = vunpack.c.h.b16 %v525
    %v4393 = vunpack.c.l.b16 %v526
    %v4394 = vunpack.c.h.b16 %v526
    %v4395 = vunpack.c.l.b16 %v527
    %v4396 = vunpack.c.h.b16 %v527
    %v4397 = vunpack.c.l.b16 %v528
    %v4398 = vunpack.c.h.b16 %v528
    %v4399 = vunpack.c.l.b16 %v529
    %v4400 = vunpack.c.h.b16 %v529
    %v4401 = vunpack.c.l.b16 %v530
    %v4402 = vunpack.c.h.b16 %v530
    %v4403 = vunpack.c.l.b16 %v531
    %v4404 = vunpack.c.h.b16 %v531
    %v4405 = vunpack.c.l.b16 %v532
    %v4406 = vunpack.c.h.b16 %v532
    %v4407 = vunpack.c.l.b16 %v533
    %v4408 = vunpack.c.h.b16 %v533
    %v4409 = vunpack.c.l.b16 %v534
    %v4410 = vunpack.c.h.b16 %v534
    %v4411 = vunpack.c.l.b16 %v535
    %v4412 = vunpack.c.h.b16 %v535
    %v4413 = vunpack.c.l.b16 %v536
    %v4414 = vunpack.c.h.b16 %v536
    %v4415 = vunpack.c.l.b16 %v537
    %v4416 = vunpack.c.h.b16 %v537
    %v4417 = vunpack.c.l.b16 %v538
    %v4418 = vunpack.c.h.b16 %v538
    %v4419 = vunpack.c.l.b16 %v539
    %v4420 = vunpack.c.h.b16 %v539
    %v4421 = vunpack.c.l.b16 %v540
    %v4422 = vunpack.c.h.b16 %v540
    %v4423 = vunpack.c.l.b16 %v541
    %v4424 = vunpack.c.h.b16 %v541
    %v4425 = vunpack.c.l.b16 %v542
    %v4426 = vunpack.c.h.b16 %v542
    %v4427 = vunpack.c.l.b16 %v543
    %v4428 = vunpack.c.h.b16 %v543
    %v4429 = vunpack.c.l.b16 %v544
    %v4430 = vunpack.c.h.b16 %v544
    %v4431 = vunpack.c.l.b16 %v545
    %v4432 = vunpack.c.h.b16 %v545
    %v4433 = vunpack.c.l.b16 %v546
    %v4434 = vunpack.c.h.b16 %v546
    %v4435 = vunpack.c.l.b16 %v547
    %v4436 = vunpack.c.h.b16 %v547
    %v4437 = vunpack.c.l.b16 %v548
    %v4438 = vunpack.c.h.b16 %v548
    %v4439 = vunpack.c.l.b16 %v549
    %v4440 = vunpack.c.h.b16 %v549
    %v4441 = vunpack.c.l.b16 %v550
    %v4442 = vunpack.c.h.b16 %v550
    %v4443 = vunpack.c.l.b16 %v551
    %v4444 = vunpack.c.h.b16 %v551
    %v4445 = vunpack.c.l.b16 %v552
    %v4446 = vunpack.c.h.b16 %v552
    %v4447 = vunpack.c.l.b16 %v553
    %v4448 = vunpack.c.h.b16 %v553
    %v4449 = vunpack.c.l.b16 %v554
    %v4450 = vunpack.c.h.b16 %v554
    %v4451 = vunpack.c.l.b16 %v555
    %v4452 = vunpack.c.h.b16 %v555
    %v4453 = vunpack.c.l.b16 %v556
    %v4454 = vunpack.c.h.b16 %v556
    %v4455 = vunpack.c.l.b16 %v557
    %v4456 = vunpack.c.h.b16 %v557
    %v4457 = vunpack.c.l.b16 %v558
    %v4458 = vunpack.c.h.b16 %v558
    %v4459 = vunpack.c.l.b16 %v559
    %v4460 = vunpack.c.h.b16 %v559
    %v4461 = vunpack.c.l.b16 %v560
    %v4462 = vunpack.c.h.b16 %v560
    %v4463 = vunpack.c.l.b16 %v561
    %v4464 = vunpack.c.h.b16 %v561
    %v4465 = vunpack.c.l.b16 %v562
    %v4466 = vunpack.c.h.b16 %v562
    %v4467 = vunpack.c.l.b16 %v563
    %v4468 = vunpack.c.h.b16 %v563
    %v4469 = vunpack.c.l.b16 %v564
    %v4470 = vunpack.c.h.b16 %v564
    %v4471 = vunpack.c.l.b16 %v565
    %v4472 = vunpack.c.h.b16 %v565
    %v4473 = vunpack.c.l.b16 %v566
    %v4474 = vunpack.c.h.b16 %v566
    %v4475 = vunpack.c.l.b16 %v567
    %v4476 = vunpack.c.h.b16 %v567
    %v4477 = vunpack.c.l.b16 %v568
    %v4478 = vunpack.c.h.b16 %v568
    %v4479 = vunpack.c.l.b16 %v569
    %v4480 = vunpack.c.h.b16 %v569
    %v4481 = vunpack.c.l.b16 %v570
    %v4482 = vunpack.c.h.b16 %v570
    %v4483 = vunpack.c.l.b16 %v571
    %v4484 = vunpack.c.h.b16 %v571
    %v4485 = vunpack.c.l.b16 %v572
    %v4486 = vunpack.c.h.b16 %v572
    %v4487 = vunpack.c.l.b16 %v573
    %v4488 = vunpack.c.h.b16 %v573
    %v4489 = vunpack.c.l.b16 %v574
    %v4490 = vunpack.c.h.b16 %v574
    %v4491 = vunpack.c.l.b16 %v575
    %v4492 = vunpack.c.h.b16 %v575
    %v4493 = vunpack.c.l.b16 %v576
    %v4494 = vunpack.c.h.b16 %v576
    %v4495 = vunpack.c.l.b16 %v577
    %v4496 = vunpack.c.h.b16 %v577
    %v4497 = vunpack.c.l.b16 %v578
    %v4498 = vunpack.c.h.b16 %v578
    %v4499 = vunpack.c.l.b16 %v579
    %v4500 = vunpack.c.h.b16 %v579
    %v4501 = vunpack.c.l.b16 %v580
    %v4502 = vunpack.c.h.b16 %v580
    %v4503 = vunpack.c.l.b16 %v581
    %v4504 = vunpack.c.h.b16 %v581
    %v4505 = vunpack.c.l.b16 %v582
    %v4506 = vunpack.c.h.b16 %v582
    %v4507 = vunpack.c.l.b16 %v583
    %v4508 = vunpack.c.h.b16 %v583
    %v4509 = vunpack.c.l.b16 %v584
    %v4510 = vunpack.c.h.b16 %v584
    %v4511 = vunpack.c.l.b16 %v585
    %v4512 = vunpack.c.h.b16 %v585
    %v4513 = vunpack.c.l.b16 %v586
    %v4514 = vunpack.c.h.b16 %v586
    %v4515 = vunpack.c.l.b16 %v587
    %v4516 = vunpack.c.h.b16 %v587
    %v4517 = vunpack.c.l.b16 %v588
    %v4518 = vunpack.c.h.b16 %v588
    %v4519 = vunpack.c.l.b16 %v589
    %v4520 = vunpack.c.h.b16 %v589
    %v4521 = vunpack.c.l.b16 %v590
    %v4522 = vunpack.c.h.b16 %v590
    %v4523 = vunpack.c.l.b16 %v591
    %v4524 = vunpack.c.h.b16 %v591
    %v4525 = vunpack.c.l.b16 %v592
    %v4526 = vunpack.c.h.b16 %v592
    %v4527 = vunpack.c.l.b16 %v593
    %v4528 = vunpack.c.h.b16 %v593
    %v4529 = vunpack.c.l.b16 %v594
    %v4530 = vunpack.c.h.b16 %v594
    %v4531 = vunpack.c.l.b16 %v595
    %v4532 = vunpack.c.h.b16 %v595
    %v4533 = vunpack.c.l.b16 %v596
    %v4534 = vunpack.c.h.b16 %v596
    %v4535 = vunpack.c.l.b16 %v597
    %v4536 = vunpack.c.h.b16 %v597
    %v4537 = vunpack.c.l.b16 %v598
    %v4538 = vunpack.c.h.b16 %v598
    %v4539 = vunpack.c.l.b16 %v599
    %v4540 = vunpack.c.h.b16 %v599
    %v4541 = vunpack.c.l.b16 %v600
    %v4542 = vunpack.c.h.b16 %v600
    %v4543 = vunpack.c.l.b16 %v601
    %v4544 = vunpack.c.h.b16 %v601
    %v4545 = vunpack.c.l.b16 %v602
    %v4546 = vunpack.c.h.b16 %v602
    %v4547 = vunpack.c.l.b16 %v603
    %v4548 = vunpack.c.h.b16 %v603
    %v4549 = vunpack.c.l.b16 %v604
    %v4550 = vunpack.c.h.b16 %v604
    %v4551 = vunpack.c.l.b16 %v605
    %v4552 = vunpack.c.h.b16 %v605
    %v4553 = vunpack.c.l.b16 %v606
    %v4554 = vunpack.c.h.b16 %v606
    %v4555 = vunpack.c.l.b16 %v607
    %v4556 = vunpack.c.h.b16 %v607
    %v4557 = vunpack.c.l.b16 %v608
    %v4558 = vunpack.c.h.b16 %v608
    %v4559 = vunpack.c.l.b16 %v609
    %v4560 = vunpack.c.h.b16 %v609
    %v4561 = vunpack.c.l.b16 %v610
    %v4562 = vunpack.c.h.b16 %v610
    %v4563 = vunpack.c.l.b16 %v611
    %v4564 = vunpack.c.h.b16 %v611
    %v4565 = vunpack.c.l.b16 %v612
    %v4566 = vunpack.c.h.b16 %v612
    %v4567 = vunpack.c.l.b16 %v613
    %v4568 = vunpack.c.h.b16 %v613
    %v4569 = vunpack.c.l.b16 %v614
    %v4570 = vunpack.c.h.b16 %v614
    %v4571 = vunpack.c.l.b16 %v615
    %v4572 = vunpack.c.h.b16 %v615
    %v4573 = vunpack.c.l.b16 %v616
    %v4574 = vunpack.c.h.b16 %v616
    %v4575 = vunpack.c.l.b16 %v617
    %v4576 = vunpack.c.h.b16 %v617
    %v4577 = vunpack.c.l.b16 %v618
    %v4578 = vunpack.c.h.b16 %v618
    %v4579 = vunpack.c.l.b16 %v619
    %v4580 = vunpack.c.h.b16 %v619
    %v4581 = vunpack.c.l.b16 %v620
    %v4582 = vunpack.c.h.b16 %v620
    %v4583 = vunpack.c.l.b16 %v621
    %v4584 = vunpack.c.h.b16 %v621
    %v4585 = vunpack.c.l.b16 %v622
    %v4586 = vunpack.c.h.b16 %v622
    %v4587 = vunpack.c.l.b16 %v623
    %v4588 = vunpack.c.h.b16 %v623
    %v4589 = vunpack.c.l.b16 %v624
    %v4590 = vunpack.c.h.b16 %v624
    %v4591 = vunpack.c.l.b16 %v625
    %v4592 = vunpack.c.h.b16 %v625
    %v4593 = vunpack.c.l.b16 %v626
    %v4594 = vunpack.c.h.b16 %v626
    %v4595 = vunpack.c.l.b16 %v627
    %v4596 = vunpack.c.h.b16 %v627
    %v4597 = vunpack.c.l.b16 %v628
    %v4598 = vunpack.c.h.b16 %v628
    %v4599 = vunpack.c.l.b16 %v629
    %v4600 = vunpack.c.h.b16 %v629
    %v4601 = vunpack.c.l.b16 %v630
    %v4602 = vunpack.c.h.b16 %v630
    %v4603 = vunpack.c.l.b16 %v631
    %v4604 = vunpack.c.h.b16 %v631
    %v4605 = vunpack.c.l.b16 %v632
    %v4606 = vunpack.c.h.b16 %v632
    %v4607 = vunpack.c.l.b16 %v633
    %v4608 = vunpack.c.h.b16 %v633
    %v4609 = vunpack.c.l.b16 %v634
    %v4610 = vunpack.c.h.b16 %v634
    %v4611 = vunpack.c.l.b16 %v635
    %v4612 = vunpack.c.h.b16 %v635
    %v4613 = vunpack.c.l.b16 %v636
    %v4614 = vunpack.c.h.b16 %v636
    %v4615 = vunpack.c.l.b16 %v637
    %v4616 = vunpack.c.h.b16 %v637
    %v4617 = vunpack.c.l.b16 %v638
    %v4618 = vunpack.c.h.b16 %v638
    %v4619 = vunpack.c.l.b16 %v639
    %v4620 = vunpack.c.h.b16 %v639
    %v4621 = vunpack.c.l.b16 %v640
    %v4622 = vunpack.c.h.b16 %v640
    %v4623 = vunpack.c.l.b16 %v641
    %v4624 = vunpack.c.h.b16 %v641
    %v4625 = vunpack.c.l.b16 %v642
    %v4626 = vunpack.c.h.b16 %v642
    %v4627 = vunpack.c.l.b16 %v643
    %v4628 = vunpack.c.h.b16 %v643
    %v4629 = vunpack.c.l.b16 %v644
    %v4630 = vunpack.c.h.b16 %v644
    %v4631 = vunpack.c.l.b16 %v645
    %v4632 = vunpack.c.h.b16 %v645
    %v4633 = vunpack.c.l.b16 %v646
    %v4634 = vunpack.c.h.b16 %v646
    %v4635 = vunpack.c.l.b16 %v647
    %v4636 = vunpack.c.h.b16 %v647
    %v4637 = vunpack.c.l.b16 %v648
    %v4638 = vunpack.c.h.b16 %v648
    %v4639 = vunpack.c.l.b16 %v649
    %v4640 = vunpack.c.h.b16 %v649
    %v4641 = vunpack.c.l.b16 %v650
    %v4642 = vunpack.c.h.b16 %v650
    %v4643 = vunpack.c.l.b16 %v651
    %v4644 = vunpack.c.h.b16 %v651
    %v4645 = vunpack.c.l.b16 %v652
    %v4646 = vunpack.c.h.b16 %v652
    %v4647 = vunpack.c.l.b16 %v653
    %v4648 = vunpack.c.h.b16 %v653
    %v4649 = vunpack.c.l.b16 %v654
    %v4650 = vunpack.c.h.b16 %v654
    %v4651 = vunpack.c.l.b16 %v655
    %v4652 = vunpack.c.h.b16 %v655
    %v4653 = vunpack.c.l.b16 %v656
    %v4654 = vunpack.c.h.b16 %v656
    %v4655 = vunpack.c.l.b16 %v657
    %v4656 = vunpack.c.h.b16 %v657
    %v4657 = vunpack.c.l.b16 %v658
    %v4658 = vunpack.c.h.b16 %v658
    %v4659 = vunpack.c.l.b16 %v659
    %v4660 = vunpack.c.h.b16 %v659
    %v4661 = vunpack.c.l.b16 %v660
    %v4662 = vunpack.c.h.b16 %v660
    %v4663 = vunpack.c.l.b16 %v661
    %v4664 = vunpack.c.h.b16 %v661
    %v4665 = vunpack.c.l.b16 %v662
    %v4666 = vunpack.c.h.b16 %v662
    %v4667 = vunpack.c.l.b16 %v663
    %v4668 = vunpack.c.h.b16 %v663
    %v4669 = vunpack.c.l.b16 %v664
    %v4670 = vunpack.c.h.b16 %v664
    %v4671 = vunpack.c.l.b16 %v665
    %v4672 = vunpack.c.h.b16 %v665
    %v4673 = vunpack.c.l.b16 %v666
    %v4674 = vunpack.c.h.b16 %v666
    %v4675 = vunpack.c.l.b16 %v667
    %v4676 = vunpack.c.h.b16 %v667
    %v4677 = vunpack.c.l.b16 %v668
    %v4678 = vunpack.c.h.b16 %v668
    %v4679 = vunpack.c.l.b16 %v669
    %v4680 = vunpack.c.h.b16 %v669
    %v4681 = vunpack.c.l.b16 %v670
    %v4682 = vunpack.c.h.b16 %v670
    %v4683 = vunpack.c.l.b16 %v671
    %v4684 = vunpack.c.h.b16 %v671
    %v4685 = vunpack.c.l.b16 %v672
    %v4686 = vunpack.c.h.b16 %v672
    %v4687 = vunpack.c.l.b16 %v673
    %v4688 = vunpack.c.h.b16 %v673
    %v4689 = vunpack.c.l.b16 %v674
    %v4690 = vunpack.c.h.b16 %v674
    %v4691 = vunpack.c.l.b16 %v675
    %v4692 = vunpack.c.h.b16 %v675
    %v4693 = vunpack.c.l.b16 %v676
    %v4694 = vunpack.c.h.b16 %v676
    %v4695 = vunpack.c.l.b16 %v677
    %v4696 = vunpack.c.h.b16 %v677
    %v4697 = vunpack.c.l.b16 %v678
    %v4698 = vunpack.c.h.b16 %v678
    %v4699 = vunpack.c.l.b16 %v679
    %v4700 = vunpack.c.h.b16 %v679
    %v4701 = vunpack.c.l.b16 %v680
    %v4702 = vunpack.c.h.b16 %v680
    %v4703 = vunpack.c.l.b16 %v681
    %v4704 = vunpack.c.h.b16 %v681
    %v4705 = vunpack.c.l.b16 %v682
    %v4706 = vunpack.c.h.b16 %v682
    %v4707 = vunpack.c.l.b16 %v683
    %v4708 = vunpack.c.h.b16 %v683
    %v4709 = vunpack.c.l.b16 %v684
    %v4710 = vunpack.c.h.b16 %v684
    %v4711 = vunpack.c.l.b16 %v685
    %v4712 = vunpack.c.h.b16 %v685
    %v4713 = vunpack.c.l.b16 %v686
    %v4714 = vunpack.c.h.b16 %v686
    %v4715 = vunpack.c.l.b16 %v687
    %v4716 = vunpack.c.h.b16 %v687
    %v4717 = vunpack.c.l.b16 %v688
    %v4718 = vunpack.c.h.b16 %v688
    %v4719 = vunpack.c.l.b16 %v689
    %v4720 = vunpack.c.h.b16 %v689
    %v4721 = vunpack.c.l.b16 %v690
    %v4722 = vunpack.c.h.b16 %v690
    %v4723 = vunpack.c.l.b16 %v691
    %v4724 = vunpack.c.h.b16 %v691
    %v4725 = vunpack.c.l.b16 %v692
    %v4726 = vunpack.c.h.b16 %v692
    %v4727 = vunpack.c.l.b16 %v693
    %v4728 = vunpack.c.h.b16 %v693
    %v4729 = vunpack.c.l.b16 %v694
    %v4730 = vunpack.c.h.b16 %v694
    %v4731 = vunpack.c.l.b16 %v695
    %v4732 = vunpack.c.h.b16 %v695
    %v4733 = vunpack.c.l.b16 %v696
    %v4734 = vunpack.c.h.b16 %v696
    %v4735 = vunpack.c.l.b16 %v697
    %v4736 = vunpack.c.h.b16 %v697
    %v4737 = vunpack.c.l.b16 %v698
    %v4738 = vunpack.c.h.b16 %v698
    %v4739 = vunpack.c.l.b16 %v699
    %v4740 = vunpack.c.h.b16 %v699
    %v4741 = vunpack.c.l.b16 %v700
    %v4742 = vunpack.c.h.b16 %v700
    %v4743 = vunpack.c.l.b16 %v701
    %v4744 = vunpack.c.h.b16 %v701
    %v4745 = vunpack.c.l.b16 %v702
    %v4746 = vunpack.c.h.b16 %v702
    %v4747 = vunpack.c.l.b16 %v703
    %v4748 = vunpack.c.h.b16 %v703
    %v4749 = vunpack.c.l.b16 %v704
    %v4750 = vunpack.c.h.b16 %v704
    %v4751 = vunpack.c.l.b16 %v705
    %v4752 = vunpack.c.h.b16 %v705
    %v4753 = vunpack.c.l.b16 %v706
    %v4754 = vunpack.c.h.b16 %v706
    %v4755 = vunpack.c.l.b16 %v707
    %v4756 = vunpack.c.h.b16 %v707
    %v4757 = vunpack.c.l.b16 %v708
    %v4758 = vunpack.c.h.b16 %v708
    %v4759 = vunpack.c.l.b16 %v709
    %v4760 = vunpack.c.h.b16 %v709
    %v4761 = vunpack.c.l.b16 %v710
    %v4762 = vunpack.c.h.b16 %v710
    %v4763 = vunpack.c.l.b16 %v711
    %v4764 = vunpack.c.h.b16 %v711
    %v4765 = vunpack.c.l.b16 %v712
    %v4766 = vunpack.c.h.b16 %v712
    %v4767 = vunpack.c.l.b16 %v713
    %v4768 = vunpack.c.h.b16 %v713
    %v4769 = vunpack.c.l.b16 %v714
    %v4770 = vunpack.c.h.b16 %v714
    %v4771 = vunpack.c.l.b16 %v715
    %v4772 = vunpack.c.h.b16 %v715
    %v4773 = vunpack.c.l.b16 %v716
    %v4774 = vunpack.c.h.b16 %v716
    %v4775 = vunpack.c.l.b16 %v717
    %v4776 = vunpack.c.h.b16 %v717
    %v4777 = vunpack.c.l.b16 %v718
    %v4778 = vunpack.c.h.b16 %v718
    %v4779 = vunpack.c.l.b16 %v719
    %v4780 = vunpack.c.h.b16 %v719
    %v4781 = vunpack.c.l.b16 %v720
    %v4782 = vunpack.c.h.b16 %v720
    %v4783 = vunpack.c.l.b16 %v721
    %v4784 = vunpack.c.h.b16 %v721
    %v4785 = vunpack.c.l.b16 %v722
    %v4786 = vunpack.c.h.b16 %v722
    %v4787 = vunpack.c.l.b16 %v723
    %v4788 = vunpack.c.h.b16 %v723
    %v4789 = vunpack.c.l.b16 %v724
    %v4790 = vunpack.c.h.b16 %v724
    %v4791 = vunpack.c.l.b16 %v725
    %v4792 = vunpack.c.h.b16 %v725
    %v4793 = vunpack.c.l.b16 %v726
    %v4794 = vunpack.c.h.b16 %v726
    %v4795 = vunpack.c.l.b16 %v727
    %v4796 = vunpack.c.h.b16 %v727
    %v4797 = vunpack.c.l.b16 %v728
    %v4798 = vunpack.c.h.b16 %v728
    %v4799 = vunpack.c.l.b16 %v729
    %v4800 = vunpack.c.h.b16 %v729
    %v4801 = vunpack.c.l.b16 %v730
    %v4802 = vunpack.c.h.b16 %v730
    %v4803 = vunpack.c.l.b16 %v731
    %v4804 = vunpack.c.h.b16 %v731
    %v4805 = vunpack.c.l.b16 %v732
    %v4806 = vunpack.c.h.b16 %v732
    %v4807 = vunpack.c.l.b16 %v733
    %v4808 = vunpack.c.h.b16 %v733
    %v4809 = vunpack.c.l.b16 %v734
    %v4810 = vunpack.c.h.b16 %v734
    %v4811 = vunpack.c.l.b16 %v735
    %v4812 = vunpack.c.h.b16 %v735
    %v4813 = vunpack.c.l.b16 %v736
    %v4814 = vunpack.c.h.b16 %v736
    %v4815 = vunpack.c.l.b16 %v737
    %v4816 = vunpack.c.h.b16 %v737
    %v4817 = vunpack.c.l.b16 %v738
    %v4818 = vunpack.c.h.b16 %v738
    %v4819 = vunpack.c.l.b16 %v739
    %v4820 = vunpack.c.h.b16 %v739
    %v4821 = vunpack.c.l.b16 %v740
    %v4822 = vunpack.c.h.b16 %v740
    %v4823 = vunpack.c.l.b16 %v741
    %v4824 = vunpack.c.h.b16 %v741
    %v4825 = vunpack.c.l.b16 %v742
    %v4826 = vunpack.c.h.b16 %v742
    %v4827 = vunpack.c.l.b16 %v743
    %v4828 = vunpack.c.h.b16 %v743
    %v4829 = vunpack.c.l.b16 %v744
    %v4830 = vunpack.c.h.b16 %v744
    %v4831 = vunpack.c.l.b16 %v745
    %v4832 = vunpack.c.h.b16 %v745
    %v4833 = vunpack.c.l.b16 %v746
    %v4834 = vunpack.c.h.b16 %v746
    %v4835 = vunpack.c.l.b16 %v747
    %v4836 = vunpack.c.h.b16 %v747
    %v4837 = vunpack.c.l.b16 %v748
    %v4838 = vunpack.c.h.b16 %v748
    %v4839 = vunpack.c.l.b16 %v749
    %v4840 = vunpack.c.h.b16 %v749
    %v4841 = vunpack.c.l.b16 %v750
    %v4842 = vunpack.c.h.b16 %v750
    %v4843 = vunpack.c.l.b16 %v751
    %v4844 = vunpack.c.h.b16 %v751
    %v4845 = vunpack.c.l.b16 %v752
    %v4846 = vunpack.c.h.b16 %v752
    %v4847 = vunpack.c.l.b16 %v753
    %v4848 = vunpack.c.h.b16 %v753
    %v4849 = vunpack.c.l.b16 %v754
    %v4850 = vunpack.c.h.b16 %v754
    %v4851 = vunpack.c.l.b16 %v755
    %v4852 = vunpack.c.h.b16 %v755
    %v4853 = vunpack.c.l.b16 %v756
    %v4854 = vunpack.c.h.b16 %v756
    %v4855 = vunpack.c.l.b16 %v757
    %v4856 = vunpack.c.h.b16 %v757
    %v4857 = vunpack.c.l.b16 %v758
    %v4858 = vunpack.c.h.b16 %v758
    %v4859 = vunpack.c.l.b16 %v759
    %v4860 = vunpack.c.h.b16 %v759
    %v4861 = vunpack.c.l.b16 %v760
    %v4862 = vunpack.c.h.b16 %v760
    %v4863 = vunpack.c.l.b16 %v761
    %v4864 = vunpack.c.h.b16 %v761
    %v4865 = vunpack.c.l.b16 %v762
    %v4866 = vunpack.c.h.b16 %v762
    %v4867 = vunpack.c.l.b16 %v763
    %v4868 = vunpack.c.h.b16 %v763
    %v4869 = vunpack.c.l.b16 %v764
    %v4870 = vunpack.c.h.b16 %v764
    %v4871 = vunpack.c.l.b16 %v765
    %v4872 = vunpack.c.h.b16 %v765
    %v4873 = vunpack.c.l.b16 %v766
    %v4874 = vunpack.c.h.b16 %v766
    %v4875 = vunpack.c.l.b16 %v767
    %v4876 = vunpack.c.h.b16 %v767
    %v4877 = vunpack.c.l.b16 %v768
    %v4878 = vunpack.c.h.b16 %v768
    %v4879 = vunpack.c.l.b16 %v769
    %v4880 = vunpack.c.h.b16 %v769
    %v4881 = vunpack.c.l.b16 %v770
    %v4882 = vunpack.c.h.b16 %v770
    %v4883 = vunpack.c.l.b16 %v771
    %v4884 = vunpack.c.h.b16 %v771
    %v4885 = vunpack.c.l.b16 %v772
    %v4886 = vunpack.c.h.b16 %v772
    %v4887 = vunpack.c.l.b16 %v773
    %v4888 = vunpack.c.h.b16 %v773
    %v4889 = vunpack.c.l.b16 %v774
    %v4890 = vunpack.c.h.b16 %v774
    %v4891 = vunpack.c.l.b16 %v775
    %v4892 = vunpack.c.h.b16 %v775
    %v4893 = vunpack.c.l.b16 %v776
    %v4894 = vunpack.c.h.b16 %v776
    %v4895 = vunpack.c.l.b16 %v777
    %v4896 = vunpack.c.h.b16 %v777
    %v4897 = vunpack.c.l.b16 %v778
    %v4898 = vunpack.c.h.b16 %v778
    %v4899 = vunpack.c.l.b16 %v779
    %v4900 = vunpack.c.h.b16 %v779
    %v4901 = vunpack.c.l.b16 %v780
    %v4902 = vunpack.c.h.b16 %v780
    %v4903 = vunpack.c.l.b16 %v781
    %v4904 = vunpack.c.h.b16 %v781
    %v4905 = vunpack.c.l.b16 %v782
    %v4906 = vunpack.c.h.b16 %v782
    %v4907 = vunpack.c.l.b16 %v783
    %v4908 = vunpack.c.h.b16 %v783
    %v4909 = vunpack.c.l.b16 %v784
    %v4910 = vunpack.c.h.b16 %v784
    %v4911 = vunpack.c.l.b16 %v785
    %v4912 = vunpack.c.h.b16 %v785
    %v4913 = vunpack.c.l.b16 %v786
    %v4914 = vunpack.c.h.b16 %v786
    %v4915 = vunpack.c.l.b16 %v787
    %v4916 = vunpack.c.h.b16 %v787
    %v4917 = vunpack.c.l.b16 %v788
    %v4918 = vunpack.c.h.b16 %v788
    %v4919 = vunpack.c.l.b16 %v789
    %v4920 = vunpack.c.h.b16 %v789
    %v4921 = vunpack.c.l.b16 %v790
    %v4922 = vunpack.c.h.b16 %v790
    %v4923 = vunpack.c.l.b16 %v791
    %v4924 = vunpack.c.h.b16 %v791
    %v4925 = vunpack.c.l.b16 %v792
    %v4926 = vunpack.c.h.b16 %v792
    %v4927 = vunpack.c.l.b16 %v793
    %v4928 = vunpack.c.h.b16 %v793
    %v4929 = vunpack.c.l.b16 %v794
    %v4930 = vunpack.c.h.b16 %v794
    %v4931 = vunpack.c.l.b16 %v795
    %v4932 = vunpack.c.h.b16 %v795
    %v4933 = vunpack.c.l.b16 %v796
    %v4934 = vunpack.c.h.b16 %v796
    %v4935 = vunpack.c.l.b16 %v797
    %v4936 = vunpack.c.h.b16 %v797
    %v4937 = vunpack.c.l.b16 %v798
    %v4938 = vunpack.c.h.b16 %v798
    %v4939 = vunpack.c.l.b16 %v799
    %v4940 = vunpack.c.h.b16 %v799
    %v4941 = vunpack.c.l.b16 %v800
    %v4942 = vunpack.c.h.b16 %v800
    %v4943 = vunpack.c.l.b16 %v801
    %v4944 = vunpack.c.h.b16 %v801
    %v4945 = vunpack.c.l.b16 %v802
    %v4946 = vunpack.c.h.b16 %v802
    %v4947 = vunpack.c.l.b16 %v803
    %v4948 = vunpack.c.h.b16 %v803
    %v4949 = vunpack.c.l.b16 %v804
    %v4950 = vunpack.c.h.b16 %v804
    %v4951 = vunpack.c.l.b16 %v805
    %v4952 = vunpack.c.h.b16 %v805
    %v4953 = vunpack.c.l.b16 %v806
    %v4954 = vunpack.c.h.b16 %v806
    %v4955 = vunpack.c.l.b16 %v807
    %v4956 = vunpack.c.h.b16 %v807
    %v4957 = vunpack.c.l.b16 %v808
    %v4958 = vunpack.c.h.b16 %v808
    %v4959 = vunpack.c.l.b16 %v809
    %v4960 = vunpack.c.h.b16 %v809
    %v4961 = vunpack.c.l.b16 %v810
    %v4962 = vunpack.c.h.b16 %v810
    %v4963 = vunpack.c.l.b16 %v811
    %v4964 = vunpack.c.h.b16 %v811
    %v4965 = vunpack.c.l.b16 %v812
    %v4966 = vunpack.c.h.b16 %v812
    %v4967 = vunpack.c.l.b16 %v813
    %v4968 = vunpack.c.h.b16 %v813
    %v4969 = vunpack.c.l.b16 %v814
    %v4970 = vunpack.c.h.b16 %v814
    %v4971 = vunpack.c.l.b16 %v815
    %v4972 = vunpack.c.h.b16 %v815
    %v4973 = vunpack.c.l.b16 %v816
    %v4974 = vunpack.c.h.b16 %v816
    %v4975 = vunpack.c.l.b16 %v817
    %v4976 = vunpack.c.h.b16 %v817
    %v4977 = vunpack.c.l.b16 %v818
    %v4978 = vunpack.c.h.b16 %v818
    %v4979 = vunpack.c.l.b16 %v819
    %v4980 = vunpack.c.h.b16 %v819
    %v4981 = vunpack.c.l.b16 %v820
    %v4982 = vunpack.c.h.b16 %v820
    %v4983 = vunpack.c.l.b16 %v821
    %v4984 = vunpack.c.h.b16 %v821
    %v4985 = vunpack.c.l.b16 %v822
    %v4986 = vunpack.c.h.b16 %v822
    %v4987 = vunpack.c.l.b16 %v823
    %v4988 = vunpack.c.h.b16 %v823
    %v4989 = vunpack.c.l.b16 %v824
    %v4990 = vunpack.c.h.b16 %v824
    %v4991 = vunpack.c.l.b16 %v825
    %v4992 = vunpack.c.h.b16 %v825
    %v4993 = vunpack.c.l.b16 %v826
    %v4994 = vunpack.c.h.b16 %v826
    %v4995 = vunpack.c.l.b16 %v827
    %v4996 = vunpack.c.h.b16 %v827
    %v4997 = vunpack.c.l.b16 %v828
    %v4998 = vunpack.c.h.b16 %v828
    %v4999 = vunpack.c.l.b16 %v829
    %v5000 = vunpack.c.h.b16 %v829
    %v5001 = vunpack.c.l.b16 %v830
    %v5002 = vunpack.c.h.b16 %v830
    %v5003 = vunpack.c.l.b16 %v831
    %v5004 = vunpack.c.h.b16 %v831
    %v5005 = vunpack.c.l.b16 %v832
    %v5006 = vunpack.c.h.b16 %v832
    %v5007 = vunpack.c.l.b16 %v833
    %v5008 = vunpack.c.h.b16 %v833
    %v5009 = vunpack.c.l.b16 %v834
    %v5010 = vunpack.c.h.b16 %v834
    %v5011 = vunpack.c.l.b16 %v835
    %v5012 = vunpack.c.h.b16 %v835
    %v5013 = vunpack.c.l.b16 %v836
    %v5014 = vunpack.c.h.b16 %v836
    %v5015 = vunpack.c.l.b16 %v837
    %v5016 = vunpack.c.h.b16 %v837
    %v5017 = vunpack.c.l.b16 %v838
    %v5018 = vunpack.c.h.b16 %v838
    %v5019 = vunpack.c.l.b16 %v839
    %v5020 = vunpack.c.h.b16 %v839
    %v5021 = vunpack.c.l.b16 %v840
    %v5022 = vunpack.c.h.b16 %v840
    %v5023 = vunpack.c.l.b16 %v841
    %v5024 = vunpack.c.h.b16 %v841
    %v5025 = vunpack.c.l.b16 %v842
    %v5026 = vunpack.c.h.b16 %v842
    %v5027 = vunpack.c.l.b16 %v843
    %v5028 = vunpack.c.h.b16 %v843
    %v5029 = vunpack.c.l.b16 %v844
    %v5030 = vunpack.c.h.b16 %v844
    %v5031 = vunpack.c.l.b16 %v845
    %v5032 = vunpack.c.h.b16 %v845
    %v5033 = vunpack.c.l.b16 %v846
    %v5034 = vunpack.c.h.b16 %v846
    %v5035 = vunpack.c.l.b16 %v847
    %v5036 = vunpack.c.h.b16 %v847
    %v5037 = vunpack.c.l.b16 %v848
    %v5038 = vunpack.c.h.b16 %v848
    %v5039 = vunpack.c.l.b16 %v849
    %v5040 = vunpack.c.h.b16 %v849
    %v5041 = vunpack.c.l.b16 %v850
    %v5042 = vunpack.c.h.b16 %v850
    %v5043 = vunpack.c.l.b16 %v851
    %v5044 = vunpack.c.h.b16 %v851
    %v5045 = vunpack.c.l.b16 %v852
    %v5046 = vunpack.c.h.b16 %v852
    %v5047 = vunpack.c.l.b16 %v853
    %v5048 = vunpack.c.h.b16 %v853
    %v5049 = vunpack.c.l.b16 %v854
    %v5050 = vunpack.c.h.b16 %v854
    %v5051 = vunpack.c.l.b16 %v855
    %v5052 = vunpack.c.h.b16 %v855
    %v5053 = vunpack.c.l.b16 %v856
    %v5054 = vunpack.c.h.b16 %v856
    %v5055 = vunpack.c.l.b16 %v857
    %v5056 = vunpack.c.h.b16 %v857
    %v5057 = vunpack.c.l.b16 %v858
    %v5058 = vunpack.c.h.b16 %v858
    %v5059 = vunpack.c.l.b16 %v859
    %v5060 = vunpack.c.h.b16 %v859
    %v5061 = vunpack.c.l.b16 %v860
    %v5062 = vunpack.c.h.b16 %v860
    %v5063 = vunpack.c.l.b16 %v861
    %v5064 = vunpack.c.h.b16 %v861
    %v5065 = vunpack.c.l.b16 %v862
    %v5066 = vunpack.c.h.b16 %v862
    %v5067 = vunpack.c.l.b16 %v863
    %v5068 = vunpack.c.h.b16 %v863
    %v5069 = vunpack.c.l.b16 %v864
    %v5070 = vunpack.c.h.b16 %v864
    %v5071 = vunpack.c.l.b16 %v865
    %v5072 = vunpack.c.h.b16 %v865
    %v5073 = vunpack.c.l.b16 %v866
    %v5074 = vunpack.c.h.b16 %v866
    %v5075 = vunpack.c.l.b16 %v867
    %v5076 = vunpack.c.h.b16 %v867
    %v5077 = vunpack.c.l.b16 %v868
    %v5078 = vunpack.c.h.b16 %v868
    %v5079 = vunpack.c.l.b16 %v869
    %v5080 = vunpack.c.h.b16 %v869
    %v5081 = vunpack.c.l.b16 %v870
    %v5082 = vunpack.c.h.b16 %v870
    %v5083 = vunpack.c.l.b16 %v871
    %v5084 = vunpack.c.h.b16 %v871
    %v5085 = vunpack.c.l.b16 %v872
    %v5086 = vunpack.c.h.b16 %v872
    %v5087 = vunpack.c.l.b16 %v873
    %v5088 = vunpack.c.h.b16 %v873
    %v5089 = vunpack.c.l.b16 %v874
    %v5090 = vunpack.c.h.b16 %v874
    %v5091 = vunpack.c.l.b16 %v875
    %v5092 = vunpack.c.h.b16 %v875
    %v5093 = vunpack.c.l.b16 %v876
    %v5094 = vunpack.c.h.b16 %v876
    %v5095 = vunpack.c.l.b16 %v877
    %v5096 = vunpack.c.h.b16 %v877
    %v5097 = vunpack.c.l.b16 %v878
    %v5098 = vunpack.c.h.b16 %v878
    %v5099 = vunpack.c.l.b16 %v879
    %v5100 = vunpack.c.h.b16 %v879
    %v5101 = vunpack.c.l.b16 %v880
    %v5102 = vunpack.c.h.b16 %v880
    %v5103 = vunpack.c.l.b16 %v881
    %v5104 = vunpack.c.h.b16 %v881
    %v5105 = vunpack.c.l.b16 %v882
    %v5106 = vunpack.c.h.b16 %v882
    %v5107 = vunpack.c.l.b16 %v883
    %v5108 = vunpack.c.h.b16 %v883
    %v5109 = vunpack.c.l.b16 %v884
    %v5110 = vunpack.c.h.b16 %v884
    %v5111 = vunpack.c.l.b16 %v885
    %v5112 = vunpack.c.h.b16 %v885
    %v5113 = vunpack.c.l.b16 %v886
    %v5114 = vunpack.c.h.b16 %v886
    %v5115 = vunpack.c.l.b16 %v887
    %v5116 = vunpack.c.h.b16 %v887
    %v5117 = vunpack.c.l.b16 %v888
    %v5118 = vunpack.c.h.b16 %v888
    %v5119 = vunpack.c.l.b16 %v889
    %v5120 = vunpack.c.h.b16 %v889
    %v5121 = vunpack.c.l.b16 %v890
    %v5122 = vunpack.c.h.b16 %v890
    %v5123 = vunpack.c.l.b16 %v891
    %v5124 = vunpack.c.h.b16 %v891
    %v5125 = vunpack.c.l.b16 %v892
    %v5126 = vunpack.c.h.b16 %v892
    %v5127 = vunpack.c.l.b16 %v893
    %v5128 = vunpack.c.h.b16 %v893
    %v5129 = vunpack.c.l.b16 %v894
    %v5130 = vunpack.c.h.b16 %v894
    %v5131 = vunpack.c.l.b16 %v895
    %v5132 = vunpack.c.h.b16 %v895
    %v5133 = vunpack.c.l.b16 %v896
    %v5134 = vunpack.c.h.b16 %v896
    %v5135 = vunpack.c.l.b16 %v897
    %v5136 = vunpack.c.h.b16 %v897
    %v5137 = vunpack.c.l.b16 %v898
    %v5138 = vunpack.c.h.b16 %v898
    %v5139 = vunpack.c.l.b16 %v899
    %v5140 = vunpack.c.h.b16 %v899
    %v5141 = vunpack.c.l.b16 %v900
    %v5142 = vunpack.c.h.b16 %v900
    %v5143 = vunpack.c.l.b16 %v901
    %v5144 = vunpack.c.h.b16 %v901
    %v5145 = vunpack.c.l.b16 %v902
    %v5146 = vunpack.c.h.b16 %v902
    %v5147 = vunpack.c.l.b16 %v903
    %v5148 = vunpack.c.h.b16 %v903
    %v5149 = vunpack.c.l.b16 %v904
    %v5150 = vunpack.c.h.b16 %v904
    %v5151 = vunpack.c.l.b16 %v905
    %v5152 = vunpack.c.h.b16 %v905
    %v5153 = vunpack.c.l.b16 %v906
    %v5154 = vunpack.c.h.b16 %v906
    %v5155 = vunpack.c.l.b16 %v907
    %v5156 = vunpack.c.h.b16 %v907
    %v5157 = vunpack.c.l.b16 %v908
    %v5158 = vunpack.c.h.b16 %v908
    %v5159 = vunpack.c.l.b16 %v909
    %v5160 = vunpack.c.h.b16 %v909
    %v5161 = vunpack.c.l.b16 %v910
    %v5162 = vunpack.c.h.b16 %v910
    %v5163 = vunpack.c.l.b16 %v911
    %v5164 = vunpack.c.h.b16 %v911
    %v5165 = vunpack.c.l.b16 %v912
    %v5166 = vunpack.c.h.b16 %v912
    %v5167 = vunpack.c.l.b16 %v913
    %v5168 = vunpack.c.h.b16 %v913
    %v5169 = vunpack.c.l.b16 %v914
    %v5170 = vunpack.c.h.b16 %v914
    %v5171 = vunpack.c.l.b16 %v915
    %v5172 = vunpack.c.h.b16 %v915
    %v5173 = vunpack.c.l.b16 %v916
    %v5174 = vunpack.c.h.b16 %v916
    %v5175 = vunpack.c.l.b16 %v917
    %v5176 = vunpack.c.h.b16 %v917
    %v5177 = vunpack.c.l.b16 %v918
    %v5178 = vunpack.c.h.b16 %v918
    %v5179 = vunpack.c.l.b16 %v919
    %v5180 = vunpack.c.h.b16 %v919
    %v5181 = vunpack.c.l.b16 %v920
    %v5182 = vunpack.c.h.b16 %v920
    %v5183 = vunpack.c.l.b16 %v921
    %v5184 = vunpack.c.h.b16 %v921
    %v5185 = vunpack.c.l.b16 %v922
    %v5186 = vunpack.c.h.b16 %v922
    %v5187 = vunpack.c.l.b16 %v923
    %v5188 = vunpack.c.h.b16 %v923
    %v5189 = vunpack.c.l.b16 %v924
    %v5190 = vunpack.c.h.b16 %v924
    %v5191 = vunpack.c.l.b16 %v925
    %v5192 = vunpack.c.h.b16 %v925
    %v5193 = vunpack.c.l.b16 %v926
    %v5194 = vunpack.c.h.b16 %v926
    %v5195 = vunpack.c.l.b16 %v927
    %v5196 = vunpack.c.h.b16 %v927
    %v5197 = vunpack.c.l.b16 %v928
    %v5198 = vunpack.c.h.b16 %v928
    %v5199 = vunpack.c.l.b16 %v929
    %v5200 = vunpack.c.h.b16 %v929
    %v5201 = vunpack.c.l.b16 %v930
    %v5202 = vunpack.c.h.b16 %v930
    %v5203 = vunpack.c.l.b16 %v931
    %v5204 = vunpack.c.h.b16 %v931
    %v5205 = vunpack.c.l.b16 %v932
    %v5206 = vunpack.c.h.b16 %v932
    %v5207 = vunpack.c.l.b16 %v933
    %v5208 = vunpack.c.h.b16 %v933
    %v5209 = vunpack.c.l.b16 %v934
    %v5210 = vunpack.c.h.b16 %v934
    %v5211 = vunpack.c.l.b16 %v935
    %v5212 = vunpack.c.h.b16 %v935
    %v5213 = vunpack.c.l.b16 %v936
    %v5214 = vunpack.c.h.b16 %v936
    %v5215 = vunpack.c.l.b16 %v937
    %v5216 = vunpack.c.h.b16 %v937
    %v5217 = vunpack.c.l.b16 %v938
    %v5218 = vunpack.c.h.b16 %v938
    %v5219 = vunpack.c.l.b16 %v939
    %v5220 = vunpack.c.h.b16 %v939
    %v5221 = vunpack.c.l.b16 %v940
    %v5222 = vunpack.c.h.b16 %v940
    %v5223 = vunpack.c.l.b16 %v941
    %v5224 = vunpack.c.h.b16 %v941
    %v5225 = vunpack.c.l.b16 %v942
    %v5226 = vunpack.c.h.b16 %v942
    %v5227 = vunpack.c.l.b16 %v943
    %v5228 = vunpack.c.h.b16 %v943
    %v5229 = vunpack.c.l.b16 %v944
    %v5230 = vunpack.c.h.b16 %v944
    %v5231 = vunpack.c.l.b16 %v945
    %v5232 = vunpack.c.h.b16 %v945
    %v5233 = vunpack.c.l.b16 %v946
    %v5234 = vunpack.c.h.b16 %v946
    %v5235 = vunpack.c.l.b16 %v947
    %v5236 = vunpack.c.h.b16 %v947
    %v5237 = vunpack.c.l.b16 %v948
    %v5238 = vunpack.c.h.b16 %v948
    %v5239 = vunpack.c.l.b16 %v949
    %v5240 = vunpack.c.h.b16 %v949
    %v5241 = vunpack.c.l.b16 %v950
    %v5242 = vunpack.c.h.b16 %v950
    %v5243 = vunpack.c.l.b16 %v951
    %v5244 = vunpack.c.h.b16 %v951
    %v5245 = vunpack.c.l.b16 %v952
    %v5246 = vunpack.c.h.b16 %v952
    %v5247 = vunpack.c.l.b16 %v953
    %v5248 = vunpack.c.h.b16 %v953
    %v5249 = vunpack.c.l.b16 %v954
    %v5250 = vunpack.c.h.b16 %v954
    %v5251 = vunpack.c.l.b16 %v955
    %v5252 = vunpack.c.h.b16 %v955
    %v5253 = vunpack.c.l.b16 %v956
    %v5254 = vunpack.c.h.b16 %v956
    %v5255 = vunpack.c.l.b16 %v957
    %v5256 = vunpack.c.h.b16 %v957
    %v5257 = vunpack.c.l.b16 %v958
    %v5258 = vunpack.c.h.b16 %v958
    %v5259 = vunpack.c.l.b16 %v959
    %v5260 = vunpack.c.h.b16 %v959
    %v5261 = vunpack.c.l.b16 %v960
    %v5262 = vunpack.c.h.b16 %v960
    %v5263 = vunpack.c.l.b16 %v961
    %v5264 = vunpack.c.h.b16 %v961
    %v5265 = vunpack.c.l.b16 %v962
    %v5266 = vunpack.c.h.b16 %v962
    %v5267 = vunpack.c.l.b16 %v963
    %v5268 = vunpack.c.h.b16 %v963
    %v5269 = vunpack.c.l.b16 %v964
    %v5270 = vunpack.c.h.b16 %v964
    %v5271 = vunpack.c.l.b16 %v965
    %v5272 = vunpack.c.h.b16 %v965
    %v5273 = vunpack.c.l.b16 %v966
    %v5274 = vunpack.c.h.b16 %v966
    %v5275 = vunpack.c.l.b16 %v967
    %v5276 = vunpack.c.h.b16 %v967
    %v5277 = vunpack.c.l.b16 %v968
    %v5278 = vunpack.c.h.b16 %v968
    %v5279 = vunpack.c.l.b16 %v969
    %v5280 = vunpack.c.h.b16 %v969
    %v5281 = vunpack.c.l.b16 %v970
    %v5282 = vunpack.c.h.b16 %v970
    %v5283 = vunpack.c.l.b16 %v971
    %v5284 = vunpack.c.h.b16 %v971
    %v5285 = vunpack.c.l.b16 %v972
    %v5286 = vunpack.c.h.b16 %v972
    %v5287 = vunpack.c.l.b16 %v973
    %v5288 = vunpack.c.h.b16 %v973
    %v5289 = vunpack.c.l.b16 %v974
    %v5290 = vunpack.c.h.b16 %v974
    %v5291 = vunpack.c.l.b16 %v975
    %v5292 = vunpack.c.h.b16 %v975
    %v5293 = vunpack.c.l.b16 %v976
    %v5294 = vunpack.c.h.b16 %v976
    %v5295 = vunpack.c.l.b16 %v977
    %v5296 = vunpack.c.h.b16 %v977
    %v5297 = vunpack.c.l.b16 %v978
    %v5298 = vunpack.c.h.b16 %v978
    %v5299 = vunpack.c.l.b16 %v979
    %v5300 = vunpack.c.h.b16 %v979
    %v5301 = vunpack.c.l.b16 %v980
    %v5302 = vunpack.c.h.b16 %v980
    %v5303 = vunpack.c.l.b16 %v981
    %v5304 = vunpack.c.h.b16 %v981
    %v5305 = vunpack.c.l.b16 %v982
    %v5306 = vunpack.c.h.b16 %v982
    %v5307 = vunpack.c.l.b16 %v983
    %v5308 = vunpack.c.h.b16 %v983
    %v5309 = vunpack.c.l.b16 %v984
    %v5310 = vunpack.c.h.b16 %v984
    %v5311 = vunpack.c.l.b16 %v985
    %v5312 = vunpack.c.h.b16 %v985
    %v5313 = vunpack.c.l.b16 %v986
    %v5314 = vunpack.c.h.b16 %v986
    %v5315 = vunpack.c.l.b16 %v987
    %v5316 = vunpack.c.h.b16 %v987
    %v5317 = vunpack.c.l.b16 %v988
    %v5318 = vunpack.c.h.b16 %v988
    %v5319 = vunpack.c.l.b16 %v989
    %v5320 = vunpack.c.h.b16 %v989
    %v5321 = vunpack.c.l.b16 %v990
    %v5322 = vunpack.c.h.b16 %v990
    %v5323 = vunpack.c.l.b16 %v991
    %v5324 = vunpack.c.h.b16 %v991
    %v5325 = vunpack.c.l.b16 %v992
    %v5326 = vunpack.c.h.b16 %v992
    %v5327 = vunpack.c.l.b16 %v993
    %v5328 = vunpack.c.h.b16 %v993
    %v5329 = vunpack.c.l.b16 %v994
    %v5330 = vunpack.c.h.b16 %v994
    %v5331 = vunpack.c.l.b16 %v995
    %v5332 = vunpack.c.h.b16 %v995
    %v5333 = vunpack.c.l.b16 %v996
    %v5334 = vunpack.c.h.b16 %v996
    %v5335 = vunpack.c.l.b16 %v997
    %v5336 = vunpack.c.h.b16 %v997
    %v5337 = vunpack.c.l.b16 %v998
    %v5338 = vunpack.c.h.b16 %v998
    %v5339 = vunpack.c.l.b16 %v999
    %v5340 = vunpack.c.h.b16 %v999
    %v5341 = vunpack.c.l.b16 %v1000
    %v5342 = vunpack.c.h.b16 %v1000
    %v5343 = vunpack.c.l.b16 %v1001
    %v5344 = vunpack.c.h.b16 %v1001
    %v5345 = vunpack.c.l.b16 %v1002
    %v5346 = vunpack.c.h.b16 %v1002
    %v5347 = vunpack.c.l.b16 %v1003
    %v5348 = vunpack.c.h.b16 %v1003
    %v5349 = vunpack.c.l.b16 %v1004
    %v5350 = vunpack.c.h.b16 %v1004
    %v5351 = vunpack.c.l.b16 %v1005
    %v5352 = vunpack.c.h.b16 %v1005
    %v5353 = vunpack.c.l.b16 %v1006
    %v5354 = vunpack.c.h.b16 %v1006
    %v5355 = vunpack.c.l.b16 %v1007
    %v5356 = vunpack.c.h.b16 %v1007
    %v5357 = vunpack.c.l.b16 %v1008
    %v5358 = vunpack.c.h.b16 %v1008
    %v5359 = vunpack.c.l.b16 %v1009
    %v5360 = vunpack.c.h.b16 %v1009
    %v5361 = vunpack.c.l.b16 %v1010
    %v5362 = vunpack.c.h.b16 %v1010
    %v5363 = vunpack.c.l.b16 %v1011
    %v5364 = vunpack.c.h.b16 %v1011
    %v5365 = vunpack.c.l.b16 %v1012
    %v5366 = vunpack.c.h.b16 %v1012
    %v5367 = vunpack.c.l.b16 %v1013
    %v5368 = vunpack.c.h.b16 %v1013
    %v5369 = vunpack.c.l.b16 %v1014
    %v5370 = vunpack.c.h.b16 %v1014
    %v5371 = vunpack.c.l.b16 %v1015
    %v5372 = vunpack.c.h.b16 %v1015
    %v5373 = vunpack.c.l.b16 %v1016
    %v5374 = vunpack.c.h.b16 %v1016
    %v5375 = vunpack.c.l.b16 %v1017
    %v5376 = vunpack.c.h.b16 %v1017
    %v5377 = vunpack.c.l.b16 %v1018
    %v5378 = vunpack.c.h.b16 %v1018
    %v5379 = vunpack.c.l.b16 %v1019
    %v5380 = vunpack.c.h.b16 %v1019
    %v5381 = vunpack.c.l.b16 %v1020
    %v5382 = vunpack.c.h.b16 %v1020
    %v5383 = vunpack.c.l.b16 %v1021
    %v5384 = vunpack.c.h.b16 %v1021
    %v5385 = vunpack.c.l.b16 %v1022
    %v5386 = vunpack.c.h.b16 %v1022
    %v5387 = vunpack.c.l.b16 %v1023
    %v5388 = vunpack.c.h.b16 %v1023
    %v5389 = vunpack.c.l.b16 %v1024
    %v5390 = vunpack.c.h.b16 %v1024
    %v5391 = vunpack.c.l.b16 %v1025
    %v5392 = vunpack.c.h.b16 %v1025
    %v5393 = vunpack.c.l.b16 %v1026
    %v5394 = vunpack.c.h.b16 %v1026
    %v5395 = vunpack.c.l.b16 %v1027
    %v5396 = vunpack.c.h.b16 %v1027
    %v5397 = vunpack.c.l.b16 %v1028
    %v5398 = vunpack.c.h.b16 %v1028
    %v5399 = vunpack.c.l.b16 %v1029
    %v5400 = vunpack.c.h.b16 %v1029
    %v5401 = vunpack.c.l.b16 %v1030
    %v5402 = vunpack.c.h.b16 %v1030
    %v5403 = vunpack.c.l.b16 %v1031
    %v5404 = vunpack.c.h.b16 %v1031
    %v5405 = vunpack.c.l.b16 %v1032
    %v5406 = vunpack.c.h.b16 %v1032
    %v5407 = vunpack.c.l.b16 %v1033
    %v5408 = vunpack.c.h.b16 %v1033
    %v5409 = vunpack.c.l.b16 %v1034
    %v5410 = vunpack.c.h.b16 %v1034
    %v5411 = vunpack.c.l.b16 %v1035
    %v5412 = vunpack.c.h.b16 %v1035
    %v5413 = vunpack.c.l.b16 %v1036
    %v5414 = vunpack.c.h.b16 %v1036
    %v5415 = vunpack.c.l.b16 %v1037
    %v5416 = vunpack.c.h.b16 %v1037
    %v5417 = vunpack.c.l.b16 %v1038
    %v5418 = vunpack.c.h.b16 %v1038
    %v5419 = vunpack.c.l.b16 %v1039
    %v5420 = vunpack.c.h.b16 %v1039
    %v5421 = vunpack.c.l.b16 %v1040
    %v5422 = vunpack.c.h.b16 %v1040
    %v5423 = vunpack.c.l.b16 %v1041
    %v5424 = vunpack.c.h.b16 %v1041
    %v5425 = vunpack.c.l.b16 %v1042
    %v5426 = vunpack.c.h.b16 %v1042
    %v5427 = vunpack.c.l.b16 %v1043
    %v5428 = vunpack.c.h.b16 %v1043
    %v5429 = vunpack.c.l.b16 %v1044
    %v5430 = vunpack.c.h.b16 %v1044
    %v5431 = vunpack.c.l.b16 %v1045
    %v5432 = vunpack.c.h.b16 %v1045
    %v5433 = vunpack.c.l.b16 %v1046
    %v5434 = vunpack.c.h.b16 %v1046
    %v5435 = vunpack.c.l.b16 %v1047
    %v5436 = vunpack.c.h.b16 %v1047
    %v5437 = vunpack.c.l.b16 %v1048
    %v5438 = vunpack.c.h.b16 %v1048
    %v5439 = vunpack.c.l.b16 %v1049
    %v5440 = vunpack.c.h.b16 %v1049
    %v5441 = vunpack.c.l.b16 %v1050
    %v5442 = vunpack.c.h.b16 %v1050
    %v5443 = vunpack.c.l.b16 %v1051
    %v5444 = vunpack.c.h.b16 %v1051
    %v5445 = vunpack.c.l.b16 %v1052
    %v5446 = vunpack.c.h.b16 %v1052
    %v5447 = vunpack.c.l.b16 %v1053
    %v5448 = vunpack.c.h.b16 %v1053
    %v5449 = vunpack.c.l.b16 %v1054
    %v5450 = vunpack.c.h.b16 %v1054
    %v5451 = vunpack.c.l.b16 %v1055
    %v5452 = vunpack.c.h.b16 %v1055
    %v5453 = vunpack.c.l.b16 %v1056
    %v5454 = vunpack.c.h.b16 %v1056
    %v5455 = vunpack.c.l.b16 %v1057
    %v5456 = vunpack.c.h.b16 %v1057
    %v5457 = vunpack.c.l.b16 %v1058
    %v5458 = vunpack.c.h.b16 %v1058
    %v5459 = vunpack.c.l.b16 %v1059
    %v5460 = vunpack.c.h.b16 %v1059
    %v5461 = vunpack.c.l.b16 %v1060
    %v5462 = vunpack.c.h.b16 %v1060
    %v5463 = vunpack.c.l.b16 %v1061
    %v5464 = vunpack.c.h.b16 %v1061
    %v5465 = vunpack.c.l.b16 %v1062
    %v5466 = vunpack.c.h.b16 %v1062
    %v5467 = vunpack.c.l.b16 %v1063
    %v5468 = vunpack.c.h.b16 %v1063
    %v5469 = vunpack.c.l.b16 %v1064
    %v5470 = vunpack.c.h.b16 %v1064
    %v5471 = vunpack.c.l.b16 %v1065
    %v5472 = vunpack.c.h.b16 %v1065
    %v5473 = vunpack.c.l.b16 %v1066
    %v5474 = vunpack.c.h.b16 %v1066
    %v5475 = vunpack.c.l.b16 %v1067
    %v5476 = vunpack.c.h.b16 %v1067
    %v5477 = vunpack.c.l.b16 %v1068
    %v5478 = vunpack.c.h.b16 %v1068
    %v5479 = vunpack.c.l.b16 %v1069
    %v5480 = vunpack.c.h.b16 %v1069
    %v5481 = vunpack.c.l.b16 %v1070
    %v5482 = vunpack.c.h.b16 %v1070
    %v5483 = vunpack.c.l.b16 %v1071
    %v5484 = vunpack.c.h.b16 %v1071
    %v5485 = vunpack.c.l.b16 %v1072
    %v5486 = vunpack.c.h.b16 %v1072
    %v5487 = vunpack.c.l.b16 %v1073
    %v5488 = vunpack.c.h.b16 %v1073
    %v5489 = vunpack.c.l.b16 %v1074
    %v5490 = vunpack.c.h.b16 %v1074
    %v5491 = vunpack.c.l.b16 %v1075
    %v5492 = vunpack.c.h.b16 %v1075
    %v5493 = vunpack.c.l.b16 %v1076
    %v5494 = vunpack.c.h.b16 %v1076
    %v5495 = vunpack.c.l.b16 %v1077
    %v5496 = vunpack.c.h.b16 %v1077
    %v5497 = vunpack.c.l.b16 %v1078
    %v5498 = vunpack.c.h.b16 %v1078
    %v5499 = vunpack.c.l.b16 %v1079
    %v5500 = vunpack.c.h.b16 %v1079
    %v5501 = vunpack.c.l.b16 %v1080
    %v5502 = vunpack.c.h.b16 %v1080
    %v5503 = vunpack.c.l.b16 %v1081
    %v5504 = vunpack.c.h.b16 %v1081
    %v5505 = vunpack.c.l.b16 %v1082
    %v5506 = vunpack.c.h.b16 %v1082
    %v5507 = vunpack.c.l.b16 %v1083
    %v5508 = vunpack.c.h.b16 %v1083
    %v5509 = vunpack.c.l.b16 %v1084
    %v5510 = vunpack.c.h.b16 %v1084
    %v5511 = vunpack.c.l.b16 %v1085
    %v5512 = vunpack.c.h.b16 %v1085
    %v5513 = vunpack.c.l.b16 %v1086
    %v5514 = vunpack.c.h.b16 %v1086
    %v5515 = vunpack.c.l.b16 %v1087
    %v5516 = vunpack.c.h.b16 %v1087
    %v5517 = vunpack.c.l.b16 %v1088
    %v5518 = vunpack.c.h.b16 %v1088
    %v5519 = vunpack.c.l.b16 %v1089
    %v5520 = vunpack.c.h.b16 %v1089
    %v5521 = vunpack.c.l.b16 %v1090
    %v5522 = vunpack.c.h.b16 %v1090
    %v5523 = vunpack.c.l.b16 %v1091
    %v5524 = vunpack.c.h.b16 %v1091
    %v5525 = vunpack.c.l.b16 %v1092
    %v5526 = vunpack.c.h.b16 %v1092
    %v5527 = vunpack.c.l.b16 %v1093
    %v5528 = vunpack.c.h.b16 %v1093
    %v5529 = vunpack.c.l.b16 %v1094
    %v5530 = vunpack.c.h.b16 %v1094
    %v5531 = vunpack.c.l.b16 %v1095
    %v5532 = vunpack.c.h.b16 %v1095
    %v5533 = vunpack.c.l.b16 %v1096
    %v5534 = vunpack.c.h.b16 %v1096
    %v5535 = vunpack.c.l.b16 %v1097
    %v5536 = vunpack.c.h.b16 %v1097
    %v5537 = vunpack.c.l.b16 %v1098
    %v5538 = vunpack.c.h.b16 %v1098
    %v5539 = vunpack.c.l.b16 %v1099
    %v5540 = vunpack.c.h.b16 %v1099
    %v5541 = vunpack.c.l.b16 %v1100
    %v5542 = vunpack.c.h.b16 %v1100
    %v5543 = vunpack.c.l.b16 %v1101
    %v5544 = vunpack.c.h.b16 %v1101
    %v5545 = vunpack.c.l.b16 %v1102
    %v5546 = vunpack.c.h.b16 %v1102
    %v5547 = vunpack.c.l.b16 %v1103
    %v5548 = vunpack.c.h.b16 %v1103
    %v5549 = vunpack.c.l.b16 %v1104
    %v5550 = vunpack.c.h.b16 %v1104
    %v5551 = vunpack.c.l.b16 %v1105
    %v5552 = vunpack.c.h.b16 %v1105
    %v5553 = vunpack.c.l.b16 %v1106
    %v5554 = vunpack.c.h.b16 %v1106
    %v5555 = vunpack.c.l.b16 %v1107
    %v5556 = vunpack.c.h.b16 %v1107
    %v5557 = vunpack.c.l.b16 %v1108
    %v5558 = vunpack.c.h.b16 %v1108
    %v5559 = vunpack.c.l.b16 %v1109
    %v5560 = vunpack.c.h.b16 %v1109
    %v5561 = vunpack.c.l.b16 %v1110
    %v5562 = vunpack.c.h.b16 %v1110
    %v5563 = vunpack.c.l.b16 %v1111
    %v5564 = vunpack.c.h.b16 %v1111
    %v5565 = vunpack.c.l.b16 %v1112
    %v5566 = vunpack.c.h.b16 %v1112
    %v5567 = vunpack.c.l.b16 %v1113
    %v5568 = vunpack.c.h.b16 %v1113
    %v5569 = vunpack.c.l.b16 %v1114
    %v5570 = vunpack.c.h.b16 %v1114
    %v5571 = vunpack.c.l.b16 %v1115
    %v5572 = vunpack.c.h.b16 %v1115
    %v5573 = vunpack.c.l.b16 %v1116
    %v5574 = vunpack.c.h.b16 %v1116
    %v5575 = vunpack.c.l.b16 %v1117
    %v5576 = vunpack.c.h.b16 %v1117
    %v5577 = vunpack.c.l.b16 %v1118
    %v5578 = vunpack.c.h.b16 %v1118
    %v5579 = vunpack.c.l.b16 %v1119
    %v5580 = vunpack.c.h.b16 %v1119
    %v5581 = vunpack.c.l.b16 %v1120
    %v5582 = vunpack.c.h.b16 %v1120
    %v5583 = vunpack.c.l.b16 %v1121
    %v5584 = vunpack.c.h.b16 %v1121
    %v5585 = vunpack.c.l.b16 %v1122
    %v5586 = vunpack.c.h.b16 %v1122
    %v5587 = vunpack.c.l.b16 %v1123
    %v5588 = vunpack.c.h.b16 %v1123
    %v5589 = vunpack.c.l.b16 %v1124
    %v5590 = vunpack.c.h.b16 %v1124
    %v5591 = vunpack.c.l.b16 %v1125
    %v5592 = vunpack.c.h.b16 %v1125
    %v5593 = vunpack.c.l.b16 %v1126
    %v5594 = vunpack.c.h.b16 %v1126
    %v5595 = vunpack.c.l.b16 %v1127
    %v5596 = vunpack.c.h.b16 %v1127
    %v5597 = vunpack.c.l.b16 %v1128
    %v5598 = vunpack.c.h.b16 %v1128
    %v5599 = vunpack.c.l.b16 %v1129
    %v5600 = vunpack.c.h.b16 %v1129
    %v5601 = vunpack.c.l.b16 %v1130
    %v5602 = vunpack.c.h.b16 %v1130
    %v5603 = vunpack.c.l.b16 %v1131
    %v5604 = vunpack.c.h.b16 %v1131
    %v5605 = vunpack.c.l.b16 %v1132
    %v5606 = vunpack.c.h.b16 %v1132
    %v5607 = vunpack.c.l.b16 %v1133
    %v5608 = vunpack.c.h.b16 %v1133
    %v5609 = vunpack.c.l.b16 %v1134
    %v5610 = vunpack.c.h.b16 %v1134
    %v5611 = vunpack.c.l.b16 %v1135
    %v5612 = vunpack.c.h.b16 %v1135
    %v5613 = vunpack.c.l.b16 %v1136
    %v5614 = vunpack.c.h.b16 %v1136
    %v5615 = vunpack.c.l.b16 %v1137
    %v5616 = vunpack.c.h.b16 %v1137
    %v5617 = vunpack.c.l.b16 %v1138
    %v5618 = vunpack.c.h.b16 %v1138
    %v5619 = vunpack.c.l.b16 %v1139
    %v5620 = vunpack.c.h.b16 %v1139
    %v5621 = vunpack.c.l.b16 %v1140
    %v5622 = vunpack.c.h.b16 %v1140
    %v5623 = vunpack.c.l.b16 %v1141
    %v5624 = vunpack.c.h.b16 %v1141
    %v5625 = vunpack.c.l.b16 %v1142
    %v5626 = vunpack.c.h.b16 %v1142
    %v5627 = vunpack.c.l.b16 %v1143
    %v5628 = vunpack.c.h.b16 %v1143
    %v5629 = vunpack.c.l.b16 %v1144
    %v5630 = vunpack.c.h.b16 %v1144
    %v5631 = vunpack.c.l.b16 %v1145
    %v5632 = vunpack.c.h.b16 %v1145
    %v5633 = vunpack.c.l.b16 %v1146
    %v5634 = vunpack.c.h.b16 %v1146
    %v5635 = vunpack.c.l.b16 %v1147
    %v5636 = vunpack.c.h.b16 %v1147
    %v5637 = vunpack.c.l.b16 %v1148
    %v5638 = vunpack.c.h.b16 %v1148
    %v5639 = vunpack.c.l.b16 %v1149
    %v5640 = vunpack.c.h.b16 %v1149
    %v5641 = vunpack.c.l.b16 %v1150
    %v5642 = vunpack.c.h.b16 %v1150
    %v5643 = vunpack.c.l.b16 %v1151
    %v5644 = vunpack.c.h.b16 %v1151
    %v5645 = vunpack.c.l.b16 %v1152
    %v5646 = vunpack.c.h.b16 %v1152
    %v5647 = vunpack.c.l.b16 %v1153
    %v5648 = vunpack.c.h.b16 %v1153
    %v5649 = vunpack.c.l.b16 %v1154
    %v5650 = vunpack.c.h.b16 %v1154
    %v5651 = vunpack.c.l.b16 %v1155
    %v5652 = vunpack.c.h.b16 %v1155
    %v5653 = vunpack.c.l.b16 %v1156
    %v5654 = vunpack.c.h.b16 %v1156
    %v5655 = vunpack.c.l.b16 %v1157
    %v5656 = vunpack.c.h.b16 %v1157
    %v5657 = vunpack.c.l.b16 %v1158
    %v5658 = vunpack.c.h.b16 %v1158
    %v5659 = vunpack.c.l.b16 %v1159
    %v5660 = vunpack.c.h.b16 %v1159
    %v5661 = vunpack.c.l.b16 %v1160
    %v5662 = vunpack.c.h.b16 %v1160
    %v5663 = vunpack.c.l.b16 %v1161
    %v5664 = vunpack.c.h.b16 %v1161
    %v5665 = vunpack.c.l.b16 %v1162
    %v5666 = vunpack.c.h.b16 %v1162
    %v5667 = vunpack.c.l.b16 %v1163
    %v5668 = vunpack.c.h.b16 %v1163
    %v5669 = vunpack.c.l.b16 %v1164
    %v5670 = vunpack.c.h.b16 %v1164
    %v5671 = vunpack.c.l.b16 %v1165
    %v5672 = vunpack.c.h.b16 %v1165
    %v5673 = vunpack.c.l.b16 %v1166
    %v5674 = vunpack.c.h.b16 %v1166
    %v5675 = vunpack.c.l.b16 %v1167
    %v5676 = vunpack.c.h.b16 %v1167
    %v5677 = vunpack.c.l.b16 %v1168
    %v5678 = vunpack.c.h.b16 %v1168
    %v5679 = vunpack.c.l.b16 %v1169
    %v5680 = vunpack.c.h.b16 %v1169
    %v5681 = vunpack.c.l.b16 %v1170
    %v5682 = vunpack.c.h.b16 %v1170
    %v5683 = vunpack.c.l.b16 %v1171
    %v5684 = vunpack.c.h.b16 %v1171
    %v5685 = vunpack.c.l.b16 %v1172
    %v5686 = vunpack.c.h.b16 %v1172
    %v5687 = vunpack.c.l.b16 %v1173
    %v5688 = vunpack.c.h.b16 %v1173
    %v5689 = vunpack.c.l.b16 %v1174
    %v5690 = vunpack.c.h.b16 %v1174
    %v5691 = vunpack.c.l.b16 %v1175
    %v5692 = vunpack.c.h.b16 %v1175
    %v5693 = vunpack.c.l.b16 %v1176
    %v5694 = vunpack.c.h.b16 %v1176
    %v5695 = vunpack.c.l.b16 %v1177
    %v5696 = vunpack.c.h.b16 %v1177
    %v5697 = vunpack.c.l.b16 %v1178
    %v5698 = vunpack.c.h.b16 %v1178
    %v5699 = vunpack.c.l.b16 %v1179
    %v5700 = vunpack.c.h.b16 %v1179
    %v5701 = vunpack.c.l.b16 %v1180
    %v5702 = vunpack.c.h.b16 %v1180
    %v5703 = vunpack.c.l.b16 %v1181
    %v5704 = vunpack.c.h.b16 %v1181
    %v5705 = vunpack.c.l.b16 %v1182
    %v5706 = vunpack.c.h.b16 %v1182
    %v5707 = vunpack.c.l.b16 %v1183
    %v5708 = vunpack.c.h.b16 %v1183
    %v5709 = vunpack.c.l.b16 %v1184
    %v5710 = vunpack.c.h.b16 %v1184
    %v5711 = vunpack.c.l.b16 %v1185
    %v5712 = vunpack.c.h.b16 %v1185
    %v5713 = vunpack.c.l.b16 %v1186
    %v5714 = vunpack.c.h.b16 %v1186
    %v5715 = vunpack.c.l.b16 %v1187
    %v5716 = vunpack.c.h.b16 %v1187
    %v5717 = vunpack.c.l.b16 %v1188
    %v5718 = vunpack.c.h.b16 %v1188
    %v5719 = vunpack.c.l.b16 %v1189
    %v5720 = vunpack.c.h.b16 %v1189
    %v5721 = vunpack.c.l.b16 %v1190
    %v5722 = vunpack.c.h.b16 %v1190
    %v5723 = vunpack.c.l.b16 %v1191
    %v5724 = vunpack.c.h.b16 %v1191
    %v5725 = vunpack.c.l.b16 %v1192
    %v5726 = vunpack.c.h.b16 %v1192
    %v5727 = vunpack.c.l.b16 %v1193
    %v5728 = vunpack.c.h.b16 %v1193
    %v5729 = vunpack.c.l.b16 %v1194
    %v5730 = vunpack.c.h.b16 %v1194
    %v5731 = vunpack.c.l.b16 %v1195
    %v5732 = vunpack.c.h.b16 %v1195
    %v5733 = vunpack.c.l.b16 %v1196
    %v5734 = vunpack.c.h.b16 %v1196
    %v5735 = vunpack.c.l.b16 %v1197
    %v5736 = vunpack.c.h.b16 %v1197
    %v5737 = vunpack.c.l.b16 %v1198
    %v5738 = vunpack.c.h.b16 %v1198
    %v5739 = vunpack.c.l.b16 %v1199
    %v5740 = vunpack.c.h.b16 %v1199
    %v5741 = vunpack.c.l.b16 %v1200
    %v5742 = vunpack.c.h.b16 %v1200
    %v5743 = vunpack.c.l.b16 %v1201
    %v5744 = vunpack.c.h.b16 %v1201
    %v5745 = vunpack.c.l.b16 %v1202
    %v5746 = vunpack.c.h.b16 %v1202
    %v5747 = vunpack.c.l.b16 %v1203
    %v5748 = vunpack.c.h.b16 %v1203
    %v5749 = vunpack.c.l.b16 %v1204
    %v5750 = vunpack.c.h.b16 %v1204
    %v5751 = vunpack.c.l.b16 %v1205
    %v5752 = vunpack.c.h.b16 %v1205
    %v5753 = vunpack.c.l.b16 %v1206
    %v5754 = vunpack.c.h.b16 %v1206
    %v5755 = vunpack.c.l.b16 %v1207
    %v5756 = vunpack.c.h.b16 %v1207
    %v5757 = vunpack.c.l.b16 %v1208
    %v5758 = vunpack.c.h.b16 %v1208
    %v5759 = vunpack.c.l.b16 %v1209
    %v5760 = vunpack.c.h.b16 %v1209
    %v5761 = vunpack.c.l.b16 %v1210
    %v5762 = vunpack.c.h.b16 %v1210
    %v5763 = vunpack.c.l.b16 %v1211
    %v5764 = vunpack.c.h.b16 %v1211
    %v5765 = vunpack.c.l.b16 %v1212
    %v5766 = vunpack.c.h.b16 %v1212
    %v5767 = vunpack.c.l.b16 %v1213
    %v5768 = vunpack.c.h.b16 %v1213
    %v5769 = vunpack.c.l.b16 %v1214
    %v5770 = vunpack.c.h.b16 %v1214
    %v5771 = vunpack.c.l.b16 %v1215
    %v5772 = vunpack.c.h.b16 %v1215
    %v5773 = vunpack.c.l.b16 %v1216
    %v5774 = vunpack.c.h.b16 %v1216
    %v5775 = vunpack.c.l.b16 %v1217
    %v5776 = vunpack.c.h.b16 %v1217
    %v5777 = vunpack.c.l.b16 %v1218
    %v5778 = vunpack.c.h.b16 %v1218
    %v5779 = vunpack.c.l.b16 %v1219
    %v5780 = vunpack.c.h.b16 %v1219
    %v5781 = vunpack.c.l.b16 %v1220
    %v5782 = vunpack.c.h.b16 %v1220
    %v5783 = vunpack.c.l.b16 %v1221
    %v5784 = vunpack.c.h.b16 %v1221
    %v5785 = vunpack.c.l.b16 %v1222
    %v5786 = vunpack.c.h.b16 %v1222
    %v5787 = vunpack.c.l.b16 %v1223
    %v5788 = vunpack.c.h.b16 %v1223
    %v5789 = vunpack.c.l.b16 %v1224
    %v5790 = vunpack.c.h.b16 %v1224
    %v5791 = vunpack.c.l.b16 %v1225
    %v5792 = vunpack.c.h.b16 %v1225
    %v5793 = vunpack.c.l.b16 %v1226
    %v5794 = vunpack.c.h.b16 %v1226
    %v5795 = vunpack.c.l.b16 %v1227
    %v5796 = vunpack.c.h.b16 %v1227
    %v5797 = vunpack.c.l.b16 %v1228
    %v5798 = vunpack.c.h.b16 %v1228
    %v5799 = vunpack.c.l.b16 %v1229
    %v5800 = vunpack.c.h.b16 %v1229
    %v5801 = vunpack.c.l.b16 %v1230
    %v5802 = vunpack.c.h.b16 %v1230
    %v5803 = vunpack.c.l.b16 %v1231
    %v5804 = vunpack.c.h.b16 %v1231
    %v5805 = vunpack.c.l.b16 %v1232
    %v5806 = vunpack.c.h.b16 %v1232
    %v5807 = vunpack.c.l.b16 %v1233
    %v5808 = vunpack.c.h.b16 %v1233
    %v5809 = vunpack.c.l.b16 %v1234
    %v5810 = vunpack.c.h.b16 %v1234
    %v5811 = vunpack.c.l.b16 %v1235
    %v5812 = vunpack.c.h.b16 %v1235
    %v5813 = vunpack.c.l.b16 %v1236
    %v5814 = vunpack.c.h.b16 %v1236
    %v5815 = vunpack.c.l.b16 %v1237
    %v5816 = vunpack.c.h.b16 %v1237
    %v5817 = vunpack.c.l.b16 %v1238
    %v5818 = vunpack.c.h.b16 %v1238
    %v5819 = vunpack.c.l.b16 %v1239
    %v5820 = vunpack.c.h.b16 %v1239
    %v5821 = vunpack.c.l.b16 %v1240
    %v5822 = vunpack.c.h.b16 %v1240
    %v5823 = vunpack.c.l.b16 %v1241
    %v5824 = vunpack.c.h.b16 %v1241
    %v5825 = vunpack.c.l.b16 %v1242
    %v5826 = vunpack.c.h.b16 %v1242
    %v5827 = vunpack.c.l.b16 %v1243
    %v5828 = vunpack.c.h.b16 %v1243
    %v5829 = vunpack.c.l.b16 %v1244
    %v5830 = vunpack.c.h.b16 %v1244
    %v5831 = vunpack.c.l.b16 %v1245
    %v5832 = vunpack.c.h.b16 %v1245
    %v5833 = vunpack.c.l.b16 %v1246
    %v5834 = vunpack.c.h.b16 %v1246
    %v5835 = vunpack.c.l.b16 %v1247
    %v5836 = vunpack.c.h.b16 %v1247
    %v5837 = vunpack.c.l.b16 %v1248
    %v5838 = vunpack.c.h.b16 %v1248
    %v5839 = vunpack.c.l.b16 %v1249
    %v5840 = vunpack.c.h.b16 %v1249
    %v5841 = vunpack.c.l.b16 %v1250
    %v5842 = vunpack.c.h.b16 %v1250
    %v5843 = vunpack.c.l.b16 %v1251
    %v5844 = vunpack.c.h.b16 %v1251
    %v5845 = vunpack.c.l.b16 %v1252
    %v5846 = vunpack.c.h.b16 %v1252
    %v5847 = vunpack.c.l.b16 %v1253
    %v5848 = vunpack.c.h.b16 %v1253
    %v5849 = vunpack.c.l.b16 %v1254
    %v5850 = vunpack.c.h.b16 %v1254
    %v5851 = vunpack.c.l.b16 %v1255
    %v5852 = vunpack.c.h.b16 %v1255
    %v5853 = vunpack.c.l.b16 %v1256
    %v5854 = vunpack.c.h.b16 %v1256
    %v5855 = vunpack.c.l.b16 %v1257
    %v5856 = vunpack.c.h.b16 %v1257
    %v5857 = vunpack.c.l.b16 %v1258
    %v5858 = vunpack.c.h.b16 %v1258
    %v5859 = vunpack.c.l.b16 %v1259
    %v5860 = vunpack.c.h.b16 %v1259
    %v5861 = vunpack.c.l.b16 %v1260
    %v5862 = vunpack.c.h.b16 %v1260
    %v5863 = vunpack.c.l.b16 %v1261
    %v5864 = vunpack.c.h.b16 %v1261
    %v5865 = vunpack.c.l.b16 %v1262
    %v5866 = vunpack.c.h.b16 %v1262
    %v5867 = vunpack.c.l.b16 %v1263
    %v5868 = vunpack.c.h.b16 %v1263
    %v5869 = vunpack.c.l.b16 %v1264
    %v5870 = vunpack.c.h.b16 %v1264
    %v5871 = vunpack.c.l.b16 %v1265
    %v5872 = vunpack.c.h.b16 %v1265
    %v5873 = vunpack.c.l.b16 %v1266
    %v5874 = vunpack.c.h.b16 %v1266
    %v5875 = vunpack.c.l.b16 %v1267
    %v5876 = vunpack.c.h.b16 %v1267
    %v5877 = vunpack.c.l.b16 %v1268
    %v5878 = vunpack.c.h.b16 %v1268
    %v5879 = vunpack.c.l.b16 %v1269
    %v5880 = vunpack.c.h.b16 %v1269
    %v5881 = vunpack.c.l.b16 %v1270
    %v5882 = vunpack.c.h.b16 %v1270
    %v5883 = vunpack.c.l.b16 %v1271
    %v5884 = vunpack.c.h.b16 %v1271
    %v5885 = vunpack.c.l.b16 %v1272
    %v5886 = vunpack.c.h.b16 %v1272
    %v5887 = vunpack.c.l.b16 %v1273
    %v5888 = vunpack.c.h.b16 %v1273
    %v5889 = vunpack.c.l.b16 %v1274
    %v5890 = vunpack.c.h.b16 %v1274
    %v5891 = vunpack.c.l.b16 %v1275
    %v5892 = vunpack.c.h.b16 %v1275
    %v5893 = vunpack.c.l.b16 %v1276
    %v5894 = vunpack.c.h.b16 %v1276
    %v5895 = vunpack.c.l.b16 %v1277
    %v5896 = vunpack.c.h.b16 %v1277
    %v5897 = vunpack.c.l.b16 %v1278
    %v5898 = vunpack.c.h.b16 %v1278
    %v5899 = vunpack.c.l.b16 %v1279
    %v5900 = vunpack.c.h.b16 %v1279
    %v5901 = vunpack.c.l.b16 %v1280
    %v5902 = vunpack.c.h.b16 %v1280
    %v5903 = vunpack.c.l.b16 %v1281
    %v5904 = vunpack.c.h.b16 %v1281
    %v5905 = vunpack.c.l.b16 %v1282
    %v5906 = vunpack.c.h.b16 %v1282
    %v5907 = vunpack.c.l.b16 %v1283
    %v5908 = vunpack.c.h.b16 %v1283
    %v5909 = vunpack.c.l.b16 %v1284
    %v5910 = vunpack.c.h.b16 %v1284
    %v5911 = vunpack.c.l.b16 %v1285
    %v5912 = vunpack.c.h.b16 %v1285
    %v5913 = vunpack.c.l.b16 %v1286
    %v5914 = vunpack.c.h.b16 %v1286
    %v5915 = vunpack.c.l.b16 %v1287
    %v5916 = vunpack.c.h.b16 %v1287
    %v5917 = vunpack.c.l.b16 %v1288
    %v5918 = vunpack.c.h.b16 %v1288
    %v5919 = vunpack.c.l.b16 %v1289
    %v5920 = vunpack.c.h.b16 %v1289
    %v5921 = vunpack.c.l.b16 %v1290
    %v5922 = vunpack.c.h.b16 %v1290
    %v5923 = vunpack.c.l.b16 %v1291
    %v5924 = vunpack.c.h.b16 %v1291
    %v5925 = vunpack.c.l.b16 %v1292
    %v5926 = vunpack.c.h.b16 %v1292
    %v5927 = vunpack.c.l.b16 %v1293
    %v5928 = vunpack.c.h.b16 %v1293
    %v5929 = vunpack.c.l.b16 %v1294
    %v5930 = vunpack.c.h.b16 %v1294
    %v5931 = vunpack.c.l.b16 %v1295
    %v5932 = vunpack.c.h.b16 %v1295
    %v5933 = vunpack.c.l.b16 %v1296
    %v5934 = vunpack.c.h.b16 %v1296
    %v5935 = vunpack.c.l.b16 %v1297
    %v5936 = vunpack.c.h.b16 %v1297
    %v5937 = vunpack.c.l.b16 %v1298
    %v5938 = vunpack.c.h.b16 %v1298
    %v5939 = vunpack.c.l.b16 %v1299
    %v5940 = vunpack.c.h.b16 %v1299
    %v5941 = vunpack.c.l.b16 %v1300
    %v5942 = vunpack.c.h.b16 %v1300
    %v5943 = vunpack.c.l.b16 %v1301
    %v5944 = vunpack.c.h.b16 %v1301
    %v5945 = vunpack.c.l.b16 %v1302
    %v5946 = vunpack.c.h.b16 %v1302
    %v5947 = vunpack.c.l.b16 %v1303
    %v5948 = vunpack.c.h.b16 %v1303
    %v5949 = vunpack.c.l.b16 %v1304
    %v5950 = vunpack.c.h.b16 %v1304
    %v5951 = vunpack.c.l.b16 %v1305
    %v5952 = vunpack.c.h.b16 %v1305
    %v5953 = vunpack.c.l.b16 %v1306
    %v5954 = vunpack.c.h.b16 %v1306
    %v5955 = vunpack.c.l.b16 %v1307
    %v5956 = vunpack.c.h.b16 %v1307
    %v5957 = vunpack.c.l.b16 %v1308
    %v5958 = vunpack.c.h.b16 %v1308
    %v5959 = vunpack.c.l.b16 %v1309
    %v5960 = vunpack.c.h.b16 %v1309
    %v5961 = vunpack.c.l.b16 %v1310
    %v5962 = vunpack.c.h.b16 %v1310
    %v5963 = vunpack.c.l.b16 %v1311
    %v5964 = vunpack.c.h.b16 %v1311
    %v5965 = vunpack.c.l.b16 %v1312
    %v5966 = vunpack.c.h.b16 %v1312
    %v5967 = vunpack.c.l.b16 %v1313
    %v5968 = vunpack.c.h.b16 %v1313
    %v5969 = vunpack.c.l.b16 %v1314
    %v5970 = vunpack.c.h.b16 %v1314
    %v5971 = vunpack.c.l.b16 %v1315
    %v5972 = vunpack.c.h.b16 %v1315
    %v5973 = vunpack.c.l.b16 %v1316
    %v5974 = vunpack.c.h.b16 %v1316
    %v5975 = vunpack.c.l.b16 %v1317
    %v5976 = vunpack.c.h.b16 %v1317
    %v5977 = vunpack.c.l.b16 %v1318
    %v5978 = vunpack.c.h.b16 %v1318
    %v5979 = vunpack.c.l.b16 %v1319
    %v5980 = vunpack.c.h.b16 %v1319
    %v5981 = vunpack.c.l.b16 %v1320
    %v5982 = vunpack.c.h.b16 %v1320
    %v5983 = vunpack.c.l.b16 %v1321
    %v5984 = vunpack.c.h.b16 %v1321
    %v5985 = vunpack.c.l.b16 %v1322
    %v5986 = vunpack.c.h.b16 %v1322
    %v5987 = vunpack.c.l.b16 %v1323
    %v5988 = vunpack.c.h.b16 %v1323
    %v5989 = vunpack.c.l.b16 %v1324
    %v5990 = vunpack.c.h.b16 %v1324
    %v5991 = vunpack.c.l.b16 %v1325
    %v5992 = vunpack.c.h.b16 %v1325
    %v5993 = vunpack.c.l.b16 %v1326
    %v5994 = vunpack.c.h.b16 %v1326
    %v5995 = vunpack.c.l.b16 %v1327
    %v5996 = vunpack.c.h.b16 %v1327
    %v5997 = vunpack.c.l.b16 %v1328
    %v5998 = vunpack.c.h.b16 %v1328
    %v5999 = vunpack.c.l.b16 %v1329
    %v6000 = vunpack.c.h.b16 %v1329
    %v6001 = vunpack.c.l.b16 %v1330
    %v6002 = vunpack.c.h.b16 %v1330
    %v6003 = vunpack.c.l.b16 %v1331
    %v6004 = vunpack.c.h.b16 %v1331
    %v6005 = vunpack.c.l.b16 %v1332
    %v6006 = vunpack.c.h.b16 %v1332
    %v6007 = vunpack.c.l.b16 %v1333
    %v6008 = vunpack.c.h.b16 %v1333
    %v6009 = vunpack.c.l.b16 %v1334
    %v6010 = vunpack.c.h.b16 %v1334
    %v6011 = vunpack.c.l.b16 %v1335
    %v6012 = vunpack.c.h.b16 %v1335
    %v6013 = vunpack.c.l.b16 %v1336
    %v6014 = vunpack.c.h.b16 %v1336
    %v6015 = vunpack.c.l.b16 %v1337
    %v6016 = vunpack.c.h.b16 %v1337
    %v6017 = vunpack.c.l.b16 %v1338
    %v6018 = vunpack.c.h.b16 %v1338
    %v6019 = vunpack.c.l.b16 %v1339
    %v6020 = vunpack.c.h.b16 %v1339
    %v6021 = vunpack.c.l.b16 %v1340
    %v6022 = vunpack.c.h.b16 %v1340
    %v6023 = vunpack.c.l.b16 %v1341
    %v6024 = vunpack.c.h.b16 %v1341
    %v6025 = vunpack.c.l.b16 %v1342
    %v6026 = vunpack.c.h.b16 %v1342
    %v6027 = vunpack.c.l.b16 %v1343
    %v6028 = vunpack.c.h.b16 %v1343
    %v6029 = vunpack.c.l.b16 %v1344
    %v6030 = vunpack.c.h.b16 %v1344
    %v6031 = vunpack.c.l.b16 %v1345
    %v6032 = vunpack.c.h.b16 %v1345
    %v6033 = vunpack.c.l.b16 %v1346
    %v6034 = vunpack.c.h.b16 %v1346
    %v6035 = vunpack.c.l.b16 %v1347
    %v6036 = vunpack.c.h.b16 %v1347
    %v6037 = vunpack.c.l.b16 %v1348
    %v6038 = vunpack.c.h.b16 %v1348
    %v6039 = vunpack.c.l.b16 %v1349
    %v6040 = vunpack.c.h.b16 %v1349
    %v6041 = vunpack.c.l.b16 %v1350
    %v6042 = vunpack.c.h.b16 %v1350
    %v6043 = vunpack.c.l.b16 %v1351
    %v6044 = vunpack.c.h.b16 %v1351
    %v6045 = vunpack.c.l.b16 %v1352
    %v6046 = vunpack.c.h.b16 %v1352
    %v6047 = vunpack.c.l.b16 %v1353
    %v6048 = vunpack.c.h.b16 %v1353
    %v6049 = vunpack.c.l.b16 %v1354
    %v6050 = vunpack.c.h.b16 %v1354
    %v6051 = vunpack.c.l.b16 %v1355
    %v6052 = vunpack.c.h.b16 %v1355
    %v6053 = vunpack.c.l.b16 %v1356
    %v6054 = vunpack.c.h.b16 %v1356
    %v6055 = vunpack.c.l.b16 %v1357
    %v6056 = vunpack.c.h.b16 %v1357
    %v6057 = vunpack.c.l.b16 %v1358
    %v6058 = vunpack.c.h.b16 %v1358
    %v6059 = vunpack.c.l.b16 %v1359
    %v6060 = vunpack.c.h.b16 %v1359
    %v6061 = vunpack.c.l.b16 %v1360
    %v6062 = vunpack.c.h.b16 %v1360
    %v6063 = vunpack.c.l.b16 %v1361
    %v6064 = vunpack.c.h.b16 %v1361
    %v6065 = vunpack.c.l.b16 %v1362
    %v6066 = vunpack.c.h.b16 %v1362
    %v6067 = vunpack.c.l.b16 %v1363
    %v6068 = vunpack.c.h.b16 %v1363
    %v6069 = vunpack.c.l.b16 %v1364
    %v6070 = vunpack.c.h.b16 %v1364
    %v6071 = vunpack.c.l.b16 %v1365
    %v6072 = vunpack.c.h.b16 %v1365
    %v6073 = vunpack.c.l.b16 %v1366
    %v6074 = vunpack.c.h.b16 %v1366
    %v6075 = vunpack.c.l.b16 %v1367
    %v6076 = vunpack.c.h.b16 %v1367
    %v6077 = vunpack.c.l.b16 %v1368
    %v6078 = vunpack.c.h.b16 %v1368
    %v6079 = vunpack.c.l.b16 %v1369
    %v6080 = vunpack.c.h.b16 %v1369
    %v6081 = vunpack.c.l.b16 %v1370
    %v6082 = vunpack.c.h.b16 %v1370
    %v6083 = vunpack.c.l.b16 %v1371
    %v6084 = vunpack.c.h.b16 %v1371
    %v6085 = vunpack.c.l.b16 %v1372
    %v6086 = vunpack.c.h.b16 %v1372
    %v6087 = vunpack.c.l.b16 %v1373
    %v6088 = vunpack.c.h.b16 %v1373
    %v6089 = vunpack.c.l.b16 %v1374
    %v6090 = vunpack.c.h.b16 %v1374
    %v6091 = vunpack.c.l.b16 %v1375
    %v6092 = vunpack.c.h.b16 %v1375
    %v6093 = vunpack.c.l.b16 %v1376
    %v6094 = vunpack.c.h.b16 %v1376
    %v6095 = vunpack.c.l.b16 %v1377
    %v6096 = vunpack.c.h.b16 %v1377
    %v6097 = vunpack.c.l.b16 %v1378
    %v6098 = vunpack.c.h.b16 %v1378
    %v6099 = vunpack.c.l.b16 %v1379
    %v6100 = vunpack.c.h.b16 %v1379
    %v6101 = vunpack.c.l.b16 %v1380
    %v6102 = vunpack.c.h.b16 %v1380
    %v6103 = vunpack.c.l.b16 %v1381
    %v6104 = vunpack.c.h.b16 %v1381
    %v6105 = vunpack.c.l.b16 %v1382
    %v6106 = vunpack.c.h.b16 %v1382
    %v6107 = vunpack.c.l.b16 %v1383
    %v6108 = vunpack.c.h.b16 %v1383
    %v6109 = vunpack.c.l.b16 %v1384
    %v6110 = vunpack.c.h.b16 %v1384
    %v6111 = vunpack.c.l.b16 %v1385
    %v6112 = vunpack.c.h.b16 %v1385
    %v6113 = vunpack.c.l.b16 %v1386
    %v6114 = vunpack.c.h.b16 %v1386
    %v6115 = vunpack.c.l.b16 %v1387
    %v6116 = vunpack.c.h.b16 %v1387
    %v6117 = vunpack.c.l.b16 %v1388
    %v6118 = vunpack.c.h.b16 %v1388
    %v6119 = vunpack.c.l.b16 %v1389
    %v6120 = vunpack.c.h.b16 %v1389
    %v6121 = vunpack.c.l.b16 %v1390
    %v6122 = vunpack.c.h.b16 %v1390
    %v6123 = vunpack.c.l.b16 %v1391
    %v6124 = vunpack.c.h.b16 %v1391
    %v6125 = vunpack.c.l.b16 %v1392
    %v6126 = vunpack.c.h.b16 %v1392
    %v6127 = vunpack.c.l.b16 %v1393
    %v6128 = vunpack.c.h.b16 %v1393
    %v6129 = vunpack.c.l.b16 %v1394
    %v6130 = vunpack.c.h.b16 %v1394
    %v6131 = vunpack.c.l.b16 %v1395
    %v6132 = vunpack.c.h.b16 %v1395
    %v6133 = vunpack.c.l.b16 %v1396
    %v6134 = vunpack.c.h.b16 %v1396
    %v6135 = vunpack.c.l.b16 %v1397
    %v6136 = vunpack.c.h.b16 %v1397
    %v6137 = vunpack.c.l.b16 %v1398
    %v6138 = vunpack.c.h.b16 %v1398
    %v6139 = vunpack.c.l.b16 %v1399
    %v6140 = vunpack.c.h.b16 %v1399
    %v6141 = vunpack.c.l.b16 %v1400
    %v6142 = vunpack.c.h.b16 %v1400
    %v6143 = vunpack.c.l.b16 %v1401
    %v6144 = vunpack.c.h.b16 %v1401
    %v6145 = vunpack.c.l.b16 %v1402
    %v6146 = vunpack.c.h.b16 %v1402
    %v6147 = vunpack.c.l.b16 %v1403
    %v6148 = vunpack.c.h.b16 %v1403
    %v6149 = vunpack.c.l.b16 %v1404
    %v6150 = vunpack.c.h.b16 %v1404
    %v6151 = vunpack.c.l.b16 %v1405
    %v6152 = vunpack.c.h.b16 %v1405
    %v6153 = vunpack.c.l.b16 %v1406
    %v6154 = vunpack.c.h.b16 %v1406
    %v6155 = vunpack.c.l.b16 %v1407
    %v6156 = vunpack.c.h.b16 %v1407
    %v6157 = vunpack.c.l.b16 %v1408
    %v6158 = vunpack.c.h.b16 %v1408
    %v6159 = vunpack.c.l.b16 %v1409
    %v6160 = vunpack.c.h.b16 %v1409
    %v6161 = vunpack.c.l.b16 %v1410
    %v6162 = vunpack.c.h.b16 %v1410
    %v6163 = vunpack.c.l.b16 %v1411
    %v6164 = vunpack.c.h.b16 %v1411
    %v6165 = vunpack.c.l.b16 %v1412
    %v6166 = vunpack.c.h.b16 %v1412
    %v6167 = vunpack.c.l.b16 %v1413
    %v6168 = vunpack.c.h.b16 %v1413
    %v6169 = vunpack.c.l.b16 %v1414
    %v6170 = vunpack.c.h.b16 %v1414
    %v6171 = vunpack.c.l.b16 %v1415
    %v6172 = vunpack.c.h.b16 %v1415
    %v6173 = vunpack.c.l.b16 %v1416
    %v6174 = vunpack.c.h.b16 %v1416
    %v6175 = vunpack.c.l.b16 %v1417
    %v6176 = vunpack.c.h.b16 %v1417
    %v6177 = vunpack.c.l.b16 %v1418
    %v6178 = vunpack.c.h.b16 %v1418
    %v6179 = vunpack.c.l.b16 %v1419
    %v6180 = vunpack.c.h.b16 %v1419
    %v6181 = vunpack.c.l.b16 %v1420
    %v6182 = vunpack.c.h.b16 %v1420
    %v6183 = vunpack.c.l.b16 %v1421
    %v6184 = vunpack.c.h.b16 %v1421
    %v6185 = vunpack.c.l.b16 %v1422
    %v6186 = vunpack.c.h.b16 %v1422
    %v6187 = vunpack.c.l.b16 %v1423
    %v6188 = vunpack.c.h.b16 %v1423
    %v6189 = vunpack.c.l.b16 %v1424
    %v6190 = vunpack.c.h.b16 %v1424
    %v6191 = vunpack.c.l.b16 %v1425
    %v6192 = vunpack.c.h.b16 %v1425
    %v6193 = vunpack.c.l.b16 %v1426
    %v6194 = vunpack.c.h.b16 %v1426
    %v6195 = vunpack.c.l.b16 %v1427
    %v6196 = vunpack.c.h.b16 %v1427
    %v6197 = vunpack.c.l.b16 %v1428
    %v6198 = vunpack.c.h.b16 %v1428
    %v6199 = vunpack.c.l.b16 %v1429
    %v6200 = vunpack.c.h.b16 %v1429
    %v6201 = vunpack.c.l.b16 %v1430
    %v6202 = vunpack.c.h.b16 %v1430
    %v6203 = vunpack.c.l.b16 %v1431
    %v6204 = vunpack.c.h.b16 %v1431
    %v6205 = vunpack.c.l.b16 %v1432
    %v6206 = vunpack.c.h.b16 %v1432
    %v6207 = vunpack.c.l.b16 %v1433
    %v6208 = vunpack.c.h.b16 %v1433
    %v6209 = vunpack.c.l.b16 %v1434
    %v6210 = vunpack.c.h.b16 %v1434
    %v6211 = vunpack.c.l.b16 %v1435
    %v6212 = vunpack.c.h.b16 %v1435
    %v6213 = vunpack.c.l.b16 %v1436
    %v6214 = vunpack.c.h.b16 %v1436
    %v6215 = vunpack.c.l.b16 %v1437
    %v6216 = vunpack.c.h.b16 %v1437
    %v6217 = vunpack.c.l.b16 %v1438
    %v6218 = vunpack.c.h.b16 %v1438
    %v6219 = vunpack.c.l.b16 %v1439
    %v6220 = vunpack.c.h.b16 %v1439
    %v6221 = vunpack.c.l.b16 %v1440
    %v6222 = vunpack.c.h.b16 %v1440
    %v6223 = vunpack.c.l.b16 %v1441
    %v6224 = vunpack.c.h.b16 %v1441
    %v6225 = vunpack.c.l.b16 %v1442
    %v6226 = vunpack.c.h.b16 %v1442
    %v6227 = vunpack.c.l.b16 %v1443
    %v6228 = vunpack.c.h.b16 %v1443
    %v6229 = vunpack.c.l.b16 %v1444
    %v6230 = vunpack.c.h.b16 %v1444
    %v6231 = vunpack.c.l.b16 %v1445
    %v6232 = vunpack.c.h.b16 %v1445
    %v6233 = vunpack.c.l.b16 %v1446
    %v6234 = vunpack.c.h.b16 %v1446
    %v6235 = vunpack.c.l.b16 %v1447
    %v6236 = vunpack.c.h.b16 %v1447
    %v6237 = vunpack.c.l.b16 %v1448
    %v6238 = vunpack.c.h.b16 %v1448
    %v6239 = vunpack.c.l.b16 %v1449
    %v6240 = vunpack.c.h.b16 %v1449
    %v6241 = vunpack.c.l.b16 %v1450
    %v6242 = vunpack.c.h.b16 %v1450
    %v6243 = vunpack.c.l.b16 %v1451
    %v6244 = vunpack.c.h.b16 %v1451
    %v6245 = vunpack.c.l.b16 %v1452
    %v6246 = vunpack.c.h.b16 %v1452
    %v6247 = vunpack.c.l.b16 %v1453
    %v6248 = vunpack.c.h.b16 %v1453
    %v6249 = vunpack.c.l.b16 %v1454
    %v6250 = vunpack.c.h.b16 %v1454
    %v6251 = vunpack.c.l.b16 %v1455
    %v6252 = vunpack.c.h.b16 %v1455
    %v6253 = vunpack.c.l.b16 %v1456
    %v6254 = vunpack.c.h.b16 %v1456
    %v6255 = vunpack.c.l.b16 %v1457
    %v6256 = vunpack.c.h.b16 %v1457
    %v6257 = vunpack.c.l.b16 %v1458
    %v6258 = vunpack.c.h.b16 %v1458
    %v6259 = vunpack.c.l.b16 %v1459
    %v6260 = vunpack.c.h.b16 %v1459
    %v6261 = vunpack.c.l.b16 %v1460
    %v6262 = vunpack.c.h.b16 %v1460
    %v6263 = vunpack.c.l.b16 %v1461
    %v6264 = vunpack.c.h.b16 %v1461
    %v6265 = vunpack.c.l.b16 %v1462
    %v6266 = vunpack.c.h.b16 %v1462
    %v6267 = vunpack.c.l.b16 %v1463
    %v6268 = vunpack.c.h.b16 %v1463
    %v6269 = vunpack.c.l.b16 %v1464
    %v6270 = vunpack.c.h.b16 %v1464
    %v6271 = vunpack.c.l.b16 %v1465
    %v6272 = vunpack.c.h.b16 %v1465
    %v6273 = vunpack.c.l.b16 %v1466
    %v6274 = vunpack.c.h.b16 %v1466
    %v6275 = vunpack.c.l.b16 %v1467
    %v6276 = vunpack.c.h.b16 %v1467
    %v6277 = vunpack.c.l.b16 %v1468
    %v6278 = vunpack.c.h.b16 %v1468
    %v6279 = vunpack.c.l.b16 %v1469
    %v6280 = vunpack.c.h.b16 %v1469
    %v6281 = vunpack.c.l.b16 %v1470
    %v6282 = vunpack.c.h.b16 %v1470
    %v6283 = vunpack.c.l.b16 %v1471
    %v6284 = vunpack.c.h.b16 %v1471
    %v6285 = vunpack.c.l.b16 %v1472
    %v6286 = vunpack.c.h.b16 %v1472
    %v6287 = vunpack.c.l.b16 %v1473
    %v6288 = vunpack.c.h.b16 %v1473
    %v6289 = vunpack.c.l.b16 %v1474
    %v6290 = vunpack.c.h.b16 %v1474
    %v6291 = vunpack.c.l.b16 %v1475
    %v6292 = vunpack.c.h.b16 %v1475
    %v6293 = vunpack.c.l.b16 %v1476
    %v6294 = vunpack.c.h.b16 %v1476
    %v6295 = vunpack.c.l.b16 %v1477
    %v6296 = vunpack.c.h.b16 %v1477
    %v6297 = vunpack.c.l.b16 %v1478
    %v6298 = vunpack.c.h.b16 %v1478
    %v6299 = vunpack.c.l.b16 %v1479
    %v6300 = vunpack.c.h.b16 %v1479
    %v6301 = vunpack.c.l.b16 %v1480
    %v6302 = vunpack.c.h.b16 %v1480
    %v6303 = vunpack.c.l.b16 %v1481
    %v6304 = vunpack.c.h.b16 %v1481
    %v6305 = vunpack.c.l.b16 %v1482
    %v6306 = vunpack.c.h.b16 %v1482
    %v6307 = vunpack.c.l.b16 %v1483
    %v6308 = vunpack.c.h.b16 %v1483
    %v6309 = vunpack.c.l.b16 %v1484
    %v6310 = vunpack.c.h.b16 %v1484
    %v6311 = vunpack.c.l.b16 %v1485
    %v6312 = vunpack.c.h.b16 %v1485
    %v6313 = vunpack.c.l.b16 %v1486
    %v6314 = vunpack.c.h.b16 %v1486
    %v6315 = vunpack.c.l.b16 %v1487
    %v6316 = vunpack.c.h.b16 %v1487
    %v6317 = vunpack.c.l.b16 %v1488
    %v6318 = vunpack.c.h.b16 %v1488
    %v6319 = vunpack.c.l.b16 %v1489
    %v6320 = vunpack.c.h.b16 %v1489
    %v6321 = vunpack.c.l.b16 %v1490
    %v6322 = vunpack.c.h.b16 %v1490
    %v6323 = vunpack.c.l.b16 %v1491
    %v6324 = vunpack.c.h.b16 %v1491
    %v6325 = vunpack.c.l.b16 %v1492
    %v6326 = vunpack.c.h.b16 %v1492
    %v6327 = vunpack.c.l.b16 %v1493
    %v6328 = vunpack.c.h.b16 %v1493
    %v6329 = vunpack.c.l.b16 %v1494
    %v6330 = vunpack.c.h.b16 %v1494
    %v6331 = vunpack.c.l.b16 %v1495
    %v6332 = vunpack.c.h.b16 %v1495
    %v6333 = vunpack.c.l.b16 %v1496
    %v6334 = vunpack.c.h.b16 %v1496
    %v6335 = vunpack.c.l.b16 %v1497
    %v6336 = vunpack.c.h.b16 %v1497
    %v6337 = vunpack.c.l.b16 %v1498
    %v6338 = vunpack.c.h.b16 %v1498
    %v6339 = vunpack.c.l.b16 %v1499
    %v6340 = vunpack.c.h.b16 %v1499
    %v6341 = vunpack.c.l.b16 %v1500
    %v6342 = vunpack.c.h.b16 %v1500
    %v6343 = vunpack.c.l.b16 %v1501
    %v6344 = vunpack.c.h.b16 %v1501
    %v6345 = vunpack.c.l.b16 %v1502
    %v6346 = vunpack.c.h.b16 %v1502
    %v6347 = vunpack.c.l.b16 %v1503
    %v6348 = vunpack.c.h.b16 %v1503
    %v6349 = vunpack.c.l.b16 %v1504
    %v6350 = vunpack.c.h.b16 %v1504
    %v6351 = vunpack.c.l.b16 %v1505
    %v6352 = vunpack.c.h.b16 %v1505
    %v6353 = vunpack.c.l.b16 %v1506
    %v6354 = vunpack.c.h.b16 %v1506
    %v6355 = vunpack.c.l.b16 %v1507
    %v6356 = vunpack.c.h.b16 %v1507
    %v6357 = vunpack.c.l.b16 %v1508
    %v6358 = vunpack.c.h.b16 %v1508
    %v6359 = vunpack.c.l.b16 %v1509
    %v6360 = vunpack.c.h.b16 %v1509
    %v6361 = vunpack.c.l.b16 %v1510
    %v6362 = vunpack.c.h.b16 %v1510
    %v6363 = vunpack.c.l.b16 %v1511
    %v6364 = vunpack.c.h.b16 %v1511
    %v6365 = vunpack.c.l.b16 %v1512
    %v6366 = vunpack.c.h.b16 %v1512
    %v6367 = vunpack.c.l.b16 %v1513
    %v6368 = vunpack.c.h.b16 %v1513
    %v6369 = vunpack.c.l.b16 %v1514
    %v6370 = vunpack.c.h.b16 %v1514
    %v6371 = vunpack.c.l.b16 %v1515
    %v6372 = vunpack.c.h.b16 %v1515
    %v6373 = vunpack.c.l.b16 %v1516
    %v6374 = vunpack.c.h.b16 %v1516
    %v6375 = vunpack.c.l.b16 %v1517
    %v6376 = vunpack.c.h.b16 %v1517
    %v6377 = vunpack.c.l.b16 %v1518
    %v6378 = vunpack.c.h.b16 %v1518
    %v6379 = vunpack.c.l.b16 %v1519
    %v6380 = vunpack.c.h.b16 %v1519
    %v6381 = vunpack.c.l.b16 %v1520
    %v6382 = vunpack.c.h.b16 %v1520
    %v6383 = vunpack.c.l.b16 %v1521
    %v6384 = vunpack.c.h.b16 %v1521
    %v6385 = vunpack.c.l.b16 %v1522
    %v6386 = vunpack.c.h.b16 %v1522
    %v6387 = vunpack.c.l.b16 %v1523
    %v6388 = vunpack.c.h.b16 %v1523
    %v6389 = vunpack.c.l.b16 %v1524
    %v6390 = vunpack.c.h.b16 %v1524
    %v6391 = vunpack.c.l.b16 %v1525
    %v6392 = vunpack.c.h.b16 %v1525
    %v6393 = vunpack.c.l.b16 %v1526
    %v6394 = vunpack.c.h.b16 %v1526
    %v6395 = vunpack.c.l.b16 %v1527
    %v6396 = vunpack.c.h.b16 %v1527
    %v6397 = vunpack.c.l.b16 %v1528
    %v6398 = vunpack.c.h.b16 %v1528
    %v6399 = vunpack.c.l.b16 %v1529
    %v6400 = vunpack.c.h.b16 %v1529
    %v6401 = vunpack.c.l.b16 %v1530
    %v6402 = vunpack.c.h.b16 %v1530
    %v6403 = vunpack.c.l.b16 %v1531
    %v6404 = vunpack.c.h.b16 %v1531
    %v6405 = vunpack.c.l.b16 %v1532
    %v6406 = vunpack.c.h.b16 %v1532
    %v6407 = vunpack.c.l.b16 %v1533
    %v6408 = vunpack.c.h.b16 %v1533
    %v6409 = vunpack.c.l.b16 %v1534
    %v6410 = vunpack.c.h.b16 %v1534
    %v6411 = vunpack.c.l.b16 %v1535
    %v6412 = vunpack.c.h.b16 %v1535
    %v6413 = vunpack.c.l.b16 %v1536
    %v6414 = vunpack.c.h.b16 %v1536
    %v6415 = vunpack.c.l.b16 %v1537
    %v6416 = vunpack.c.h.b16 %v1537
    %v6417 = vunpack.c.l.b16 %v1538
    %v6418 = vunpack.c.h.b16 %v1538
    %v6419 = vunpack.c.l.b16 %v1539
    %v6420 = vunpack.c.h.b16 %v1539
    %v6421 = vunpack.c.l.b16 %v1540
    %v6422 = vunpack.c.h.b16 %v1540
    %v6423 = vunpack.c.l.b16 %v1541
    %v6424 = vunpack.c.h.b16 %v1541
    %v6425 = vunpack.c.l.b16 %v1542
    %v6426 = vunpack.c.h.b16 %v1542
    %v6427 = vunpack.c.l.b16 %v1543
    %v6428 = vunpack.c.h.b16 %v1543
    %v6429 = vunpack.c.l.b16 %v1544
    %v6430 = vunpack.c.h.b16 %v1544
    %v6431 = vunpack.c.l.b16 %v1545
    %v6432 = vunpack.c.h.b16 %v1545
    %v6433 = vunpack.c.l.b16 %v1546
    %v6434 = vunpack.c.h.b16 %v1546
    %v6435 = vunpack.c.l.b16 %v1547
    %v6436 = vunpack.c.h.b16 %v1547
    %v6437 = vunpack.c.l.b16 %v1548
    %v6438 = vunpack.c.h.b16 %v1548
    %v6439 = vunpack.c.l.b16 %v1549
    %v6440 = vunpack.c.h.b16 %v1549
    %v6441 = vunpack.c.l.b16 %v1550
    %v6442 = vunpack.c.h.b16 %v1550
    %v6443 = vunpack.c.l.b16 %v1551
    %v6444 = vunpack.c.h.b16 %v1551
    %v6445 = vunpack.c.l.b16 %v1552
    %v6446 = vunpack.c.h.b16 %v1552
    %v6447 = vunpack.c.l.b16 %v1553
    %v6448 = vunpack.c.h.b16 %v1553
    %v6449 = vunpack.c.l.b16 %v1554
    %v6450 = vunpack.c.h.b16 %v1554
    %v6451 = vunpack.c.l.b16 %v1555
    %v6452 = vunpack.c.h.b16 %v1555
    %v6453 = vunpack.c.l.b16 %v1556
    %v6454 = vunpack.c.h.b16 %v1556
    %v6455 = vunpack.c.l.b16 %v1557
    %v6456 = vunpack.c.h.b16 %v1557
    %v6457 = vunpack.c.l.b16 %v1558
    %v6458 = vunpack.c.h.b16 %v1558
    %v6459 = vunpack.c.l.b16 %v1559
    %v6460 = vunpack.c.h.b16 %v1559
    %v6461 = vunpack.c.l.b16 %v1560
    %v6462 = vunpack.c.h.b16 %v1560
    %v6463 = vunpack.c.l.b16 %v1561
    %v6464 = vunpack.c.h.b16 %v1561
    %v6465 = vunpack.c.l.b16 %v1562
    %v6466 = vunpack.c.h.b16 %v1562
    %v6467 = vunpack.c.l.b16 %v1563
    %v6468 = vunpack.c.h.b16 %v1563
    %v6469 = vunpack.c.l.b16 %v1564
    %v6470 = vunpack.c.h.b16 %v1564
    %v6471 = vunpack.c.l.b16 %v1565
    %v6472 = vunpack.c.h.b16 %v1565
    %v6473 = vunpack.c.l.b16 %v1566
    %v6474 = vunpack.c.h.b16 %v1566
    %v6475 = vunpack.c.l.b16 %v1567
    %v6476 = vunpack.c.h.b16 %v1567
    %v6477 = vunpack.c.l.b16 %v1568
    %v6478 = vunpack.c.h.b16 %v1568
    %v6479 = vunpack.c.l.b16 %v1569
    %v6480 = vunpack.c.h.b16 %v1569
    %v6481 = vunpack.c.l.b16 %v1570
    %v6482 = vunpack.c.h.b16 %v1570
    %v6483 = vunpack.c.l.b16 %v1571
    %v6484 = vunpack.c.h.b16 %v1571
    %v6485 = vunpack.c.l.b16 %v1572
    %v6486 = vunpack.c.h.b16 %v1572
    %v6487 = vunpack.c.l.b16 %v1573
    %v6488 = vunpack.c.h.b16 %v1573
    %v6489 = vunpack.c.l.b16 %v1574
    %v6490 = vunpack.c.h.b16 %v1574
    %v6491 = vunpack.c.l.b16 %v1575
    %v6492 = vunpack.c.h.b16 %v1575
    %v6493 = vunpack.c.l.b16 %v1576
    %v6494 = vunpack.c.h.b16 %v1576
    %v6495 = vunpack.c.l.b16 %v1577
    %v6496 = vunpack.c.h.b16 %v1577
    %v6497 = vunpack.c.l.b16 %v1578
    %v6498 = vunpack.c.h.b16 %v1578
    %v6499 = vunpack.c.l.b16 %v1579
    %v6500 = vunpack.c.h.b16 %v1579
    %v6501 = vunpack.c.l.b16 %v1580
    %v6502 = vunpack.c.h.b16 %v1580
    %v6503 = vunpack.c.l.b16 %v1581
    %v6504 = vunpack.c.h.b16 %v1581
    %v6505 = vunpack.c.l.b16 %v1582
    %v6506 = vunpack.c.h.b16 %v1582
    %v6507 = vunpack.c.l.b16 %v1583
    %v6508 = vunpack.c.h.b16 %v1583
    %v6509 = vunpack.c.l.b16 %v1584
    %v6510 = vunpack.c.h.b16 %v1584
    %v6511 = vunpack.c.l.b16 %v1585
    %v6512 = vunpack.c.h.b16 %v1585
    %v6513 = vunpack.c.l.b16 %v1586
    %v6514 = vunpack.c.h.b16 %v1586
    %v6515 = vunpack.c.l.b16 %v1587
    %v6516 = vunpack.c.h.b16 %v1587
    %v6517 = vunpack.c.l.b16 %v1588
    %v6518 = vunpack.c.h.b16 %v1588
    %v6519 = vunpack.c.l.b16 %v1589
    %v6520 = vunpack.c.h.b16 %v1589
    %v6521 = vunpack.c.l.b16 %v1590
    %v6522 = vunpack.c.h.b16 %v1590
    %v6523 = vunpack.c.l.b16 %v1591
    %v6524 = vunpack.c.h.b16 %v1591
    %v6525 = vunpack.c.l.b16 %v1592
    %v6526 = vunpack.c.h.b16 %v1592
    %v6527 = vunpack.c.l.b16 %v1593
    %v6528 = vunpack.c.h.b16 %v1593
    %v6529 = vpack.c.b16 %v3401, %v3393
    %v6530 = vpack.c.b16 %v3402, %v3394
    %v6531 = vpack.c.b16 %v3403, %v3395
    %v6532 = vpack.c.b16 %v3404, %v3396
    %v6533 = vpack.c.b16 %v3405, %v3397
    %v6534 = vpack.c.b16 %v3406, %v3398
    %v6535 = vpack.c.b16 %v3407, %v3399
    %v6536 = vpack.c.b16 %v3408, %v3400
    %v6537 = vpack.c.b16 %v3417, %v3409
    %v6538 = vpack.c.b16 %v3418, %v3410
    %v6539 = vpack.c.b16 %v3419, %v3411
    %v6540 = vpack.c.b16 %v3420, %v3412
    %v6541 = vpack.c.b16 %v3421, %v3413
    %v6542 = vpack.c.b16 %v3422, %v3414
    %v6543 = vpack.c.b16 %v3423, %v3415
    %v6544 = vpack.c.b16 %v3424, %v3416
    %v6545 = vpack.c.b16 %v3433, %v3425
    %v6546 = vpack.c.b16 %v3434, %v3426
    %v6547 = vpack.c.b16 %v3435, %v3427
    %v6548 = vpack.c.b16 %v3436, %v3428
    %v6549 = vpack.c.b16 %v3437, %v3429
    %v6550 = vpack.c.b16 %v3438, %v3430
    %v6551 = vpack.c.b16 %v3439, %v3431
    %v6552 = vpack.c.b16 %v3440, %v3432
    %v6553 = vpack.c.b16 %v3449, %v3441
    %v6554 = vpack.c.b16 %v3450, %v3442
    %v6555 = vpack.c.b16 %v3451, %v3443
    %v6556 = vpack.c.b16 %v3452, %v3444
    %v6557 = vpack.c.b16 %v3453, %v3445
    %v6558 = vpack.c.b16 %v3454, %v3446
    %v6559 = vpack.c.b16 %v3455, %v3447
    %v6560 = vpack.c.b16 %v3456, %v3448
    %v6561 = vpack.c.b16 %v3465, %v3457
    %v6562 = vpack.c.b16 %v3466, %v3458
    %v6563 = vpack.c.b16 %v3467, %v3459
    %v6564 = vpack.c.b16 %v3468, %v3460
    %v6565 = vpack.c.b16 %v3469, %v3461
    %v6566 = vpack.c.b16 %v3470, %v3462
    %v6567 = vpack.c.b16 %v3471, %v3463
    %v6568 = vpack.c.b16 %v3472, %v3464
    %v6569 = vpack.c.b16 %v3481, %v3473
    %v6570 = vpack.c.b16 %v3482, %v3474
    %v6571 = vpack.c.b16 %v3483, %v3475
    %v6572 = vpack.c.b16 %v3484, %v3476
    %v6573 = vpack.c.b16 %v3485, %v3477
    %v6574 = vpack.c.b16 %v3486, %v3478
    %v6575 = vpack.c.b16 %v3487, %v3479
    %v6576 = vpack.c.b16 %v3488, %v3480
    %v6577 = vpack.c.b16 %v3497, %v3489
    %v6578 = vpack.c.b16 %v3498, %v3490
    %v6579 = vpack.c.b16 %v3499, %v3491
    %v6580 = vpack.c.b16 %v3500, %v3492
    %v6581 = vpack.c.b16 %v3501, %v3493
    %v6582 = vpack.c.b16 %v3502, %v3494
    %v6583 = vpack.c.b16 %v3503, %v3495
    %v6584 = vpack.c.b16 %v3504, %v3496
    %v6585 = vpack.c.b16 %v3513, %v3505
    %v6586 = vpack.c.b16 %v3514, %v3506
    %v6587 = vpack.c.b16 %v3515, %v3507
    %v6588 = vpack.c.b16 %v3516, %v3508
    %v6589 = vpack.c.b16 %v3517, %v3509
    %v6590 = vpack.c.b16 %v3518, %v3510
    %v6591 = vpack.c.b16 %v3519, %v3511
    %v6592 = vpack.c.b16 %v3520, %v3512
    %v6593 = vpack.c.b16 %v3529, %v3521
    %v6594 = vpack.c.b16 %v3530, %v3522
    %v6595 = vpack.c.b16 %v3531, %v3523
    %v6596 = vpack.c.b16 %v3532, %v3524
    %v6597 = vpack.c.b16 %v3533, %v3525
    %v6598 = vpack.c.b16 %v3534, %v3526
    %v6599 = vpack.c.b16 %v3535, %v3527
    %v6600 = vpack.c.b16 %v3536, %v3528
    %v6601 = vpack.c.b16 %v3545, %v3537
    %v6602 = vpack.c.b16 %v3546, %v3538
    %v6603 = vpack.c.b16 %v3547, %v3539
    %v6604 = vpack.c.b16 %v3548, %v3540
    %v6605 = vpack.c.b16 %v3549, %v3541
    %v6606 = vpack.c.b16 %v3550, %v3542
    %v6607 = vpack.c.b16 %v3551, %v3543
    %v6608 = vpack.c.b16 %v3552, %v3544
    %v6609 = vpack.c.b16 %v3561, %v3553
    %v6610 = vpack.c.b16 %v3562, %v3554
    %v6611 = vpack.c.b16 %v3563, %v3555
    %v6612 = vpack.c.b16 %v3564, %v3556
    %v6613 = vpack.c.b16 %v3565, %v3557
    %v6614 = vpack.c.b16 %v3566, %v3558
    %v6615 = vpack.c.b16 %v3567, %v3559
    %v6616 = vpack.c.b16 %v3568, %v3560
    %v6617 = vpack.c.b16 %v3577, %v3569
    %v6618 = vpack.c.b16 %v3578, %v3570
    %v6619 = vpack.c.b16 %v3579, %v3571
    %v6620 = vpack.c.b16 %v3580, %v3572
    %v6621 = vpack.c.b16 %v3581, %v3573
    %v6622 = vpack.c.b16 %v3582, %v3574
    %v6623 = vpack.c.b16 %v3583, %v3575
    %v6624 = vpack.c.b16 %v3584, %v3576
    %v6625 = vpack.c.b16 %v3593, %v3585
    %v6626 = vpack.c.b16 %v3594, %v3586
    %v6627 = vpack.c.b16 %v3595, %v3587
    %v6628 = vpack.c.b16 %v3596, %v3588
    %v6629 = vpack.c.b16 %v3597, %v3589
    %v6630 = vpack.c.b16 %v3598, %v3590
    %v6631 = vpack.c.b16 %v3599, %v3591
    %v6632 = vpack.c.b16 %v3600, %v3592
    %v6633 = vpack.c.b16 %v3609, %v3601
    %v6634 = vpack.c.b16 %v3610, %v3602
    %v6635 = vpack.c.b16 %v3611, %v3603
    %v6636 = vpack.c.b16 %v3612, %v3604
    %v6637 = vpack.c.b16 %v3613, %v3605
    %v6638 = vpack.c.b16 %v3614, %v3606
    %v6639 = vpack.c.b16 %v3615, %v3607
    %v6640 = vpack.c.b16 %v3616, %v3608
    %v6641 = vpack.c.b16 %v3625, %v3617
    %v6642 = vpack.c.b16 %v3626, %v3618
    %v6643 = vpack.c.b16 %v3627, %v3619
    %v6644 = vpack.c.b16 %v3628, %v3620
    %v6645 = vpack.c.b16 %v3629, %v3621
    %v6646 = vpack.c.b16 %v3630, %v3622
    %v6647 = vpack.c.b16 %v3631, %v3623
    %v6648 = vpack.c.b16 %v3632, %v3624
    %v6649 = vpack.c.b16 %v3641, %v3633
    %v6650 = vpack.c.b16 %v3642, %v3634
    %v6651 = vpack.c.b16 %v3643, %v3635
    %v6652 = vpack.c.b16 %v3644, %v3636
    %v6653 = vpack.c.b16 %v3645, %v3637
    %v6654 = vpack.c.b16 %v3646, %v3638
    %v6655 = vpack.c.b16 %v3647, %v3639
    %v6656 = vpack.c.b16 %v3648, %v3640
    %v6657 = vpack.c.b16 %v3657, %v3649
    %v6658 = vpack.c.b16 %v3658, %v3650
    %v6659 = vpack.c.b16 %v3659, %v3651
    %v6660 = vpack.c.b16 %v3660, %v3652
    %v6661 = vpack.c.b16 %v3661, %v3653
    %v6662 = vpack.c.b16 %v3662, %v3654
    %v6663 = vpack.c.b16 %v3663, %v3655
    %v6664 = vpack.c.b16 %v3664, %v3656
    %v6665 = vpack.c.b16 %v3673, %v3665
    %v6666 = vpack.c.b16 %v3674, %v3666
    %v6667 = vpack.c.b16 %v3675, %v3667
    %v6668 = vpack.c.b16 %v3676, %v3668
    %v6669 = vpack.c.b16 %v3677, %v3669
    %v6670 = vpack.c.b16 %v3678, %v3670
    %v6671 = vpack.c.b16 %v3679, %v3671
    %v6672 = vpack.c.b16 %v3680, %v3672
    %v6673 = vpack.c.b16 %v3689, %v3681
    %v6674 = vpack.c.b16 %v3690, %v3682
    %v6675 = vpack.c.b16 %v3691, %v3683
    %v6676 = vpack.c.b16 %v3692, %v3684
    %v6677 = vpack.c.b16 %v3693, %v3685
    %v6678 = vpack.c.b16 %v3694, %v3686
    %v6679 = vpack.c.b16 %v3695, %v3687
    %v6680 = vpack.c.b16 %v3696, %v3688
    %v6681 = vpack.c.b16 %v3705, %v3697
    %v6682 = vpack.c.b16 %v3706, %v3698
    %v6683 = vpack.c.b16 %v3707, %v3699
    %v6684 = vpack.c.b16 %v3708, %v3700
    %v6685 = vpack.c.b16 %v3709, %v3701
    %v6686 = vpack.c.b16 %v3710, %v3702
    %v6687 = vpack.c.b16 %v3711, %v3703
    %v6688 = vpack.c.b16 %v3712, %v3704
    %v6689 = vpack.c.b16 %v3721, %v3713
    %v6690 = vpack.c.b16 %v3722, %v3714
    %v6691 = vpack.c.b16 %v3723, %v3715
    %v6692 = vpack.c.b16 %v3724, %v3716
    %v6693 = vpack.c.b16 %v3725, %v3717
    %v6694 = vpack.c.b16 %v3726, %v3718
    %v6695 = vpack.c.b16 %v3727, %v3719
    %v6696 = vpack.c.b16 %v3728, %v3720
    %v6697 = vpack.c.b16 %v3737, %v3729
    %v6698 = vpack.c.b16 %v3738, %v3730
    %v6699 = vpack.c.b16 %v3739, %v3731
    %v6700 = vpack.c.b16 %v3740, %v3732
    %v6701 = vpack.c.b16 %v3741, %v3733
    %v6702 = vpack.c.b16 %v3742, %v3734
    %v6703 = vpack.c.b16 %v3743, %v3735
    %v6704 = vpack.c.b16 %v3744, %v3736
    %v6705 = vpack.c.b16 %v3753, %v3745
    %v6706 = vpack.c.b16 %v3754, %v3746
    %v6707 = vpack.c.b16 %v3755, %v3747
    %v6708 = vpack.c.b16 %v3756, %v3748
    %v6709 = vpack.c.b16 %v3757, %v3749
    %v6710 = vpack.c.b16 %v3758, %v3750
    %v6711 = vpack.c.b16 %v3759, %v3751
    %v6712 = vpack.c.b16 %v3760, %v3752
    %v6713 = vpack.c.b16 %v3769, %v3761
    %v6714 = vpack.c.b16 %v3770, %v3762
    %v6715 = vpack.c.b16 %v3771, %v3763
    %v6716 = vpack.c.b16 %v3772, %v3764
    %v6717 = vpack.c.b16 %v3773, %v3765
    %v6718 = vpack.c.b16 %v3774, %v3766
    %v6719 = vpack.c.b16 %v3775, %v3767
    %v6720 = vpack.c.b16 %v3776, %v3768
    %v6721 = vpack.c.b16 %v3785, %v3777
    %v6722 = vpack.c.b16 %v3786, %v3778
    %v6723 = vpack.c.b16 %v3787, %v3779
    %v6724 = vpack.c.b16 %v3788, %v3780
    %v6725 = vpack.c.b16 %v3789, %v3781
    %v6726 = vpack.c.b16 %v3790, %v3782
    %v6727 = vpack.c.b16 %v3791, %v3783
    %v6728 = vpack.c.b16 %v3792, %v3784
    %v6729 = vpack.c.b16 %v3801, %v3793
    %v6730 = vpack.c.b16 %v3802, %v3794
    %v6731 = vpack.c.b16 %v3803, %v3795
    %v6732 = vpack.c.b16 %v3804, %v3796
    %v6733 = vpack.c.b16 %v3805, %v3797
    %v6734 = vpack.c.b16 %v3806, %v3798
    %v6735 = vpack.c.b16 %v3807, %v3799
    %v6736 = vpack.c.b16 %v3808, %v3800
    %v6737 = vpack.c.b16 %v3817, %v3809
    %v6738 = vpack.c.b16 %v3818, %v3810
    %v6739 = vpack.c.b16 %v3819, %v3811
    %v6740 = vpack.c.b16 %v3820, %v3812
    %v6741 = vpack.c.b16 %v3821, %v3813
    %v6742 = vpack.c.b16 %v3822, %v3814
    %v6743 = vpack.c.b16 %v3823, %v3815
    %v6744 = vpack.c.b16 %v3824, %v3816
    %v6745 = vpack.c.b16 %v3833, %v3825
    %v6746 = vpack.c.b16 %v3834, %v3826
    %v6747 = vpack.c.b16 %v3835, %v3827
    %v6748 = vpack.c.b16 %v3836, %v3828
    %v6749 = vpack.c.b16 %v3837, %v3829
    %v6750 = vpack.c.b16 %v3838, %v3830
    %v6751 = vpack.c.b16 %v3839, %v3831
    %v6752 = vpack.c.b16 %v3840, %v3832
    %v6753 = vpack.c.b16 %v3849, %v3841
    %v6754 = vpack.c.b16 %v3850, %v3842
    %v6755 = vpack.c.b16 %v3851, %v3843
    %v6756 = vpack.c.b16 %v3852, %v3844
    %v6757 = vpack.c.b16 %v3853, %v3845
    %v6758 = vpack.c.b16 %v3854, %v3846
    %v6759 = vpack.c.b16 %v3855, %v3847
    %v6760 = vpack.c.b16 %v3856, %v3848
    %v6761 = vpack.c.b16 %v3865, %v3857
    %v6762 = vpack.c.b16 %v3866, %v3858
    %v6763 = vpack.c.b16 %v3867, %v3859
    %v6764 = vpack.c.b16 %v3868, %v3860
    %v6765 = vpack.c.b16 %v3869, %v3861
    %v6766 = vpack.c.b16 %v3870, %v3862
    %v6767 = vpack.c.b16 %v3871, %v3863
    %v6768 = vpack.c.b16 %v3872, %v3864
    %v6769 = vpack.c.b16 %v3881, %v3873
    %v6770 = vpack.c.b16 %v3882, %v3874
    %v6771 = vpack.c.b16 %v3883, %v3875
    %v6772 = vpack.c.b16 %v3884, %v3876
    %v6773 = vpack.c.b16 %v3885, %v3877
    %v6774 = vpack.c.b16 %v3886, %v3878
    %v6775 = vpack.c.b16 %v3887, %v3879
    %v6776 = vpack.c.b16 %v3888, %v3880
    %v6777 = vpack.c.b16 %v3897, %v3889
    %v6778 = vpack.c.b16 %v3898, %v3890
    %v6779 = vpack.c.b16 %v3899, %v3891
    %v6780 = vpack.c.b16 %v3900, %v3892
    %v6781 = vpack.c.b16 %v3901, %v3893
    %v6782 = vpack.c.b16 %v3902, %v3894
    %v6783 = vpack.c.b16 %v3903, %v3895
    %v6784 = vpack.c.b16 %v3904, %v3896
    %v6785 = vpack.c.b16 %v3913, %v3905
    %v6786 = vpack.c.b16 %v3914, %v3906
    %v6787 = vpack.c.b16 %v3915, %v3907
    %v6788 = vpack.c.b16 %v3916, %v3908
    %v6789 = vpack.c.b16 %v3917, %v3909
    %v6790 = vpack.c.b16 %v3918, %v3910
    %v6791 = vpack.c.b16 %v3919, %v3911
    %v6792 = vpack.c.b16 %v3920, %v3912
    %v6793 = vpack.c.b16 %v3929, %v3921
    %v6794 = vpack.c.b16 %v3930, %v3922
    %v6795 = vpack.c.b16 %v3931, %v3923
    %v6796 = vpack.c.b16 %v3932, %v3924
    %v6797 = vpack.c.b16 %v3933, %v3925
    %v6798 = vpack.c.b16 %v3934, %v3926
    %v6799 = vpack.c.b16 %v3935, %v3927
    %v6800 = vpack.c.b16 %v3936, %v3928
    %v6801 = vpack.c.b16 %v3945, %v3937
    %v6802 = vpack.c.b16 %v3946, %v3938
    %v6803 = vpack.c.b16 %v3947, %v3939
    %v6804 = vpack.c.b16 %v3948, %v3940
    %v6805 = vpack.c.b16 %v3949, %v3941
    %v6806 = vpack.c.b16 %v3950, %v3942
    %v6807 = vpack.c.b16 %v3951, %v3943
    %v6808 = vpack.c.b16 %v3952, %v3944
    %v6809 = vpack.c.b16 %v3961, %v3953
    %v6810 = vpack.c.b16 %v3962, %v3954
    %v6811 = vpack.c.b16 %v3963, %v3955
    %v6812 = vpack.c.b16 %v3964, %v3956
    %v6813 = vpack.c.b16 %v3965, %v3957
    %v6814 = vpack.c.b16 %v3966, %v3958
    %v6815 = vpack.c.b16 %v3967, %v3959
    %v6816 = vpack.c.b16 %v3968, %v3960
    %v6817 = vpack.c.b16 %v3977, %v3969
    %v6818 = vpack.c.b16 %v3978, %v3970
    %v6819 = vpack.c.b16 %v3979, %v3971
    %v6820 = vpack.c.b16 %v3980, %v3972
    %v6821 = vpack.c.b16 %v3981, %v3973
    %v6822 = vpack.c.b16 %v3982, %v3974
    %v6823 = vpack.c.b16 %v3983, %v3975
    %v6824 = vpack.c.b16 %v3984, %v3976
    %v6825 = vpack.c.b16 %v3993, %v3985
    %v6826 = vpack.c.b16 %v3994, %v3986
    %v6827 = vpack.c.b16 %v3995, %v3987
    %v6828 = vpack.c.b16 %v3996, %v3988
    %v6829 = vpack.c.b16 %v3997, %v3989
    %v6830 = vpack.c.b16 %v3998, %v3990
    %v6831 = vpack.c.b16 %v3999, %v3991
    %v6832 = vpack.c.b16 %v4000, %v3992
    %v6833 = vpack.c.b16 %v4009, %v4001
    %v6834 = vpack.c.b16 %v4010, %v4002
    %v6835 = vpack.c.b16 %v4011, %v4003
    %v6836 = vpack.c.b16 %v4012, %v4004
    %v6837 = vpack.c.b16 %v4013, %v4005
    %v6838 = vpack.c.b16 %v4014, %v4006
    %v6839 = vpack.c.b16 %v4015, %v4007
    %v6840 = vpack.c.b16 %v4016, %v4008
    %v6841 = vpack.c.b16 %v4025, %v4017
    %v6842 = vpack.c.b16 %v4026, %v4018
    %v6843 = vpack.c.b16 %v4027, %v4019
    %v6844 = vpack.c.b16 %v4028, %v4020
    %v6845 = vpack.c.b16 %v4029, %v4021
    %v6846 = vpack.c.b16 %v4030, %v4022
    %v6847 = vpack.c.b16 %v4031, %v4023
    %v6848 = vpack.c.b16 %v4032, %v4024
    %v6849 = vpack.c.b16 %v4041, %v4033
    %v6850 = vpack.c.b16 %v4042, %v4034
    %v6851 = vpack.c.b16 %v4043, %v4035
    %v6852 = vpack.c.b16 %v4044, %v4036
    %v6853 = vpack.c.b16 %v4045, %v4037
    %v6854 = vpack.c.b16 %v4046, %v4038
    %v6855 = vpack.c.b16 %v4047, %v4039
    %v6856 = vpack.c.b16 %v4048, %v4040
    %v6857 = vpack.c.b16 %v4057, %v4049
    %v6858 = vpack.c.b16 %v4058, %v4050
    %v6859 = vpack.c.b16 %v4059, %v4051
    %v6860 = vpack.c.b16 %v4060, %v4052
    %v6861 = vpack.c.b16 %v4061, %v4053
    %v6862 = vpack.c.b16 %v4062, %v4054
    %v6863 = vpack.c.b16 %v4063, %v4055
    %v6864 = vpack.c.b16 %v4064, %v4056
    %v6865 = vpack.c.b16 %v4073, %v4065
    %v6866 = vpack.c.b16 %v4074, %v4066
    %v6867 = vpack.c.b16 %v4075, %v4067
    %v6868 = vpack.c.b16 %v4076, %v4068
    %v6869 = vpack.c.b16 %v4077, %v4069
    %v6870 = vpack.c.b16 %v4078, %v4070
    %v6871 = vpack.c.b16 %v4079, %v4071
    %v6872 = vpack.c.b16 %v4080, %v4072
    %v6873 = vpack.c.b16 %v4089, %v4081
    %v6874 = vpack.c.b16 %v4090, %v4082
    %v6875 = vpack.c.b16 %v4091, %v4083
    %v6876 = vpack.c.b16 %v4092, %v4084
    %v6877 = vpack.c.b16 %v4093, %v4085
    %v6878 = vpack.c.b16 %v4094, %v4086
    %v6879 = vpack.c.b16 %v4095, %v4087
    %v6880 = vpack.c.b16 %v4096, %v4088
    %v6881 = vpack.c.b16 %v4105, %v4097
    %v6882 = vpack.c.b16 %v4106, %v4098
    %v6883 = vpack.c.b16 %v4107, %v4099
    %v6884 = vpack.c.b16 %v4108, %v4100
    %v6885 = vpack.c.b16 %v4109, %v4101
    %v6886 = vpack.c.b16 %v4110, %v4102
    %v6887 = vpack.c.b16 %v4111, %v4103
    %v6888 = vpack.c.b16 %v4112, %v4104
    %v6889 = vpack.c.b16 %v4121, %v4113
    %v6890 = vpack.c.b16 %v4122, %v4114
    %v6891 = vpack.c.b16 %v4123, %v4115
    %v6892 = vpack.c.b16 %v4124, %v4116
    %v6893 = vpack.c.b16 %v4125, %v4117
    %v6894 = vpack.c.b16 %v4126, %v4118
    %v6895 = vpack.c.b16 %v4127, %v4119
    %v6896 = vpack.c.b16 %v4128, %v4120
    %v6897 = vpack.c.b16 %v4137, %v4129
    %v6898 = vpack.c.b16 %v4138, %v4130
    %v6899 = vpack.c.b16 %v4139, %v4131
    %v6900 = vpack.c.b16 %v4140, %v4132
    %v6901 = vpack.c.b16 %v4141, %v4133
    %v6902 = vpack.c.b16 %v4142, %v4134
    %v6903 = vpack.c.b16 %v4143, %v4135
    %v6904 = vpack.c.b16 %v4144, %v4136
    %v6905 = vpack.c.b16 %v4153, %v4145
    %v6906 = vpack.c.b16 %v4154, %v4146
    %v6907 = vpack.c.b16 %v4155, %v4147
    %v6908 = vpack.c.b16 %v4156, %v4148
    %v6909 = vpack.c.b16 %v4157, %v4149
    %v6910 = vpack.c.b16 %v4158, %v4150
    %v6911 = vpack.c.b16 %v4159, %v4151
    %v6912 = vpack.c.b16 %v4160, %v4152
    %v6913 = vpack.c.b16 %v4169, %v4161
    %v6914 = vpack.c.b16 %v4170, %v4162
    %v6915 = vpack.c.b16 %v4171, %v4163
    %v6916 = vpack.c.b16 %v4172, %v4164
    %v6917 = vpack.c.b16 %v4173, %v4165
    %v6918 = vpack.c.b16 %v4174, %v4166
    %v6919 = vpack.c.b16 %v4175, %v4167
    %v6920 = vpack.c.b16 %v4176, %v4168
    %v6921 = vpack.c.b16 %v4185, %v4177
    %v6922 = vpack.c.b16 %v4186, %v4178
    %v6923 = vpack.c.b16 %v4187, %v4179
    %v6924 = vpack.c.b16 %v4188, %v4180
    %v6925 = vpack.c.b16 %v4189, %v4181
    %v6926 = vpack.c.b16 %v4190, %v4182
    %v6927 = vpack.c.b16 %v4191, %v4183
    %v6928 = vpack.c.b16 %v4192, %v4184
    %v6929 = vpack.c.b16 %v4201, %v4193
    %v6930 = vpack.c.b16 %v4202, %v4194
    %v6931 = vpack.c.b16 %v4203, %v4195
    %v6932 = vpack.c.b16 %v4204, %v4196
    %v6933 = vpack.c.b16 %v4205, %v4197
    %v6934 = vpack.c.b16 %v4206, %v4198
    %v6935 = vpack.c.b16 %v4207, %v4199
    %v6936 = vpack.c.b16 %v4208, %v4200
    %v6937 = vpack.c.b16 %v4217, %v4209
    %v6938 = vpack.c.b16 %v4218, %v4210
    %v6939 = vpack.c.b16 %v4219, %v4211
    %v6940 = vpack.c.b16 %v4220, %v4212
    %v6941 = vpack.c.b16 %v4221, %v4213
    %v6942 = vpack.c.b16 %v4222, %v4214
    %v6943 = vpack.c.b16 %v4223, %v4215
    %v6944 = vpack.c.b16 %v4224, %v4216
    %v6945 = vpack.c.b16 %v4233, %v4225
    %v6946 = vpack.c.b16 %v4234, %v4226
    %v6947 = vpack.c.b16 %v4235, %v4227
    %v6948 = vpack.c.b16 %v4236, %v4228
    %v6949 = vpack.c.b16 %v4237, %v4229
    %v6950 = vpack.c.b16 %v4238, %v4230
    %v6951 = vpack.c.b16 %v4239, %v4231
    %v6952 = vpack.c.b16 %v4240, %v4232
    %v6953 = vpack.c.b16 %v4249, %v4241
    %v6954 = vpack.c.b16 %v4250, %v4242
    %v6955 = vpack.c.b16 %v4251, %v4243
    %v6956 = vpack.c.b16 %v4252, %v4244
    %v6957 = vpack.c.b16 %v4253, %v4245
    %v6958 = vpack.c.b16 %v4254, %v4246
    %v6959 = vpack.c.b16 %v4255, %v4247
    %v6960 = vpack.c.b16 %v4256, %v4248
    %v6961 = vpack.c.b16 %v4265, %v4257
    %v6962 = vpack.c.b16 %v4266, %v4258
    %v6963 = vpack.c.b16 %v4267, %v4259
    %v6964 = vpack.c.b16 %v4268, %v4260
    %v6965 = vpack.c.b16 %v4269, %v4261
    %v6966 = vpack.c.b16 %v4270, %v4262
    %v6967 = vpack.c.b16 %v4271, %v4263
    %v6968 = vpack.c.b16 %v4272, %v4264
    %v6969 = vpack.c.b16 %v4281, %v4273
    %v6970 = vpack.c.b16 %v4282, %v4274
    %v6971 = vpack.c.b16 %v4283, %v4275
    %v6972 = vpack.c.b16 %v4284, %v4276
    %v6973 = vpack.c.b16 %v4285, %v4277
    %v6974 = vpack.c.b16 %v4286, %v4278
    %v6975 = vpack.c.b16 %v4287, %v4279
    %v6976 = vpack.c.b16 %v4288, %v4280
    %v6977 = vpack.c.b16 %v4297, %v4289
    %v6978 = vpack.c.b16 %v4298, %v4290
    %v6979 = vpack.c.b16 %v4299, %v4291
    %v6980 = vpack.c.b16 %v4300, %v4292
    %v6981 = vpack.c.b16 %v4301, %v4293
    %v6982 = vpack.c.b16 %v4302, %v4294
    %v6983 = vpack.c.b16 %v4303, %v4295
    %v6984 = vpack.c.b16 %v4304, %v4296
    %v6985 = vpack.c.b16 %v4313, %v4305
    %v6986 = vpack.c.b16 %v4314, %v4306
    %v6987 = vpack.c.b16 %v4315, %v4307
    %v6988 = vpack.c.b16 %v4316, %v4308
    %v6989 = vpack.c.b16 %v4317, %v4309
    %v6990 = vpack.c.b16 %v4318, %v4310
    %v6991 = vpack.c.b16 %v4319, %v4311
    %v6992 = vpack.c.b16 %v4320, %v4312
    %v6993 = vpack.c.b16 %v4329, %v4321
    %v6994 = vpack.c.b16 %v4330, %v4322
    %v6995 = vpack.c.b16 %v4331, %v4323
    %v6996 = vpack.c.b16 %v4332, %v4324
    %v6997 = vpack.c.b16 %v4333, %v4325
    %v6998 = vpack.c.b16 %v4334, %v4326
    %v6999 = vpack.c.b16 %v4335, %v4327
    %v7000 = vpack.c.b16 %v4336, %v4328
    %v7001 = vpack.c.b16 %v4345, %v4337
    %v7002 = vpack.c.b16 %v4346, %v4338
    %v7003 = vpack.c.b16 %v4347, %v4339
    %v7004 = vpack.c.b16 %v4348, %v4340
    %v7005 = vpack.c.b16 %v4349, %v4341
    %v7006 = vpack.c.b16 %v4350, %v4342
    %v7007 = vpack.c.b16 %v4351, %v4343
    %v7008 = vpack.c.b16 %v4352, %v4344
    %v7009 = vpack.c.b16 %v4361, %v4353
    %v7010 = vpack.c.b16 %v4362, %v4354
    %v7011 = vpack.c.b16 %v4363, %v4355
    %v7012 = vpack.c.b16 %v4364, %v4356
    %v7013 = vpack.c.b16 %v4365, %v4357
    %v7014 = vpack.c.b16 %v4366, %v4358
    %v7015 = vpack.c.b16 %v4367, %v4359
    %v7016 = vpack.c.b16 %v4368, %v4360
    %v7017 = vpack.c.b16 %v4377, %v4369
    %v7018 = vpack.c.b16 %v4378, %v4370
    %v7019 = vpack.c.b16 %v4379, %v4371
    %v7020 = vpack.c.b16 %v4380, %v4372
    %v7021 = vpack.c.b16 %v4381, %v4373
    %v7022 = vpack.c.b16 %v4382, %v4374
    %v7023 = vpack.c.b16 %v4383, %v4375
    %v7024 = vpack.c.b16 %v4384, %v4376
    %v7025 = vpack.c.b16 %v4393, %v4385
    %v7026 = vpack.c.b16 %v4394, %v4386
    %v7027 = vpack.c.b16 %v4395, %v4387
    %v7028 = vpack.c.b16 %v4396, %v4388
    %v7029 = vpack.c.b16 %v4397, %v4389
    %v7030 = vpack.c.b16 %v4398, %v4390
    %v7031 = vpack.c.b16 %v4399, %v4391
    %v7032 = vpack.c.b16 %v4400, %v4392
    %v7033 = vpack.c.b16 %v4409, %v4401
    %v7034 = vpack.c.b16 %v4410, %v4402
    %v7035 = vpack.c.b16 %v4411, %v4403
    %v7036 = vpack.c.b16 %v4412, %v4404
    %v7037 = vpack.c.b16 %v4413, %v4405
    %v7038 = vpack.c.b16 %v4414, %v4406
    %v7039 = vpack.c.b16 %v4415, %v4407
    %v7040 = vpack.c.b16 %v4416, %v4408
    %v7041 = vpack.c.b16 %v4425, %v4417
    %v7042 = vpack.c.b16 %v4426, %v4418
    %v7043 = vpack.c.b16 %v4427, %v4419
    %v7044 = vpack.c.b16 %v4428, %v4420
    %v7045 = vpack.c.b16 %v4429, %v4421
    %v7046 = vpack.c.b16 %v4430, %v4422
    %v7047 = vpack.c.b16 %v4431, %v4423
    %v7048 = vpack.c.b16 %v4432, %v4424
    %v7049 = vpack.c.b16 %v4441, %v4433
    %v7050 = vpack.c.b16 %v4442, %v4434
    %v7051 = vpack.c.b16 %v4443, %v4435
    %v7052 = vpack.c.b16 %v4444, %v4436
    %v7053 = vpack.c.b16 %v4445, %v4437
    %v7054 = vpack.c.b16 %v4446, %v4438
    %v7055 = vpack.c.b16 %v4447, %v4439
    %v7056 = vpack.c.b16 %v4448, %v4440
    %v7057 = vpack.c.b16 %v4457, %v4449
    %v7058 = vpack.c.b16 %v4458, %v4450
    %v7059 = vpack.c.b16 %v4459, %v4451
    %v7060 = vpack.c.b16 %v4460, %v4452
    %v7061 = vpack.c.b16 %v4461, %v4453
    %v7062 = vpack.c.b16 %v4462, %v4454
    %v7063 = vpack.c.b16 %v4463, %v4455
    %v7064 = vpack.c.b16 %v4464, %v4456
    %v7065 = vpack.c.b16 %v4473, %v4465
    %v7066 = vpack.c.b16 %v4474, %v4466
    %v7067 = vpack.c.b16 %v4475, %v4467
    %v7068 = vpack.c.b16 %v4476, %v4468
    %v7069 = vpack.c.b16 %v4477, %v4469
    %v7070 = vpack.c.b16 %v4478, %v4470
    %v7071 = vpack.c.b16 %v4479, %v4471
    %v7072 = vpack.c.b16 %v4480, %v4472
    %v7073 = vpack.c.b16 %v4489, %v4481
    %v7074 = vpack.c.b16 %v4490, %v4482
    %v7075 = vpack.c.b16 %v4491, %v4483
    %v7076 = vpack.c.b16 %v4492, %v4484
    %v7077 = vpack.c.b16 %v4493, %v4485
    %v7078 = vpack.c.b16 %v4494, %v4486
    %v7079 = vpack.c.b16 %v4495, %v4487
    %v7080 = vpack.c.b16 %v4496, %v4488
    %v7081 = vpack.c.b16 %v4505, %v4497
    %v7082 = vpack.c.b16 %v4506, %v4498
    %v7083 = vpack.c.b16 %v4507, %v4499
    %v7084 = vpack.c.b16 %v4508, %v4500
    %v7085 = vpack.c.b16 %v4509, %v4501
    %v7086 = vpack.c.b16 %v4510, %v4502
    %v7087 = vpack.c.b16 %v4511, %v4503
    %v7088 = vpack.c.b16 %v4512, %v4504
    %v7089 = vpack.c.b16 %v4521, %v4513
    %v7090 = vpack.c.b16 %v4522, %v4514
    %v7091 = vpack.c.b16 %v4523, %v4515
    %v7092 = vpack.c.b16 %v4524, %v4516
    %v7093 = vpack.c.b16 %v4525, %v4517
    %v7094 = vpack.c.b16 %v4526, %v4518
    %v7095 = vpack.c.b16 %v4527, %v4519
    %v7096 = vpack.c.b16 %v4528, %v4520
    %v7097 = vpack.c.b16 %v4537, %v4529
    %v7098 = vpack.c.b16 %v4538, %v4530
    %v7099 = vpack.c.b16 %v4539, %v4531
    %v7100 = vpack.c.b16 %v4540, %v4532
    %v7101 = vpack.c.b16 %v4541, %v4533
    %v7102 = vpack.c.b16 %v4542, %v4534
    %v7103 = vpack.c.b16 %v4543, %v4535
    %v7104 = vpack.c.b16 %v4544, %v4536
    %v7105 = vpack.c.b16 %v4553, %v4545
    %v7106 = vpack.c.b16 %v4554, %v4546
    %v7107 = vpack.c.b16 %v4555, %v4547
    %v7108 = vpack.c.b16 %v4556, %v4548
    %v7109 = vpack.c.b16 %v4557, %v4549
    %v7110 = vpack.c.b16 %v4558, %v4550
    %v7111 = vpack.c.b16 %v4559, %v4551
    %v7112 = vpack.c.b16 %v4560, %v4552
    %v7113 = vpack.c.b16 %v4569, %v4561
    %v7114 = vpack.c.b16 %v4570, %v4562
    %v7115 = vpack.c.b16 %v4571, %v4563
    %v7116 = vpack.c.b16 %v4572, %v4564
    %v7117 = vpack.c.b16 %v4573, %v4565
    %v7118 = vpack.c.b16 %v4574, %v4566
    %v7119 = vpack.c.b16 %v4575, %v4567
    %v7120 = vpack.c.b16 %v4576, %v4568
    %v7121 = vpack.c.b16 %v4585, %v4577
    %v7122 = vpack.c.b16 %v4586, %v4578
    %v7123 = vpack.c.b16 %v4587, %v4579
    %v7124 = vpack.c.b16 %v4588, %v4580
    %v7125 = vpack.c.b16 %v4589, %v4581
    %v7126 = vpack.c.b16 %v4590, %v4582
    %v7127 = vpack.c.b16 %v4591, %v4583
    %v7128 = vpack.c.b16 %v4592, %v4584
    %v7129 = vpack.c.b16 %v4601, %v4593
    %v7130 = vpack.c.b16 %v4602, %v4594
    %v7131 = vpack.c.b16 %v4603, %v4595
    %v7132 = vpack.c.b16 %v4604, %v4596
    %v7133 = vpack.c.b16 %v4605, %v4597
    %v7134 = vpack.c.b16 %v4606, %v4598
    %v7135 = vpack.c.b16 %v4607, %v4599
    %v7136 = vpack.c.b16 %v4608, %v4600
    %v7137 = vpack.c.b16 %v4617, %v4609
    %v7138 = vpack.c.b16 %v4618, %v4610
    %v7139 = vpack.c.b16 %v4619, %v4611
    %v7140 = vpack.c.b16 %v4620, %v4612
    %v7141 = vpack.c.b16 %v4621, %v4613
    %v7142 = vpack.c.b16 %v4622, %v4614
    %v7143 = vpack.c.b16 %v4623, %v4615
    %v7144 = vpack.c.b16 %v4624, %v4616
    %v7145 = vpack.c.b16 %v4633, %v4625
    %v7146 = vpack.c.b16 %v4634, %v4626
    %v7147 = vpack.c.b16 %v4635, %v4627
    %v7148 = vpack.c.b16 %v4636, %v4628
    %v7149 = vpack.c.b16 %v4637, %v4629
    %v7150 = vpack.c.b16 %v4638, %v4630
    %v7151 = vpack.c.b16 %v4639, %v4631
    %v7152 = vpack.c.b16 %v4640, %v4632
    %v7153 = vpack.c.b16 %v4649, %v4641
    %v7154 = vpack.c.b16 %v4650, %v4642
    %v7155 = vpack.c.b16 %v4651, %v4643
    %v7156 = vpack.c.b16 %v4652, %v4644
    %v7157 = vpack.c.b16 %v4653, %v4645
    %v7158 = vpack.c.b16 %v4654, %v4646
    %v7159 = vpack.c.b16 %v4655, %v4647
    %v7160 = vpack.c.b16 %v4656, %v4648
    %v7161 = vpack.c.b16 %v4665, %v4657
    %v7162 = vpack.c.b16 %v4666, %v4658
    %v7163 = vpack.c.b16 %v4667, %v4659
    %v7164 = vpack.c.b16 %v4668, %v4660
    %v7165 = vpack.c.b16 %v4669, %v4661
    %v7166 = vpack.c.b16 %v4670, %v4662
    %v7167 = vpack.c.b16 %v4671, %v4663
    %v7168 = vpack.c.b16 %v4672, %v4664
    %v7169 = vpack.c.b16 %v4681, %v4673
    %v7170 = vpack.c.b16 %v4682, %v4674
    %v7171 = vpack.c.b16 %v4683, %v4675
    %v7172 = vpack.c.b16 %v4684, %v4676
    %v7173 = vpack.c.b16 %v4685, %v4677
    %v7174 = vpack.c.b16 %v4686, %v4678
    %v7175 = vpack.c.b16 %v4687, %v4679
    %v7176 = vpack.c.b16 %v4688, %v4680
    %v7177 = vpack.c.b16 %v4697, %v4689
    %v7178 = vpack.c.b16 %v4698, %v4690
    %v7179 = vpack.c.b16 %v4699, %v4691
    %v7180 = vpack.c.b16 %v4700, %v4692
    %v7181 = vpack.c.b16 %v4701, %v4693
    %v7182 = vpack.c.b16 %v4702, %v4694
    %v7183 = vpack.c.b16 %v4703, %v4695
    %v7184 = vpack.c.b16 %v4704, %v4696
    %v7185 = vpack.c.b16 %v4713, %v4705
    %v7186 = vpack.c.b16 %v4714, %v4706
    %v7187 = vpack.c.b16 %v4715, %v4707
    %v7188 = vpack.c.b16 %v4716, %v4708
    %v7189 = vpack.c.b16 %v4717, %v4709
    %v7190 = vpack.c.b16 %v4718, %v4710
    %v7191 = vpack.c.b16 %v4719, %v4711
    %v7192 = vpack.c.b16 %v4720, %v4712
    %v7193 = vpack.c.b16 %v4729, %v4721
    %v7194 = vpack.c.b16 %v4730, %v4722
    %v7195 = vpack.c.b16 %v4731, %v4723
    %v7196 = vpack.c.b16 %v4732, %v4724
    %v7197 = vpack.c.b16 %v4733, %v4725
    %v7198 = vpack.c.b16 %v4734, %v4726
    %v7199 = vpack.c.b16 %v4735, %v4727
    %v7200 = vpack.c.b16 %v4736, %v4728
    %v7201 = vpack.c.b16 %v4745, %v4737
    %v7202 = vpack.c.b16 %v4746, %v4738
    %v7203 = vpack.c.b16 %v4747, %v4739
    %v7204 = vpack.c.b16 %v4748, %v4740
    %v7205 = vpack.c.b16 %v4749, %v4741
    %v7206 = vpack.c.b16 %v4750, %v4742
    %v7207 = vpack.c.b16 %v4751, %v4743
    %v7208 = vpack.c.b16 %v4752, %v4744
    %v7209 = vpack.c.b16 %v4761, %v4753
    %v7210 = vpack.c.b16 %v4762, %v4754
    %v7211 = vpack.c.b16 %v4763, %v4755
    %v7212 = vpack.c.b16 %v4764, %v4756
    %v7213 = vpack.c.b16 %v4765, %v4757
    %v7214 = vpack.c.b16 %v4766, %v4758
    %v7215 = vpack.c.b16 %v4767, %v4759
    %v7216 = vpack.c.b16 %v4768, %v4760
    %v7217 = vpack.c.b16 %v4777, %v4769
    %v7218 = vpack.c.b16 %v4778, %v4770
    %v7219 = vpack.c.b16 %v4779, %v4771
    %v7220 = vpack.c.b16 %v4780, %v4772
    %v7221 = vpack.c.b16 %v4781, %v4773
    %v7222 = vpack.c.b16 %v4782, %v4774
    %v7223 = vpack.c.b16 %v4783, %v4775
    %v7224 = vpack.c.b16 %v4784, %v4776
    %v7225 = vpack.c.b16 %v4793, %v4785
    %v7226 = vpack.c.b16 %v4794, %v4786
    %v7227 = vpack.c.b16 %v4795, %v4787
    %v7228 = vpack.c.b16 %v4796, %v4788
    %v7229 = vpack.c.b16 %v4797, %v4789
    %v7230 = vpack.c.b16 %v4798, %v4790
    %v7231 = vpack.c.b16 %v4799, %v4791
    %v7232 = vpack.c.b16 %v4800, %v4792
    %v7233 = vpack.c.b16 %v4809, %v4801
    %v7234 = vpack.c.b16 %v4810, %v4802
    %v7235 = vpack.c.b16 %v4811, %v4803
    %v7236 = vpack.c.b16 %v4812, %v4804
    %v7237 = vpack.c.b16 %v4813, %v4805
    %v7238 = vpack.c.b16 %v4814, %v4806
    %v7239 = vpack.c.b16 %v4815, %v4807
    %v7240 = vpack.c.b16 %v4816, %v4808
    %v7241 = vpack.c.b16 %v4825, %v4817
    %v7242 = vpack.c.b16 %v4826, %v4818
    %v7243 = vpack.c.b16 %v4827, %v4819
    %v7244 = vpack.c.b16 %v4828, %v4820
    %v7245 = vpack.c.b16 %v4829, %v4821
    %v7246 = vpack.c.b16 %v4830, %v4822
    %v7247 = vpack.c.b16 %v4831, %v4823
    %v7248 = vpack.c.b16 %v4832, %v4824
    %v7249 = vpack.c.b16 %v4841, %v4833
    %v7250 = vpack.c.b16 %v4842, %v4834
    %v7251 = vpack.c.b16 %v4843, %v4835
    %v7252 = vpack.c.b16 %v4844, %v4836
    %v7253 = vpack.c.b16 %v4845, %v4837
    %v7254 = vpack.c.b16 %v4846, %v4838
    %v7255 = vpack.c.b16 %v4847, %v4839
    %v7256 = vpack.c.b16 %v4848, %v4840
    %v7257 = vpack.c.b16 %v4857, %v4849
    %v7258 = vpack.c.b16 %v4858, %v4850
    %v7259 = vpack.c.b16 %v4859, %v4851
    %v7260 = vpack.c.b16 %v4860, %v4852
    %v7261 = vpack.c.b16 %v4861, %v4853
    %v7262 = vpack.c.b16 %v4862, %v4854
    %v7263 = vpack.c.b16 %v4863, %v4855
    %v7264 = vpack.c.b16 %v4864, %v4856
    %v7265 = vpack.c.b16 %v4873, %v4865
    %v7266 = vpack.c.b16 %v4874, %v4866
    %v7267 = vpack.c.b16 %v4875, %v4867
    %v7268 = vpack.c.b16 %v4876, %v4868
    %v7269 = vpack.c.b16 %v4877, %v4869
    %v7270 = vpack.c.b16 %v4878, %v4870
    %v7271 = vpack.c.b16 %v4879, %v4871
    %v7272 = vpack.c.b16 %v4880, %v4872
    %v7273 = vpack.c.b16 %v4889, %v4881
    %v7274 = vpack.c.b16 %v4890, %v4882
    %v7275 = vpack.c.b16 %v4891, %v4883
    %v7276 = vpack.c.b16 %v4892, %v4884
    %v7277 = vpack.c.b16 %v4893, %v4885
    %v7278 = vpack.c.b16 %v4894, %v4886
    %v7279 = vpack.c.b16 %v4895, %v4887
    %v7280 = vpack.c.b16 %v4896, %v4888
    %v7281 = vpack.c.b16 %v4905, %v4897
    %v7282 = vpack.c.b16 %v4906, %v4898
    %v7283 = vpack.c.b16 %v4907, %v4899
    %v7284 = vpack.c.b16 %v4908, %v4900
    %v7285 = vpack.c.b16 %v4909, %v4901
    %v7286 = vpack.c.b16 %v4910, %v4902
    %v7287 = vpack.c.b16 %v4911, %v4903
    %v7288 = vpack.c.b16 %v4912, %v4904
    %v7289 = vpack.c.b16 %v4921, %v4913
    %v7290 = vpack.c.b16 %v4922, %v4914
    %v7291 = vpack.c.b16 %v4923, %v4915
    %v7292 = vpack.c.b16 %v4924, %v4916
    %v7293 = vpack.c.b16 %v4925, %v4917
    %v7294 = vpack.c.b16 %v4926, %v4918
    %v7295 = vpack.c.b16 %v4927, %v4919
    %v7296 = vpack.c.b16 %v4928, %v4920
    %v7297 = vpack.c.b16 %v4937, %v4929
    %v7298 = vpack.c.b16 %v4938, %v4930
    %v7299 = vpack.c.b16 %v4939, %v4931
    %v7300 = vpack.c.b16 %v4940, %v4932
    %v7301 = vpack.c.b16 %v4941, %v4933
    %v7302 = vpack.c.b16 %v4942, %v4934
    %v7303 = vpack.c.b16 %v4943, %v4935
    %v7304 = vpack.c.b16 %v4944, %v4936
    %v7305 = vpack.c.b16 %v4953, %v4945
    %v7306 = vpack.c.b16 %v4954, %v4946
    %v7307 = vpack.c.b16 %v4955, %v4947
    %v7308 = vpack.c.b16 %v4956, %v4948
    %v7309 = vpack.c.b16 %v4957, %v4949
    %v7310 = vpack.c.b16 %v4958, %v4950
    %v7311 = vpack.c.b16 %v4959, %v4951
    %v7312 = vpack.c.b16 %v4960, %v4952
    %v7313 = vpack.c.b16 %v4969, %v4961
    %v7314 = vpack.c.b16 %v4970, %v4962
    %v7315 = vpack.c.b16 %v4971, %v4963
    %v7316 = vpack.c.b16 %v4972, %v4964
    %v7317 = vpack.c.b16 %v4973, %v4965
    %v7318 = vpack.c.b16 %v4974, %v4966
    %v7319 = vpack.c.b16 %v4975, %v4967
    %v7320 = vpack.c.b16 %v4976, %v4968
    %v7321 = vpack.c.b16 %v4985, %v4977
    %v7322 = vpack.c.b16 %v4986, %v4978
    %v7323 = vpack.c.b16 %v4987, %v4979
    %v7324 = vpack.c.b16 %v4988, %v4980
    %v7325 = vpack.c.b16 %v4989, %v4981
    %v7326 = vpack.c.b16 %v4990, %v4982
    %v7327 = vpack.c.b16 %v4991, %v4983
    %v7328 = vpack.c.b16 %v4992, %v4984
    %v7329 = vpack.c.b16 %v5001, %v4993
    %v7330 = vpack.c.b16 %v5002, %v4994
    %v7331 = vpack.c.b16 %v5003, %v4995
    %v7332 = vpack.c.b16 %v5004, %v4996
    %v7333 = vpack.c.b16 %v5005, %v4997
    %v7334 = vpack.c.b16 %v5006, %v4998
    %v7335 = vpack.c.b16 %v5007, %v4999
    %v7336 = vpack.c.b16 %v5008, %v5000
    %v7337 = vpack.c.b16 %v5017, %v5009
    %v7338 = vpack.c.b16 %v5018, %v5010
    %v7339 = vpack.c.b16 %v5019, %v5011
    %v7340 = vpack.c.b16 %v5020, %v5012
    %v7341 = vpack.c.b16 %v5021, %v5013
    %v7342 = vpack.c.b16 %v5022, %v5014
    %v7343 = vpack.c.b16 %v5023, %v5015
    %v7344 = vpack.c.b16 %v5024, %v5016
    %v7345 = vpack.c.b16 %v5033, %v5025
    %v7346 = vpack.c.b16 %v5034, %v5026
    %v7347 = vpack.c.b16 %v5035, %v5027
    %v7348 = vpack.c.b16 %v5036, %v5028
    %v7349 = vpack.c.b16 %v5037, %v5029
    %v7350 = vpack.c.b16 %v5038, %v5030
    %v7351 = vpack.c.b16 %v5039, %v5031
    %v7352 = vpack.c.b16 %v5040, %v5032
    %v7353 = vpack.c.b16 %v5049, %v5041
    %v7354 = vpack.c.b16 %v5050, %v5042
    %v7355 = vpack.c.b16 %v5051, %v5043
    %v7356 = vpack.c.b16 %v5052, %v5044
    %v7357 = vpack.c.b16 %v5053, %v5045
    %v7358 = vpack.c.b16 %v5054, %v5046
    %v7359 = vpack.c.b16 %v5055, %v5047
    %v7360 = vpack.c.b16 %v5056, %v5048
    %v7361 = vpack.c.b16 %v5065, %v5057
    %v7362 = vpack.c.b16 %v5066, %v5058
    %v7363 = vpack.c.b16 %v5067, %v5059
    %v7364 = vpack.c.b16 %v5068, %v5060
    %v7365 = vpack.c.b16 %v5069, %v5061
    %v7366 = vpack.c.b16 %v5070, %v5062
    %v7367 = vpack.c.b16 %v5071, %v5063
    %v7368 = vpack.c.b16 %v5072, %v5064
    %v7369 = vpack.c.b16 %v5081, %v5073
    %v7370 = vpack.c.b16 %v5082, %v5074
    %v7371 = vpack.c.b16 %v5083, %v5075
    %v7372 = vpack.c.b16 %v5084, %v5076
    %v7373 = vpack.c.b16 %v5085, %v5077
    %v7374 = vpack.c.b16 %v5086, %v5078
    %v7375 = vpack.c.b16 %v5087, %v5079
    %v7376 = vpack.c.b16 %v5088, %v5080
    %v7377 = vpack.c.b16 %v5097, %v5089
    %v7378 = vpack.c.b16 %v5098, %v5090
    %v7379 = vpack.c.b16 %v5099, %v5091
    %v7380 = vpack.c.b16 %v5100, %v5092
    %v7381 = vpack.c.b16 %v5101, %v5093
    %v7382 = vpack.c.b16 %v5102, %v5094
    %v7383 = vpack.c.b16 %v5103, %v5095
    %v7384 = vpack.c.b16 %v5104, %v5096
    %v7385 = vpack.c.b16 %v5113, %v5105
    %v7386 = vpack.c.b16 %v5114, %v5106
    %v7387 = vpack.c.b16 %v5115, %v5107
    %v7388 = vpack.c.b16 %v5116, %v5108
    %v7389 = vpack.c.b16 %v5117, %v5109
    %v7390 = vpack.c.b16 %v5118, %v5110
    %v7391 = vpack.c.b16 %v5119, %v5111
    %v7392 = vpack.c.b16 %v5120, %v5112
    %v7393 = vpack.c.b16 %v5129, %v5121
    %v7394 = vpack.c.b16 %v5130, %v5122
    %v7395 = vpack.c.b16 %v5131, %v5123
    %v7396 = vpack.c.b16 %v5132, %v5124
    %v7397 = vpack.c.b16 %v5133, %v5125
    %v7398 = vpack.c.b16 %v5134, %v5126
    %v7399 = vpack.c.b16 %v5135, %v5127
    %v7400 = vpack.c.b16 %v5136, %v5128
    %v7401 = vpack.c.b16 %v5145, %v5137
    %v7402 = vpack.c.b16 %v5146, %v5138
    %v7403 = vpack.c.b16 %v5147, %v5139
    %v7404 = vpack.c.b16 %v5148, %v5140
    %v7405 = vpack.c.b16 %v5149, %v5141
    %v7406 = vpack.c.b16 %v5150, %v5142
    %v7407 = vpack.c.b16 %v5151, %v5143
    %v7408 = vpack.c.b16 %v5152, %v5144
    %v7409 = vpack.c.b16 %v5161, %v5153
    %v7410 = vpack.c.b16 %v5162, %v5154
    %v7411 = vpack.c.b16 %v5163, %v5155
    %v7412 = vpack.c.b16 %v5164, %v5156
    %v7413 = vpack.c.b16 %v5165, %v5157
    %v7414 = vpack.c.b16 %v5166, %v5158
    %v7415 = vpack.c.b16 %v5167, %v5159
    %v7416 = vpack.c.b16 %v5168, %v5160
    %v7417 = vpack.c.b16 %v5177, %v5169
    %v7418 = vpack.c.b16 %v5178, %v5170
    %v7419 = vpack.c.b16 %v5179, %v5171
    %v7420 = vpack.c.b16 %v5180, %v5172
    %v7421 = vpack.c.b16 %v5181, %v5173
    %v7422 = vpack.c.b16 %v5182, %v5174
    %v7423 = vpack.c.b16 %v5183, %v5175
    %v7424 = vpack.c.b16 %v5184, %v5176
    %v7425 = vpack.c.b16 %v5193, %v5185
    %v7426 = vpack.c.b16 %v5194, %v5186
    %v7427 = vpack.c.b16 %v5195, %v5187
    %v7428 = vpack.c.b16 %v5196, %v5188
    %v7429 = vpack.c.b16 %v5197, %v5189
    %v7430 = vpack.c.b16 %v5198, %v5190
    %v7431 = vpack.c.b16 %v5199, %v5191
    %v7432 = vpack.c.b16 %v5200, %v5192
    %v7433 = vpack.c.b16 %v5209, %v5201
    %v7434 = vpack.c.b16 %v5210, %v5202
    %v7435 = vpack.c.b16 %v5211, %v5203
    %v7436 = vpack.c.b16 %v5212, %v5204
    %v7437 = vpack.c.b16 %v5213, %v5205
    %v7438 = vpack.c.b16 %v5214, %v5206
    %v7439 = vpack.c.b16 %v5215, %v5207
    %v7440 = vpack.c.b16 %v5216, %v5208
    %v7441 = vpack.c.b16 %v5225, %v5217
    %v7442 = vpack.c.b16 %v5226, %v5218
    %v7443 = vpack.c.b16 %v5227, %v5219
    %v7444 = vpack.c.b16 %v5228, %v5220
    %v7445 = vpack.c.b16 %v5229, %v5221
    %v7446 = vpack.c.b16 %v5230, %v5222
    %v7447 = vpack.c.b16 %v5231, %v5223
    %v7448 = vpack.c.b16 %v5232, %v5224
    %v7449 = vpack.c.b16 %v5241, %v5233
    %v7450 = vpack.c.b16 %v5242, %v5234
    %v7451 = vpack.c.b16 %v5243, %v5235
    %v7452 = vpack.c.b16 %v5244, %v5236
    %v7453 = vpack.c.b16 %v5245, %v5237
    %v7454 = vpack.c.b16 %v5246, %v5238
    %v7455 = vpack.c.b16 %v5247, %v5239
    %v7456 = vpack.c.b16 %v5248, %v5240
    %v7457 = vpack.c.b16 %v5257, %v5249
    %v7458 = vpack.c.b16 %v5258, %v5250
    %v7459 = vpack.c.b16 %v5259, %v5251
    %v7460 = vpack.c.b16 %v5260, %v5252
    %v7461 = vpack.c.b16 %v5261, %v5253
    %v7462 = vpack.c.b16 %v5262, %v5254
    %v7463 = vpack.c.b16 %v5263, %v5255
    %v7464 = vpack.c.b16 %v5264, %v5256
    %v7465 = vpack.c.b16 %v5273, %v5265
    %v7466 = vpack.c.b16 %v5274, %v5266
    %v7467 = vpack.c.b16 %v5275, %v5267
    %v7468 = vpack.c.b16 %v5276, %v5268
    %v7469 = vpack.c.b16 %v5277, %v5269
    %v7470 = vpack.c.b16 %v5278, %v5270
    %v7471 = vpack.c.b16 %v5279, %v5271
    %v7472 = vpack.c.b16 %v5280, %v5272
    %v7473 = vpack.c.b16 %v5289, %v5281
    %v7474 = vpack.c.b16 %v5290, %v5282
    %v7475 = vpack.c.b16 %v5291, %v5283
    %v7476 = vpack.c.b16 %v5292, %v5284
    %v7477 = vpack.c.b16 %v5293, %v5285
    %v7478 = vpack.c.b16 %v5294, %v5286
    %v7479 = vpack.c.b16 %v5295, %v5287
    %v7480 = vpack.c.b16 %v5296, %v5288
    %v7481 = vpack.c.b16 %v5305, %v5297
    %v7482 = vpack.c.b16 %v5306, %v5298
    %v7483 = vpack.c.b16 %v5307, %v5299
    %v7484 = vpack.c.b16 %v5308, %v5300
    %v7485 = vpack.c.b16 %v5309, %v5301
    %v7486 = vpack.c.b16 %v5310, %v5302
    %v7487 = vpack.c.b16 %v5311, %v5303
    %v7488 = vpack.c.b16 %v5312, %v5304
    %v7489 = vpack.c.b16 %v5321, %v5313
    %v7490 = vpack.c.b16 %v5322, %v5314
    %v7491 = vpack.c.b16 %v5323, %v5315
    %v7492 = vpack.c.b16 %v5324, %v5316
    %v7493 = vpack.c.b16 %v5325, %v5317
    %v7494 = vpack.c.b16 %v5326, %v5318
    %v7495 = vpack.c.b16 %v5327, %v5319
    %v7496 = vpack.c.b16 %v5328, %v5320
    %v7497 = vpack.c.b16 %v5337, %v5329
    %v7498 = vpack.c.b16 %v5338, %v5330
    %v7499 = vpack.c.b16 %v5339, %v5331
    %v7500 = vpack.c.b16 %v5340, %v5332
    %v7501 = vpack.c.b16 %v5341, %v5333
    %v7502 = vpack.c.b16 %v5342, %v5334
    %v7503 = vpack.c.b16 %v5343, %v5335
    %v7504 = vpack.c.b16 %v5344, %v5336
    %v7505 = vpack.c.b16 %v5353, %v5345
    %v7506 = vpack.c.b16 %v5354, %v5346
    %v7507 = vpack.c.b16 %v5355, %v5347
    %v7508 = vpack.c.b16 %v5356, %v5348
    %v7509 = vpack.c.b16 %v5357, %v5349
    %v7510 = vpack.c.b16 %v5358, %v5350
    %v7511 = vpack.c.b16 %v5359, %v5351
    %v7512 = vpack.c.b16 %v5360, %v5352
    %v7513 = vpack.c.b16 %v5369, %v5361
    %v7514 = vpack.c.b16 %v5370, %v5362
    %v7515 = vpack.c.b16 %v5371, %v5363
    %v7516 = vpack.c.b16 %v5372, %v5364
    %v7517 = vpack.c.b16 %v5373, %v5365
    %v7518 = vpack.c.b16 %v5374, %v5366
    %v7519 = vpack.c.b16 %v5375, %v5367
    %v7520 = vpack.c.b16 %v5376, %v5368
    %v7521 = vpack.c.b16 %v5385, %v5377
    %v7522 = vpack.c.b16 %v5386, %v5378
    %v7523 = vpack.c.b16 %v5387, %v5379
    %v7524 = vpack.c.b16 %v5388, %v5380
    %v7525 = vpack.c.b16 %v5389, %v5381
    %v7526 = vpack.c.b16 %v5390, %v5382
    %v7527 = vpack.c.b16 %v5391, %v5383
    %v7528 = vpack.c.b16 %v5392, %v5384
    %v7529 = vpack.c.b16 %v5401, %v5393
    %v7530 = vpack.c.b16 %v5402, %v5394
    %v7531 = vpack.c.b16 %v5403, %v5395
    %v7532 = vpack.c.b16 %v5404, %v5396
    %v7533 = vpack.c.b16 %v5405, %v5397
    %v7534 = vpack.c.b16 %v5406, %v5398
    %v7535 = vpack.c.b16 %v5407, %v5399
    %v7536 = vpack.c.b16 %v5408, %v5400
    %v7537 = vpack.c.b16 %v5417, %v5409
    %v7538 = vpack.c.b16 %v5418, %v5410
    %v7539 = vpack.c.b16 %v5419, %v5411
    %v7540 = vpack.c.b16 %v5420, %v5412
    %v7541 = vpack.c.b16 %v5421, %v5413
    %v7542 = vpack.c.b16 %v5422, %v5414
    %v7543 = vpack.c.b16 %v5423, %v5415
    %v7544 = vpack.c.b16 %v5424, %v5416
    %v7545 = vpack.c.b16 %v5433, %v5425
    %v7546 = vpack.c.b16 %v5434, %v5426
    %v7547 = vpack.c.b16 %v5435, %v5427
    %v7548 = vpack.c.b16 %v5436, %v5428
    %v7549 = vpack.c.b16 %v5437, %v5429
    %v7550 = vpack.c.b16 %v5438, %v5430
    %v7551 = vpack.c.b16 %v5439, %v5431
    %v7552 = vpack.c.b16 %v5440, %v5432
    %v7553 = vpack.c.b16 %v5449, %v5441
    %v7554 = vpack.c.b16 %v5450, %v5442
    %v7555 = vpack.c.b16 %v5451, %v5443
    %v7556 = vpack.c.b16 %v5452, %v5444
    %v7557 = vpack.c.b16 %v5453, %v5445
    %v7558 = vpack.c.b16 %v5454, %v5446
    %v7559 = vpack.c.b16 %v5455, %v5447
    %v7560 = vpack.c.b16 %v5456, %v5448
    %v7561 = vpack.c.b16 %v5465, %v5457
    %v7562 = vpack.c.b16 %v5466, %v5458
    %v7563 = vpack.c.b16 %v5467, %v5459
    %v7564 = vpack.c.b16 %v5468, %v5460
    %v7565 = vpack.c.b16 %v5469, %v5461
    %v7566 = vpack.c.b16 %v5470, %v5462
    %v7567 = vpack.c.b16 %v5471, %v5463
    %v7568 = vpack.c.b16 %v5472, %v5464
    %v7569 = vpack.c.b16 %v5481, %v5473
    %v7570 = vpack.c.b16 %v5482, %v5474
    %v7571 = vpack.c.b16 %v5483, %v5475
    %v7572 = vpack.c.b16 %v5484, %v5476
    %v7573 = vpack.c.b16 %v5485, %v5477
    %v7574 = vpack.c.b16 %v5486, %v5478
    %v7575 = vpack.c.b16 %v5487, %v5479
    %v7576 = vpack.c.b16 %v5488, %v5480
    %v7577 = vpack.c.b16 %v5497, %v5489
    %v7578 = vpack.c.b16 %v5498, %v5490
    %v7579 = vpack.c.b16 %v5499, %v5491
    %v7580 = vpack.c.b16 %v5500, %v5492
    %v7581 = vpack.c.b16 %v5501, %v5493
    %v7582 = vpack.c.b16 %v5502, %v5494
    %v7583 = vpack.c.b16 %v5503, %v5495
    %v7584 = vpack.c.b16 %v5504, %v5496
    %v7585 = vpack.c.b16 %v5513, %v5505
    %v7586 = vpack.c.b16 %v5514, %v5506
    %v7587 = vpack.c.b16 %v5515, %v5507
    %v7588 = vpack.c.b16 %v5516, %v5508
    %v7589 = vpack.c.b16 %v5517, %v5509
    %v7590 = vpack.c.b16 %v5518, %v5510
    %v7591 = vpack.c.b16 %v5519, %v5511
    %v7592 = vpack.c.b16 %v5520, %v5512
    %v7593 = vpack.c.b16 %v5529, %v5521
    %v7594 = vpack.c.b16 %v5530, %v5522
    %v7595 = vpack.c.b16 %v5531, %v5523
    %v7596 = vpack.c.b16 %v5532, %v5524
    %v7597 = vpack.c.b16 %v5533, %v5525
    %v7598 = vpack.c.b16 %v5534, %v5526
    %v7599 = vpack.c.b16 %v5535, %v5527
    %v7600 = vpack.c.b16 %v5536, %v5528
    %v7601 = vpack.c.b16 %v5545, %v5537
    %v7602 = vpack.c.b16 %v5546, %v5538
    %v7603 = vpack.c.b16 %v5547, %v5539
    %v7604 = vpack.c.b16 %v5548, %v5540
    %v7605 = vpack.c.b16 %v5549, %v5541
    %v7606 = vpack.c.b16 %v5550, %v5542
    %v7607 = vpack.c.b16 %v5551, %v5543
    %v7608 = vpack.c.b16 %v5552, %v5544
    %v7609 = vpack.c.b16 %v5561, %v5553
    %v7610 = vpack.c.b16 %v5562, %v5554
    %v7611 = vpack.c.b16 %v5563, %v5555
    %v7612 = vpack.c.b16 %v5564, %v5556
    %v7613 = vpack.c.b16 %v5565, %v5557
    %v7614 = vpack.c.b16 %v5566, %v5558
    %v7615 = vpack.c.b16 %v5567, %v5559
    %v7616 = vpack.c.b16 %v5568, %v5560
    %v7617 = vpack.c.b16 %v5577, %v5569
    %v7618 = vpack.c.b16 %v5578, %v5570
    %v7619 = vpack.c.b16 %v5579, %v5571
    %v7620 = vpack.c.b16 %v5580, %v5572
    %v7621 = vpack.c.b16 %v5581, %v5573
    %v7622 = vpack.c.b16 %v5582, %v5574
    %v7623 = vpack.c.b16 %v5583, %v5575
    %v7624 = vpack.c.b16 %v5584, %v5576
    %v7625 = vpack.c.b16 %v5593, %v5585
    %v7626 = vpack.c.b16 %v5594, %v5586
    %v7627 = vpack.c.b16 %v5595, %v5587
    %v7628 = vpack.c.b16 %v5596, %v5588
    %v7629 = vpack.c.b16 %v5597, %v5589
    %v7630 = vpack.c.b16 %v5598, %v5590
    %v7631 = vpack.c.b16 %v5599, %v5591
    %v7632 = vpack.c.b16 %v5600, %v5592
    %v7633 = vpack.c.b16 %v5609, %v5601
    %v7634 = vpack.c.b16 %v5610, %v5602
    %v7635 = vpack.c.b16 %v5611, %v5603
    %v7636 = vpack.c.b16 %v5612, %v5604
    %v7637 = vpack.c.b16 %v5613, %v5605
    %v7638 = vpack.c.b16 %v5614, %v5606
    %v7639 = vpack.c.b16 %v5615, %v5607
    %v7640 = vpack.c.b16 %v5616, %v5608
    %v7641 = vpack.c.b16 %v5625, %v5617
    %v7642 = vpack.c.b16 %v5626, %v5618
    %v7643 = vpack.c.b16 %v5627, %v5619
    %v7644 = vpack.c.b16 %v5628, %v5620
    %v7645 = vpack.c.b16 %v5629, %v5621
    %v7646 = vpack.c.b16 %v5630, %v5622
    %v7647 = vpack.c.b16 %v5631, %v5623
    %v7648 = vpack.c.b16 %v5632, %v5624
    %v7649 = vpack.c.b16 %v5641, %v5633
    %v7650 = vpack.c.b16 %v5642, %v5634
    %v7651 = vpack.c.b16 %v5643, %v5635
    %v7652 = vpack.c.b16 %v5644, %v5636
    %v7653 = vpack.c.b16 %v5645, %v5637
    %v7654 = vpack.c.b16 %v5646, %v5638
    %v7655 = vpack.c.b16 %v5647, %v5639
    %v7656 = vpack.c.b16 %v5648, %v5640
    %v7657 = vpack.c.b16 %v5657, %v5649
    %v7658 = vpack.c.b16 %v5658, %v5650
    %v7659 = vpack.c.b16 %v5659, %v5651
    %v7660 = vpack.c.b16 %v5660, %v5652
    %v7661 = vpack.c.b16 %v5661, %v5653
    %v7662 = vpack.c.b16 %v5662, %v5654
    %v7663 = vpack.c.b16 %v5663, %v5655
    %v7664 = vpack.c.b16 %v5664, %v5656
    %v7665 = vpack.c.b16 %v5673, %v5665
    %v7666 = vpack.c.b16 %v5674, %v5666
    %v7667 = vpack.c.b16 %v5675, %v5667
    %v7668 = vpack.c.b16 %v5676, %v5668
    %v7669 = vpack.c.b16 %v5677, %v5669
    %v7670 = vpack.c.b16 %v5678, %v5670
    %v7671 = vpack.c.b16 %v5679, %v5671
    %v7672 = vpack.c.b16 %v5680, %v5672
    %v7673 = vpack.c.b16 %v5689, %v5681
    %v7674 = vpack.c.b16 %v5690, %v5682
    %v7675 = vpack.c.b16 %v5691, %v5683
    %v7676 = vpack.c.b16 %v5692, %v5684
    %v7677 = vpack.c.b16 %v5693, %v5685
    %v7678 = vpack.c.b16 %v5694, %v5686
    %v7679 = vpack.c.b16 %v5695, %v5687
    %v7680 = vpack.c.b16 %v5696, %v5688
    %v7681 = vpack.c.b16 %v5705, %v5697
    %v7682 = vpack.c.b16 %v5706, %v5698
    %v7683 = vpack.c.b16 %v5707, %v5699
    %v7684 = vpack.c.b16 %v5708, %v5700
    %v7685 = vpack.c.b16 %v5709, %v5701
    %v7686 = vpack.c.b16 %v5710, %v5702
    %v7687 = vpack.c.b16 %v5711, %v5703
    %v7688 = vpack.c.b16 %v5712, %v5704
    %v7689 = vpack.c.b16 %v5721, %v5713
    %v7690 = vpack.c.b16 %v5722, %v5714
    %v7691 = vpack.c.b16 %v5723, %v5715
    %v7692 = vpack.c.b16 %v5724, %v5716
    %v7693 = vpack.c.b16 %v5725, %v5717
    %v7694 = vpack.c.b16 %v5726, %v5718
    %v7695 = vpack.c.b16 %v5727, %v5719
    %v7696 = vpack.c.b16 %v5728, %v5720
    %v7697 = vpack.c.b16 %v5737, %v5729
    %v7698 = vpack.c.b16 %v5738, %v5730
    %v7699 = vpack.c.b16 %v5739, %v5731
    %v7700 = vpack.c.b16 %v5740, %v5732
    %v7701 = vpack.c.b16 %v5741, %v5733
    %v7702 = vpack.c.b16 %v5742, %v5734
    %v7703 = vpack.c.b16 %v5743, %v5735
    %v7704 = vpack.c.b16 %v5744, %v5736
    %v7705 = vpack.c.b16 %v5753, %v5745
    %v7706 = vpack.c.b16 %v5754, %v5746
    %v7707 = vpack.c.b16 %v5755, %v5747
    %v7708 = vpack.c.b16 %v5756, %v5748
    %v7709 = vpack.c.b16 %v5757, %v5749
    %v7710 = vpack.c.b16 %v5758, %v5750
    %v7711 = vpack.c.b16 %v5759, %v5751
    %v7712 = vpack.c.b16 %v5760, %v5752
    %v7713 = vpack.c.b16 %v5769, %v5761
    %v7714 = vpack.c.b16 %v5770, %v5762
    %v7715 = vpack.c.b16 %v5771, %v5763
    %v7716 = vpack.c.b16 %v5772, %v5764
    %v7717 = vpack.c.b16 %v5773, %v5765
    %v7718 = vpack.c.b16 %v5774, %v5766
    %v7719 = vpack.c.b16 %v5775, %v5767
    %v7720 = vpack.c.b16 %v5776, %v5768
    %v7721 = vpack.c.b16 %v5785, %v5777
    %v7722 = vpack.c.b16 %v5786, %v5778
    %v7723 = vpack.c.b16 %v5787, %v5779
    %v7724 = vpack.c.b16 %v5788, %v5780
    %v7725 = vpack.c.b16 %v5789, %v5781
    %v7726 = vpack.c.b16 %v5790, %v5782
    %v7727 = vpack.c.b16 %v5791, %v5783
    %v7728 = vpack.c.b16 %v5792, %v5784
    %v7729 = vpack.c.b16 %v5801, %v5793
    %v7730 = vpack.c.b16 %v5802, %v5794
    %v7731 = vpack.c.b16 %v5803, %v5795
    %v7732 = vpack.c.b16 %v5804, %v5796
    %v7733 = vpack.c.b16 %v5805, %v5797
    %v7734 = vpack.c.b16 %v5806, %v5798
    %v7735 = vpack.c.b16 %v5807, %v5799
    %v7736 = vpack.c.b16 %v5808, %v5800
    %v7737 = vpack.c.b16 %v5817, %v5809
    %v7738 = vpack.c.b16 %v5818, %v5810
    %v7739 = vpack.c.b16 %v5819, %v5811
    %v7740 = vpack.c.b16 %v5820, %v5812
    %v7741 = vpack.c.b16 %v5821, %v5813
    %v7742 = vpack.c.b16 %v5822, %v5814
    %v7743 = vpack.c.b16 %v5823, %v5815
    %v7744 = vpack.c.b16 %v5824, %v5816
    %v7745 = vpack.c.b16 %v5833, %v5825
    %v7746 = vpack.c.b16 %v5834, %v5826
    %v7747 = vpack.c.b16 %v5835, %v5827
    %v7748 = vpack.c.b16 %v5836, %v5828
    %v7749 = vpack.c.b16 %v5837, %v5829
    %v7750 = vpack.c.b16 %v5838, %v5830
    %v7751 = vpack.c.b16 %v5839, %v5831
    %v7752 = vpack.c.b16 %v5840, %v5832
    %v7753 = vpack.c.b16 %v5849, %v5841
    %v7754 = vpack.c.b16 %v5850, %v5842
    %v7755 = vpack.c.b16 %v5851, %v5843
    %v7756 = vpack.c.b16 %v5852, %v5844
    %v7757 = vpack.c.b16 %v5853, %v5845
    %v7758 = vpack.c.b16 %v5854, %v5846
    %v7759 = vpack.c.b16 %v5855, %v5847
    %v7760 = vpack.c.b16 %v5856, %v5848
    %v7761 = vpack.c.b16 %v5865, %v5857
    %v7762 = vpack.c.b16 %v5866, %v5858
    %v7763 = vpack.c.b16 %v5867, %v5859
    %v7764 = vpack.c.b16 %v5868, %v5860
    %v7765 = vpack.c.b16 %v5869, %v5861
    %v7766 = vpack.c.b16 %v5870, %v5862
    %v7767 = vpack.c.b16 %v5871, %v5863
    %v7768 = vpack.c.b16 %v5872, %v5864
    %v7769 = vpack.c.b16 %v5881, %v5873
    %v7770 = vpack.c.b16 %v5882, %v5874
    %v7771 = vpack.c.b16 %v5883, %v5875
    %v7772 = vpack.c.b16 %v5884, %v5876
    %v7773 = vpack.c.b16 %v5885, %v5877
    %v7774 = vpack.c.b16 %v5886, %v5878
    %v7775 = vpack.c.b16 %v5887, %v5879
    %v7776 = vpack.c.b16 %v5888, %v5880
    %v7777 = vpack.c.b16 %v5897, %v5889
    %v7778 = vpack.c.b16 %v5898, %v5890
    %v7779 = vpack.c.b16 %v5899, %v5891
    %v7780 = vpack.c.b16 %v5900, %v5892
    %v7781 = vpack.c.b16 %v5901, %v5893
    %v7782 = vpack.c.b16 %v5902, %v5894
    %v7783 = vpack.c.b16 %v5903, %v5895
    %v7784 = vpack.c.b16 %v5904, %v5896
    %v7785 = vpack.c.b16 %v5913, %v5905
    %v7786 = vpack.c.b16 %v5914, %v5906
    %v7787 = vpack.c.b16 %v5915, %v5907
    %v7788 = vpack.c.b16 %v5916, %v5908
    %v7789 = vpack.c.b16 %v5917, %v5909
    %v7790 = vpack.c.b16 %v5918, %v5910
    %v7791 = vpack.c.b16 %v5919, %v5911
    %v7792 = vpack.c.b16 %v5920, %v5912
    %v7793 = vpack.c.b16 %v5929, %v5921
    %v7794 = vpack.c.b16 %v5930, %v5922
    %v7795 = vpack.c.b16 %v5931, %v5923
    %v7796 = vpack.c.b16 %v5932, %v5924
    %v7797 = vpack.c.b16 %v5933, %v5925
    %v7798 = vpack.c.b16 %v5934, %v5926
    %v7799 = vpack.c.b16 %v5935, %v5927
    %v7800 = vpack.c.b16 %v5936, %v5928
    %v7801 = vpack.c.b16 %v5945, %v5937
    %v7802 = vpack.c.b16 %v5946, %v5938
    %v7803 = vpack.c.b16 %v5947, %v5939
    %v7804 = vpack.c.b16 %v5948, %v5940
    %v7805 = vpack.c.b16 %v5949, %v5941
    %v7806 = vpack.c.b16 %v5950, %v5942
    %v7807 = vpack.c.b16 %v5951, %v5943
    %v7808 = vpack.c.b16 %v5952, %v5944
    %v7809 = vpack.c.b16 %v5961, %v5953
    %v7810 = vpack.c.b16 %v5962, %v5954
    %v7811 = vpack.c.b16 %v5963, %v5955
    %v7812 = vpack.c.b16 %v5964, %v5956
    %v7813 = vpack.c.b16 %v5965, %v5957
    %v7814 = vpack.c.b16 %v5966, %v5958
    %v7815 = vpack.c.b16 %v5967, %v5959
    %v7816 = vpack.c.b16 %v5968, %v5960
    %v7817 = vpack.c.b16 %v5977, %v5969
    %v7818 = vpack.c.b16 %v5978, %v5970
    %v7819 = vpack.c.b16 %v5979, %v5971
    %v7820 = vpack.c.b16 %v5980, %v5972
    %v7821 = vpack.c.b16 %v5981, %v5973
    %v7822 = vpack.c.b16 %v5982, %v5974
    %v7823 = vpack.c.b16 %v5983, %v5975
    %v7824 = vpack.c.b16 %v5984, %v5976
    %v7825 = vpack.c.b16 %v5993, %v5985
    %v7826 = vpack.c.b16 %v5994, %v5986
    %v7827 = vpack.c.b16 %v5995, %v5987
    %v7828 = vpack.c.b16 %v5996, %v5988
    %v7829 = vpack.c.b16 %v5997, %v5989
    %v7830 = vpack.c.b16 %v5998, %v5990
    %v7831 = vpack.c.b16 %v5999, %v5991
    %v7832 = vpack.c.b16 %v6000, %v5992
    %v7833 = vpack.c.b16 %v6009, %v6001
    %v7834 = vpack.c.b16 %v6010, %v6002
    %v7835 = vpack.c.b16 %v6011, %v6003
    %v7836 = vpack.c.b16 %v6012, %v6004
    %v7837 = vpack.c.b16 %v6013, %v6005
    %v7838 = vpack.c.b16 %v6014, %v6006
    %v7839 = vpack.c.b16 %v6015, %v6007
    %v7840 = vpack.c.b16 %v6016, %v6008
    %v7841 = vpack.c.b16 %v6025, %v6017
    %v7842 = vpack.c.b16 %v6026, %v6018
    %v7843 = vpack.c.b16 %v6027, %v6019
    %v7844 = vpack.c.b16 %v6028, %v6020
    %v7845 = vpack.c.b16 %v6029, %v6021
    %v7846 = vpack.c.b16 %v6030, %v6022
    %v7847 = vpack.c.b16 %v6031, %v6023
    %v7848 = vpack.c.b16 %v6032, %v6024
    %v7849 = vpack.c.b16 %v6041, %v6033
    %v7850 = vpack.c.b16 %v6042, %v6034
    %v7851 = vpack.c.b16 %v6043, %v6035
    %v7852 = vpack.c.b16 %v6044, %v6036
    %v7853 = vpack.c.b16 %v6045, %v6037
    %v7854 = vpack.c.b16 %v6046, %v6038
    %v7855 = vpack.c.b16 %v6047, %v6039
    %v7856 = vpack.c.b16 %v6048, %v6040
    %v7857 = vpack.c.b16 %v6057, %v6049
    %v7858 = vpack.c.b16 %v6058, %v6050
    %v7859 = vpack.c.b16 %v6059, %v6051
    %v7860 = vpack.c.b16 %v6060, %v6052
    %v7861 = vpack.c.b16 %v6061, %v6053
    %v7862 = vpack.c.b16 %v6062, %v6054
    %v7863 = vpack.c.b16 %v6063, %v6055
    %v7864 = vpack.c.b16 %v6064, %v6056
    %v7865 = vpack.c.b16 %v6073, %v6065
    %v7866 = vpack.c.b16 %v6074, %v6066
    %v7867 = vpack.c.b16 %v6075, %v6067
    %v7868 = vpack.c.b16 %v6076, %v6068
    %v7869 = vpack.c.b16 %v6077, %v6069
    %v7870 = vpack.c.b16 %v6078, %v6070
    %v7871 = vpack.c.b16 %v6079, %v6071
    %v7872 = vpack.c.b16 %v6080, %v6072
    %v7873 = vpack.c.b16 %v6089, %v6081
    %v7874 = vpack.c.b16 %v6090, %v6082
    %v7875 = vpack.c.b16 %v6091, %v6083
    %v7876 = vpack.c.b16 %v6092, %v6084
    %v7877 = vpack.c.b16 %v6093, %v6085
    %v7878 = vpack.c.b16 %v6094, %v6086
    %v7879 = vpack.c.b16 %v6095, %v6087
    %v7880 = vpack.c.b16 %v6096, %v6088
    %v7881 = vpack.c.b16 %v6105, %v6097
    %v7882 = vpack.c.b16 %v6106, %v6098
    %v7883 = vpack.c.b16 %v6107, %v6099
    %v7884 = vpack.c.b16 %v6108, %v6100
    %v7885 = vpack.c.b16 %v6109, %v6101
    %v7886 = vpack.c.b16 %v6110, %v6102
    %v7887 = vpack.c.b16 %v6111, %v6103
    %v7888 = vpack.c.b16 %v6112, %v6104
    %v7889 = vpack.c.b16 %v6121, %v6113
    %v7890 = vpack.c.b16 %v6122, %v6114
    %v7891 = vpack.c.b16 %v6123, %v6115
    %v7892 = vpack.c.b16 %v6124, %v6116
    %v7893 = vpack.c.b16 %v6125, %v6117
    %v7894 = vpack.c.b16 %v6126, %v6118
    %v7895 = vpack.c.b16 %v6127, %v6119
    %v7896 = vpack.c.b16 %v6128, %v6120
    %v7897 = vpack.c.b16 %v6137, %v6129
    %v7898 = vpack.c.b16 %v6138, %v6130
    %v7899 = vpack.c.b16 %v6139, %v6131
    %v7900 = vpack.c.b16 %v6140, %v6132
    %v7901 = vpack.c.b16 %v6141, %v6133
    %v7902 = vpack.c.b16 %v6142, %v6134
    %v7903 = vpack.c.b16 %v6143, %v6135
    %v7904 = vpack.c.b16 %v6144, %v6136
    %v7905 = vpack.c.b16 %v6153, %v6145
    %v7906 = vpack.c.b16 %v6154, %v6146
    %v7907 = vpack.c.b16 %v6155, %v6147
    %v7908 = vpack.c.b16 %v6156, %v6148
    %v7909 = vpack.c.b16 %v6157, %v6149
    %v7910 = vpack.c.b16 %v6158, %v6150
    %v7911 = vpack.c.b16 %v6159, %v6151
    %v7912 = vpack.c.b16 %v6160, %v6152
    %v7913 = vpack.c.b16 %v6169, %v6161
    %v7914 = vpack.c.b16 %v6170, %v6162
    %v7915 = vpack.c.b16 %v6171, %v6163
    %v7916 = vpack.c.b16 %v6172, %v6164
    %v7917 = vpack.c.b16 %v6173, %v6165
    %v7918 = vpack.c.b16 %v6174, %v6166
    %v7919 = vpack.c.b16 %v6175, %v6167
    %v7920 = vpack.c.b16 %v6176, %v6168
    %v7921 = vpack.c.b16 %v6185, %v6177
    %v7922 = vpack.c.b16 %v6186, %v6178
    %v7923 = vpack.c.b16 %v6187, %v6179
    %v7924 = vpack.c.b16 %v6188, %v6180
    %v7925 = vpack.c.b16 %v6189, %v6181
    %v7926 = vpack.c.b16 %v6190, %v6182
    %v7927 = vpack.c.b16 %v6191, %v6183
    %v7928 = vpack.c.b16 %v6192, %v6184
    %v7929 = vpack.c.b16 %v6201, %v6193
    %v7930 = vpack.c.b16 %v6202, %v6194
    %v7931 = vpack.c.b16 %v6203, %v6195
    %v7932 = vpack.c.b16 %v6204, %v6196
    %v7933 = vpack.c.b16 %v6205, %v6197
    %v7934 = vpack.c.b16 %v6206, %v6198
    %v7935 = vpack.c.b16 %v6207, %v6199
    %v7936 = vpack.c.b16 %v6208, %v6200
    %v7937 = vpack.c.b16 %v6217, %v6209
    %v7938 = vpack.c.b16 %v6218, %v6210
    %v7939 = vpack.c.b16 %v6219, %v6211
    %v7940 = vpack.c.b16 %v6220, %v6212
    %v7941 = vpack.c.b16 %v6221, %v6213
    %v7942 = vpack.c.b16 %v6222, %v6214
    %v7943 = vpack.c.b16 %v6223, %v6215
    %v7944 = vpack.c.b16 %v6224, %v6216
    %v7945 = vpack.c.b16 %v6233, %v6225
    %v7946 = vpack.c.b16 %v6234, %v6226
    %v7947 = vpack.c.b16 %v6235, %v6227
    %v7948 = vpack.c.b16 %v6236, %v6228
    %v7949 = vpack.c.b16 %v6237, %v6229
    %v7950 = vpack.c.b16 %v6238, %v6230
    %v7951 = vpack.c.b16 %v6239, %v6231
    %v7952 = vpack.c.b16 %v6240, %v6232
    %v7953 = vpack.c.b16 %v6249, %v6241
    %v7954 = vpack.c.b16 %v6250, %v6242
    %v7955 = vpack.c.b16 %v6251, %v6243
    %v7956 = vpack.c.b16 %v6252, %v6244
    %v7957 = vpack.c.b16 %v6253, %v6245
    %v7958 = vpack.c.b16 %v6254, %v6246
    %v7959 = vpack.c.b16 %v6255, %v6247
    %v7960 = vpack.c.b16 %v6256, %v6248
    %v7961 = vpack.c.b16 %v6265, %v6257
    %v7962 = vpack.c.b16 %v6266, %v6258
    %v7963 = vpack.c.b16 %v6267, %v6259
    %v7964 = vpack.c.b16 %v6268, %v6260
    %v7965 = vpack.c.b16 %v6269, %v6261
    %v7966 = vpack.c.b16 %v6270, %v6262
    %v7967 = vpack.c.b16 %v6271, %v6263
    %v7968 = vpack.c.b16 %v6272, %v6264
    %v7969 = vpack.c.b16 %v6281, %v6273
    %v7970 = vpack.c.b16 %v6282, %v6274
    %v7971 = vpack.c.b16 %v6283, %v6275
    %v7972 = vpack.c.b16 %v6284, %v6276
    %v7973 = vpack.c.b16 %v6285, %v6277
    %v7974 = vpack.c.b16 %v6286, %v6278
    %v7975 = vpack.c.b16 %v6287, %v6279
    %v7976 = vpack.c.b16 %v6288, %v6280
    %v7977 = vpack.c.b16 %v6297, %v6289
    %v7978 = vpack.c.b16 %v6298, %v6290
    %v7979 = vpack.c.b16 %v6299, %v6291
    %v7980 = vpack.c.b16 %v6300, %v6292
    %v7981 = vpack.c.b16 %v6301, %v6293
    %v7982 = vpack.c.b16 %v6302, %v6294
    %v7983 = vpack.c.b16 %v6303, %v6295
    %v7984 = vpack.c.b16 %v6304, %v6296
    %v7985 = vpack.c.b16 %v6313, %v6305
    %v7986 = vpack.c.b16 %v6314, %v6306
    %v7987 = vpack.c.b16 %v6315, %v6307
    %v7988 = vpack.c.b16 %v6316, %v6308
    %v7989 = vpack.c.b16 %v6317, %v6309
    %v7990 = vpack.c.b16 %v6318, %v6310
    %v7991 = vpack.c.b16 %v6319, %v6311
    %v7992 = vpack.c.b16 %v6320, %v6312
    %v7993 = vpack.c.b16 %v6329, %v6321
    %v7994 = vpack.c.b16 %v6330, %v6322
    %v7995 = vpack.c.b16 %v6331, %v6323
    %v7996 = vpack.c.b16 %v6332, %v6324
    %v7997 = vpack.c.b16 %v6333, %v6325
    %v7998 = vpack.c.b16 %v6334, %v6326
    %v7999 = vpack.c.b16 %v6335, %v6327
    %v8000 = vpack.c.b16 %v6336, %v6328
    %v8001 = vpack.c.b16 %v6345, %v6337
    %v8002 = vpack.c.b16 %v6346, %v6338
    %v8003 = vpack.c.b16 %v6347, %v6339
    %v8004 = vpack.c.b16 %v6348, %v6340
    %v8005 = vpack.c.b16 %v6349, %v6341
    %v8006 = vpack.c.b16 %v6350, %v6342
    %v8007 = vpack.c.b16 %v6351, %v6343
    %v8008 = vpack.c.b16 %v6352, %v6344
    %v8009 = vpack.c.b16 %v6361, %v6353
    %v8010 = vpack.c.b16 %v6362, %v6354
    %v8011 = vpack.c.b16 %v6363, %v6355
    %v8012 = vpack.c.b16 %v6364, %v6356
    %v8013 = vpack.c.b16 %v6365, %v6357
    %v8014 = vpack.c.b16 %v6366, %v6358
    %v8015 = vpack.c.b16 %v6367, %v6359
    %v8016 = vpack.c.b16 %v6368, %v6360
    %v8017 = vpack.c.b16 %v6377, %v6369
    %v8018 = vpack.c.b16 %v6378, %v6370
    %v8019 = vpack.c.b16 %v6379, %v6371
    %v8020 = vpack.c.b16 %v6380, %v6372
    %v8021 = vpack.c.b16 %v6381, %v6373
    %v8022 = vpack.c.b16 %v6382, %v6374
    %v8023 = vpack.c.b16 %v6383, %v6375
    %v8024 = vpack.c.b16 %v6384, %v6376
    %v8025 = vpack.c.b16 %v6393, %v6385
    %v8026 = vpack.c.b16 %v6394, %v6386
    %v8027 = vpack.c.b16 %v6395, %v6387
    %v8028 = vpack.c.b16 %v6396, %v6388
    %v8029 = vpack.c.b16 %v6397, %v6389
    %v8030 = vpack.c.b16 %v6398, %v6390
    %v8031 = vpack.c.b16 %v6399, %v6391
    %v8032 = vpack.c.b16 %v6400, %v6392
    %v8033 = vpack.c.b16 %v6409, %v6401
    %v8034 = vpack.c.b16 %v6410, %v6402
    %v8035 = vpack.c.b16 %v6411, %v6403
    %v8036 = vpack.c.b16 %v6412, %v6404
    %v8037 = vpack.c.b16 %v6413, %v6405
    %v8038 = vpack.c.b16 %v6414, %v6406
    %v8039 = vpack.c.b16 %v6415, %v6407
    %v8040 = vpack.c.b16 %v6416, %v6408
    %v8041 = vpack.c.b16 %v6425, %v6417
    %v8042 = vpack.c.b16 %v6426, %v6418
    %v8043 = vpack.c.b16 %v6427, %v6419
    %v8044 = vpack.c.b16 %v6428, %v6420
    %v8045 = vpack.c.b16 %v6429, %v6421
    %v8046 = vpack.c.b16 %v6430, %v6422
    %v8047 = vpack.c.b16 %v6431, %v6423
    %v8048 = vpack.c.b16 %v6432, %v6424
    %v8049 = vpack.c.b16 %v6441, %v6433
    %v8050 = vpack.c.b16 %v6442, %v6434
    %v8051 = vpack.c.b16 %v6443, %v6435
    %v8052 = vpack.c.b16 %v6444, %v6436
    %v8053 = vpack.c.b16 %v6445, %v6437
    %v8054 = vpack.c.b16 %v6446, %v6438
    %v8055 = vpack.c.b16 %v6447, %v6439
    %v8056 = vpack.c.b16 %v6448, %v6440
    %v8057 = vpack.c.b16 %v6457, %v6449
    %v8058 = vpack.c.b16 %v6458, %v6450
    %v8059 = vpack.c.b16 %v6459, %v6451
    %v8060 = vpack.c.b16 %v6460, %v6452
    %v8061 = vpack.c.b16 %v6461, %v6453
    %v8062 = vpack.c.b16 %v6462, %v6454
    %v8063 = vpack.c.b16 %v6463, %v6455
    %v8064 = vpack.c.b16 %v6464, %v6456
    %v8065 = vpack.c.b16 %v6473, %v6465
    %v8066 = vpack.c.b16 %v6474, %v6466
    %v8067 = vpack.c.b16 %v6475, %v6467
    %v8068 = vpack.c.b16 %v6476, %v6468
    %v8069 = vpack.c.b16 %v6477, %v6469
    %v8070 = vpack.c.b16 %v6478, %v6470
    %v8071 = vpack.c.b16 %v6479, %v6471
    %v8072 = vpack.c.b16 %v6480, %v6472
    %v8073 = vpack.c.b16 %v6489, %v6481
    %v8074 = vpack.c.b16 %v6490, %v6482
    %v8075 = vpack.c.b16 %v6491, %v6483
    %v8076 = vpack.c.b16 %v6492, %v6484
    %v8077 = vpack.c.b16 %v6493, %v6485
    %v8078 = vpack.c.b16 %v6494, %v6486
    %v8079 = vpack.c.b16 %v6495, %v6487
    %v8080 = vpack.c.b16 %v6496, %v6488
    %v8081 = vpack.c.b16 %v6505, %v6497
    %v8082 = vpack.c.b16 %v6506, %v6498
    %v8083 = vpack.c.b16 %v6507, %v6499
    %v8084 = vpack.c.b16 %v6508, %v6500
    %v8085 = vpack.c.b16 %v6509, %v6501
    %v8086 = vpack.c.b16 %v6510, %v6502
    %v8087 = vpack.c.b16 %v6511, %v6503
    %v8088 = vpack.c.b16 %v6512, %v6504
    %v8089 = vpack.c.b16 %v6521, %v6513
    %v8090 = vpack.c.b16 %v6522, %v6514
    %v8091 = vpack.c.b16 %v6523, %v6515
    %v8092 = vpack.c.b16 %v6524, %v6516
    %v8093 = vpack.c.b16 %v6525, %v6517
    %v8094 = vpack.c.b16 %v6526, %v6518
    %v8095 = vpack.c.b16 %v6527, %v6519
    %v8096 = vpack.c.b16 %v6528, %v6520
    %vm9665 = vcmask 523264
    %v9667 = vsel %vm9665, %v1800, 0
    %9669 = vmatprep.subr.bf16.mxu0 %v6530
    %9670 = vmatpush1.bf16.msra.mxu0 %v6529
    %9671 = vmatprep.subr.bf16.mxu0 %v6538
    %9672 = vmatpush1.bf16.msra.mxu0 %v6537
    %9673 = vmatprep.subr.bf16.mxu0 %v6546
    %9674 = vmatpush1.bf16.msra.mxu0 %v6545
    %9675 = vmatprep.subr.bf16.mxu0 %v6554
    %9676 = vmatpush1.bf16.msra.mxu0 %v6553
    %9677 = vmatprep.subr.bf16.mxu0 %v6562
    %9678 = vmatpush1.bf16.msra.mxu0 %v6561
    %9679 = vmatprep.subr.bf16.mxu0 %v6570
    %9680 = vmatpush1.bf16.msra.mxu0 %v6569
    %9681 = vmatprep.subr.bf16.mxu0 %v6578
    %9682 = vmatpush1.bf16.msra.mxu0 %v6577
    %9683 = vmatprep.subr.bf16.mxu0 %v6586
    %9684 = vmatpush1.bf16.msra.mxu0 %v6585
    %9685 = vmatprep.subr.bf16.mxu0 %v6594
    %9686 = vmatpush1.bf16.msra.mxu0 %v6593
    %9687 = vmatprep.subr.bf16.mxu0 %v6602
    %9688 = vmatpush1.bf16.msra.mxu0 %v6601
    %9689 = vmatprep.subr.bf16.mxu0 %v6610
    %9690 = vmatpush1.bf16.msra.mxu0 %v6609
    %9691 = vmatprep.subr.bf16.mxu0 %v6618
    %9692 = vmatpush1.bf16.msra.mxu0 %v6617
    %9693 = vmatprep.subr.bf16.mxu0 %v6626
    %9694 = vmatpush1.bf16.msra.mxu0 %v6625
    %9695 = vmatprep.subr.bf16.mxu0 %v6634
    %9696 = vmatpush1.bf16.msra.mxu0 %v6633
    %9697 = vmatprep.subr.bf16.mxu0 %v6642
    %9698 = vmatpush1.bf16.msra.mxu0 %v6641
    %9699 = vmatprep.subr.bf16.mxu0 %v6650
    %9700 = vmatpush1.bf16.msra.mxu0 %v6649
    %9701 = vmatprep.mubr.bf16.mxu0 %v1677
    %9702 = vmatmul.mubr.bf16.gmra.mrb[0].mxu0 %v1663
    %v9703 = vpop.f32.mrb[0].mxu0
    %v9704 = vadd.f32 %v1599, %v9703
    %v9705 = vpop.f32.mrb[0].mxu0
    %v9706 = vadd.f32 %v1603, %v9705
    %v9707 = vpop.f32.mrb[0].mxu0
    %v9708 = vpop.f32.mrb[0].mxu0
    %9709 = vdwg.mxu0
    %9710 = vmatprep.subr.bf16.mxu0 %v6658
    %9711 = vmatpush1.bf16.msra.mxu0 %v6657
    %9712 = vmatprep.subr.bf16.mxu0 %v6666
    %9713 = vmatpush1.bf16.msra.mxu0 %v6665
    %9714 = vmatprep.subr.bf16.mxu0 %v6674
    %9715 = vmatpush1.bf16.msra.mxu0 %v6673
    %9716 = vmatprep.subr.bf16.mxu0 %v6682
    %9717 = vmatpush1.bf16.msra.mxu0 %v6681
    %9718 = vmatprep.subr.bf16.mxu0 %v6690
    %9719 = vmatpush1.bf16.msra.mxu0 %v6689
    %9720 = vmatprep.subr.bf16.mxu0 %v6698
    %9721 = vmatpush1.bf16.msra.mxu0 %v6697
    %9722 = vmatprep.subr.bf16.mxu0 %v6706
    %9723 = vmatpush1.bf16.msra.mxu0 %v6705
    %9724 = vmatprep.subr.bf16.mxu0 %v6714
    %9725 = vmatpush1.bf16.msra.mxu0 %v6713
    %9726 = vmatprep.subr.bf16.mxu0 %v6722
    %9727 = vmatpush1.bf16.msra.mxu0 %v6721
    %9728 = vmatprep.subr.bf16.mxu0 %v6730
    %9729 = vmatpush1.bf16.msra.mxu0 %v6729
    %9730 = vmatprep.subr.bf16.mxu0 %v6738
    %9731 = vmatpush1.bf16.msra.mxu0 %v6737
    %9732 = vmatprep.subr.bf16.mxu0 %v6746
    %9733 = vmatpush1.bf16.msra.mxu0 %v6745
    %9734 = vmatprep.subr.bf16.mxu0 %v6754
    %9735 = vmatpush1.bf16.msra.mxu0 %v6753
    %9736 = vmatprep.subr.bf16.mxu0 %v6762
    %9737 = vmatpush1.bf16.msra.mxu0 %v6761
    %9738 = vmatprep.subr.bf16.mxu0 %v6770
    %9739 = vmatpush1.bf16.msra.mxu0 %v6769
    %9740 = vmatprep.subr.bf16.mxu0 %v6778
    %9741 = vmatpush1.bf16.msra.mxu0 %v6777
    %9742 = vmatprep.mubr.bf16.mxu0 %v1687
    %9743 = vmatmul.mubr.bf16.gmra.mrb[0].mxu0 %v1685
    %v9744 = vpop.f32.mrb[0].mxu0
    %v9745 = vadd.f32 %v9704, %v9744
    %v9746 = vpop.f32.mrb[0].mxu0
    %v9747 = vadd.f32 %v9706, %v9746
    %v9748 = vpop.f32.mrb[0].mxu0
    %v9749 = vpop.f32.mrb[0].mxu0
    %9750 = vdwg.mxu0
    %9751 = vmatprep.subr.bf16.mxu0 %v6786
    %9752 = vmatpush1.bf16.msra.mxu0 %v6785
    %9753 = vmatprep.subr.bf16.mxu0 %v6794
    %9754 = vmatpush1.bf16.msra.mxu0 %v6793
    %9755 = vmatprep.subr.bf16.mxu0 %v6802
    %9756 = vmatpush1.bf16.msra.mxu0 %v6801
    %9757 = vmatprep.subr.bf16.mxu0 %v6810
    %9758 = vmatpush1.bf16.msra.mxu0 %v6809
    %9759 = vmatprep.subr.bf16.mxu0 %v6818
    %9760 = vmatpush1.bf16.msra.mxu0 %v6817
    %9761 = vmatprep.subr.bf16.mxu0 %v6826
    %9762 = vmatpush1.bf16.msra.mxu0 %v6825
    %9763 = vmatprep.subr.bf16.mxu0 %v6834
    %9764 = vmatpush1.bf16.msra.mxu0 %v6833
    %9765 = vmatprep.subr.bf16.mxu0 %v6842
    %9766 = vmatpush1.bf16.msra.mxu0 %v6841
    %9767 = vmatprep.subr.bf16.mxu0 %v6850
    %9768 = vmatpush1.bf16.msra.mxu0 %v6849
    %9769 = vmatprep.subr.bf16.mxu0 %v6858
    %9770 = vmatpush1.bf16.msra.mxu0 %v6857
    %9771 = vmatprep.subr.bf16.mxu0 %v6866
    %9772 = vmatpush1.bf16.msra.mxu0 %v6865
    %9773 = vmatprep.subr.bf16.mxu0 %v6874
    %9774 = vmatpush1.bf16.msra.mxu0 %v6873
    %9775 = vmatprep.subr.bf16.mxu0 %v6882
    %9776 = vmatpush1.bf16.msra.mxu0 %v6881
    %9777 = vmatprep.subr.bf16.mxu0 %v6890
    %9778 = vmatpush1.bf16.msra.mxu0 %v6889
    %9779 = vmatprep.subr.bf16.mxu0 %v6898
    %9780 = vmatpush1.bf16.msra.mxu0 %v6897
    %9781 = vmatprep.subr.bf16.mxu0 %v6906
    %9782 = vmatpush1.bf16.msra.mxu0 %v6905
    %9783 = vmatprep.mubr.bf16.mxu0 %v1684
    %9784 = vmatmul.mubr.bf16.gmra.mrb[0].mxu0 %v1670
    %v9785 = vpop.f32.mrb[0].mxu0
    %v9786 = vadd.f32 %v9745, %v9785
    %v9787 = vpop.f32.mrb[0].mxu0
    %v9788 = vadd.f32 %v9747, %v9787
    %v9789 = vpop.f32.mrb[0].mxu0
    %v9790 = vpop.f32.mrb[0].mxu0
    %9791 = vdwg.mxu0
    %9792 = vmatprep.subr.bf16.mxu0 %v6914
    %9793 = vmatpush1.bf16.msra.mxu0 %v6913
    %9794 = vmatprep.subr.bf16.mxu0 %v6922
    %9795 = vmatpush1.bf16.msra.mxu0 %v6921
    %9796 = vmatprep.subr.bf16.mxu0 %v6930
    %9797 = vmatpush1.bf16.msra.mxu0 %v6929
    %9798 = vmatprep.subr.bf16.mxu0 %v6938
    %9799 = vmatpush1.bf16.msra.mxu0 %v6937
    %9800 = vmatprep.subr.bf16.mxu0 %v6946
    %9801 = vmatpush1.bf16.msra.mxu0 %v6945
    %9802 = vmatprep.subr.bf16.mxu0 %v6954
    %9803 = vmatpush1.bf16.msra.mxu0 %v6953
    %9804 = vmatprep.subr.bf16.mxu0 %v6962
    %9805 = vmatpush1.bf16.msra.mxu0 %v6961
    %9806 = vmatprep.subr.bf16.mxu0 %v6970
    %9807 = vmatpush1.bf16.msra.mxu0 %v6969
    %9808 = vmatprep.subr.bf16.mxu0 %v6978
    %9809 = vmatpush1.bf16.msra.mxu0 %v6977
    %9810 = vmatprep.subr.bf16.mxu0 %v6986
    %9811 = vmatpush1.bf16.msra.mxu0 %v6985
    %9812 = vmatprep.subr.bf16.mxu0 %v6994
    %9813 = vmatpush1.bf16.msra.mxu0 %v6993
    %9814 = vmatprep.subr.bf16.mxu0 %v7002
    %9815 = vmatpush1.bf16.msra.mxu0 %v7001
    %9816 = vmatprep.subr.bf16.mxu0 %v7010
    %9817 = vmatpush1.bf16.msra.mxu0 %v7009
    %9818 = vmatprep.subr.bf16.mxu0 %v7018
    %9819 = vmatpush1.bf16.msra.mxu0 %v7017
    %9820 = vmatprep.subr.bf16.mxu0 %v7026
    %9821 = vmatpush1.bf16.msra.mxu0 %v7025
    %9822 = vmatprep.subr.bf16.mxu0 %v7034
    %9823 = vmatpush1.bf16.msra.mxu0 %v7033
    %9824 = vmatprep.mubr.bf16.mxu0 %v1688
    %9825 = vmatmul.mubr.bf16.gmra.mrb[0].mxu0 %v1686
    %v9826 = vpop.f32.mrb[0].mxu0
    %v9827 = vadd.f32 %v9786, %v9826
    %v9828 = vpop.f32.mrb[0].mxu0
    %v9829 = vadd.f32 %v9788, %v9828
    %v9830 = vpop.f32.mrb[0].mxu0
    %v9831 = vpop.f32.mrb[0].mxu0
    %9832 = vdwg.mxu0
    %9833 = vmatprep.subr.bf16.mxu0 %v7042
    %9834 = vmatpush1.bf16.msra.mxu0 %v7041
    %9835 = vmatprep.subr.bf16.mxu0 %v7050
    %9836 = vmatpush1.bf16.msra.mxu0 %v7049
    %9837 = vmatprep.subr.bf16.mxu0 %v7058
    %9838 = vmatpush1.bf16.msra.mxu0 %v7057
    %9839 = vmatprep.subr.bf16.mxu0 %v7066
    %9840 = vmatpush1.bf16.msra.mxu0 %v7065
    %9841 = vmatprep.subr.bf16.mxu0 %v7074
    %9842 = vmatpush1.bf16.msra.mxu0 %v7073
    %9843 = vmatprep.subr.bf16.mxu0 %v7082
    %9844 = vmatpush1.bf16.msra.mxu0 %v7081
    %9845 = vmatprep.subr.bf16.mxu0 %v7090
    %9846 = vmatpush1.bf16.msra.mxu0 %v7089
    %9847 = vmatprep.subr.bf16.mxu0 %v7098
    %9848 = vmatpush1.bf16.msra.mxu0 %v7097
    %9849 = vmatprep.subr.bf16.mxu0 %v7106
    %9850 = vmatpush1.bf16.msra.mxu0 %v7105
    %9851 = vmatprep.subr.bf16.mxu0 %v7114
    %9852 = vmatpush1.bf16.msra.mxu0 %v7113
    %9853 = vmatprep.subr.bf16.mxu0 %v7122
    %9854 = vmatpush1.bf16.msra.mxu0 %v7121
    %9855 = vmatprep.subr.bf16.mxu0 %v7130
    %9856 = vmatpush1.bf16.msra.mxu0 %v7129
    %9857 = vmatprep.subr.bf16.mxu0 %v7138
    %9858 = vmatpush1.bf16.msra.mxu0 %v7137
    %9859 = vmatprep.subr.bf16.mxu0 %v7146
    %9860 = vmatpush1.bf16.msra.mxu0 %v7145
    %9861 = vmatprep.subr.bf16.mxu0 %v7154
    %9862 = vmatpush1.bf16.msra.mxu0 %v7153
    %9863 = vmatprep.subr.bf16.mxu0 %v7162
    %9864 = vmatpush1.bf16.msra.mxu0 %v7161
    %9865 = vmatprep.mubr.bf16.mxu0 %v1726
    %9866 = vmatmul.mubr.bf16.gmra.mrb[0].mxu0 %v1712
    %v9867 = vpop.f32.mrb[0].mxu0
    %v9868 = vadd.f32 %v9827, %v9867
    %v9869 = vpop.f32.mrb[0].mxu0
    %v9870 = vadd.f32 %v9829, %v9869
    %v9871 = vpop.f32.mrb[0].mxu0
    %v9872 = vpop.f32.mrb[0].mxu0
    %9873 = vdwg.mxu0
    %9874 = vmatprep.subr.bf16.mxu0 %v7170
    %9875 = vmatpush1.bf16.msra.mxu0 %v7169
    %9876 = vmatprep.subr.bf16.mxu0 %v7178
    %9877 = vmatpush1.bf16.msra.mxu0 %v7177
    %9878 = vmatprep.subr.bf16.mxu0 %v7186
    %9879 = vmatpush1.bf16.msra.mxu0 %v7185
    %9880 = vmatprep.subr.bf16.mxu0 %v7194
    %9881 = vmatpush1.bf16.msra.mxu0 %v7193
    %9882 = vmatprep.subr.bf16.mxu0 %v7202
    %9883 = vmatpush1.bf16.msra.mxu0 %v7201
    %9884 = vmatprep.subr.bf16.mxu0 %v7210
    %9885 = vmatpush1.bf16.msra.mxu0 %v7209
    %9886 = vmatprep.subr.bf16.mxu0 %v7218
    %9887 = vmatpush1.bf16.msra.mxu0 %v7217
    %9888 = vmatprep.subr.bf16.mxu0 %v7226
    %9889 = vmatpush1.bf16.msra.mxu0 %v7225
    %9890 = vmatprep.subr.bf16.mxu0 %v7234
    %9891 = vmatpush1.bf16.msra.mxu0 %v7233
    %9892 = vmatprep.subr.bf16.mxu0 %v7242
    %9893 = vmatpush1.bf16.msra.mxu0 %v7241
    %9894 = vmatprep.subr.bf16.mxu0 %v7250
    %9895 = vmatpush1.bf16.msra.mxu0 %v7249
    %9896 = vmatprep.subr.bf16.mxu0 %v7258
    %9897 = vmatpush1.bf16.msra.mxu0 %v7257
    %9898 = vmatprep.subr.bf16.mxu0 %v7266
    %9899 = vmatpush1.bf16.msra.mxu0 %v7265
    %9900 = vmatprep.subr.bf16.mxu0 %v7274
    %9901 = vmatpush1.bf16.msra.mxu0 %v7273
    %9902 = vmatprep.subr.bf16.mxu0 %v7282
    %9903 = vmatpush1.bf16.msra.mxu0 %v7281
    %9904 = vmatprep.subr.bf16.mxu0 %v7290
    %9905 = vmatpush1.bf16.msra.mxu0 %v7289
    %9906 = vmatprep.mubr.bf16.mxu0 %v1736
    %9907 = vmatmul.mubr.bf16.gmra.mrb[0].mxu0 %v1734
    %v9908 = vpop.f32.mrb[0].mxu0
    %v9909 = vadd.f32 %v9868, %v9908
    %v9910 = vpop.f32.mrb[0].mxu0
    %v9911 = vadd.f32 %v9870, %v9910
    %v9912 = vpop.f32.mrb[0].mxu0
    %v9913 = vpop.f32.mrb[0].mxu0
    %9914 = vdwg.mxu0
    %9915 = vmatprep.subr.bf16.mxu0 %v7298
    %9916 = vmatpush1.bf16.msra.mxu0 %v7297
    %9917 = vmatprep.subr.bf16.mxu0 %v7306
    %9918 = vmatpush1.bf16.msra.mxu0 %v7305
    %9919 = vmatprep.subr.bf16.mxu0 %v7314
    %9920 = vmatpush1.bf16.msra.mxu0 %v7313
    %9921 = vmatprep.subr.bf16.mxu0 %v7322
    %9922 = vmatpush1.bf16.msra.mxu0 %v7321
    %9923 = vmatprep.subr.bf16.mxu0 %v7330
    %9924 = vmatpush1.bf16.msra.mxu0 %v7329
    %9925 = vmatprep.subr.bf16.mxu0 %v7338
    %9926 = vmatpush1.bf16.msra.mxu0 %v7337
    %9927 = vmatprep.subr.bf16.mxu0 %v7346
    %9928 = vmatpush1.bf16.msra.mxu0 %v7345
    %9929 = vmatprep.subr.bf16.mxu0 %v7354
    %9930 = vmatpush1.bf16.msra.mxu0 %v7353
    %9931 = vmatprep.subr.bf16.mxu0 %v7362
    %9932 = vmatpush1.bf16.msra.mxu0 %v7361
    %9933 = vmatprep.subr.bf16.mxu0 %v7370
    %9934 = vmatpush1.bf16.msra.mxu0 %v7369
    %9935 = vmatprep.subr.bf16.mxu0 %v7378
    %9936 = vmatpush1.bf16.msra.mxu0 %v7377
    %9937 = vmatprep.subr.bf16.mxu0 %v7386
    %9938 = vmatpush1.bf16.msra.mxu0 %v7385
    %9939 = vmatprep.subr.bf16.mxu0 %v7394
    %9940 = vmatpush1.bf16.msra.mxu0 %v7393
    %9941 = vmatprep.subr.bf16.mxu0 %v7402
    %9942 = vmatpush1.bf16.msra.mxu0 %v7401
    %9943 = vmatprep.subr.bf16.mxu0 %v7410
    %9944 = vmatpush1.bf16.msra.mxu0 %v7409
    %9945 = vmatprep.subr.bf16.mxu0 %v7418
    %9946 = vmatpush1.bf16.msra.mxu0 %v7417
    %9947 = vmatprep.mubr.bf16.mxu0 %v1733
    %9948 = vmatmul.mubr.bf16.gmra.mrb[0].mxu0 %v1719
    %v9949 = vpop.f32.mrb[0].mxu0
    %v9950 = vadd.f32 %v9909, %v9949
    %v9951 = vpop.f32.mrb[0].mxu0
    %v9952 = vadd.f32 %v9911, %v9951
    %v9953 = vpop.f32.mrb[0].mxu0
    %v9954 = vpop.f32.mrb[0].mxu0
    %9955 = vdwg.mxu0
    %9956 = vmatprep.subr.bf16.mxu0 %v7426
    %9957 = vmatpush1.bf16.msra.mxu0 %v7425
    %9958 = vmatprep.subr.bf16.mxu0 %v7434
    %9959 = vmatpush1.bf16.msra.mxu0 %v7433
    %9960 = vmatprep.subr.bf16.mxu0 %v7442
    %9961 = vmatpush1.bf16.msra.mxu0 %v7441
    %9962 = vmatprep.subr.bf16.mxu0 %v7450
    %9963 = vmatpush1.bf16.msra.mxu0 %v7449
    %9964 = vmatprep.subr.bf16.mxu0 %v7458
    %9965 = vmatpush1.bf16.msra.mxu0 %v7457
    %9966 = vmatprep.subr.bf16.mxu0 %v7466
    %9967 = vmatpush1.bf16.msra.mxu0 %v7465
    %9968 = vmatprep.subr.bf16.mxu0 %v7474
    %9969 = vmatpush1.bf16.msra.mxu0 %v7473
    %9970 = vmatprep.subr.bf16.mxu0 %v7482
    %9971 = vmatpush1.bf16.msra.mxu0 %v7481
    %9972 = vmatprep.subr.bf16.mxu0 %v7490
    %9973 = vmatpush1.bf16.msra.mxu0 %v7489
    %9974 = vmatprep.subr.bf16.mxu0 %v7498
    %9975 = vmatpush1.bf16.msra.mxu0 %v7497
    %9976 = vmatprep.subr.bf16.mxu0 %v7506
    %9977 = vmatpush1.bf16.msra.mxu0 %v7505
    %9978 = vmatprep.subr.bf16.mxu0 %v7514
    %9979 = vmatpush1.bf16.msra.mxu0 %v7513
    %9980 = vmatprep.subr.bf16.mxu0 %v7522
    %9981 = vmatpush1.bf16.msra.mxu0 %v7521
    %9982 = vmatprep.subr.bf16.mxu0 %v7530
    %9983 = vmatpush1.bf16.msra.mxu0 %v7529
    %9984 = vmatprep.subr.bf16.mxu0 %v7538
    %9985 = vmatpush1.bf16.msra.mxu0 %v7537
    %9986 = vmatprep.subr.bf16.mxu0 %v7546
    %9987 = vmatpush1.bf16.msra.mxu0 %v7545
    %9988 = vmatprep.mubr.bf16.mxu0 %v1737
    %9989 = vmatmul.mubr.bf16.gmra.mrb[0].mxu0 %v1735
    %v9990 = vpop.f32.mrb[0].mxu0
    %v9991 = vadd.f32 %v9950, %v9990
    %v9992 = vpop.f32.mrb[0].mxu0
    %v9993 = vadd.f32 %v9952, %v9992
    %v9994 = vpop.f32.mrb[0].mxu0
    %v9995 = vpop.f32.mrb[0].mxu0
    %9996 = vdwg.mxu0
    %9997 = vmatprep.subr.bf16.mxu0 %v7554
    %9998 = vmatpush1.bf16.msra.mxu0 %v7553
    %9999 = vmatprep.subr.bf16.mxu0 %v7562
    %10000 = vmatpush1.bf16.msra.mxu0 %v7561
    %10001 = vmatprep.subr.bf16.mxu0 %v7570
    %10002 = vmatpush1.bf16.msra.mxu0 %v7569
    %10003 = vmatprep.subr.bf16.mxu0 %v7578
    %10004 = vmatpush1.bf16.msra.mxu0 %v7577
    %10005 = vmatprep.subr.bf16.mxu0 %v7586
    %10006 = vmatpush1.bf16.msra.mxu0 %v7585
    %10007 = vmatprep.subr.bf16.mxu0 %v7594
    %10008 = vmatpush1.bf16.msra.mxu0 %v7593
    %10009 = vmatprep.subr.bf16.mxu0 %v7602
    %10010 = vmatpush1.bf16.msra.mxu0 %v7601
    %10011 = vmatprep.subr.bf16.mxu0 %v7610
    %10012 = vmatpush1.bf16.msra.mxu0 %v7609
    %10013 = vmatprep.subr.bf16.mxu0 %v7618
    %10014 = vmatpush1.bf16.msra.mxu0 %v7617
    %10015 = vmatprep.subr.bf16.mxu0 %v7626
    %10016 = vmatpush1.bf16.msra.mxu0 %v7625
    %10017 = vmatprep.subr.bf16.mxu0 %v7634
    %10018 = vmatpush1.bf16.msra.mxu0 %v7633
    %10019 = vmatprep.subr.bf16.mxu0 %v7642
    %10020 = vmatpush1.bf16.msra.mxu0 %v7641
    %10021 = vmatprep.subr.bf16.mxu0 %v7650
    %10022 = vmatpush1.bf16.msra.mxu0 %v7649
    %10023 = vmatprep.subr.bf16.mxu0 %v7658
    %10024 = vmatpush1.bf16.msra.mxu0 %v7657
    %10025 = vmatprep.subr.bf16.mxu0 %v7666
    %10026 = vmatpush1.bf16.msra.mxu0 %v7665
    %10027 = vmatprep.subr.bf16.mxu0 %v7674
    %10028 = vmatpush1.bf16.msra.mxu0 %v7673
    %10029 = vmatprep.mubr.bf16.mxu0 %v1775
    %10030 = vmatmul.mubr.bf16.gmra.mrb[0].mxu0 %v1761
    %v10031 = vpop.f32.mrb[0].mxu0
    %v10032 = vadd.f32 %v9991, %v10031
    %v10033 = vpop.f32.mrb[0].mxu0
    %v10034 = vadd.f32 %v9993, %v10033
    %v10035 = vpop.f32.mrb[0].mxu0
    %v10036 = vpop.f32.mrb[0].mxu0
    %10037 = vdwg.mxu0
    %10038 = vmatprep.subr.bf16.mxu0 %v7682
    %10039 = vmatpush1.bf16.msra.mxu0 %v7681
    %10040 = vmatprep.subr.bf16.mxu0 %v7690
    %10041 = vmatpush1.bf16.msra.mxu0 %v7689
    %10042 = vmatprep.subr.bf16.mxu0 %v7698
    %10043 = vmatpush1.bf16.msra.mxu0 %v7697
    %10044 = vmatprep.subr.bf16.mxu0 %v7706
    %10045 = vmatpush1.bf16.msra.mxu0 %v7705
    %10046 = vmatprep.subr.bf16.mxu0 %v7714
    %10047 = vmatpush1.bf16.msra.mxu0 %v7713
    %10048 = vmatprep.subr.bf16.mxu0 %v7722
    %10049 = vmatpush1.bf16.msra.mxu0 %v7721
    %10050 = vmatprep.subr.bf16.mxu0 %v7730
    %10051 = vmatpush1.bf16.msra.mxu0 %v7729
    %10052 = vmatprep.subr.bf16.mxu0 %v7738
    %10053 = vmatpush1.bf16.msra.mxu0 %v7737
    %10054 = vmatprep.subr.bf16.mxu0 %v7746
    %10055 = vmatpush1.bf16.msra.mxu0 %v7745
    %10056 = vmatprep.subr.bf16.mxu0 %v7754
    %10057 = vmatpush1.bf16.msra.mxu0 %v7753
    %10058 = vmatprep.subr.bf16.mxu0 %v7762
    %10059 = vmatpush1.bf16.msra.mxu0 %v7761
    %10060 = vmatprep.subr.bf16.mxu0 %v7770
    %10061 = vmatpush1.bf16.msra.mxu0 %v7769
    %10062 = vmatprep.subr.bf16.mxu0 %v7778
    %10063 = vmatpush1.bf16.msra.mxu0 %v7777
    %10064 = vmatprep.subr.bf16.mxu0 %v7786
    %10065 = vmatpush1.bf16.msra.mxu0 %v7785
    %10066 = vmatprep.subr.bf16.mxu0 %v7794
    %10067 = vmatpush1.bf16.msra.mxu0 %v7793
    %10068 = vmatprep.subr.bf16.mxu0 %v7802
    %10069 = vmatpush1.bf16.msra.mxu0 %v7801
    %10070 = vmatprep.mubr.bf16.mxu0 %v1785
    %10071 = vmatmul.mubr.bf16.gmra.mrb[0].mxu0 %v1783
    %v10072 = vpop.f32.mrb[0].mxu0
    %v10073 = vadd.f32 %v10032, %v10072
    %v10074 = vpop.f32.mrb[0].mxu0
    %v10075 = vadd.f32 %v10034, %v10074
    %v10076 = vpop.f32.mrb[0].mxu0
    %v10077 = vpop.f32.mrb[0].mxu0
    %10078 = vdwg.mxu0
    %10079 = vmatprep.subr.bf16.mxu0 %v7810
    %10080 = vmatpush1.bf16.msra.mxu0 %v7809
    %10081 = vmatprep.subr.bf16.mxu0 %v7818
    %10082 = vmatpush1.bf16.msra.mxu0 %v7817
    %10083 = vmatprep.subr.bf16.mxu0 %v7826
    %10084 = vmatpush1.bf16.msra.mxu0 %v7825
    %10085 = vmatprep.subr.bf16.mxu0 %v7834
    %10086 = vmatpush1.bf16.msra.mxu0 %v7833
    %10087 = vmatprep.subr.bf16.mxu0 %v7842
    %10088 = vmatpush1.bf16.msra.mxu0 %v7841
    %10089 = vmatprep.subr.bf16.mxu0 %v7850
    %10090 = vmatpush1.bf16.msra.mxu0 %v7849
    %10091 = vmatprep.subr.bf16.mxu0 %v7858
    %10092 = vmatpush1.bf16.msra.mxu0 %v7857
    %10093 = vmatprep.subr.bf16.mxu0 %v7866
    %10094 = vmatpush1.bf16.msra.mxu0 %v7865
    %10095 = vmatprep.subr.bf16.mxu0 %v7874
    %10096 = vmatpush1.bf16.msra.mxu0 %v7873
    %10097 = vmatprep.subr.bf16.mxu0 %v7882
    %10098 = vmatpush1.bf16.msra.mxu0 %v7881
    %10099 = vmatprep.subr.bf16.mxu0 %v7890
    %10100 = vmatpush1.bf16.msra.mxu0 %v7889
    %10101 = vmatprep.subr.bf16.mxu0 %v7898
    %10102 = vmatpush1.bf16.msra.mxu0 %v7897
    %10103 = vmatprep.subr.bf16.mxu0 %v7906
    %10104 = vmatpush1.bf16.msra.mxu0 %v7905
    %10105 = vmatprep.subr.bf16.mxu0 %v7914
    %10106 = vmatpush1.bf16.msra.mxu0 %v7913
    %10107 = vmatprep.subr.bf16.mxu0 %v7922
    %10108 = vmatpush1.bf16.msra.mxu0 %v7921
    %10109 = vmatprep.subr.bf16.mxu0 %v7930
    %10110 = vmatpush1.bf16.msra.mxu0 %v7929
    %10111 = vmatprep.mubr.bf16.mxu0 %v1782
    %10112 = vmatmul.mubr.bf16.gmra.mrb[0].mxu0 %v1768
    %v10113 = vpop.f32.mrb[0].mxu0
    %v10114 = vadd.f32 %v10073, %v10113
    %v10115 = vpop.f32.mrb[0].mxu0
    %v10116 = vadd.f32 %v10075, %v10115
    %v10117 = vpop.f32.mrb[0].mxu0
    %v10118 = vpop.f32.mrb[0].mxu0
    %10119 = vdwg.mxu0
    %10120 = vmatprep.subr.bf16.mxu0 %v7938
    %10121 = vmatpush1.bf16.msra.mxu0 %v7937
    %10122 = vmatprep.subr.bf16.mxu0 %v7946
    %10123 = vmatpush1.bf16.msra.mxu0 %v7945
    %10124 = vmatprep.subr.bf16.mxu0 %v7954
    %10125 = vmatpush1.bf16.msra.mxu0 %v7953
    %10126 = vmatprep.subr.bf16.mxu0 %v7962
    %10127 = vmatpush1.bf16.msra.mxu0 %v7961
    %10128 = vmatprep.subr.bf16.mxu0 %v7970
    %10129 = vmatpush1.bf16.msra.mxu0 %v7969
    %10130 = vmatprep.subr.bf16.mxu0 %v7978
    %10131 = vmatpush1.bf16.msra.mxu0 %v7977
    %10132 = vmatprep.subr.bf16.mxu0 %v7986
    %10133 = vmatpush1.bf16.msra.mxu0 %v7985
    %10134 = vmatprep.subr.bf16.mxu0 %v7994
    %10135 = vmatpush1.bf16.msra.mxu0 %v7993
    %10136 = vmatprep.subr.bf16.mxu0 %v8002
    %10137 = vmatpush1.bf16.msra.mxu0 %v8001
    %10138 = vmatprep.subr.bf16.mxu0 %v8010
    %10139 = vmatpush1.bf16.msra.mxu0 %v8009
    %10140 = vmatprep.subr.bf16.mxu0 %v8018
    %10141 = vmatpush1.bf16.msra.mxu0 %v8017
    %10142 = vmatprep.subr.bf16.mxu0 %v8026
    %10143 = vmatpush1.bf16.msra.mxu0 %v8025
    %10144 = vmatprep.subr.bf16.mxu0 %v8034
    %10145 = vmatpush1.bf16.msra.mxu0 %v8033
    %10146 = vmatprep.subr.bf16.mxu0 %v8042
    %10147 = vmatpush1.bf16.msra.mxu0 %v8041
    %10148 = vmatprep.subr.bf16.mxu0 %v8050
    %10149 = vmatpush1.bf16.msra.mxu0 %v8049
    %10150 = vmatprep.subr.bf16.mxu0 %v8058
    %10151 = vmatpush1.bf16.msra.mxu0 %v8057
    %10152 = vmatprep.mubr.bf16.mxu0 %v1786
    %10153 = vmatmul.mubr.bf16.gmra.mrb[0].mxu0 %v1784
    %v10154 = vpop.f32.mrb[0].mxu0
    %v10155 = vadd.f32 %v10114, %v10154
    %v10156 = vpop.f32.mrb[0].mxu0
    %v10157 = vadd.f32 %v10116, %v10156
    %v10158 = vpop.f32.mrb[0].mxu0
    %v10159 = vpop.f32.mrb[0].mxu0
    %10160 = vdwg.mxu0
    %10161 = vmatprep.subr.bf16.mxu0 %v8066
    %10162 = vmatpush1.bf16.msra.mxu0 %v8065
    %10163 = vmatprep.subr.bf16.mxu0 %v8074
    %10164 = vmatpush1.bf16.msra.mxu0 %v8073
    %10165 = vmatprep.subr.bf16.mxu0 %v8082
    %10166 = vmatpush1.bf16.msra.mxu0 %v8081
    %10167 = vmatprep.subr.bf16.mxu0 %v8090
    %10168 = vmatpush1.bf16.msra.mxu0 %v8089
    %10169 = vmatprep.subr.bf16.mxu0 0
    %10170 = vmatpush1.bf16.msra.mxu0 0
    %10171 = vmatprep.subr.bf16.mxu0 0
    %10172 = vmatpush1.bf16.msra.mxu0 0
    %10173 = vmatprep.subr.bf16.mxu0 0
    %10174 = vmatpush1.bf16.msra.mxu0 0
    %10175 = vmatprep.subr.bf16.mxu0 0
    %10176 = vmatpush1.bf16.msra.mxu0 0
    %10177 = vmatprep.subr.bf16.mxu0 0
    %10178 = vmatpush1.bf16.msra.mxu0 0
    %10179 = vmatprep.subr.bf16.mxu0 0
    %10180 = vmatpush1.bf16.msra.mxu0 0
    %10181 = vmatprep.subr.bf16.mxu0 0
    %10182 = vmatpush1.bf16.msra.mxu0 0
    %10183 = vmatprep.subr.bf16.mxu0 0
    %10184 = vmatpush1.bf16.msra.mxu0 0
    %10185 = vmatprep.subr.bf16.mxu0 0
    %10186 = vmatpush1.bf16.msra.mxu0 0
    %10187 = vmatprep.subr.bf16.mxu0 0
    %10188 = vmatpush1.bf16.msra.mxu0 0
    %10189 = vmatprep.subr.bf16.mxu0 0
    %10190 = vmatpush1.bf16.msra.mxu0 0
    %10191 = vmatprep.subr.bf16.mxu0 0
    %10192 = vmatpush1.bf16.msra.mxu0 0
    %10193 = vmatprep.mubr.bf16.mxu0 0
    %10194 = vmatmul.mubr.bf16.gmra.mrb[0].mxu0 %v9667
    %v10195 = vpop.f32.mrb[0].mxu0
    %v10196 = vadd.f32 %v10155, %v10195
    %v10197 = vpop.f32.mrb[0].mxu0
    %v10198 = vadd.f32 %v10157, %v10197
    %v10199 = vpop.f32.mrb[0].mxu0
    %v10200 = vpop.f32.mrb[0].mxu0
    %10201 = vdwg.mxu0
    %10202 = vmatprep.subr.bf16.mxu0 %v6532
    %10203 = vmatpush1.bf16.msra.mxu0 %v6531
    %10204 = vmatprep.subr.bf16.mxu0 %v6540
    %10205 = vmatpush1.bf16.msra.mxu0 %v6539
    %10206 = vmatprep.subr.bf16.mxu0 %v6548
    %10207 = vmatpush1.bf16.msra.mxu0 %v6547
    %10208 = vmatprep.subr.bf16.mxu0 %v6556
    %10209 = vmatpush1.bf16.msra.mxu0 %v6555
    %10210 = vmatprep.subr.bf16.mxu0 %v6564
    %10211 = vmatpush1.bf16.msra.mxu0 %v6563
    %10212 = vmatprep.subr.bf16.mxu0 %v6572
    %10213 = vmatpush1.bf16.msra.mxu0 %v6571
    %10214 = vmatprep.subr.bf16.mxu0 %v6580
    %10215 = vmatpush1.bf16.msra.mxu0 %v6579
    %10216 = vmatprep.subr.bf16.mxu0 %v6588
    %10217 = vmatpush1.bf16.msra.mxu0 %v6587
    %10218 = vmatprep.subr.bf16.mxu0 %v6596
    %10219 = vmatpush1.bf16.msra.mxu0 %v6595
    %10220 = vmatprep.subr.bf16.mxu0 %v6604
    %10221 = vmatpush1.bf16.msra.mxu0 %v6603
    %10222 = vmatprep.subr.bf16.mxu0 %v6612
    %10223 = vmatpush1.bf16.msra.mxu0 %v6611
    %10224 = vmatprep.subr.bf16.mxu0 %v6620
    %10225 = vmatpush1.bf16.msra.mxu0 %v6619
    %10226 = vmatprep.subr.bf16.mxu0 %v6628
    %10227 = vmatpush1.bf16.msra.mxu0 %v6627
    %10228 = vmatprep.subr.bf16.mxu0 %v6636
    %10229 = vmatpush1.bf16.msra.mxu0 %v6635
    %10230 = vmatprep.subr.bf16.mxu0 %v6644
    %10231 = vmatpush1.bf16.msra.mxu0 %v6643
    %10232 = vmatprep.subr.bf16.mxu0 %v6652
    %10233 = vmatpush1.bf16.msra.mxu0 %v6651
    %10234 = vmatprep.mubr.bf16.mxu0 %v1677
    %10235 = vmatmul.mubr.bf16.gmra.mrb[0].mxu0 %v1663
    %v10236 = vpop.f32.mrb[0].mxu0
    %v10237 = vadd.f32 %v1607, %v10236
    %v10238 = vpop.f32.mrb[0].mxu0
    %v10239 = vadd.f32 %v1611, %v10238
    %v10240 = vpop.f32.mrb[0].mxu0
    %v10241 = vpop.f32.mrb[0].mxu0
    %10242 = vdwg.mxu0
    %10243 = vmatprep.subr.bf16.mxu0 %v6660
    %10244 = vmatpush1.bf16.msra.mxu0 %v6659
    %10245 = vmatprep.subr.bf16.mxu0 %v6668
    %10246 = vmatpush1.bf16.msra.mxu0 %v6667
    %10247 = vmatprep.subr.bf16.mxu0 %v6676
    %10248 = vmatpush1.bf16.msra.mxu0 %v6675
    %10249 = vmatprep.subr.bf16.mxu0 %v6684
    %10250 = vmatpush1.bf16.msra.mxu0 %v6683
    %10251 = vmatprep.subr.bf16.mxu0 %v6692
    %10252 = vmatpush1.bf16.msra.mxu0 %v6691
    %10253 = vmatprep.subr.bf16.mxu0 %v6700
    %10254 = vmatpush1.bf16.msra.mxu0 %v6699
    %10255 = vmatprep.subr.bf16.mxu0 %v6708
    %10256 = vmatpush1.bf16.msra.mxu0 %v6707
    %10257 = vmatprep.subr.bf16.mxu0 %v6716
    %10258 = vmatpush1.bf16.msra.mxu0 %v6715
    %10259 = vmatprep.subr.bf16.mxu0 %v6724
    %10260 = vmatpush1.bf16.msra.mxu0 %v6723
    %10261 = vmatprep.subr.bf16.mxu0 %v6732
    %10262 = vmatpush1.bf16.msra.mxu0 %v6731
    %10263 = vmatprep.subr.bf16.mxu0 %v6740
    %10264 = vmatpush1.bf16.msra.mxu0 %v6739
    %10265 = vmatprep.subr.bf16.mxu0 %v6748
    %10266 = vmatpush1.bf16.msra.mxu0 %v6747
    %10267 = vmatprep.subr.bf16.mxu0 %v6756
    %10268 = vmatpush1.bf16.msra.mxu0 %v6755
    %10269 = vmatprep.subr.bf16.mxu0 %v6764
    %10270 = vmatpush1.bf16.msra.mxu0 %v6763
    %10271 = vmatprep.subr.bf16.mxu0 %v6772
    %10272 = vmatpush1.bf16.msra.mxu0 %v6771
    %10273 = vmatprep.subr.bf16.mxu0 %v6780
    %10274 = vmatpush1.bf16.msra.mxu0 %v6779
    %10275 = vmatprep.mubr.bf16.mxu0 %v1687
    %10276 = vmatmul.mubr.bf16.gmra.mrb[0].mxu0 %v1685
    %v10277 = vpop.f32.mrb[0].mxu0
    %v10278 = vadd.f32 %v10237, %v10277
    %v10279 = vpop.f32.mrb[0].mxu0
    %v10280 = vadd.f32 %v10239, %v10279
    %v10281 = vpop.f32.mrb[0].mxu0
    %v10282 = vpop.f32.mrb[0].mxu0
    %10283 = vdwg.mxu0
    %10284 = vmatprep.subr.bf16.mxu0 %v6788
    %10285 = vmatpush1.bf16.msra.mxu0 %v6787
    %10286 = vmatprep.subr.bf16.mxu0 %v6796
    %10287 = vmatpush1.bf16.msra.mxu0 %v6795
    %10288 = vmatprep.subr.bf16.mxu0 %v6804
    %10289 = vmatpush1.bf16.msra.mxu0 %v6803
    %10290 = vmatprep.subr.bf16.mxu0 %v6812
    %10291 = vmatpush1.bf16.msra.mxu0 %v6811
    %10292 = vmatprep.subr.bf16.mxu0 %v6820
    %10293 = vmatpush1.bf16.msra.mxu0 %v6819
    %10294 = vmatprep.subr.bf16.mxu0 %v6828
    %10295 = vmatpush1.bf16.msra.mxu0 %v6827
    %10296 = vmatprep.subr.bf16.mxu0 %v6836
    %10297 = vmatpush1.bf16.msra.mxu0 %v6835
    %10298 = vmatprep.subr.bf16.mxu0 %v6844
    %10299 = vmatpush1.bf16.msra.mxu0 %v6843
    %10300 = vmatprep.subr.bf16.mxu0 %v6852
    %10301 = vmatpush1.bf16.msra.mxu0 %v6851
    %10302 = vmatprep.subr.bf16.mxu0 %v6860
    %10303 = vmatpush1.bf16.msra.mxu0 %v6859
    %10304 = vmatprep.subr.bf16.mxu0 %v6868
    %10305 = vmatpush1.bf16.msra.mxu0 %v6867
    %10306 = vmatprep.subr.bf16.mxu0 %v6876
    %10307 = vmatpush1.bf16.msra.mxu0 %v6875
    %10308 = vmatprep.subr.bf16.mxu0 %v6884
    %10309 = vmatpush1.bf16.msra.mxu0 %v6883
    %10310 = vmatprep.subr.bf16.mxu0 %v6892
    %10311 = vmatpush1.bf16.msra.mxu0 %v6891
    %10312 = vmatprep.subr.bf16.mxu0 %v6900
    %10313 = vmatpush1.bf16.msra.mxu0 %v6899
    %10314 = vmatprep.subr.bf16.mxu0 %v6908
    %10315 = vmatpush1.bf16.msra.mxu0 %v6907
    %10316 = vmatprep.mubr.bf16.mxu0 %v1684
    %10317 = vmatmul.mubr.bf16.gmra.mrb[0].mxu0 %v1670
    %v10318 = vpop.f32.mrb[0].mxu0
    %v10319 = vadd.f32 %v10278, %v10318
    %v10320 = vpop.f32.mrb[0].mxu0
    %v10321 = vadd.f32 %v10280, %v10320
    %v10322 = vpop.f32.mrb[0].mxu0
    %v10323 = vpop.f32.mrb[0].mxu0
    %10324 = vdwg.mxu0
    %10325 = vmatprep.subr.bf16.mxu0 %v6916
    %10326 = vmatpush1.bf16.msra.mxu0 %v6915
    %10327 = vmatprep.subr.bf16.mxu0 %v6924
    %10328 = vmatpush1.bf16.msra.mxu0 %v6923
    %10329 = vmatprep.subr.bf16.mxu0 %v6932
    %10330 = vmatpush1.bf16.msra.mxu0 %v6931
    %10331 = vmatprep.subr.bf16.mxu0 %v6940
    %10332 = vmatpush1.bf16.msra.mxu0 %v6939
    %10333 = vmatprep.subr.bf16.mxu0 %v6948
    %10334 = vmatpush1.bf16.msra.mxu0 %v6947
    %10335 = vmatprep.subr.bf16.mxu0 %v6956
    %10336 = vmatpush1.bf16.msra.mxu0 %v6955
    %10337 = vmatprep.subr.bf16.mxu0 %v6964
    %10338 = vmatpush1.bf16.msra.mxu0 %v6963
    %10339 = vmatprep.subr.bf16.mxu0 %v6972
    %10340 = vmatpush1.bf16.msra.mxu0 %v6971
    %10341 = vmatprep.subr.bf16.mxu0 %v6980
    %10342 = vmatpush1.bf16.msra.mxu0 %v6979
    %10343 = vmatprep.subr.bf16.mxu0 %v6988
    %10344 = vmatpush1.bf16.msra.mxu0 %v6987
    %10345 = vmatprep.subr.bf16.mxu0 %v6996
    %10346 = vmatpush1.bf16.msra.mxu0 %v6995
    %10347 = vmatprep.subr.bf16.mxu0 %v7004
    %10348 = vmatpush1.bf16.msra.mxu0 %v7003
    %10349 = vmatprep.subr.bf16.mxu0 %v7012
    %10350 = vmatpush1.bf16.msra.mxu0 %v7011
    %10351 = vmatprep.subr.bf16.mxu0 %v7020
    %10352 = vmatpush1.bf16.msra.mxu0 %v7019
    %10353 = vmatprep.subr.bf16.mxu0 %v7028
    %10354 = vmatpush1.bf16.msra.mxu0 %v7027
    %10355 = vmatprep.subr.bf16.mxu0 %v7036
    %10356 = vmatpush1.bf16.msra.mxu0 %v7035
    %10357 = vmatprep.mubr.bf16.mxu0 %v1688
    %10358 = vmatmul.mubr.bf16.gmra.mrb[0].mxu0 %v1686
    %v10359 = vpop.f32.mrb[0].mxu0
    %v10360 = vadd.f32 %v10319, %v10359
    %v10361 = vpop.f32.mrb[0].mxu0
    %v10362 = vadd.f32 %v10321, %v10361
    %v10363 = vpop.f32.mrb[0].mxu0
    %v10364 = vpop.f32.mrb[0].mxu0
    %10365 = vdwg.mxu0
    %10366 = vmatprep.subr.bf16.mxu0 %v7044
    %10367 = vmatpush1.bf16.msra.mxu0 %v7043
    %10368 = vmatprep.subr.bf16.mxu0 %v7052
    %10369 = vmatpush1.bf16.msra.mxu0 %v7051
    %10370 = vmatprep.subr.bf16.mxu0 %v7060
    %10371 = vmatpush1.bf16.msra.mxu0 %v7059
    %10372 = vmatprep.subr.bf16.mxu0 %v7068
    %10373 = vmatpush1.bf16.msra.mxu0 %v7067
    %10374 = vmatprep.subr.bf16.mxu0 %v7076
    %10375 = vmatpush1.bf16.msra.mxu0 %v7075
    %10376 = vmatprep.subr.bf16.mxu0 %v7084
    %10377 = vmatpush1.bf16.msra.mxu0 %v7083
    %10378 = vmatprep.subr.bf16.mxu0 %v7092
    %10379 = vmatpush1.bf16.msra.mxu0 %v7091
    %10380 = vmatprep.subr.bf16.mxu0 %v7100
    %10381 = vmatpush1.bf16.msra.mxu0 %v7099
    %10382 = vmatprep.subr.bf16.mxu0 %v7108
    %10383 = vmatpush1.bf16.msra.mxu0 %v7107
    %10384 = vmatprep.subr.bf16.mxu0 %v7116
    %10385 = vmatpush1.bf16.msra.mxu0 %v7115
    %10386 = vmatprep.subr.bf16.mxu0 %v7124
    %10387 = vmatpush1.bf16.msra.mxu0 %v7123
    %10388 = vmatprep.subr.bf16.mxu0 %v7132
    %10389 = vmatpush1.bf16.msra.mxu0 %v7131
    %10390 = vmatprep.subr.bf16.mxu0 %v7140
    %10391 = vmatpush1.bf16.msra.mxu0 %v7139
    %10392 = vmatprep.subr.bf16.mxu0 %v7148
    %10393 = vmatpush1.bf16.msra.mxu0 %v7147
    %10394 = vmatprep.subr.bf16.mxu0 %v7156
    %10395 = vmatpush1.bf16.msra.mxu0 %v7155
    %10396 = vmatprep.subr.bf16.mxu0 %v7164
    %10397 = vmatpush1.bf16.msra.mxu0 %v7163
    %10398 = vmatprep.mubr.bf16.mxu0 %v1726
    %10399 = vmatmul.mubr.bf16.gmra.mrb[0].mxu0 %v1712
    %v10400 = vpop.f32.mrb[0].mxu0
    %v10401 = vadd.f32 %v10360, %v10400
    %v10402 = vpop.f32.mrb[0].mxu0
    %v10403 = vadd.f32 %v10362, %v10402
    %v10404 = vpop.f32.mrb[0].mxu0
    %v10405 = vpop.f32.mrb[0].mxu0
    %10406 = vdwg.mxu0
    %10407 = vmatprep.subr.bf16.mxu0 %v7172
    %10408 = vmatpush1.bf16.msra.mxu0 %v7171
    %10409 = vmatprep.subr.bf16.mxu0 %v7180
    %10410 = vmatpush1.bf16.msra.mxu0 %v7179
    %10411 = vmatprep.subr.bf16.mxu0 %v7188
    %10412 = vmatpush1.bf16.msra.mxu0 %v7187
    %10413 = vmatprep.subr.bf16.mxu0 %v7196
    %10414 = vmatpush1.bf16.msra.mxu0 %v7195
    %10415 = vmatprep.subr.bf16.mxu0 %v7204
    %10416 = vmatpush1.bf16.msra.mxu0 %v7203
    %10417 = vmatprep.subr.bf16.mxu0 %v7212
    %10418 = vmatpush1.bf16.msra.mxu0 %v7211
    %10419 = vmatprep.subr.bf16.mxu0 %v7220
    %10420 = vmatpush1.bf16.msra.mxu0 %v7219
    %10421 = vmatprep.subr.bf16.mxu0 %v7228
    %10422 = vmatpush1.bf16.msra.mxu0 %v7227
    %10423 = vmatprep.subr.bf16.mxu0 %v7236
    %10424 = vmatpush1.bf16.msra.mxu0 %v7235
    %10425 = vmatprep.subr.bf16.mxu0 %v7244
    %10426 = vmatpush1.bf16.msra.mxu0 %v7243
    %10427 = vmatprep.subr.bf16.mxu0 %v7252
    %10428 = vmatpush1.bf16.msra.mxu0 %v7251
    %10429 = vmatprep.subr.bf16.mxu0 %v7260
    %10430 = vmatpush1.bf16.msra.mxu0 %v7259
    %10431 = vmatprep.subr.bf16.mxu0 %v7268
    %10432 = vmatpush1.bf16.msra.mxu0 %v7267
    %10433 = vmatprep.subr.bf16.mxu0 %v7276
    %10434 = vmatpush1.bf16.msra.mxu0 %v7275
    %10435 = vmatprep.subr.bf16.mxu0 %v7284
    %10436 = vmatpush1.bf16.msra.mxu0 %v7283
    %10437 = vmatprep.subr.bf16.mxu0 %v7292
    %10438 = vmatpush1.bf16.msra.mxu0 %v7291
    %10439 = vmatprep.mubr.bf16.mxu0 %v1736
    %10440 = vmatmul.mubr.bf16.gmra.mrb[0].mxu0 %v1734
    %v10441 = vpop.f32.mrb[0].mxu0
    %v10442 = vadd.f32 %v10401, %v10441
    %v10443 = vpop.f32.mrb[0].mxu0
    %v10444 = vadd.f32 %v10403, %v10443
    %v10445 = vpop.f32.mrb[0].mxu0
    %v10446 = vpop.f32.mrb[0].mxu0
    %10447 = vdwg.mxu0
    %10448 = vmatprep.subr.bf16.mxu0 %v7300
    %10449 = vmatpush1.bf16.msra.mxu0 %v7299
    %10450 = vmatprep.subr.bf16.mxu0 %v7308
    %10451 = vmatpush1.bf16.msra.mxu0 %v7307
    %10452 = vmatprep.subr.bf16.mxu0 %v7316
    %10453 = vmatpush1.bf16.msra.mxu0 %v7315
    %10454 = vmatprep.subr.bf16.mxu0 %v7324
    %10455 = vmatpush1.bf16.msra.mxu0 %v7323
    %10456 = vmatprep.subr.bf16.mxu0 %v7332
    %10457 = vmatpush1.bf16.msra.mxu0 %v7331
    %10458 = vmatprep.subr.bf16.mxu0 %v7340
    %10459 = vmatpush1.bf16.msra.mxu0 %v7339
    %10460 = vmatprep.subr.bf16.mxu0 %v7348
    %10461 = vmatpush1.bf16.msra.mxu0 %v7347
    %10462 = vmatprep.subr.bf16.mxu0 %v7356
    %10463 = vmatpush1.bf16.msra.mxu0 %v7355
    %10464 = vmatprep.subr.bf16.mxu0 %v7364
    %10465 = vmatpush1.bf16.msra.mxu0 %v7363
    %10466 = vmatprep.subr.bf16.mxu0 %v7372
    %10467 = vmatpush1.bf16.msra.mxu0 %v7371
    %10468 = vmatprep.subr.bf16.mxu0 %v7380
    %10469 = vmatpush1.bf16.msra.mxu0 %v7379
    %10470 = vmatprep.subr.bf16.mxu0 %v7388
    %10471 = vmatpush1.bf16.msra.mxu0 %v7387
    %10472 = vmatprep.subr.bf16.mxu0 %v7396
    %10473 = vmatpush1.bf16.msra.mxu0 %v7395
    %10474 = vmatprep.subr.bf16.mxu0 %v7404
    %10475 = vmatpush1.bf16.msra.mxu0 %v7403
    %10476 = vmatprep.subr.bf16.mxu0 %v7412
    %10477 = vmatpush1.bf16.msra.mxu0 %v7411
    %10478 = vmatprep.subr.bf16.mxu0 %v7420
    %10479 = vmatpush1.bf16.msra.mxu0 %v7419
    %10480 = vmatprep.mubr.bf16.mxu0 %v1733
    %10481 = vmatmul.mubr.bf16.gmra.mrb[0].mxu0 %v1719
    %v10482 = vpop.f32.mrb[0].mxu0
    %v10483 = vadd.f32 %v10442, %v10482
    %v10484 = vpop.f32.mrb[0].mxu0
    %v10485 = vadd.f32 %v10444, %v10484
    %v10486 = vpop.f32.mrb[0].mxu0
    %v10487 = vpop.f32.mrb[0].mxu0
    %10488 = vdwg.mxu0
    %10489 = vmatprep.subr.bf16.mxu0 %v7428
    %10490 = vmatpush1.bf16.msra.mxu0 %v7427
    %10491 = vmatprep.subr.bf16.mxu0 %v7436
    %10492 = vmatpush1.bf16.msra.mxu0 %v7435
    %10493 = vmatprep.subr.bf16.mxu0 %v7444
    %10494 = vmatpush1.bf16.msra.mxu0 %v7443
    %10495 = vmatprep.subr.bf16.mxu0 %v7452
    %10496 = vmatpush1.bf16.msra.mxu0 %v7451
    %10497 = vmatprep.subr.bf16.mxu0 %v7460
    %10498 = vmatpush1.bf16.msra.mxu0 %v7459
    %10499 = vmatprep.subr.bf16.mxu0 %v7468
    %10500 = vmatpush1.bf16.msra.mxu0 %v7467
    %10501 = vmatprep.subr.bf16.mxu0 %v7476
    %10502 = vmatpush1.bf16.msra.mxu0 %v7475
    %10503 = vmatprep.subr.bf16.mxu0 %v7484
    %10504 = vmatpush1.bf16.msra.mxu0 %v7483
    %10505 = vmatprep.subr.bf16.mxu0 %v7492
    %10506 = vmatpush1.bf16.msra.mxu0 %v7491
    %10507 = vmatprep.subr.bf16.mxu0 %v7500
    %10508 = vmatpush1.bf16.msra.mxu0 %v7499
    %10509 = vmatprep.subr.bf16.mxu0 %v7508
    %10510 = vmatpush1.bf16.msra.mxu0 %v7507
    %10511 = vmatprep.subr.bf16.mxu0 %v7516
    %10512 = vmatpush1.bf16.msra.mxu0 %v7515
    %10513 = vmatprep.subr.bf16.mxu0 %v7524
    %10514 = vmatpush1.bf16.msra.mxu0 %v7523
    %10515 = vmatprep.subr.bf16.mxu0 %v7532
    %10516 = vmatpush1.bf16.msra.mxu0 %v7531
    %10517 = vmatprep.subr.bf16.mxu0 %v7540
    %10518 = vmatpush1.bf16.msra.mxu0 %v7539
    %10519 = vmatprep.subr.bf16.mxu0 %v7548
    %10520 = vmatpush1.bf16.msra.mxu0 %v7547
    %10521 = vmatprep.mubr.bf16.mxu0 %v1737
    %10522 = vmatmul.mubr.bf16.gmra.mrb[0].mxu0 %v1735
    %v10523 = vpop.f32.mrb[0].mxu0
    %v10524 = vadd.f32 %v10483, %v10523
    %v10525 = vpop.f32.mrb[0].mxu0
    %v10526 = vadd.f32 %v10485, %v10525
    %v10527 = vpop.f32.mrb[0].mxu0
    %v10528 = vpop.f32.mrb[0].mxu0
    %10529 = vdwg.mxu0
    %10530 = vmatprep.subr.bf16.mxu0 %v7556
    %10531 = vmatpush1.bf16.msra.mxu0 %v7555
    %10532 = vmatprep.subr.bf16.mxu0 %v7564
    %10533 = vmatpush1.bf16.msra.mxu0 %v7563
    %10534 = vmatprep.subr.bf16.mxu0 %v7572
    %10535 = vmatpush1.bf16.msra.mxu0 %v7571
    %10536 = vmatprep.subr.bf16.mxu0 %v7580
    %10537 = vmatpush1.bf16.msra.mxu0 %v7579
    %10538 = vmatprep.subr.bf16.mxu0 %v7588
    %10539 = vmatpush1.bf16.msra.mxu0 %v7587
    %10540 = vmatprep.subr.bf16.mxu0 %v7596
    %10541 = vmatpush1.bf16.msra.mxu0 %v7595
    %10542 = vmatprep.subr.bf16.mxu0 %v7604
    %10543 = vmatpush1.bf16.msra.mxu0 %v7603
    %10544 = vmatprep.subr.bf16.mxu0 %v7612
    %10545 = vmatpush1.bf16.msra.mxu0 %v7611
    %10546 = vmatprep.subr.bf16.mxu0 %v7620
    %10547 = vmatpush1.bf16.msra.mxu0 %v7619
    %10548 = vmatprep.subr.bf16.mxu0 %v7628
    %10549 = vmatpush1.bf16.msra.mxu0 %v7627
    %10550 = vmatprep.subr.bf16.mxu0 %v7636
    %10551 = vmatpush1.bf16.msra.mxu0 %v7635
    %10552 = vmatprep.subr.bf16.mxu0 %v7644
    %10553 = vmatpush1.bf16.msra.mxu0 %v7643
    %10554 = vmatprep.subr.bf16.mxu0 %v7652
    %10555 = vmatpush1.bf16.msra.mxu0 %v7651
    %10556 = vmatprep.subr.bf16.mxu0 %v7660
    %10557 = vmatpush1.bf16.msra.mxu0 %v7659
    %10558 = vmatprep.subr.bf16.mxu0 %v7668
    %10559 = vmatpush1.bf16.msra.mxu0 %v7667
    %10560 = vmatprep.subr.bf16.mxu0 %v7676
    %10561 = vmatpush1.bf16.msra.mxu0 %v7675
    %10562 = vmatprep.mubr.bf16.mxu0 %v1775
    %10563 = vmatmul.mubr.bf16.gmra.mrb[0].mxu0 %v1761
    %v10564 = vpop.f32.mrb[0].mxu0
    %v10565 = vadd.f32 %v10524, %v10564
    %v10566 = vpop.f32.mrb[0].mxu0
    %v10567 = vadd.f32 %v10526, %v10566
    %v10568 = vpop.f32.mrb[0].mxu0
    %v10569 = vpop.f32.mrb[0].mxu0
    %10570 = vdwg.mxu0
    %10571 = vmatprep.subr.bf16.mxu0 %v7684
    %10572 = vmatpush1.bf16.msra.mxu0 %v7683
    %10573 = vmatprep.subr.bf16.mxu0 %v7692
    %10574 = vmatpush1.bf16.msra.mxu0 %v7691
    %10575 = vmatprep.subr.bf16.mxu0 %v7700
    %10576 = vmatpush1.bf16.msra.mxu0 %v7699
    %10577 = vmatprep.subr.bf16.mxu0 %v7708
    %10578 = vmatpush1.bf16.msra.mxu0 %v7707
    %10579 = vmatprep.subr.bf16.mxu0 %v7716
    %10580 = vmatpush1.bf16.msra.mxu0 %v7715
    %10581 = vmatprep.subr.bf16.mxu0 %v7724
    %10582 = vmatpush1.bf16.msra.mxu0 %v7723
    %10583 = vmatprep.subr.bf16.mxu0 %v7732
    %10584 = vmatpush1.bf16.msra.mxu0 %v7731
    %10585 = vmatprep.subr.bf16.mxu0 %v7740
    %10586 = vmatpush1.bf16.msra.mxu0 %v7739
    %10587 = vmatprep.subr.bf16.mxu0 %v7748
    %10588 = vmatpush1.bf16.msra.mxu0 %v7747
    %10589 = vmatprep.subr.bf16.mxu0 %v7756
    %10590 = vmatpush1.bf16.msra.mxu0 %v7755
    %10591 = vmatprep.subr.bf16.mxu0 %v7764
    %10592 = vmatpush1.bf16.msra.mxu0 %v7763
    %10593 = vmatprep.subr.bf16.mxu0 %v7772
    %10594 = vmatpush1.bf16.msra.mxu0 %v7771
    %10595 = vmatprep.subr.bf16.mxu0 %v7780
    %10596 = vmatpush1.bf16.msra.mxu0 %v7779
    %10597 = vmatprep.subr.bf16.mxu0 %v7788
    %10598 = vmatpush1.bf16.msra.mxu0 %v7787
    %10599 = vmatprep.subr.bf16.mxu0 %v7796
    %10600 = vmatpush1.bf16.msra.mxu0 %v7795
    %10601 = vmatprep.subr.bf16.mxu0 %v7804
    %10602 = vmatpush1.bf16.msra.mxu0 %v7803
    %10603 = vmatprep.mubr.bf16.mxu0 %v1785
    %10604 = vmatmul.mubr.bf16.gmra.mrb[0].mxu0 %v1783
    %v10605 = vpop.f32.mrb[0].mxu0
    %v10606 = vadd.f32 %v10565, %v10605
    %v10607 = vpop.f32.mrb[0].mxu0
    %v10608 = vadd.f32 %v10567, %v10607
    %v10609 = vpop.f32.mrb[0].mxu0
    %v10610 = vpop.f32.mrb[0].mxu0
    %10611 = vdwg.mxu0
    %10612 = vmatprep.subr.bf16.mxu0 %v7812
    %10613 = vmatpush1.bf16.msra.mxu0 %v7811
    %10614 = vmatprep.subr.bf16.mxu0 %v7820
    %10615 = vmatpush1.bf16.msra.mxu0 %v7819
    %10616 = vmatprep.subr.bf16.mxu0 %v7828
    %10617 = vmatpush1.bf16.msra.mxu0 %v7827
    %10618 = vmatprep.subr.bf16.mxu0 %v7836
    %10619 = vmatpush1.bf16.msra.mxu0 %v7835
    %10620 = vmatprep.subr.bf16.mxu0 %v7844
    %10621 = vmatpush1.bf16.msra.mxu0 %v7843
    %10622 = vmatprep.subr.bf16.mxu0 %v7852
    %10623 = vmatpush1.bf16.msra.mxu0 %v7851
    %10624 = vmatprep.subr.bf16.mxu0 %v7860
    %10625 = vmatpush1.bf16.msra.mxu0 %v7859
    %10626 = vmatprep.subr.bf16.mxu0 %v7868
    %10627 = vmatpush1.bf16.msra.mxu0 %v7867
    %10628 = vmatprep.subr.bf16.mxu0 %v7876
    %10629 = vmatpush1.bf16.msra.mxu0 %v7875
    %10630 = vmatprep.subr.bf16.mxu0 %v7884
    %10631 = vmatpush1.bf16.msra.mxu0 %v7883
    %10632 = vmatprep.subr.bf16.mxu0 %v7892
    %10633 = vmatpush1.bf16.msra.mxu0 %v7891
    %10634 = vmatprep.subr.bf16.mxu0 %v7900
    %10635 = vmatpush1.bf16.msra.mxu0 %v7899
    %10636 = vmatprep.subr.bf16.mxu0 %v7908
    %10637 = vmatpush1.bf16.msra.mxu0 %v7907
    %10638 = vmatprep.subr.bf16.mxu0 %v7916
    %10639 = vmatpush1.bf16.msra.mxu0 %v7915
    %10640 = vmatprep.subr.bf16.mxu0 %v7924
    %10641 = vmatpush1.bf16.msra.mxu0 %v7923
    %10642 = vmatprep.subr.bf16.mxu0 %v7932
    %10643 = vmatpush1.bf16.msra.mxu0 %v7931
    %10644 = vmatprep.mubr.bf16.mxu0 %v1782
    %10645 = vmatmul.mubr.bf16.gmra.mrb[0].mxu0 %v1768
    %v10646 = vpop.f32.mrb[0].mxu0
    %v10647 = vadd.f32 %v10606, %v10646
    %v10648 = vpop.f32.mrb[0].mxu0
    %v10649 = vadd.f32 %v10608, %v10648
    %v10650 = vpop.f32.mrb[0].mxu0
    %v10651 = vpop.f32.mrb[0].mxu0
    %10652 = vdwg.mxu0
    %10653 = vmatprep.subr.bf16.mxu0 %v7940
    %10654 = vmatpush1.bf16.msra.mxu0 %v7939
    %10655 = vmatprep.subr.bf16.mxu0 %v7948
    %10656 = vmatpush1.bf16.msra.mxu0 %v7947
    %10657 = vmatprep.subr.bf16.mxu0 %v7956
    %10658 = vmatpush1.bf16.msra.mxu0 %v7955
    %10659 = vmatprep.subr.bf16.mxu0 %v7964
    %10660 = vmatpush1.bf16.msra.mxu0 %v7963
    %10661 = vmatprep.subr.bf16.mxu0 %v7972
    %10662 = vmatpush1.bf16.msra.mxu0 %v7971
    %10663 = vmatprep.subr.bf16.mxu0 %v7980
    %10664 = vmatpush1.bf16.msra.mxu0 %v7979
    %10665 = vmatprep.subr.bf16.mxu0 %v7988
    %10666 = vmatpush1.bf16.msra.mxu0 %v7987
    %10667 = vmatprep.subr.bf16.mxu0 %v7996
    %10668 = vmatpush1.bf16.msra.mxu0 %v7995
    %10669 = vmatprep.subr.bf16.mxu0 %v8004
    %10670 = vmatpush1.bf16.msra.mxu0 %v8003
    %10671 = vmatprep.subr.bf16.mxu0 %v8012
    %10672 = vmatpush1.bf16.msra.mxu0 %v8011
    %10673 = vmatprep.subr.bf16.mxu0 %v8020
    %10674 = vmatpush1.bf16.msra.mxu0 %v8019
    %10675 = vmatprep.subr.bf16.mxu0 %v8028
    %10676 = vmatpush1.bf16.msra.mxu0 %v8027
    %10677 = vmatprep.subr.bf16.mxu0 %v8036
    %10678 = vmatpush1.bf16.msra.mxu0 %v8035
    %10679 = vmatprep.subr.bf16.mxu0 %v8044
    %10680 = vmatpush1.bf16.msra.mxu0 %v8043
    %10681 = vmatprep.subr.bf16.mxu0 %v8052
    %10682 = vmatpush1.bf16.msra.mxu0 %v8051
    %10683 = vmatprep.subr.bf16.mxu0 %v8060
    %10684 = vmatpush1.bf16.msra.mxu0 %v8059
    %10685 = vmatprep.mubr.bf16.mxu0 %v1786
    %10686 = vmatmul.mubr.bf16.gmra.mrb[0].mxu0 %v1784
    %v10687 = vpop.f32.mrb[0].mxu0
    %v10688 = vadd.f32 %v10647, %v10687
    %v10689 = vpop.f32.mrb[0].mxu0
    %v10690 = vadd.f32 %v10649, %v10689
    %v10691 = vpop.f32.mrb[0].mxu0
    %v10692 = vpop.f32.mrb[0].mxu0
    %10693 = vdwg.mxu0
    %10694 = vmatprep.subr.bf16.mxu0 %v8068
    %10695 = vmatpush1.bf16.msra.mxu0 %v8067
    %10696 = vmatprep.subr.bf16.mxu0 %v8076
    %10697 = vmatpush1.bf16.msra.mxu0 %v8075
    %10698 = vmatprep.subr.bf16.mxu0 %v8084
    %10699 = vmatpush1.bf16.msra.mxu0 %v8083
    %10700 = vmatprep.subr.bf16.mxu0 %v8092
    %10701 = vmatpush1.bf16.msra.mxu0 %v8091
    %10702 = vmatprep.subr.bf16.mxu0 0
    %10703 = vmatpush1.bf16.msra.mxu0 0
    %10704 = vmatprep.subr.bf16.mxu0 0
    %10705 = vmatpush1.bf16.msra.mxu0 0
    %10706 = vmatprep.subr.bf16.mxu0 0
    %10707 = vmatpush1.bf16.msra.mxu0 0
    %10708 = vmatprep.subr.bf16.mxu0 0
    %10709 = vmatpush1.bf16.msra.mxu0 0
    %10710 = vmatprep.subr.bf16.mxu0 0
    %10711 = vmatpush1.bf16.msra.mxu0 0
    %10712 = vmatprep.subr.bf16.mxu0 0
    %10713 = vmatpush1.bf16.msra.mxu0 0
    %10714 = vmatprep.subr.bf16.mxu0 0
    %10715 = vmatpush1.bf16.msra.mxu0 0
    %10716 = vmatprep.subr.bf16.mxu0 0
    %10717 = vmatpush1.bf16.msra.mxu0 0
    %10718 = vmatprep.subr.bf16.mxu0 0
    %10719 = vmatpush1.bf16.msra.mxu0 0
    %10720 = vmatprep.subr.bf16.mxu0 0
    %10721 = vmatpush1.bf16.msra.mxu0 0
    %10722 = vmatprep.subr.bf16.mxu0 0
    %10723 = vmatpush1.bf16.msra.mxu0 0
    %10724 = vmatprep.subr.bf16.mxu0 0
    %10725 = vmatpush1.bf16.msra.mxu0 0
    %10726 = vmatprep.mubr.bf16.mxu0 0
    %10727 = vmatmul.mubr.bf16.gmra.mrb[0].mxu0 %v9667
    %v10728 = vpop.f32.mrb[0].mxu0
    %v10729 = vadd.f32 %v10688, %v10728
    %v10730 = vpop.f32.mrb[0].mxu0
    %v10731 = vadd.f32 %v10690, %v10730
    %v10732 = vpop.f32.mrb[0].mxu0
    %v10733 = vpop.f32.mrb[0].mxu0
    %10734 = vdwg.mxu0
    %10735 = vmatprep.subr.bf16.mxu0 %v6534
    %10736 = vmatpush1.bf16.msra.mxu0 %v6533
    %10737 = vmatprep.subr.bf16.mxu0 %v6542
    %10738 = vmatpush1.bf16.msra.mxu0 %v6541
    %10739 = vmatprep.subr.bf16.mxu0 %v6550
    %10740 = vmatpush1.bf16.msra.mxu0 %v6549
    %10741 = vmatprep.subr.bf16.mxu0 %v6558
    %10742 = vmatpush1.bf16.msra.mxu0 %v6557
    %10743 = vmatprep.subr.bf16.mxu0 %v6566
    %10744 = vmatpush1.bf16.msra.mxu0 %v6565
    %10745 = vmatprep.subr.bf16.mxu0 %v6574
    %10746 = vmatpush1.bf16.msra.mxu0 %v6573
    %10747 = vmatprep.subr.bf16.mxu0 %v6582
    %10748 = vmatpush1.bf16.msra.mxu0 %v6581
    %10749 = vmatprep.subr.bf16.mxu0 %v6590
    %10750 = vmatpush1.bf16.msra.mxu0 %v6589
    %10751 = vmatprep.subr.bf16.mxu0 %v6598
    %10752 = vmatpush1.bf16.msra.mxu0 %v6597
    %10753 = vmatprep.subr.bf16.mxu0 %v6606
    %10754 = vmatpush1.bf16.msra.mxu0 %v6605
    %10755 = vmatprep.subr.bf16.mxu0 %v6614
    %10756 = vmatpush1.bf16.msra.mxu0 %v6613
    %10757 = vmatprep.subr.bf16.mxu0 %v6622
    %10758 = vmatpush1.bf16.msra.mxu0 %v6621
    %10759 = vmatprep.subr.bf16.mxu0 %v6630
    %10760 = vmatpush1.bf16.msra.mxu0 %v6629
    %10761 = vmatprep.subr.bf16.mxu0 %v6638
    %10762 = vmatpush1.bf16.msra.mxu0 %v6637
    %10763 = vmatprep.subr.bf16.mxu0 %v6646
    %10764 = vmatpush1.bf16.msra.mxu0 %v6645
    %10765 = vmatprep.subr.bf16.mxu0 %v6654
    %10766 = vmatpush1.bf16.msra.mxu0 %v6653
    %10767 = vmatprep.mubr.bf16.mxu0 %v1677
    %10768 = vmatmul.mubr.bf16.gmra.mrb[0].mxu0 %v1663
    %v10769 = vpop.f32.mrb[0].mxu0
    %v10770 = vadd.f32 %v1615, %v10769
    %v10771 = vpop.f32.mrb[0].mxu0
    %v10772 = vadd.f32 %v1619, %v10771
    %v10773 = vpop.f32.mrb[0].mxu0
    %v10774 = vpop.f32.mrb[0].mxu0
    %10775 = vdwg.mxu0
    %10776 = vmatprep.subr.bf16.mxu0 %v6662
    %10777 = vmatpush1.bf16.msra.mxu0 %v6661
    %10778 = vmatprep.subr.bf16.mxu0 %v6670
    %10779 = vmatpush1.bf16.msra.mxu0 %v6669
    %10780 = vmatprep.subr.bf16.mxu0 %v6678
    %10781 = vmatpush1.bf16.msra.mxu0 %v6677
    %10782 = vmatprep.subr.bf16.mxu0 %v6686
    %10783 = vmatpush1.bf16.msra.mxu0 %v6685
    %10784 = vmatprep.subr.bf16.mxu0 %v6694
    %10785 = vmatpush1.bf16.msra.mxu0 %v6693
    %10786 = vmatprep.subr.bf16.mxu0 %v6702
    %10787 = vmatpush1.bf16.msra.mxu0 %v6701
    %10788 = vmatprep.subr.bf16.mxu0 %v6710
    %10789 = vmatpush1.bf16.msra.mxu0 %v6709
    %10790 = vmatprep.subr.bf16.mxu0 %v6718
    %10791 = vmatpush1.bf16.msra.mxu0 %v6717
    %10792 = vmatprep.subr.bf16.mxu0 %v6726
    %10793 = vmatpush1.bf16.msra.mxu0 %v6725
    %10794 = vmatprep.subr.bf16.mxu0 %v6734
    %10795 = vmatpush1.bf16.msra.mxu0 %v6733
    %10796 = vmatprep.subr.bf16.mxu0 %v6742
    %10797 = vmatpush1.bf16.msra.mxu0 %v6741
    %10798 = vmatprep.subr.bf16.mxu0 %v6750
    %10799 = vmatpush1.bf16.msra.mxu0 %v6749
    %10800 = vmatprep.subr.bf16.mxu0 %v6758
    %10801 = vmatpush1.bf16.msra.mxu0 %v6757
    %10802 = vmatprep.subr.bf16.mxu0 %v6766
    %10803 = vmatpush1.bf16.msra.mxu0 %v6765
    %10804 = vmatprep.subr.bf16.mxu0 %v6774
    %10805 = vmatpush1.bf16.msra.mxu0 %v6773
    %10806 = vmatprep.subr.bf16.mxu0 %v6782
    %10807 = vmatpush1.bf16.msra.mxu0 %v6781
    %10808 = vmatprep.mubr.bf16.mxu0 %v1687
    %10809 = vmatmul.mubr.bf16.gmra.mrb[0].mxu0 %v1685
    %v10810 = vpop.f32.mrb[0].mxu0
    %v10811 = vadd.f32 %v10770, %v10810
    %v10812 = vpop.f32.mrb[0].mxu0
    %v10813 = vadd.f32 %v10772, %v10812
    %v10814 = vpop.f32.mrb[0].mxu0
    %v10815 = vpop.f32.mrb[0].mxu0
    %10816 = vdwg.mxu0
    %10817 = vmatprep.subr.bf16.mxu0 %v6790
    %10818 = vmatpush1.bf16.msra.mxu0 %v6789
    %10819 = vmatprep.subr.bf16.mxu0 %v6798
    %10820 = vmatpush1.bf16.msra.mxu0 %v6797
    %10821 = vmatprep.subr.bf16.mxu0 %v6806
    %10822 = vmatpush1.bf16.msra.mxu0 %v6805
    %10823 = vmatprep.subr.bf16.mxu0 %v6814
    %10824 = vmatpush1.bf16.msra.mxu0 %v6813
    %10825 = vmatprep.subr.bf16.mxu0 %v6822
    %10826 = vmatpush1.bf16.msra.mxu0 %v6821
    %10827 = vmatprep.subr.bf16.mxu0 %v6830
    %10828 = vmatpush1.bf16.msra.mxu0 %v6829
    %10829 = vmatprep.subr.bf16.mxu0 %v6838
    %10830 = vmatpush1.bf16.msra.mxu0 %v6837
    %10831 = vmatprep.subr.bf16.mxu0 %v6846
    %10832 = vmatpush1.bf16.msra.mxu0 %v6845
    %10833 = vmatprep.subr.bf16.mxu0 %v6854
    %10834 = vmatpush1.bf16.msra.mxu0 %v6853
    %10835 = vmatprep.subr.bf16.mxu0 %v6862
    %10836 = vmatpush1.bf16.msra.mxu0 %v6861
    %10837 = vmatprep.subr.bf16.mxu0 %v6870
    %10838 = vmatpush1.bf16.msra.mxu0 %v6869
    %10839 = vmatprep.subr.bf16.mxu0 %v6878
    %10840 = vmatpush1.bf16.msra.mxu0 %v6877
    %10841 = vmatprep.subr.bf16.mxu0 %v6886
    %10842 = vmatpush1.bf16.msra.mxu0 %v6885
    %10843 = vmatprep.subr.bf16.mxu0 %v6894
    %10844 = vmatpush1.bf16.msra.mxu0 %v6893
    %10845 = vmatprep.subr.bf16.mxu0 %v6902
    %10846 = vmatpush1.bf16.msra.mxu0 %v6901
    %10847 = vmatprep.subr.bf16.mxu0 %v6910
    %10848 = vmatpush1.bf16.msra.mxu0 %v6909
    %10849 = vmatprep.mubr.bf16.mxu0 %v1684
    %10850 = vmatmul.mubr.bf16.gmra.mrb[0].mxu0 %v1670
    %v10851 = vpop.f32.mrb[0].mxu0
    %v10852 = vadd.f32 %v10811, %v10851
    %v10853 = vpop.f32.mrb[0].mxu0
    %v10854 = vadd.f32 %v10813, %v10853
    %v10855 = vpop.f32.mrb[0].mxu0
    %v10856 = vpop.f32.mrb[0].mxu0
    %10857 = vdwg.mxu0
    %10858 = vmatprep.subr.bf16.mxu0 %v6918
    %10859 = vmatpush1.bf16.msra.mxu0 %v6917
    %10860 = vmatprep.subr.bf16.mxu0 %v6926
    %10861 = vmatpush1.bf16.msra.mxu0 %v6925
    %10862 = vmatprep.subr.bf16.mxu0 %v6934
    %10863 = vmatpush1.bf16.msra.mxu0 %v6933
    %10864 = vmatprep.subr.bf16.mxu0 %v6942
    %10865 = vmatpush1.bf16.msra.mxu0 %v6941
    %10866 = vmatprep.subr.bf16.mxu0 %v6950
    %10867 = vmatpush1.bf16.msra.mxu0 %v6949
    %10868 = vmatprep.subr.bf16.mxu0 %v6958
    %10869 = vmatpush1.bf16.msra.mxu0 %v6957
    %10870 = vmatprep.subr.bf16.mxu0 %v6966
    %10871 = vmatpush1.bf16.msra.mxu0 %v6965
    %10872 = vmatprep.subr.bf16.mxu0 %v6974
    %10873 = vmatpush1.bf16.msra.mxu0 %v6973
    %10874 = vmatprep.subr.bf16.mxu0 %v6982
    %10875 = vmatpush1.bf16.msra.mxu0 %v6981
    %10876 = vmatprep.subr.bf16.mxu0 %v6990
    %10877 = vmatpush1.bf16.msra.mxu0 %v6989
    %10878 = vmatprep.subr.bf16.mxu0 %v6998
    %10879 = vmatpush1.bf16.msra.mxu0 %v6997
    %10880 = vmatprep.subr.bf16.mxu0 %v7006
    %10881 = vmatpush1.bf16.msra.mxu0 %v7005
    %10882 = vmatprep.subr.bf16.mxu0 %v7014
    %10883 = vmatpush1.bf16.msra.mxu0 %v7013
    %10884 = vmatprep.subr.bf16.mxu0 %v7022
    %10885 = vmatpush1.bf16.msra.mxu0 %v7021
    %10886 = vmatprep.subr.bf16.mxu0 %v7030
    %10887 = vmatpush1.bf16.msra.mxu0 %v7029
    %10888 = vmatprep.subr.bf16.mxu0 %v7038
    %10889 = vmatpush1.bf16.msra.mxu0 %v7037
    %10890 = vmatprep.mubr.bf16.mxu0 %v1688
    %10891 = vmatmul.mubr.bf16.gmra.mrb[0].mxu0 %v1686
    %v10892 = vpop.f32.mrb[0].mxu0
    %v10893 = vadd.f32 %v10852, %v10892
    %v10894 = vpop.f32.mrb[0].mxu0
    %v10895 = vadd.f32 %v10854, %v10894
    %v10896 = vpop.f32.mrb[0].mxu0
    %v10897 = vpop.f32.mrb[0].mxu0
    %10898 = vdwg.mxu0
    %10899 = vmatprep.subr.bf16.mxu0 %v7046
    %10900 = vmatpush1.bf16.msra.mxu0 %v7045
    %10901 = vmatprep.subr.bf16.mxu0 %v7054
    %10902 = vmatpush1.bf16.msra.mxu0 %v7053
    %10903 = vmatprep.subr.bf16.mxu0 %v7062
    %10904 = vmatpush1.bf16.msra.mxu0 %v7061
    %10905 = vmatprep.subr.bf16.mxu0 %v7070
    %10906 = vmatpush1.bf16.msra.mxu0 %v7069
    %10907 = vmatprep.subr.bf16.mxu0 %v7078
    %10908 = vmatpush1.bf16.msra.mxu0 %v7077
    %10909 = vmatprep.subr.bf16.mxu0 %v7086
    %10910 = vmatpush1.bf16.msra.mxu0 %v7085
    %10911 = vmatprep.subr.bf16.mxu0 %v7094
    %10912 = vmatpush1.bf16.msra.mxu0 %v7093
    %10913 = vmatprep.subr.bf16.mxu0 %v7102
    %10914 = vmatpush1.bf16.msra.mxu0 %v7101
    %10915 = vmatprep.subr.bf16.mxu0 %v7110
    %10916 = vmatpush1.bf16.msra.mxu0 %v7109
    %10917 = vmatprep.subr.bf16.mxu0 %v7118
    %10918 = vmatpush1.bf16.msra.mxu0 %v7117
    %10919 = vmatprep.subr.bf16.mxu0 %v7126
    %10920 = vmatpush1.bf16.msra.mxu0 %v7125
    %10921 = vmatprep.subr.bf16.mxu0 %v7134
    %10922 = vmatpush1.bf16.msra.mxu0 %v7133
    %10923 = vmatprep.subr.bf16.mxu0 %v7142
    %10924 = vmatpush1.bf16.msra.mxu0 %v7141
    %10925 = vmatprep.subr.bf16.mxu0 %v7150
    %10926 = vmatpush1.bf16.msra.mxu0 %v7149
    %10927 = vmatprep.subr.bf16.mxu0 %v7158
    %10928 = vmatpush1.bf16.msra.mxu0 %v7157
    %10929 = vmatprep.subr.bf16.mxu0 %v7166
    %10930 = vmatpush1.bf16.msra.mxu0 %v7165
    %10931 = vmatprep.mubr.bf16.mxu0 %v1726
    %10932 = vmatmul.mubr.bf16.gmra.mrb[0].mxu0 %v1712
    %v10933 = vpop.f32.mrb[0].mxu0
    %v10934 = vadd.f32 %v10893, %v10933
    %v10935 = vpop.f32.mrb[0].mxu0
    %v10936 = vadd.f32 %v10895, %v10935
    %v10937 = vpop.f32.mrb[0].mxu0
    %v10938 = vpop.f32.mrb[0].mxu0
    %10939 = vdwg.mxu0
    %10940 = vmatprep.subr.bf16.mxu0 %v7174
    %10941 = vmatpush1.bf16.msra.mxu0 %v7173
    %10942 = vmatprep.subr.bf16.mxu0 %v7182
    %10943 = vmatpush1.bf16.msra.mxu0 %v7181
    %10944 = vmatprep.subr.bf16.mxu0 %v7190
    %10945 = vmatpush1.bf16.msra.mxu0 %v7189
    %10946 = vmatprep.subr.bf16.mxu0 %v7198
    %10947 = vmatpush1.bf16.msra.mxu0 %v7197
    %10948 = vmatprep.subr.bf16.mxu0 %v7206
    %10949 = vmatpush1.bf16.msra.mxu0 %v7205
    %10950 = vmatprep.subr.bf16.mxu0 %v7214
    %10951 = vmatpush1.bf16.msra.mxu0 %v7213
    %10952 = vmatprep.subr.bf16.mxu0 %v7222
    %10953 = vmatpush1.bf16.msra.mxu0 %v7221
    %10954 = vmatprep.subr.bf16.mxu0 %v7230
    %10955 = vmatpush1.bf16.msra.mxu0 %v7229
    %10956 = vmatprep.subr.bf16.mxu0 %v7238
    %10957 = vmatpush1.bf16.msra.mxu0 %v7237
    %10958 = vmatprep.subr.bf16.mxu0 %v7246
    %10959 = vmatpush1.bf16.msra.mxu0 %v7245
    %10960 = vmatprep.subr.bf16.mxu0 %v7254
    %10961 = vmatpush1.bf16.msra.mxu0 %v7253
    %10962 = vmatprep.subr.bf16.mxu0 %v7262
    %10963 = vmatpush1.bf16.msra.mxu0 %v7261
    %10964 = vmatprep.subr.bf16.mxu0 %v7270
    %10965 = vmatpush1.bf16.msra.mxu0 %v7269
    %10966 = vmatprep.subr.bf16.mxu0 %v7278
    %10967 = vmatpush1.bf16.msra.mxu0 %v7277
    %10968 = vmatprep.subr.bf16.mxu0 %v7286
    %10969 = vmatpush1.bf16.msra.mxu0 %v7285
    %10970 = vmatprep.subr.bf16.mxu0 %v7294
    %10971 = vmatpush1.bf16.msra.mxu0 %v7293
    %10972 = vmatprep.mubr.bf16.mxu0 %v1736
    %10973 = vmatmul.mubr.bf16.gmra.mrb[0].mxu0 %v1734
    %v10974 = vpop.f32.mrb[0].mxu0
    %v10975 = vadd.f32 %v10934, %v10974
    %v10976 = vpop.f32.mrb[0].mxu0
    %v10977 = vadd.f32 %v10936, %v10976
    %v10978 = vpop.f32.mrb[0].mxu0
    %v10979 = vpop.f32.mrb[0].mxu0
    %10980 = vdwg.mxu0
    %10981 = vmatprep.subr.bf16.mxu0 %v7302
    %10982 = vmatpush1.bf16.msra.mxu0 %v7301
    %10983 = vmatprep.subr.bf16.mxu0 %v7310
    %10984 = vmatpush1.bf16.msra.mxu0 %v7309
    %10985 = vmatprep.subr.bf16.mxu0 %v7318
    %10986 = vmatpush1.bf16.msra.mxu0 %v7317
    %10987 = vmatprep.subr.bf16.mxu0 %v7326
    %10988 = vmatpush1.bf16.msra.mxu0 %v7325
    %10989 = vmatprep.subr.bf16.mxu0 %v7334
    %10990 = vmatpush1.bf16.msra.mxu0 %v7333
    %10991 = vmatprep.subr.bf16.mxu0 %v7342
    %10992 = vmatpush1.bf16.msra.mxu0 %v7341
    %10993 = vmatprep.subr.bf16.mxu0 %v7350
    %10994 = vmatpush1.bf16.msra.mxu0 %v7349
    %10995 = vmatprep.subr.bf16.mxu0 %v7358
    %10996 = vmatpush1.bf16.msra.mxu0 %v7357
    %10997 = vmatprep.subr.bf16.mxu0 %v7366
    %10998 = vmatpush1.bf16.msra.mxu0 %v7365
    %10999 = vmatprep.subr.bf16.mxu0 %v7374
    %11000 = vmatpush1.bf16.msra.mxu0 %v7373
    %11001 = vmatprep.subr.bf16.mxu0 %v7382
    %11002 = vmatpush1.bf16.msra.mxu0 %v7381
    %11003 = vmatprep.subr.bf16.mxu0 %v7390
    %11004 = vmatpush1.bf16.msra.mxu0 %v7389
    %11005 = vmatprep.subr.bf16.mxu0 %v7398
    %11006 = vmatpush1.bf16.msra.mxu0 %v7397
    %11007 = vmatprep.subr.bf16.mxu0 %v7406
    %11008 = vmatpush1.bf16.msra.mxu0 %v7405
    %11009 = vmatprep.subr.bf16.mxu0 %v7414
    %11010 = vmatpush1.bf16.msra.mxu0 %v7413
    %11011 = vmatprep.subr.bf16.mxu0 %v7422
    %11012 = vmatpush1.bf16.msra.mxu0 %v7421
    %11013 = vmatprep.mubr.bf16.mxu0 %v1733
    %11014 = vmatmul.mubr.bf16.gmra.mrb[0].mxu0 %v1719
    %v11015 = vpop.f32.mrb[0].mxu0
    %v11016 = vadd.f32 %v10975, %v11015
    %v11017 = vpop.f32.mrb[0].mxu0
    %v11018 = vadd.f32 %v10977, %v11017
    %v11019 = vpop.f32.mrb[0].mxu0
    %v11020 = vpop.f32.mrb[0].mxu0
    %11021 = vdwg.mxu0
    %11022 = vmatprep.subr.bf16.mxu0 %v7430
    %11023 = vmatpush1.bf16.msra.mxu0 %v7429
    %11024 = vmatprep.subr.bf16.mxu0 %v7438
    %11025 = vmatpush1.bf16.msra.mxu0 %v7437
    %11026 = vmatprep.subr.bf16.mxu0 %v7446
    %11027 = vmatpush1.bf16.msra.mxu0 %v7445
    %11028 = vmatprep.subr.bf16.mxu0 %v7454
    %11029 = vmatpush1.bf16.msra.mxu0 %v7453
    %11030 = vmatprep.subr.bf16.mxu0 %v7462
    %11031 = vmatpush1.bf16.msra.mxu0 %v7461
    %11032 = vmatprep.subr.bf16.mxu0 %v7470
    %11033 = vmatpush1.bf16.msra.mxu0 %v7469
    %11034 = vmatprep.subr.bf16.mxu0 %v7478
    %11035 = vmatpush1.bf16.msra.mxu0 %v7477
    %11036 = vmatprep.subr.bf16.mxu0 %v7486
    %11037 = vmatpush1.bf16.msra.mxu0 %v7485
    %11038 = vmatprep.subr.bf16.mxu0 %v7494
    %11039 = vmatpush1.bf16.msra.mxu0 %v7493
    %11040 = vmatprep.subr.bf16.mxu0 %v7502
    %11041 = vmatpush1.bf16.msra.mxu0 %v7501
    %11042 = vmatprep.subr.bf16.mxu0 %v7510
    %11043 = vmatpush1.bf16.msra.mxu0 %v7509
    %11044 = vmatprep.subr.bf16.mxu0 %v7518
    %11045 = vmatpush1.bf16.msra.mxu0 %v7517
    %11046 = vmatprep.subr.bf16.mxu0 %v7526
    %11047 = vmatpush1.bf16.msra.mxu0 %v7525
    %11048 = vmatprep.subr.bf16.mxu0 %v7534
    %11049 = vmatpush1.bf16.msra.mxu0 %v7533
    %11050 = vmatprep.subr.bf16.mxu0 %v7542
    %11051 = vmatpush1.bf16.msra.mxu0 %v7541
    %11052 = vmatprep.subr.bf16.mxu0 %v7550
    %11053 = vmatpush1.bf16.msra.mxu0 %v7549
    %11054 = vmatprep.mubr.bf16.mxu0 %v1737
    %11055 = vmatmul.mubr.bf16.gmra.mrb[0].mxu0 %v1735
    %v11056 = vpop.f32.mrb[0].mxu0
    %v11057 = vadd.f32 %v11016, %v11056
    %v11058 = vpop.f32.mrb[0].mxu0
    %v11059 = vadd.f32 %v11018, %v11058
    %v11060 = vpop.f32.mrb[0].mxu0
    %v11061 = vpop.f32.mrb[0].mxu0
    %11062 = vdwg.mxu0
    %11063 = vmatprep.subr.bf16.mxu0 %v7558
    %11064 = vmatpush1.bf16.msra.mxu0 %v7557
    %11065 = vmatprep.subr.bf16.mxu0 %v7566
    %11066 = vmatpush1.bf16.msra.mxu0 %v7565
    %11067 = vmatprep.subr.bf16.mxu0 %v7574
    %11068 = vmatpush1.bf16.msra.mxu0 %v7573
    %11069 = vmatprep.subr.bf16.mxu0 %v7582
    %11070 = vmatpush1.bf16.msra.mxu0 %v7581
    %11071 = vmatprep.subr.bf16.mxu0 %v7590
    %11072 = vmatpush1.bf16.msra.mxu0 %v7589
    %11073 = vmatprep.subr.bf16.mxu0 %v7598
    %11074 = vmatpush1.bf16.msra.mxu0 %v7597
    %11075 = vmatprep.subr.bf16.mxu0 %v7606
    %11076 = vmatpush1.bf16.msra.mxu0 %v7605
    %11077 = vmatprep.subr.bf16.mxu0 %v7614
    %11078 = vmatpush1.bf16.msra.mxu0 %v7613
    %11079 = vmatprep.subr.bf16.mxu0 %v7622
    %11080 = vmatpush1.bf16.msra.mxu0 %v7621
    %11081 = vmatprep.subr.bf16.mxu0 %v7630
    %11082 = vmatpush1.bf16.msra.mxu0 %v7629
    %11083 = vmatprep.subr.bf16.mxu0 %v7638
    %11084 = vmatpush1.bf16.msra.mxu0 %v7637
    %11085 = vmatprep.subr.bf16.mxu0 %v7646
    %11086 = vmatpush1.bf16.msra.mxu0 %v7645
    %11087 = vmatprep.subr.bf16.mxu0 %v7654
    %11088 = vmatpush1.bf16.msra.mxu0 %v7653
    %11089 = vmatprep.subr.bf16.mxu0 %v7662
    %11090 = vmatpush1.bf16.msra.mxu0 %v7661
    %11091 = vmatprep.subr.bf16.mxu0 %v7670
    %11092 = vmatpush1.bf16.msra.mxu0 %v7669
    %11093 = vmatprep.subr.bf16.mxu0 %v7678
    %11094 = vmatpush1.bf16.msra.mxu0 %v7677
    %11095 = vmatprep.mubr.bf16.mxu0 %v1775
    %11096 = vmatmul.mubr.bf16.gmra.mrb[0].mxu0 %v1761
    %v11097 = vpop.f32.mrb[0].mxu0
    %v11098 = vadd.f32 %v11057, %v11097
    %v11099 = vpop.f32.mrb[0].mxu0
    %v11100 = vadd.f32 %v11059, %v11099
    %v11101 = vpop.f32.mrb[0].mxu0
    %v11102 = vpop.f32.mrb[0].mxu0
    %11103 = vdwg.mxu0
    %11104 = vmatprep.subr.bf16.mxu0 %v7686
    %11105 = vmatpush1.bf16.msra.mxu0 %v7685
    %11106 = vmatprep.subr.bf16.mxu0 %v7694
    %11107 = vmatpush1.bf16.msra.mxu0 %v7693
    %11108 = vmatprep.subr.bf16.mxu0 %v7702
    %11109 = vmatpush1.bf16.msra.mxu0 %v7701
    %11110 = vmatprep.subr.bf16.mxu0 %v7710
    %11111 = vmatpush1.bf16.msra.mxu0 %v7709
    %11112 = vmatprep.subr.bf16.mxu0 %v7718
    %11113 = vmatpush1.bf16.msra.mxu0 %v7717
    %11114 = vmatprep.subr.bf16.mxu0 %v7726
    %11115 = vmatpush1.bf16.msra.mxu0 %v7725
    %11116 = vmatprep.subr.bf16.mxu0 %v7734
    %11117 = vmatpush1.bf16.msra.mxu0 %v7733
    %11118 = vmatprep.subr.bf16.mxu0 %v7742
    %11119 = vmatpush1.bf16.msra.mxu0 %v7741
    %11120 = vmatprep.subr.bf16.mxu0 %v7750
    %11121 = vmatpush1.bf16.msra.mxu0 %v7749
    %11122 = vmatprep.subr.bf16.mxu0 %v7758
    %11123 = vmatpush1.bf16.msra.mxu0 %v7757
    %11124 = vmatprep.subr.bf16.mxu0 %v7766
    %11125 = vmatpush1.bf16.msra.mxu0 %v7765
    %11126 = vmatprep.subr.bf16.mxu0 %v7774
    %11127 = vmatpush1.bf16.msra.mxu0 %v7773
    %11128 = vmatprep.subr.bf16.mxu0 %v7782
    %11129 = vmatpush1.bf16.msra.mxu0 %v7781
    %11130 = vmatprep.subr.bf16.mxu0 %v7790
    %11131 = vmatpush1.bf16.msra.mxu0 %v7789
    %11132 = vmatprep.subr.bf16.mxu0 %v7798
    %11133 = vmatpush1.bf16.msra.mxu0 %v7797
    %11134 = vmatprep.subr.bf16.mxu0 %v7806
    %11135 = vmatpush1.bf16.msra.mxu0 %v7805
    %11136 = vmatprep.mubr.bf16.mxu0 %v1785
    %11137 = vmatmul.mubr.bf16.gmra.mrb[0].mxu0 %v1783
    %v11138 = vpop.f32.mrb[0].mxu0
    %v11139 = vadd.f32 %v11098, %v11138
    %v11140 = vpop.f32.mrb[0].mxu0
    %v11141 = vadd.f32 %v11100, %v11140
    %v11142 = vpop.f32.mrb[0].mxu0
    %v11143 = vpop.f32.mrb[0].mxu0
    %11144 = vdwg.mxu0
    %11145 = vmatprep.subr.bf16.mxu0 %v7814
    %11146 = vmatpush1.bf16.msra.mxu0 %v7813
    %11147 = vmatprep.subr.bf16.mxu0 %v7822
    %11148 = vmatpush1.bf16.msra.mxu0 %v7821
    %11149 = vmatprep.subr.bf16.mxu0 %v7830
    %11150 = vmatpush1.bf16.msra.mxu0 %v7829
    %11151 = vmatprep.subr.bf16.mxu0 %v7838
    %11152 = vmatpush1.bf16.msra.mxu0 %v7837
    %11153 = vmatprep.subr.bf16.mxu0 %v7846
    %11154 = vmatpush1.bf16.msra.mxu0 %v7845
    %11155 = vmatprep.subr.bf16.mxu0 %v7854
    %11156 = vmatpush1.bf16.msra.mxu0 %v7853
    %11157 = vmatprep.subr.bf16.mxu0 %v7862
    %11158 = vmatpush1.bf16.msra.mxu0 %v7861
    %11159 = vmatprep.subr.bf16.mxu0 %v7870
    %11160 = vmatpush1.bf16.msra.mxu0 %v7869
    %11161 = vmatprep.subr.bf16.mxu0 %v7878
    %11162 = vmatpush1.bf16.msra.mxu0 %v7877
    %11163 = vmatprep.subr.bf16.mxu0 %v7886
    %11164 = vmatpush1.bf16.msra.mxu0 %v7885
    %11165 = vmatprep.subr.bf16.mxu0 %v7894
    %11166 = vmatpush1.bf16.msra.mxu0 %v7893
    %11167 = vmatprep.subr.bf16.mxu0 %v7902
    %11168 = vmatpush1.bf16.msra.mxu0 %v7901
    %11169 = vmatprep.subr.bf16.mxu0 %v7910
    %11170 = vmatpush1.bf16.msra.mxu0 %v7909
    %11171 = vmatprep.subr.bf16.mxu0 %v7918
    %11172 = vmatpush1.bf16.msra.mxu0 %v7917
    %11173 = vmatprep.subr.bf16.mxu0 %v7926
    %11174 = vmatpush1.bf16.msra.mxu0 %v7925
    %11175 = vmatprep.subr.bf16.mxu0 %v7934
    %11176 = vmatpush1.bf16.msra.mxu0 %v7933
    %11177 = vmatprep.mubr.bf16.mxu0 %v1782
    %11178 = vmatmul.mubr.bf16.gmra.mrb[0].mxu0 %v1768
    %v11179 = vpop.f32.mrb[0].mxu0
    %v11180 = vadd.f32 %v11139, %v11179
    %v11181 = vpop.f32.mrb[0].mxu0
    %v11182 = vadd.f32 %v11141, %v11181
    %v11183 = vpop.f32.mrb[0].mxu0
    %v11184 = vpop.f32.mrb[0].mxu0
    %11185 = vdwg.mxu0
    %11186 = vmatprep.subr.bf16.mxu0 %v7942
    %11187 = vmatpush1.bf16.msra.mxu0 %v7941
    %11188 = vmatprep.subr.bf16.mxu0 %v7950
    %11189 = vmatpush1.bf16.msra.mxu0 %v7949
    %11190 = vmatprep.subr.bf16.mxu0 %v7958
    %11191 = vmatpush1.bf16.msra.mxu0 %v7957
    %11192 = vmatprep.subr.bf16.mxu0 %v7966
    %11193 = vmatpush1.bf16.msra.mxu0 %v7965
    %11194 = vmatprep.subr.bf16.mxu0 %v7974
    %11195 = vmatpush1.bf16.msra.mxu0 %v7973
    %11196 = vmatprep.subr.bf16.mxu0 %v7982
    %11197 = vmatpush1.bf16.msra.mxu0 %v7981
    %11198 = vmatprep.subr.bf16.mxu0 %v7990
    %11199 = vmatpush1.bf16.msra.mxu0 %v7989
    %11200 = vmatprep.subr.bf16.mxu0 %v7998
    %11201 = vmatpush1.bf16.msra.mxu0 %v7997
    %11202 = vmatprep.subr.bf16.mxu0 %v8006
    %11203 = vmatpush1.bf16.msra.mxu0 %v8005
    %11204 = vmatprep.subr.bf16.mxu0 %v8014
    %11205 = vmatpush1.bf16.msra.mxu0 %v8013
    %11206 = vmatprep.subr.bf16.mxu0 %v8022
    %11207 = vmatpush1.bf16.msra.mxu0 %v8021
    %11208 = vmatprep.subr.bf16.mxu0 %v8030
    %11209 = vmatpush1.bf16.msra.mxu0 %v8029
    %11210 = vmatprep.subr.bf16.mxu0 %v8038
    %11211 = vmatpush1.bf16.msra.mxu0 %v8037
    %11212 = vmatprep.subr.bf16.mxu0 %v8046
    %11213 = vmatpush1.bf16.msra.mxu0 %v8045
    %11214 = vmatprep.subr.bf16.mxu0 %v8054
    %11215 = vmatpush1.bf16.msra.mxu0 %v8053
    %11216 = vmatprep.subr.bf16.mxu0 %v8062
    %11217 = vmatpush1.bf16.msra.mxu0 %v8061
    %11218 = vmatprep.mubr.bf16.mxu0 %v1786
    %11219 = vmatmul.mubr.bf16.gmra.mrb[0].mxu0 %v1784
    %v11220 = vpop.f32.mrb[0].mxu0
    %v11221 = vadd.f32 %v11180, %v11220
    %v11222 = vpop.f32.mrb[0].mxu0
    %v11223 = vadd.f32 %v11182, %v11222
    %v11224 = vpop.f32.mrb[0].mxu0
    %v11225 = vpop.f32.mrb[0].mxu0
    %11226 = vdwg.mxu0
    %11227 = vmatprep.subr.bf16.mxu0 %v8070
    %11228 = vmatpush1.bf16.msra.mxu0 %v8069
    %11229 = vmatprep.subr.bf16.mxu0 %v8078
    %11230 = vmatpush1.bf16.msra.mxu0 %v8077
    %11231 = vmatprep.subr.bf16.mxu0 %v8086
    %11232 = vmatpush1.bf16.msra.mxu0 %v8085
    %11233 = vmatprep.subr.bf16.mxu0 %v8094
    %11234 = vmatpush1.bf16.msra.mxu0 %v8093
    %11235 = vmatprep.subr.bf16.mxu0 0
    %11236 = vmatpush1.bf16.msra.mxu0 0
    %11237 = vmatprep.subr.bf16.mxu0 0
    %11238 = vmatpush1.bf16.msra.mxu0 0
    %11239 = vmatprep.subr.bf16.mxu0 0
    %11240 = vmatpush1.bf16.msra.mxu0 0
    %11241 = vmatprep.subr.bf16.mxu0 0
    %11242 = vmatpush1.bf16.msra.mxu0 0
    %11243 = vmatprep.subr.bf16.mxu0 0
    %11244 = vmatpush1.bf16.msra.mxu0 0
    %11245 = vmatprep.subr.bf16.mxu0 0
    %11246 = vmatpush1.bf16.msra.mxu0 0
    %11247 = vmatprep.subr.bf16.mxu0 0
    %11248 = vmatpush1.bf16.msra.mxu0 0
    %11249 = vmatprep.subr.bf16.mxu0 0
    %11250 = vmatpush1.bf16.msra.mxu0 0
    %11251 = vmatprep.subr.bf16.mxu0 0
    %11252 = vmatpush1.bf16.msra.mxu0 0
    %11253 = vmatprep.subr.bf16.mxu0 0
    %11254 = vmatpush1.bf16.msra.mxu0 0
    %11255 = vmatprep.subr.bf16.mxu0 0
    %11256 = vmatpush1.bf16.msra.mxu0 0
    %11257 = vmatprep.subr.bf16.mxu0 0
    %11258 = vmatpush1.bf16.msra.mxu0 0
    %11259 = vmatprep.mubr.bf16.mxu0 0
    %11260 = vmatmul.mubr.bf16.gmra.mrb[0].mxu0 %v9667
    %v11261 = vpop.f32.mrb[0].mxu0
    %v11262 = vadd.f32 %v11221, %v11261
    %v11263 = vpop.f32.mrb[0].mxu0
    %v11264 = vadd.f32 %v11223, %v11263
    %v11265 = vpop.f32.mrb[0].mxu0
    %v11266 = vpop.f32.mrb[0].mxu0
    %11267 = vdwg.mxu0
    %11268 = vmatprep.subr.bf16.mxu0 %v6536
    %11269 = vmatpush1.bf16.msra.mxu0 %v6535
    %11270 = vmatprep.subr.bf16.mxu0 %v6544
    %11271 = vmatpush1.bf16.msra.mxu0 %v6543
    %11272 = vmatprep.subr.bf16.mxu0 %v6552
    %11273 = vmatpush1.bf16.msra.mxu0 %v6551
    %11274 = vmatprep.subr.bf16.mxu0 %v6560
    %11275 = vmatpush1.bf16.msra.mxu0 %v6559
    %11276 = vmatprep.subr.bf16.mxu0 %v6568
    %11277 = vmatpush1.bf16.msra.mxu0 %v6567
    %11278 = vmatprep.subr.bf16.mxu0 %v6576
    %11279 = vmatpush1.bf16.msra.mxu0 %v6575
    %11280 = vmatprep.subr.bf16.mxu0 %v6584
    %11281 = vmatpush1.bf16.msra.mxu0 %v6583
    %11282 = vmatprep.subr.bf16.mxu0 %v6592
    %11283 = vmatpush1.bf16.msra.mxu0 %v6591
    %11284 = vmatprep.subr.bf16.mxu0 %v6600
    %11285 = vmatpush1.bf16.msra.mxu0 %v6599
    %11286 = vmatprep.subr.bf16.mxu0 %v6608
    %11287 = vmatpush1.bf16.msra.mxu0 %v6607
    %11288 = vmatprep.subr.bf16.mxu0 %v6616
    %11289 = vmatpush1.bf16.msra.mxu0 %v6615
    %11290 = vmatprep.subr.bf16.mxu0 %v6624
    %11291 = vmatpush1.bf16.msra.mxu0 %v6623
    %11292 = vmatprep.subr.bf16.mxu0 %v6632
    %11293 = vmatpush1.bf16.msra.mxu0 %v6631
    %11294 = vmatprep.subr.bf16.mxu0 %v6640
    %11295 = vmatpush1.bf16.msra.mxu0 %v6639
    %11296 = vmatprep.subr.bf16.mxu0 %v6648
    %11297 = vmatpush1.bf16.msra.mxu0 %v6647
    %11298 = vmatprep.subr.bf16.mxu0 %v6656
    %11299 = vmatpush1.bf16.msra.mxu0 %v6655
    %11300 = vmatprep.mubr.bf16.mxu0 %v1677
    %11301 = vmatmul.mubr.bf16.gmra.mrb[0].mxu0 %v1663
    %v11302 = vpop.f32.mrb[0].mxu0
    %v11303 = vadd.f32 %v1623, %v11302
    %v11304 = vpop.f32.mrb[0].mxu0
    %v11305 = vadd.f32 %v1627, %v11304
    %v11306 = vpop.f32.mrb[0].mxu0
    %v11307 = vpop.f32.mrb[0].mxu0
    %11308 = vdwg.mxu0
    %11309 = vmatprep.subr.bf16.mxu0 %v6664
    %11310 = vmatpush1.bf16.msra.mxu0 %v6663
    %11311 = vmatprep.subr.bf16.mxu0 %v6672
    %11312 = vmatpush1.bf16.msra.mxu0 %v6671
    %11313 = vmatprep.subr.bf16.mxu0 %v6680
    %11314 = vmatpush1.bf16.msra.mxu0 %v6679
    %11315 = vmatprep.subr.bf16.mxu0 %v6688
    %11316 = vmatpush1.bf16.msra.mxu0 %v6687
    %11317 = vmatprep.subr.bf16.mxu0 %v6696
    %11318 = vmatpush1.bf16.msra.mxu0 %v6695
    %11319 = vmatprep.subr.bf16.mxu0 %v6704
    %11320 = vmatpush1.bf16.msra.mxu0 %v6703
    %11321 = vmatprep.subr.bf16.mxu0 %v6712
    %11322 = vmatpush1.bf16.msra.mxu0 %v6711
    %11323 = vmatprep.subr.bf16.mxu0 %v6720
    %11324 = vmatpush1.bf16.msra.mxu0 %v6719
    %11325 = vmatprep.subr.bf16.mxu0 %v6728
    %11326 = vmatpush1.bf16.msra.mxu0 %v6727
    %11327 = vmatprep.subr.bf16.mxu0 %v6736
    %11328 = vmatpush1.bf16.msra.mxu0 %v6735
    %11329 = vmatprep.subr.bf16.mxu0 %v6744
    %11330 = vmatpush1.bf16.msra.mxu0 %v6743
    %11331 = vmatprep.subr.bf16.mxu0 %v6752
    %11332 = vmatpush1.bf16.msra.mxu0 %v6751
    %11333 = vmatprep.subr.bf16.mxu0 %v6760
    %11334 = vmatpush1.bf16.msra.mxu0 %v6759
    %11335 = vmatprep.subr.bf16.mxu0 %v6768
    %11336 = vmatpush1.bf16.msra.mxu0 %v6767
    %11337 = vmatprep.subr.bf16.mxu0 %v6776
    %11338 = vmatpush1.bf16.msra.mxu0 %v6775
    %11339 = vmatprep.subr.bf16.mxu0 %v6784
    %11340 = vmatpush1.bf16.msra.mxu0 %v6783
    %11341 = vmatprep.mubr.bf16.mxu0 %v1687
    %11342 = vmatmul.mubr.bf16.gmra.mrb[0].mxu0 %v1685
    %v11343 = vpop.f32.mrb[0].mxu0
    %v11344 = vadd.f32 %v11303, %v11343
    %v11345 = vpop.f32.mrb[0].mxu0
    %v11346 = vadd.f32 %v11305, %v11345
    %v11347 = vpop.f32.mrb[0].mxu0
    %v11348 = vpop.f32.mrb[0].mxu0
    %11349 = vdwg.mxu0
    %11350 = vmatprep.subr.bf16.mxu0 %v6792
    %11351 = vmatpush1.bf16.msra.mxu0 %v6791
    %11352 = vmatprep.subr.bf16.mxu0 %v6800
    %11353 = vmatpush1.bf16.msra.mxu0 %v6799
    %11354 = vmatprep.subr.bf16.mxu0 %v6808
    %11355 = vmatpush1.bf16.msra.mxu0 %v6807
    %11356 = vmatprep.subr.bf16.mxu0 %v6816
    %11357 = vmatpush1.bf16.msra.mxu0 %v6815
    %11358 = vmatprep.subr.bf16.mxu0 %v6824
    %11359 = vmatpush1.bf16.msra.mxu0 %v6823
    %11360 = vmatprep.subr.bf16.mxu0 %v6832
    %11361 = vmatpush1.bf16.msra.mxu0 %v6831
    %11362 = vmatprep.subr.bf16.mxu0 %v6840
    %11363 = vmatpush1.bf16.msra.mxu0 %v6839
    %11364 = vmatprep.subr.bf16.mxu0 %v6848
    %11365 = vmatpush1.bf16.msra.mxu0 %v6847
    %11366 = vmatprep.subr.bf16.mxu0 %v6856
    %11367 = vmatpush1.bf16.msra.mxu0 %v6855
    %11368 = vmatprep.subr.bf16.mxu0 %v6864
    %11369 = vmatpush1.bf16.msra.mxu0 %v6863
    %11370 = vmatprep.subr.bf16.mxu0 %v6872
    %11371 = vmatpush1.bf16.msra.mxu0 %v6871
    %11372 = vmatprep.subr.bf16.mxu0 %v6880
    %11373 = vmatpush1.bf16.msra.mxu0 %v6879
    %11374 = vmatprep.subr.bf16.mxu0 %v6888
    %11375 = vmatpush1.bf16.msra.mxu0 %v6887
    %11376 = vmatprep.subr.bf16.mxu0 %v6896
    %11377 = vmatpush1.bf16.msra.mxu0 %v6895
    %11378 = vmatprep.subr.bf16.mxu0 %v6904
    %11379 = vmatpush1.bf16.msra.mxu0 %v6903
    %11380 = vmatprep.subr.bf16.mxu0 %v6912
    %11381 = vmatpush1.bf16.msra.mxu0 %v6911
    %11382 = vmatprep.mubr.bf16.mxu0 %v1684
    %11383 = vmatmul.mubr.bf16.gmra.mrb[0].mxu0 %v1670
    %v11384 = vpop.f32.mrb[0].mxu0
    %v11385 = vadd.f32 %v11344, %v11384
    %v11386 = vpop.f32.mrb[0].mxu0
    %v11387 = vadd.f32 %v11346, %v11386
    %v11388 = vpop.f32.mrb[0].mxu0
    %v11389 = vpop.f32.mrb[0].mxu0
    %11390 = vdwg.mxu0
    %11391 = vmatprep.subr.bf16.mxu0 %v6920
    %11392 = vmatpush1.bf16.msra.mxu0 %v6919
    %11393 = vmatprep.subr.bf16.mxu0 %v6928
    %11394 = vmatpush1.bf16.msra.mxu0 %v6927
    %11395 = vmatprep.subr.bf16.mxu0 %v6936
    %11396 = vmatpush1.bf16.msra.mxu0 %v6935
    %11397 = vmatprep.subr.bf16.mxu0 %v6944
    %11398 = vmatpush1.bf16.msra.mxu0 %v6943
    %11399 = vmatprep.subr.bf16.mxu0 %v6952
    %11400 = vmatpush1.bf16.msra.mxu0 %v6951
    %11401 = vmatprep.subr.bf16.mxu0 %v6960
    %11402 = vmatpush1.bf16.msra.mxu0 %v6959
    %11403 = vmatprep.subr.bf16.mxu0 %v6968
    %11404 = vmatpush1.bf16.msra.mxu0 %v6967
    %11405 = vmatprep.subr.bf16.mxu0 %v6976
    %11406 = vmatpush1.bf16.msra.mxu0 %v6975
    %11407 = vmatprep.subr.bf16.mxu0 %v6984
    %11408 = vmatpush1.bf16.msra.mxu0 %v6983
    %11409 = vmatprep.subr.bf16.mxu0 %v6992
    %11410 = vmatpush1.bf16.msra.mxu0 %v6991
    %11411 = vmatprep.subr.bf16.mxu0 %v7000
    %11412 = vmatpush1.bf16.msra.mxu0 %v6999
    %11413 = vmatprep.subr.bf16.mxu0 %v7008
    %11414 = vmatpush1.bf16.msra.mxu0 %v7007
    %11415 = vmatprep.subr.bf16.mxu0 %v7016
    %11416 = vmatpush1.bf16.msra.mxu0 %v7015
    %11417 = vmatprep.subr.bf16.mxu0 %v7024
    %11418 = vmatpush1.bf16.msra.mxu0 %v7023
    %11419 = vmatprep.subr.bf16.mxu0 %v7032
    %11420 = vmatpush1.bf16.msra.mxu0 %v7031
    %11421 = vmatprep.subr.bf16.mxu0 %v7040
    %11422 = vmatpush1.bf16.msra.mxu0 %v7039
    %11423 = vmatprep.mubr.bf16.mxu0 %v1688
    %11424 = vmatmul.mubr.bf16.gmra.mrb[0].mxu0 %v1686
    %v11425 = vpop.f32.mrb[0].mxu0
    %v11426 = vadd.f32 %v11385, %v11425
    %v11427 = vpop.f32.mrb[0].mxu0
    %v11428 = vadd.f32 %v11387, %v11427
    %v11429 = vpop.f32.mrb[0].mxu0
    %v11430 = vpop.f32.mrb[0].mxu0
    %11431 = vdwg.mxu0
    %11432 = vmatprep.subr.bf16.mxu0 %v7048
    %11433 = vmatpush1.bf16.msra.mxu0 %v7047
    %11434 = vmatprep.subr.bf16.mxu0 %v7056
    %11435 = vmatpush1.bf16.msra.mxu0 %v7055
    %11436 = vmatprep.subr.bf16.mxu0 %v7064
    %11437 = vmatpush1.bf16.msra.mxu0 %v7063
    %11438 = vmatprep.subr.bf16.mxu0 %v7072
    %11439 = vmatpush1.bf16.msra.mxu0 %v7071
    %11440 = vmatprep.subr.bf16.mxu0 %v7080
    %11441 = vmatpush1.bf16.msra.mxu0 %v7079
    %11442 = vmatprep.subr.bf16.mxu0 %v7088
    %11443 = vmatpush1.bf16.msra.mxu0 %v7087
    %11444 = vmatprep.subr.bf16.mxu0 %v7096
    %11445 = vmatpush1.bf16.msra.mxu0 %v7095
    %11446 = vmatprep.subr.bf16.mxu0 %v7104
    %11447 = vmatpush1.bf16.msra.mxu0 %v7103
    %11448 = vmatprep.subr.bf16.mxu0 %v7112
    %11449 = vmatpush1.bf16.msra.mxu0 %v7111
    %11450 = vmatprep.subr.bf16.mxu0 %v7120
    %11451 = vmatpush1.bf16.msra.mxu0 %v7119
    %11452 = vmatprep.subr.bf16.mxu0 %v7128
    %11453 = vmatpush1.bf16.msra.mxu0 %v7127
    %11454 = vmatprep.subr.bf16.mxu0 %v7136
    %11455 = vmatpush1.bf16.msra.mxu0 %v7135
    %11456 = vmatprep.subr.bf16.mxu0 %v7144
    %11457 = vmatpush1.bf16.msra.mxu0 %v7143
    %11458 = vmatprep.subr.bf16.mxu0 %v7152
    %11459 = vmatpush1.bf16.msra.mxu0 %v7151
    %11460 = vmatprep.subr.bf16.mxu0 %v7160
    %11461 = vmatpush1.bf16.msra.mxu0 %v7159
    %11462 = vmatprep.subr.bf16.mxu0 %v7168
    %11463 = vmatpush1.bf16.msra.mxu0 %v7167
    %11464 = vmatprep.mubr.bf16.mxu0 %v1726
    %11465 = vmatmul.mubr.bf16.gmra.mrb[0].mxu0 %v1712
    %v11466 = vpop.f32.mrb[0].mxu0
    %v11467 = vadd.f32 %v11426, %v11466
    %v11468 = vpop.f32.mrb[0].mxu0
    %v11469 = vadd.f32 %v11428, %v11468
    %v11470 = vpop.f32.mrb[0].mxu0
    %v11471 = vpop.f32.mrb[0].mxu0
    %11472 = vdwg.mxu0
    %11473 = vmatprep.subr.bf16.mxu0 %v7176
    %11474 = vmatpush1.bf16.msra.mxu0 %v7175
    %11475 = vmatprep.subr.bf16.mxu0 %v7184
    %11476 = vmatpush1.bf16.msra.mxu0 %v7183
    %11477 = vmatprep.subr.bf16.mxu0 %v7192
    %11478 = vmatpush1.bf16.msra.mxu0 %v7191
    %11479 = vmatprep.subr.bf16.mxu0 %v7200
    %11480 = vmatpush1.bf16.msra.mxu0 %v7199
    %11481 = vmatprep.subr.bf16.mxu0 %v7208
    %11482 = vmatpush1.bf16.msra.mxu0 %v7207
    %11483 = vmatprep.subr.bf16.mxu0 %v7216
    %11484 = vmatpush1.bf16.msra.mxu0 %v7215
    %11485 = vmatprep.subr.bf16.mxu0 %v7224
    %11486 = vmatpush1.bf16.msra.mxu0 %v7223
    %11487 = vmatprep.subr.bf16.mxu0 %v7232
    %11488 = vmatpush1.bf16.msra.mxu0 %v7231
    %11489 = vmatprep.subr.bf16.mxu0 %v7240
    %11490 = vmatpush1.bf16.msra.mxu0 %v7239
    %11491 = vmatprep.subr.bf16.mxu0 %v7248
    %11492 = vmatpush1.bf16.msra.mxu0 %v7247
    %11493 = vmatprep.subr.bf16.mxu0 %v7256
    %11494 = vmatpush1.bf16.msra.mxu0 %v7255
    %11495 = vmatprep.subr.bf16.mxu0 %v7264
    %11496 = vmatpush1.bf16.msra.mxu0 %v7263
    %11497 = vmatprep.subr.bf16.mxu0 %v7272
    %11498 = vmatpush1.bf16.msra.mxu0 %v7271
    %11499 = vmatprep.subr.bf16.mxu0 %v7280
    %11500 = vmatpush1.bf16.msra.mxu0 %v7279
    %11501 = vmatprep.subr.bf16.mxu0 %v7288
    %11502 = vmatpush1.bf16.msra.mxu0 %v7287
    %11503 = vmatprep.subr.bf16.mxu0 %v7296
    %11504 = vmatpush1.bf16.msra.mxu0 %v7295
    %11505 = vmatprep.mubr.bf16.mxu0 %v1736
    %11506 = vmatmul.mubr.bf16.gmra.mrb[0].mxu0 %v1734
    %v11507 = vpop.f32.mrb[0].mxu0
    %v11508 = vadd.f32 %v11467, %v11507
    %v11509 = vpop.f32.mrb[0].mxu0
    %v11510 = vadd.f32 %v11469, %v11509
    %v11511 = vpop.f32.mrb[0].mxu0
    %v11512 = vpop.f32.mrb[0].mxu0
    %11513 = vdwg.mxu0
    %11514 = vmatprep.subr.bf16.mxu0 %v7304
    %11515 = vmatpush1.bf16.msra.mxu0 %v7303
    %11516 = vmatprep.subr.bf16.mxu0 %v7312
    %11517 = vmatpush1.bf16.msra.mxu0 %v7311
    %11518 = vmatprep.subr.bf16.mxu0 %v7320
    %11519 = vmatpush1.bf16.msra.mxu0 %v7319
    %11520 = vmatprep.subr.bf16.mxu0 %v7328
    %11521 = vmatpush1.bf16.msra.mxu0 %v7327
    %11522 = vmatprep.subr.bf16.mxu0 %v7336
    %11523 = vmatpush1.bf16.msra.mxu0 %v7335
    %11524 = vmatprep.subr.bf16.mxu0 %v7344
    %11525 = vmatpush1.bf16.msra.mxu0 %v7343
    %11526 = vmatprep.subr.bf16.mxu0 %v7352
    %11527 = vmatpush1.bf16.msra.mxu0 %v7351
    %11528 = vmatprep.subr.bf16.mxu0 %v7360
    %11529 = vmatpush1.bf16.msra.mxu0 %v7359
    %11530 = vmatprep.subr.bf16.mxu0 %v7368
    %11531 = vmatpush1.bf16.msra.mxu0 %v7367
    %11532 = vmatprep.subr.bf16.mxu0 %v7376
    %11533 = vmatpush1.bf16.msra.mxu0 %v7375
    %11534 = vmatprep.subr.bf16.mxu0 %v7384
    %11535 = vmatpush1.bf16.msra.mxu0 %v7383
    %11536 = vmatprep.subr.bf16.mxu0 %v7392
    %11537 = vmatpush1.bf16.msra.mxu0 %v7391
    %11538 = vmatprep.subr.bf16.mxu0 %v7400
    %11539 = vmatpush1.bf16.msra.mxu0 %v7399
    %11540 = vmatprep.subr.bf16.mxu0 %v7408
    %11541 = vmatpush1.bf16.msra.mxu0 %v7407
    %11542 = vmatprep.subr.bf16.mxu0 %v7416
    %11543 = vmatpush1.bf16.msra.mxu0 %v7415
    %11544 = vmatprep.subr.bf16.mxu0 %v7424
    %11545 = vmatpush1.bf16.msra.mxu0 %v7423
    %11546 = vmatprep.mubr.bf16.mxu0 %v1733
    %11547 = vmatmul.mubr.bf16.gmra.mrb[0].mxu0 %v1719
    %v11548 = vpop.f32.mrb[0].mxu0
    %v11549 = vadd.f32 %v11508, %v11548
    %v11550 = vpop.f32.mrb[0].mxu0
    %v11551 = vadd.f32 %v11510, %v11550
    %v11552 = vpop.f32.mrb[0].mxu0
    %v11553 = vpop.f32.mrb[0].mxu0
    %11554 = vdwg.mxu0
    %11555 = vmatprep.subr.bf16.mxu0 %v7432
    %11556 = vmatpush1.bf16.msra.mxu0 %v7431
    %11557 = vmatprep.subr.bf16.mxu0 %v7440
    %11558 = vmatpush1.bf16.msra.mxu0 %v7439
    %11559 = vmatprep.subr.bf16.mxu0 %v7448
    %11560 = vmatpush1.bf16.msra.mxu0 %v7447
    %11561 = vmatprep.subr.bf16.mxu0 %v7456
    %11562 = vmatpush1.bf16.msra.mxu0 %v7455
    %11563 = vmatprep.subr.bf16.mxu0 %v7464
    %11564 = vmatpush1.bf16.msra.mxu0 %v7463
    %11565 = vmatprep.subr.bf16.mxu0 %v7472
    %11566 = vmatpush1.bf16.msra.mxu0 %v7471
    %11567 = vmatprep.subr.bf16.mxu0 %v7480
    %11568 = vmatpush1.bf16.msra.mxu0 %v7479
    %11569 = vmatprep.subr.bf16.mxu0 %v7488
    %11570 = vmatpush1.bf16.msra.mxu0 %v7487
    %11571 = vmatprep.subr.bf16.mxu0 %v7496
    %11572 = vmatpush1.bf16.msra.mxu0 %v7495
    %11573 = vmatprep.subr.bf16.mxu0 %v7504
    %11574 = vmatpush1.bf16.msra.mxu0 %v7503
    %11575 = vmatprep.subr.bf16.mxu0 %v7512
    %11576 = vmatpush1.bf16.msra.mxu0 %v7511
    %11577 = vmatprep.subr.bf16.mxu0 %v7520
    %11578 = vmatpush1.bf16.msra.mxu0 %v7519
    %11579 = vmatprep.subr.bf16.mxu0 %v7528
    %11580 = vmatpush1.bf16.msra.mxu0 %v7527
    %11581 = vmatprep.subr.bf16.mxu0 %v7536
    %11582 = vmatpush1.bf16.msra.mxu0 %v7535
    %11583 = vmatprep.subr.bf16.mxu0 %v7544
    %11584 = vmatpush1.bf16.msra.mxu0 %v7543
    %11585 = vmatprep.subr.bf16.mxu0 %v7552
    %11586 = vmatpush1.bf16.msra.mxu0 %v7551
    %11587 = vmatprep.mubr.bf16.mxu0 %v1737
    %11588 = vmatmul.mubr.bf16.gmra.mrb[0].mxu0 %v1735
    %v11589 = vpop.f32.mrb[0].mxu0
    %v11590 = vadd.f32 %v11549, %v11589
    %v11591 = vpop.f32.mrb[0].mxu0
    %v11592 = vadd.f32 %v11551, %v11591
    %v11593 = vpop.f32.mrb[0].mxu0
    %v11594 = vpop.f32.mrb[0].mxu0
    %11595 = vdwg.mxu0
    %11596 = vmatprep.subr.bf16.mxu0 %v7560
    %11597 = vmatpush1.bf16.msra.mxu0 %v7559
    %11598 = vmatprep.subr.bf16.mxu0 %v7568
    %11599 = vmatpush1.bf16.msra.mxu0 %v7567
    %11600 = vmatprep.subr.bf16.mxu0 %v7576
    %11601 = vmatpush1.bf16.msra.mxu0 %v7575
    %11602 = vmatprep.subr.bf16.mxu0 %v7584
    %11603 = vmatpush1.bf16.msra.mxu0 %v7583
    %11604 = vmatprep.subr.bf16.mxu0 %v7592
    %11605 = vmatpush1.bf16.msra.mxu0 %v7591
    %11606 = vmatprep.subr.bf16.mxu0 %v7600
    %11607 = vmatpush1.bf16.msra.mxu0 %v7599
    %11608 = vmatprep.subr.bf16.mxu0 %v7608
    %11609 = vmatpush1.bf16.msra.mxu0 %v7607
    %11610 = vmatprep.subr.bf16.mxu0 %v7616
    %11611 = vmatpush1.bf16.msra.mxu0 %v7615
    %11612 = vmatprep.subr.bf16.mxu0 %v7624
    %11613 = vmatpush1.bf16.msra.mxu0 %v7623
    %11614 = vmatprep.subr.bf16.mxu0 %v7632
    %11615 = vmatpush1.bf16.msra.mxu0 %v7631
    %11616 = vmatprep.subr.bf16.mxu0 %v7640
    %11617 = vmatpush1.bf16.msra.mxu0 %v7639
    %11618 = vmatprep.subr.bf16.mxu0 %v7648
    %11619 = vmatpush1.bf16.msra.mxu0 %v7647
    %11620 = vmatprep.subr.bf16.mxu0 %v7656
    %11621 = vmatpush1.bf16.msra.mxu0 %v7655
    %11622 = vmatprep.subr.bf16.mxu0 %v7664
    %11623 = vmatpush1.bf16.msra.mxu0 %v7663
    %11624 = vmatprep.subr.bf16.mxu0 %v7672
    %11625 = vmatpush1.bf16.msra.mxu0 %v7671
    %11626 = vmatprep.subr.bf16.mxu0 %v7680
    %11627 = vmatpush1.bf16.msra.mxu0 %v7679
    %11628 = vmatprep.mubr.bf16.mxu0 %v1775
    %11629 = vmatmul.mubr.bf16.gmra.mrb[0].mxu0 %v1761
    %v11630 = vpop.f32.mrb[0].mxu0
    %v11631 = vadd.f32 %v11590, %v11630
    %v11632 = vpop.f32.mrb[0].mxu0
    %v11633 = vadd.f32 %v11592, %v11632
    %v11634 = vpop.f32.mrb[0].mxu0
    %v11635 = vpop.f32.mrb[0].mxu0
    %11636 = vdwg.mxu0
    %11637 = vmatprep.subr.bf16.mxu0 %v7688
    %11638 = vmatpush1.bf16.msra.mxu0 %v7687
    %11639 = vmatprep.subr.bf16.mxu0 %v7696
    %11640 = vmatpush1.bf16.msra.mxu0 %v7695
    %11641 = vmatprep.subr.bf16.mxu0 %v7704
    %11642 = vmatpush1.bf16.msra.mxu0 %v7703
    %11643 = vmatprep.subr.bf16.mxu0 %v7712
    %11644 = vmatpush1.bf16.msra.mxu0 %v7711
    %11645 = vmatprep.subr.bf16.mxu0 %v7720
    %11646 = vmatpush1.bf16.msra.mxu0 %v7719
    %11647 = vmatprep.subr.bf16.mxu0 %v7728
    %11648 = vmatpush1.bf16.msra.mxu0 %v7727
    %11649 = vmatprep.subr.bf16.mxu0 %v7736
    %11650 = vmatpush1.bf16.msra.mxu0 %v7735
    %11651 = vmatprep.subr.bf16.mxu0 %v7744
    %11652 = vmatpush1.bf16.msra.mxu0 %v7743
    %11653 = vmatprep.subr.bf16.mxu0 %v7752
    %11654 = vmatpush1.bf16.msra.mxu0 %v7751
    %11655 = vmatprep.subr.bf16.mxu0 %v7760
    %11656 = vmatpush1.bf16.msra.mxu0 %v7759
    %11657 = vmatprep.subr.bf16.mxu0 %v7768
    %11658 = vmatpush1.bf16.msra.mxu0 %v7767
    %11659 = vmatprep.subr.bf16.mxu0 %v7776
    %11660 = vmatpush1.bf16.msra.mxu0 %v7775
    %11661 = vmatprep.subr.bf16.mxu0 %v7784
    %11662 = vmatpush1.bf16.msra.mxu0 %v7783
    %11663 = vmatprep.subr.bf16.mxu0 %v7792
    %11664 = vmatpush1.bf16.msra.mxu0 %v7791
    %11665 = vmatprep.subr.bf16.mxu0 %v7800
    %11666 = vmatpush1.bf16.msra.mxu0 %v7799
    %11667 = vmatprep.subr.bf16.mxu0 %v7808
    %11668 = vmatpush1.bf16.msra.mxu0 %v7807
    %11669 = vmatprep.mubr.bf16.mxu0 %v1785
    %11670 = vmatmul.mubr.bf16.gmra.mrb[0].mxu0 %v1783
    %v11671 = vpop.f32.mrb[0].mxu0
    %v11672 = vadd.f32 %v11631, %v11671
    %v11673 = vpop.f32.mrb[0].mxu0
    %v11674 = vadd.f32 %v11633, %v11673
    %v11675 = vpop.f32.mrb[0].mxu0
    %v11676 = vpop.f32.mrb[0].mxu0
    %11677 = vdwg.mxu0
    %11678 = vmatprep.subr.bf16.mxu0 %v7816
    %11679 = vmatpush1.bf16.msra.mxu0 %v7815
    %11680 = vmatprep.subr.bf16.mxu0 %v7824
    %11681 = vmatpush1.bf16.msra.mxu0 %v7823
    %11682 = vmatprep.subr.bf16.mxu0 %v7832
    %11683 = vmatpush1.bf16.msra.mxu0 %v7831
    %11684 = vmatprep.subr.bf16.mxu0 %v7840
    %11685 = vmatpush1.bf16.msra.mxu0 %v7839
    %11686 = vmatprep.subr.bf16.mxu0 %v7848
    %11687 = vmatpush1.bf16.msra.mxu0 %v7847
    %11688 = vmatprep.subr.bf16.mxu0 %v7856
    %11689 = vmatpush1.bf16.msra.mxu0 %v7855
    %11690 = vmatprep.subr.bf16.mxu0 %v7864
    %11691 = vmatpush1.bf16.msra.mxu0 %v7863
    %11692 = vmatprep.subr.bf16.mxu0 %v7872
    %11693 = vmatpush1.bf16.msra.mxu0 %v7871
    %11694 = vmatprep.subr.bf16.mxu0 %v7880
    %11695 = vmatpush1.bf16.msra.mxu0 %v7879
    %11696 = vmatprep.subr.bf16.mxu0 %v7888
    %11697 = vmatpush1.bf16.msra.mxu0 %v7887
    %11698 = vmatprep.subr.bf16.mxu0 %v7896
    %11699 = vmatpush1.bf16.msra.mxu0 %v7895
    %11700 = vmatprep.subr.bf16.mxu0 %v7904
    %11701 = vmatpush1.bf16.msra.mxu0 %v7903
    %11702 = vmatprep.subr.bf16.mxu0 %v7912
    %11703 = vmatpush1.bf16.msra.mxu0 %v7911
    %11704 = vmatprep.subr.bf16.mxu0 %v7920
    %11705 = vmatpush1.bf16.msra.mxu0 %v7919
    %11706 = vmatprep.subr.bf16.mxu0 %v7928
    %11707 = vmatpush1.bf16.msra.mxu0 %v7927
    %11708 = vmatprep.subr.bf16.mxu0 %v7936
    %11709 = vmatpush1.bf16.msra.mxu0 %v7935
    %11710 = vmatprep.mubr.bf16.mxu0 %v1782
    %11711 = vmatmul.mubr.bf16.gmra.mrb[0].mxu0 %v1768
    %v11712 = vpop.f32.mrb[0].mxu0
    %v11713 = vadd.f32 %v11672, %v11712
    %v11714 = vpop.f32.mrb[0].mxu0
    %v11715 = vadd.f32 %v11674, %v11714
    %v11716 = vpop.f32.mrb[0].mxu0
    %v11717 = vpop.f32.mrb[0].mxu0
    %11718 = vdwg.mxu0
    %11719 = vmatprep.subr.bf16.mxu0 %v7944
    %11720 = vmatpush1.bf16.msra.mxu0 %v7943
    %11721 = vmatprep.subr.bf16.mxu0 %v7952
    %11722 = vmatpush1.bf16.msra.mxu0 %v7951
    %11723 = vmatprep.subr.bf16.mxu0 %v7960
    %11724 = vmatpush1.bf16.msra.mxu0 %v7959
    %11725 = vmatprep.subr.bf16.mxu0 %v7968
    %11726 = vmatpush1.bf16.msra.mxu0 %v7967
    %11727 = vmatprep.subr.bf16.mxu0 %v7976
    %11728 = vmatpush1.bf16.msra.mxu0 %v7975
    %11729 = vmatprep.subr.bf16.mxu0 %v7984
    %11730 = vmatpush1.bf16.msra.mxu0 %v7983
    %11731 = vmatprep.subr.bf16.mxu0 %v7992
    %11732 = vmatpush1.bf16.msra.mxu0 %v7991
    %11733 = vmatprep.subr.bf16.mxu0 %v8000
    %11734 = vmatpush1.bf16.msra.mxu0 %v7999
    %11735 = vmatprep.subr.bf16.mxu0 %v8008
    %11736 = vmatpush1.bf16.msra.mxu0 %v8007
    %11737 = vmatprep.subr.bf16.mxu0 %v8016
    %11738 = vmatpush1.bf16.msra.mxu0 %v8015
    %11739 = vmatprep.subr.bf16.mxu0 %v8024
    %11740 = vmatpush1.bf16.msra.mxu0 %v8023
    %11741 = vmatprep.subr.bf16.mxu0 %v8032
    %11742 = vmatpush1.bf16.msra.mxu0 %v8031
    %11743 = vmatprep.subr.bf16.mxu0 %v8040
    %11744 = vmatpush1.bf16.msra.mxu0 %v8039
    %11745 = vmatprep.subr.bf16.mxu0 %v8048
    %11746 = vmatpush1.bf16.msra.mxu0 %v8047
    %11747 = vmatprep.subr.bf16.mxu0 %v8056
    %11748 = vmatpush1.bf16.msra.mxu0 %v8055
    %11749 = vmatprep.subr.bf16.mxu0 %v8064
    %11750 = vmatpush1.bf16.msra.mxu0 %v8063
    %11751 = vmatprep.mubr.bf16.mxu0 %v1786
    %11752 = vmatmul.mubr.bf16.gmra.mrb[0].mxu0 %v1784
    %v11753 = vpop.f32.mrb[0].mxu0
    %v11754 = vadd.f32 %v11713, %v11753
    %v11755 = vpop.f32.mrb[0].mxu0
    %v11756 = vadd.f32 %v11715, %v11755
    %v11757 = vpop.f32.mrb[0].mxu0
    %v11758 = vpop.f32.mrb[0].mxu0
    %11759 = vdwg.mxu0
    %11760 = vmatprep.subr.bf16.mxu0 %v8072
    %11761 = vmatpush1.bf16.msra.mxu0 %v8071
    %11762 = vmatprep.subr.bf16.mxu0 %v8080
    %11763 = vmatpush1.bf16.msra.mxu0 %v8079
    %11764 = vmatprep.subr.bf16.mxu0 %v8088
    %11765 = vmatpush1.bf16.msra.mxu0 %v8087
    %11766 = vmatprep.subr.bf16.mxu0 %v8096
    %11767 = vmatpush1.bf16.msra.mxu0 %v8095
    %11768 = vmatprep.subr.bf16.mxu0 0
    %11769 = vmatpush1.bf16.msra.mxu0 0
    %11770 = vmatprep.subr.bf16.mxu0 0
    %11771 = vmatpush1.bf16.msra.mxu0 0
    %11772 = vmatprep.subr.bf16.mxu0 0
    %11773 = vmatpush1.bf16.msra.mxu0 0
    %11774 = vmatprep.subr.bf16.mxu0 0
    %11775 = vmatpush1.bf16.msra.mxu0 0
    %11776 = vmatprep.subr.bf16.mxu0 0
    %11777 = vmatpush1.bf16.msra.mxu0 0
    %11778 = vmatprep.subr.bf16.mxu0 0
    %11779 = vmatpush1.bf16.msra.mxu0 0
    %11780 = vmatprep.subr.bf16.mxu0 0
    %11781 = vmatpush1.bf16.msra.mxu0 0
    %11782 = vmatprep.subr.bf16.mxu0 0
    %11783 = vmatpush1.bf16.msra.mxu0 0
    %11784 = vmatprep.subr.bf16.mxu0 0
    %11785 = vmatpush1.bf16.msra.mxu0 0
    %11786 = vmatprep.subr.bf16.mxu0 0
    %11787 = vmatpush1.bf16.msra.mxu0 0
    %11788 = vmatprep.subr.bf16.mxu0 0
    %11789 = vmatpush1.bf16.msra.mxu0 0
    %11790 = vmatprep.subr.bf16.mxu0 0
    %11791 = vmatpush1.bf16.msra.mxu0 0
    %11792 = vmatprep.mubr.bf16.mxu0 0
    %11793 = vmatmul.mubr.bf16.gmra.mrb[0].mxu0 %v9667
    %v11794 = vpop.f32.mrb[0].mxu0
    %v11795 = vadd.f32 %v11754, %v11794
    %v11796 = vpop.f32.mrb[0].mxu0
    %v11797 = vadd.f32 %v11756, %v11796
    %v11798 = vpop.f32.mrb[0].mxu0
    %v11799 = vpop.f32.mrb[0].mxu0
    %11800 = vdwg.mxu0
    %v11801 = vmax.f32 %v10196, 0.0
    %v11802 = vmax.f32 %v10198, 0.0
    %v11803 = vmax.f32 %v10729, 0.0
    %v11804 = vmax.f32 %v10731, 0.0
    %v11805 = vmax.f32 %v11262, 0.0
    %v11806 = vmax.f32 %v11264, 0.0
    %v11807 = vmax.f32 %v11795, 0.0
    %v11808 = vmax.f32 %v11797, 0.0
    %v11809 = vpack.c.bf16 %v11801, %v11801
    %v11810 = vpack.c.bf16 %v11802, %v11802
    %v11811 = vpack.c.bf16 %v11803, %v11803
    %v11812 = vpack.c.bf16 %v11804, %v11804
    %v11813 = vpack.c.bf16 %v11805, %v11805
    %v11814 = vpack.c.bf16 %v11806, %v11806
    %v11815 = vpack.c.bf16 %v11807, %v11807
    %v11816 = vpack.c.bf16 %v11808, %v11808
    %v11817 = vld [vmem:[%s3] sm:$0xf]
    %v11818 = vld [vmem:[%s3 + $0x4] sm:$0xf]
    %v11819 = vld [vmem:[%s3 + $0x8] sm:$0xf]
    %v11820 = vld [vmem:[%s3 + $0xc] sm:$0xf]
    %v11821 = vld [vmem:[%s3 + $0x10] sm:$0xf]
    %v11822 = vld [vmem:[%s3 + $0x14] sm:$0xf]
    %v11823 = vld [vmem:[%s3 + $0x18] sm:$0xf]
    %v11824 = vld [vmem:[%s3 + $0x1c] sm:$0xf]
    %v11825 = vld [vmem:[%s3 + $0x20] sm:$0xf]
    %v11826 = vld [vmem:[%s3 + $0x24] sm:$0xf]
    %v11827 = vld [vmem:[%s3 + $0x28] sm:$0xf]
    %v11828 = vld [vmem:[%s3 + $0x2c] sm:$0xf]
    %v11829 = vld [vmem:[%s3 + $0x30] sm:$0xf]
    %v11830 = vld [vmem:[%s3 + $0x34] sm:$0xf]
    %v11831 = vld [vmem:[%s3 + $0x38] sm:$0xf]
    %v11832 = vld [vmem:[%s3 + $0x3c] sm:$0xf]
    %v11833 = vld [vmem:[%s3 + $0x40] sm:$0xf]
    %v11834 = vld [vmem:[%s3 + $0x44] sm:$0xf]
    %v11835 = vld [vmem:[%s3 + $0x48] sm:$0xf]
    %v11836 = vld [vmem:[%s3 + $0x4c] sm:$0xf]
    %v11837 = vld [vmem:[%s3 + $0x50] sm:$0xf]
    %v11838 = vld [vmem:[%s3 + $0x54] sm:$0xf]
    %v11839 = vld [vmem:[%s3 + $0x58] sm:$0xf]
    %v11840 = vld [vmem:[%s3 + $0x5c] sm:$0xf]
    %v11841 = vld [vmem:[%s3 + $0x60] sm:$0xf]
    %v11842 = vld [vmem:[%s3 + $0x64] sm:$0xf]
    %v11843 = vld [vmem:[%s3 + $0x68] sm:$0xf]
    %v11844 = vld [vmem:[%s3 + $0x6c] sm:$0xf]
    %v11845 = vld [vmem:[%s3 + $0x70] sm:$0xf]
    %v11846 = vld [vmem:[%s3 + $0x74] sm:$0xf]
    %v11847 = vld [vmem:[%s3 + $0x78] sm:$0xf]
    %v11848 = vld [vmem:[%s3 + $0x7c] sm:$0xf]
    %v11849 = vld [vmem:[%s3 + $0x80] sm:$0xf]
    %v11850 = vld [vmem:[%s3 + $0x84] sm:$0xf]
    %v11851 = vld [vmem:[%s3 + $0x88] sm:$0xf]
    %v11852 = vld [vmem:[%s3 + $0x8c] sm:$0xf]
    %v11853 = vld [vmem:[%s3 + $0x90] sm:$0xf]
    %v11854 = vld [vmem:[%s3 + $0x94] sm:$0xf]
    %v11855 = vld [vmem:[%s3 + $0x98] sm:$0xf]
    %v11856 = vld [vmem:[%s3 + $0x9c] sm:$0xf]
    %v11857 = vld [vmem:[%s3 + $0xa0] sm:$0xf]
    %v11858 = vld [vmem:[%s3 + $0xa4] sm:$0xf]
    %v11859 = vld [vmem:[%s3 + $0xa8] sm:$0xf]
    %v11860 = vld [vmem:[%s3 + $0xac] sm:$0xf]
    %v11861 = vld [vmem:[%s3 + $0xb0] sm:$0xf]
    %v11862 = vld [vmem:[%s3 + $0xb4] sm:$0xf]
    %v11863 = vld [vmem:[%s3 + $0xb8] sm:$0xf]
    %v11864 = vld [vmem:[%s3 + $0xbc] sm:$0xf]
    %v11865 = vld [vmem:[%s3 + $0xc0] sm:$0xf]
    %v11866 = vld [vmem:[%s3 + $0xc4] sm:$0xf]
    %v11867 = vld [vmem:[%s3 + $0xc8] sm:$0xf]
    %v11868 = vld [vmem:[%s3 + $0xcc] sm:$0xf]
    %v11869 = vld [vmem:[%s3 + $0xd0] sm:$0xf]
    %v11870 = vld [vmem:[%s3 + $0xd4] sm:$0xf]
    %v11871 = vld [vmem:[%s3 + $0xd8] sm:$0xf]
    %v11872 = vld [vmem:[%s3 + $0xdc] sm:$0xf]
    %v11873 = vld [vmem:[%s3 + $0xe0] sm:$0xf]
    %v11874 = vld [vmem:[%s3 + $0xe4] sm:$0xf]
    %v11875 = vld [vmem:[%s3 + $0xe8] sm:$0xf]
    %v11876 = vld [vmem:[%s3 + $0xec] sm:$0xf]
    %v11877 = vld [vmem:[%s3 + $0xf0] sm:$0xf]
    %v11878 = vld [vmem:[%s3 + $0xf4] sm:$0xf]
    %v11879 = vld [vmem:[%s3 + $0xf8] sm:$0xf]
    %v11880 = vld [vmem:[%s3 + $0xfc] sm:$0xf]
    %v11881 = vld [vmem:[%s3 + $0x100] sm:$0xf]
    %v11882 = vld [vmem:[%s3 + $0x104] sm:$0xf]
    %v11883 = vld [vmem:[%s3 + $0x108] sm:$0xf]
    %v11884 = vld [vmem:[%s3 + $0x10c] sm:$0xf]
    %v11885 = vld [vmem:[%s3 + $0x110] sm:$0xf]
    %v11886 = vld [vmem:[%s3 + $0x114] sm:$0xf]
    %v11887 = vld [vmem:[%s3 + $0x118] sm:$0xf]
    %v11888 = vld [vmem:[%s3 + $0x11c] sm:$0xf]
    %v11889 = vld [vmem:[%s3 + $0x120] sm:$0xf]
    %v11890 = vld [vmem:[%s3 + $0x124] sm:$0xf]
    %v11891 = vld [vmem:[%s3 + $0x128] sm:$0xf]
    %v11892 = vld [vmem:[%s3 + $0x12c] sm:$0xf]
    %v11893 = vld [vmem:[%s3 + $0x130] sm:$0xf]
    %v11894 = vld [vmem:[%s3 + $0x134] sm:$0xf]
    %v11895 = vld [vmem:[%s3 + $0x138] sm:$0xf]
    %v11896 = vld [vmem:[%s3 + $0x13c] sm:$0xf]
    %v11897 = vld [vmem:[%s3 + $0x140] sm:$0xf]
    %v11898 = vld [vmem:[%s3 + $0x144] sm:$0xf]
    %v11899 = vld [vmem:[%s3 + $0x148] sm:$0xf]
    %v11900 = vld [vmem:[%s3 + $0x14c] sm:$0xf]
    %v11901 = vld [vmem:[%s3 + $0x150] sm:$0xf]
    %v11902 = vld [vmem:[%s3 + $0x154] sm:$0xf]
    %v11903 = vld [vmem:[%s3 + $0x158] sm:$0xf]
    %v11904 = vld [vmem:[%s3 + $0x15c] sm:$0xf]
    %v11905 = vld [vmem:[%s3 + $0x160] sm:$0xf]
    %v11906 = vld [vmem:[%s3 + $0x164] sm:$0xf]
    %v11907 = vld [vmem:[%s3 + $0x168] sm:$0xf]
    %v11908 = vld [vmem:[%s3 + $0x16c] sm:$0xf]
    %v11909 = vld [vmem:[%s3 + $0x170] sm:$0xf]
    %v11910 = vld [vmem:[%s3 + $0x174] sm:$0xf]
    %v11911 = vld [vmem:[%s3 + $0x178] sm:$0xf]
    %v11912 = vld [vmem:[%s3 + $0x17c] sm:$0xf]
    %v11913 = vld [vmem:[%s3 + $0x180] sm:$0xf]
    %v11914 = vld [vmem:[%s3 + $0x184] sm:$0xf]
    %v11915 = vld [vmem:[%s3 + $0x188] sm:$0xf]
    %v11916 = vld [vmem:[%s3 + $0x18c] sm:$0xf]
    %v11917 = vld [vmem:[%s3 + $0x190] sm:$0xf]
    %v11918 = vld [vmem:[%s3 + $0x194] sm:$0xf]
    %v11919 = vld [vmem:[%s3 + $0x198] sm:$0xf]
    %v11920 = vld [vmem:[%s3 + $0x19c] sm:$0xf]
    %v11921 = vld [vmem:[%s3 + $0x1a0] sm:$0xf]
    %v11922 = vld [vmem:[%s3 + $0x1a4] sm:$0xf]
    %v11923 = vld [vmem:[%s3 + $0x1a8] sm:$0xf]
    %v11924 = vld [vmem:[%s3 + $0x1ac] sm:$0xf]
    %v11925 = vld [vmem:[%s3 + $0x1b0] sm:$0xf]
    %v11926 = vld [vmem:[%s3 + $0x1b4] sm:$0xf]
    %v11927 = vld [vmem:[%s3 + $0x1b8] sm:$0xf]
    %v11928 = vld [vmem:[%s3 + $0x1bc] sm:$0xf]
    %v11929 = vld [vmem:[%s3 + $0x1c0] sm:$0xf]
    %v11930 = vld [vmem:[%s3 + $0x1c4] sm:$0xf]
    %v11931 = vld [vmem:[%s3 + $0x1c8] sm:$0xf]
    %v11932 = vld [vmem:[%s3 + $0x1cc] sm:$0xf]
    %v11933 = vld [vmem:[%s3 + $0x1d0] sm:$0xf]
    %v11934 = vld [vmem:[%s3 + $0x1d4] sm:$0xf]
    %v11935 = vld [vmem:[%s3 + $0x1d8] sm:$0xf]
    %v11936 = vld [vmem:[%s3 + $0x1dc] sm:$0xf]
    %v11937 = vld [vmem:[%s3 + $0x1e0] sm:$0xf]
    %v11938 = vld [vmem:[%s3 + $0x1e4] sm:$0xf]
    %v11939 = vld [vmem:[%s3 + $0x1e8] sm:$0xf]
    %v11940 = vld [vmem:[%s3 + $0x1ec] sm:$0xf]
    %v11941 = vld [vmem:[%s3 + $0x1f0] sm:$0xf]
    %v11942 = vld [vmem:[%s3 + $0x1f4] sm:$0xf]
    %v11943 = vld [vmem:[%s3 + $0x1f8] sm:$0xf]
    %v11944 = vld [vmem:[%s3 + $0x1fc] sm:$0xf]
    %v11945 = vld [vmem:[%s4] sm:$0x1]
    %v11947 = vlaneseq
    %v11948 = vshrl.u32 %v11947, 7
    %v11949 = vsub.s32 0, %v11948
    %v11950 = vrot.slane %v11945, %v11949
    %v12080 = vunpack.c.l.b16 %v11817
    %v12081 = vunpack.c.l.b16 %v11818
    %v12082 = vunpack.c.l.b16 %v11819
    %v12083 = vunpack.c.l.b16 %v11820
    %v12084 = vunpack.c.l.b16 %v11821
    %v12085 = vunpack.c.l.b16 %v11822
    %v12086 = vunpack.c.l.b16 %v11823
    %v12087 = vunpack.c.l.b16 %v11824
    %v12088 = vunpack.c.l.b16 %v11825
    %v12089 = vunpack.c.l.b16 %v11826
    %v12090 = vunpack.c.l.b16 %v11827
    %v12091 = vunpack.c.l.b16 %v11828
    %v12092 = vunpack.c.l.b16 %v11829
    %v12093 = vunpack.c.l.b16 %v11830
    %v12094 = vunpack.c.l.b16 %v11831
    %v12095 = vunpack.c.l.b16 %v11832
    %v12096 = vunpack.c.l.b16 %v11833
    %v12097 = vunpack.c.l.b16 %v11834
    %v12098 = vunpack.c.l.b16 %v11835
    %v12099 = vunpack.c.l.b16 %v11836
    %v12100 = vunpack.c.l.b16 %v11837
    %v12101 = vunpack.c.l.b16 %v11838
    %v12102 = vunpack.c.l.b16 %v11839
    %v12103 = vunpack.c.l.b16 %v11840
    %v12104 = vunpack.c.l.b16 %v11841
    %v12105 = vunpack.c.l.b16 %v11842
    %v12106 = vunpack.c.l.b16 %v11843
    %v12107 = vunpack.c.l.b16 %v11844
    %v12108 = vunpack.c.l.b16 %v11845
    %v12109 = vunpack.c.l.b16 %v11846
    %v12110 = vunpack.c.l.b16 %v11847
    %v12111 = vunpack.c.l.b16 %v11848
    %v12112 = vunpack.c.l.b16 %v11849
    %v12113 = vunpack.c.l.b16 %v11850
    %v12114 = vunpack.c.l.b16 %v11851
    %v12115 = vunpack.c.l.b16 %v11852
    %v12116 = vunpack.c.l.b16 %v11853
    %v12117 = vunpack.c.l.b16 %v11854
    %v12118 = vunpack.c.l.b16 %v11855
    %v12119 = vunpack.c.l.b16 %v11856
    %v12120 = vunpack.c.l.b16 %v11857
    %v12121 = vunpack.c.l.b16 %v11858
    %v12122 = vunpack.c.l.b16 %v11859
    %v12123 = vunpack.c.l.b16 %v11860
    %v12124 = vunpack.c.l.b16 %v11861
    %v12125 = vunpack.c.l.b16 %v11862
    %v12126 = vunpack.c.l.b16 %v11863
    %v12127 = vunpack.c.l.b16 %v11864
    %v12128 = vunpack.c.l.b16 %v11865
    %v12129 = vunpack.c.l.b16 %v11866
    %v12130 = vunpack.c.l.b16 %v11867
    %v12131 = vunpack.c.l.b16 %v11868
    %v12132 = vunpack.c.l.b16 %v11869
    %v12133 = vunpack.c.l.b16 %v11870
    %v12134 = vunpack.c.l.b16 %v11871
    %v12135 = vunpack.c.l.b16 %v11872
    %v12136 = vunpack.c.l.b16 %v11873
    %v12137 = vunpack.c.l.b16 %v11874
    %v12138 = vunpack.c.l.b16 %v11875
    %v12139 = vunpack.c.l.b16 %v11876
    %v12140 = vunpack.c.l.b16 %v11877
    %v12141 = vunpack.c.l.b16 %v11878
    %v12142 = vunpack.c.l.b16 %v11879
    %v12143 = vunpack.c.l.b16 %v11880
    %v12144 = vunpack.c.l.b16 %v11881
    %v12145 = vunpack.c.l.b16 %v11882
    %v12146 = vunpack.c.l.b16 %v11883
    %v12147 = vunpack.c.l.b16 %v11884
    %v12148 = vunpack.c.l.b16 %v11885
    %v12149 = vunpack.c.l.b16 %v11886
    %v12150 = vunpack.c.l.b16 %v11887
    %v12151 = vunpack.c.l.b16 %v11888
    %v12152 = vunpack.c.l.b16 %v11889
    %v12153 = vunpack.c.l.b16 %v11890
    %v12154 = vunpack.c.l.b16 %v11891
    %v12155 = vunpack.c.l.b16 %v11892
    %v12156 = vunpack.c.l.b16 %v11893
    %v12157 = vunpack.c.l.b16 %v11894
    %v12158 = vunpack.c.l.b16 %v11895
    %v12159 = vunpack.c.l.b16 %v11896
    %v12160 = vunpack.c.l.b16 %v11897
    %v12161 = vunpack.c.l.b16 %v11898
    %v12162 = vunpack.c.l.b16 %v11899
    %v12163 = vunpack.c.l.b16 %v11900
    %v12164 = vunpack.c.l.b16 %v11901
    %v12165 = vunpack.c.l.b16 %v11902
    %v12166 = vunpack.c.l.b16 %v11903
    %v12167 = vunpack.c.l.b16 %v11904
    %v12168 = vunpack.c.l.b16 %v11905
    %v12169 = vunpack.c.l.b16 %v11906
    %v12170 = vunpack.c.l.b16 %v11907
    %v12171 = vunpack.c.l.b16 %v11908
    %v12172 = vunpack.c.l.b16 %v11909
    %v12173 = vunpack.c.l.b16 %v11910
    %v12174 = vunpack.c.l.b16 %v11911
    %v12175 = vunpack.c.l.b16 %v11912
    %v12176 = vunpack.c.l.b16 %v11913
    %v12177 = vunpack.c.l.b16 %v11914
    %v12178 = vunpack.c.l.b16 %v11915
    %v12179 = vunpack.c.l.b16 %v11916
    %v12180 = vunpack.c.l.b16 %v11917
    %v12181 = vunpack.c.l.b16 %v11918
    %v12182 = vunpack.c.l.b16 %v11919
    %v12183 = vunpack.c.l.b16 %v11920
    %v12184 = vunpack.c.l.b16 %v11921
    %v12185 = vunpack.c.l.b16 %v11922
    %v12186 = vunpack.c.l.b16 %v11923
    %v12187 = vunpack.c.l.b16 %v11924
    %v12188 = vunpack.c.l.b16 %v11925
    %v12189 = vunpack.c.l.b16 %v11926
    %v12190 = vunpack.c.l.b16 %v11927
    %v12191 = vunpack.c.l.b16 %v11928
    %v12192 = vunpack.c.l.b16 %v11929
    %v12193 = vunpack.c.l.b16 %v11930
    %v12194 = vunpack.c.l.b16 %v11931
    %v12195 = vunpack.c.l.b16 %v11932
    %v12196 = vunpack.c.l.b16 %v11933
    %v12197 = vunpack.c.l.b16 %v11934
    %v12198 = vunpack.c.l.b16 %v11935
    %v12199 = vunpack.c.l.b16 %v11936
    %v12200 = vunpack.c.l.b16 %v11937
    %v12201 = vunpack.c.l.b16 %v11938
    %v12202 = vunpack.c.l.b16 %v11939
    %v12203 = vunpack.c.l.b16 %v11940
    %v12204 = vunpack.c.l.b16 %v11941
    %v12205 = vunpack.c.l.b16 %v11942
    %v12206 = vunpack.c.l.b16 %v11943
    %v12207 = vunpack.c.l.b16 %v11944
    %v12208 = vpack.c.b16 %v12081, %v12080
    %v12209 = vpack.c.b16 %v12083, %v12082
    %v12210 = vpack.c.b16 %v12085, %v12084
    %v12211 = vpack.c.b16 %v12087, %v12086
    %v12212 = vpack.c.b16 %v12089, %v12088
    %v12213 = vpack.c.b16 %v12091, %v12090
    %v12214 = vpack.c.b16 %v12093, %v12092
    %v12215 = vpack.c.b16 %v12095, %v12094
    %v12216 = vpack.c.b16 %v12097, %v12096
    %v12217 = vpack.c.b16 %v12099, %v12098
    %v12218 = vpack.c.b16 %v12101, %v12100
    %v12219 = vpack.c.b16 %v12103, %v12102
    %v12220 = vpack.c.b16 %v12105, %v12104
    %v12221 = vpack.c.b16 %v12107, %v12106
    %v12222 = vpack.c.b16 %v12109, %v12108
    %v12223 = vpack.c.b16 %v12111, %v12110
    %v12224 = vpack.c.b16 %v12113, %v12112
    %v12225 = vpack.c.b16 %v12115, %v12114
    %v12226 = vpack.c.b16 %v12117, %v12116
    %v12227 = vpack.c.b16 %v12119, %v12118
    %v12228 = vpack.c.b16 %v12121, %v12120
    %v12229 = vpack.c.b16 %v12123, %v12122
    %v12230 = vpack.c.b16 %v12125, %v12124
    %v12231 = vpack.c.b16 %v12127, %v12126
    %v12232 = vpack.c.b16 %v12129, %v12128
    %v12233 = vpack.c.b16 %v12131, %v12130
    %v12234 = vpack.c.b16 %v12133, %v12132
    %v12235 = vpack.c.b16 %v12135, %v12134
    %v12236 = vpack.c.b16 %v12137, %v12136
    %v12237 = vpack.c.b16 %v12139, %v12138
    %v12238 = vpack.c.b16 %v12141, %v12140
    %v12239 = vpack.c.b16 %v12143, %v12142
    %v12240 = vpack.c.b16 %v12145, %v12144
    %v12241 = vpack.c.b16 %v12147, %v12146
    %v12242 = vpack.c.b16 %v12149, %v12148
    %v12243 = vpack.c.b16 %v12151, %v12150
    %v12244 = vpack.c.b16 %v12153, %v12152
    %v12245 = vpack.c.b16 %v12155, %v12154
    %v12246 = vpack.c.b16 %v12157, %v12156
    %v12247 = vpack.c.b16 %v12159, %v12158
    %v12248 = vpack.c.b16 %v12161, %v12160
    %v12249 = vpack.c.b16 %v12163, %v12162
    %v12250 = vpack.c.b16 %v12165, %v12164
    %v12251 = vpack.c.b16 %v12167, %v12166
    %v12252 = vpack.c.b16 %v12169, %v12168
    %v12253 = vpack.c.b16 %v12171, %v12170
    %v12254 = vpack.c.b16 %v12173, %v12172
    %v12255 = vpack.c.b16 %v12175, %v12174
    %v12256 = vpack.c.b16 %v12177, %v12176
    %v12257 = vpack.c.b16 %v12179, %v12178
    %v12258 = vpack.c.b16 %v12181, %v12180
    %v12259 = vpack.c.b16 %v12183, %v12182
    %v12260 = vpack.c.b16 %v12185, %v12184
    %v12261 = vpack.c.b16 %v12187, %v12186
    %v12262 = vpack.c.b16 %v12189, %v12188
    %v12263 = vpack.c.b16 %v12191, %v12190
    %v12264 = vpack.c.b16 %v12193, %v12192
    %v12265 = vpack.c.b16 %v12195, %v12194
    %v12266 = vpack.c.b16 %v12197, %v12196
    %v12267 = vpack.c.b16 %v12199, %v12198
    %v12268 = vpack.c.b16 %v12201, %v12200
    %v12269 = vpack.c.b16 %v12203, %v12202
    %v12270 = vpack.c.b16 %v12205, %v12204
    %v12271 = vpack.c.b16 %v12207, %v12206
    %12336 = vmatprep.subr.bf16.mxu0 0
    %12337 = vmatpush1.bf16.msra.mxu0 %v12208
    %12338 = vmatprep.subr.bf16.mxu0 0
    %12339 = vmatpush1.bf16.msra.mxu0 %v12209
    %12340 = vmatprep.subr.bf16.mxu0 0
    %12341 = vmatpush1.bf16.msra.mxu0 %v12210
    %12342 = vmatprep.subr.bf16.mxu0 0
    %12343 = vmatpush1.bf16.msra.mxu0 %v12211
    %12344 = vmatprep.subr.bf16.mxu0 0
    %12345 = vmatpush1.bf16.msra.mxu0 %v12212
    %12346 = vmatprep.subr.bf16.mxu0 0
    %12347 = vmatpush1.bf16.msra.mxu0 %v12213
    %12348 = vmatprep.subr.bf16.mxu0 0
    %12349 = vmatpush1.bf16.msra.mxu0 %v12214
    %12350 = vmatprep.subr.bf16.mxu0 0
    %12351 = vmatpush1.bf16.msra.mxu0 %v12215
    %12352 = vmatprep.subr.bf16.mxu0 0
    %12353 = vmatpush1.bf16.msra.mxu0 %v12216
    %12354 = vmatprep.subr.bf16.mxu0 0
    %12355 = vmatpush1.bf16.msra.mxu0 %v12217
    %12356 = vmatprep.subr.bf16.mxu0 0
    %12357 = vmatpush1.bf16.msra.mxu0 %v12218
    %12358 = vmatprep.subr.bf16.mxu0 0
    %12359 = vmatpush1.bf16.msra.mxu0 %v12219
    %12360 = vmatprep.subr.bf16.mxu0 0
    %12361 = vmatpush1.bf16.msra.mxu0 %v12220
    %12362 = vmatprep.subr.bf16.mxu0 0
    %12363 = vmatpush1.bf16.msra.mxu0 %v12221
    %12364 = vmatprep.subr.bf16.mxu0 0
    %12365 = vmatpush1.bf16.msra.mxu0 %v12222
    %12366 = vmatprep.subr.bf16.mxu0 0
    %12367 = vmatpush1.bf16.msra.mxu0 %v12223
    %12368 = vmatprep.mubr.bf16.mxu0 %v11810
    %12369 = vmatmul.mubr.bf16.gmra.mrb[0].mxu0 %v11809
    %v12370 = vpop.f32.mrb[0].mxu0
    %v12371 = vadd.f32 %v11950, %v12370
    %v12372 = vpop.f32.mrb[0].mxu0
    %v12373 = vpop.f32.mrb[0].mxu0
    %v12374 = vpop.f32.mrb[0].mxu0
    %12375 = vdwg.mxu0
    %12376 = vmatprep.subr.bf16.mxu0 0
    %12377 = vmatpush1.bf16.msra.mxu0 %v12224
    %12378 = vmatprep.subr.bf16.mxu0 0
    %12379 = vmatpush1.bf16.msra.mxu0 %v12225
    %12380 = vmatprep.subr.bf16.mxu0 0
    %12381 = vmatpush1.bf16.msra.mxu0 %v12226
    %12382 = vmatprep.subr.bf16.mxu0 0
    %12383 = vmatpush1.bf16.msra.mxu0 %v12227
    %12384 = vmatprep.subr.bf16.mxu0 0
    %12385 = vmatpush1.bf16.msra.mxu0 %v12228
    %12386 = vmatprep.subr.bf16.mxu0 0
    %12387 = vmatpush1.bf16.msra.mxu0 %v12229
    %12388 = vmatprep.subr.bf16.mxu0 0
    %12389 = vmatpush1.bf16.msra.mxu0 %v12230
    %12390 = vmatprep.subr.bf16.mxu0 0
    %12391 = vmatpush1.bf16.msra.mxu0 %v12231
    %12392 = vmatprep.subr.bf16.mxu0 0
    %12393 = vmatpush1.bf16.msra.mxu0 %v12232
    %12394 = vmatprep.subr.bf16.mxu0 0
    %12395 = vmatpush1.bf16.msra.mxu0 %v12233
    %12396 = vmatprep.subr.bf16.mxu0 0
    %12397 = vmatpush1.bf16.msra.mxu0 %v12234
    %12398 = vmatprep.subr.bf16.mxu0 0
    %12399 = vmatpush1.bf16.msra.mxu0 %v12235
    %12400 = vmatprep.subr.bf16.mxu0 0
    %12401 = vmatpush1.bf16.msra.mxu0 %v12236
    %12402 = vmatprep.subr.bf16.mxu0 0
    %12403 = vmatpush1.bf16.msra.mxu0 %v12237
    %12404 = vmatprep.subr.bf16.mxu0 0
    %12405 = vmatpush1.bf16.msra.mxu0 %v12238
    %12406 = vmatprep.subr.bf16.mxu0 0
    %12407 = vmatpush1.bf16.msra.mxu0 %v12239
    %12408 = vmatprep.mubr.bf16.mxu0 %v11812
    %12409 = vmatmul.mubr.bf16.gmra.mrb[0].mxu0 %v11811
    %v12410 = vpop.f32.mrb[0].mxu0
    %v12411 = vadd.f32 %v12371, %v12410
    %v12412 = vpop.f32.mrb[0].mxu0
    %v12413 = vpop.f32.mrb[0].mxu0
    %v12414 = vpop.f32.mrb[0].mxu0
    %12415 = vdwg.mxu0
    %12416 = vmatprep.subr.bf16.mxu0 0
    %12417 = vmatpush1.bf16.msra.mxu0 %v12240
    %12418 = vmatprep.subr.bf16.mxu0 0
    %12419 = vmatpush1.bf16.msra.mxu0 %v12241
    %12420 = vmatprep.subr.bf16.mxu0 0
    %12421 = vmatpush1.bf16.msra.mxu0 %v12242
    %12422 = vmatprep.subr.bf16.mxu0 0
    %12423 = vmatpush1.bf16.msra.mxu0 %v12243
    %12424 = vmatprep.subr.bf16.mxu0 0
    %12425 = vmatpush1.bf16.msra.mxu0 %v12244
    %12426 = vmatprep.subr.bf16.mxu0 0
    %12427 = vmatpush1.bf16.msra.mxu0 %v12245
    %12428 = vmatprep.subr.bf16.mxu0 0
    %12429 = vmatpush1.bf16.msra.mxu0 %v12246
    %12430 = vmatprep.subr.bf16.mxu0 0
    %12431 = vmatpush1.bf16.msra.mxu0 %v12247
    %12432 = vmatprep.subr.bf16.mxu0 0
    %12433 = vmatpush1.bf16.msra.mxu0 %v12248
    %12434 = vmatprep.subr.bf16.mxu0 0
    %12435 = vmatpush1.bf16.msra.mxu0 %v12249
    %12436 = vmatprep.subr.bf16.mxu0 0
    %12437 = vmatpush1.bf16.msra.mxu0 %v12250
    %12438 = vmatprep.subr.bf16.mxu0 0
    %12439 = vmatpush1.bf16.msra.mxu0 %v12251
    %12440 = vmatprep.subr.bf16.mxu0 0
    %12441 = vmatpush1.bf16.msra.mxu0 %v12252
    %12442 = vmatprep.subr.bf16.mxu0 0
    %12443 = vmatpush1.bf16.msra.mxu0 %v12253
    %12444 = vmatprep.subr.bf16.mxu0 0
    %12445 = vmatpush1.bf16.msra.mxu0 %v12254
    %12446 = vmatprep.subr.bf16.mxu0 0
    %12447 = vmatpush1.bf16.msra.mxu0 %v12255
    %12448 = vmatprep.mubr.bf16.mxu0 %v11814
    %12449 = vmatmul.mubr.bf16.gmra.mrb[0].mxu0 %v11813
    %v12450 = vpop.f32.mrb[0].mxu0
    %v12451 = vadd.f32 %v12411, %v12450
    %v12452 = vpop.f32.mrb[0].mxu0
    %v12453 = vpop.f32.mrb[0].mxu0
    %v12454 = vpop.f32.mrb[0].mxu0
    %12455 = vdwg.mxu0
    %12456 = vmatprep.subr.bf16.mxu0 0
    %12457 = vmatpush1.bf16.msra.mxu0 %v12256
    %12458 = vmatprep.subr.bf16.mxu0 0
    %12459 = vmatpush1.bf16.msra.mxu0 %v12257
    %12460 = vmatprep.subr.bf16.mxu0 0
    %12461 = vmatpush1.bf16.msra.mxu0 %v12258
    %12462 = vmatprep.subr.bf16.mxu0 0
    %12463 = vmatpush1.bf16.msra.mxu0 %v12259
    %12464 = vmatprep.subr.bf16.mxu0 0
    %12465 = vmatpush1.bf16.msra.mxu0 %v12260
    %12466 = vmatprep.subr.bf16.mxu0 0
    %12467 = vmatpush1.bf16.msra.mxu0 %v12261
    %12468 = vmatprep.subr.bf16.mxu0 0
    %12469 = vmatpush1.bf16.msra.mxu0 %v12262
    %12470 = vmatprep.subr.bf16.mxu0 0
    %12471 = vmatpush1.bf16.msra.mxu0 %v12263
    %12472 = vmatprep.subr.bf16.mxu0 0
    %12473 = vmatpush1.bf16.msra.mxu0 %v12264
    %12474 = vmatprep.subr.bf16.mxu0 0
    %12475 = vmatpush1.bf16.msra.mxu0 %v12265
    %12476 = vmatprep.subr.bf16.mxu0 0
    %12477 = vmatpush1.bf16.msra.mxu0 %v12266
    %12478 = vmatprep.subr.bf16.mxu0 0
    %12479 = vmatpush1.bf16.msra.mxu0 %v12267
    %12480 = vmatprep.subr.bf16.mxu0 0
    %12481 = vmatpush1.bf16.msra.mxu0 %v12268
    %12482 = vmatprep.subr.bf16.mxu0 0
    %12483 = vmatpush1.bf16.msra.mxu0 %v12269
    %12484 = vmatprep.subr.bf16.mxu0 0
    %12485 = vmatpush1.bf16.msra.mxu0 %v12270
    %12486 = vmatprep.subr.bf16.mxu0 0
    %12487 = vmatpush1.bf16.msra.mxu0 %v12271
    %12488 = vmatprep.mubr.bf16.mxu0 %v11816
    %12489 = vmatmul.mubr.bf16.gmra.mrb[0].mxu0 %v11815
    %v12490 = vpop.f32.mrb[0].mxu0
    %v12491 = vadd.f32 %v12451, %v12490
    %v12492 = vpop.f32.mrb[0].mxu0
    %v12493 = vpop.f32.mrb[0].mxu0
    %v12494 = vpop.f32.mrb[0].mxu0
    %12495 = vdwg.mxu0
    %v12496 = vlaneseq
    %v12497 = vand.u32 %v12496, 127
    %vm12498 = vcmp.lt.s32.totalorder %v12497, 6
    %v12499 = vsel %vm12498, %v12491, 0.0
    %vm12500 = vcmask 1041408
    %v12501 = vsel %vm12500, %v12499, 0.0
    %12502 = vadd.xlane.f32.xlu0 %v12501
    %v12503 = vpop.xlane.xlu0 %12502
    %v12504 = vrcp.pop 6.0
    %v12505 = vmul.f32 %v12503, %v12504
    %vm12506 = vcmp.eq.s32.totalorder %v12497, 6
    %v12507 = vsel %vm12506, %v12491, 0.0
    %v12508 = vsel %vm12500, %v12507, 0.0
    %12509 = vadd.xlane.f32.xlu0 %v12508
    %v12510 = vpop.xlane.xlu0 %12509
    %v12511 = vsub.f32 %v12510, %v12505
    %v12512 = vadd.f32 %v12491, %v12511
    %12513 = vst [vmem:[#allocation2] sm:$0x3] %v12512
    // Predicated region
    $region22: #{dueling_dqn_forward.7} parent=1 // pred_check
      _
    $region23: #{dueling_dqn_forward.7} parent=1 // pred_check_branch
      %12515 = sbr.rel (0) target = $region25
    $region24: #{dueling_dqn_forward.7} parent=1 // pred_region
      %s12517 = ssub.s32 32, 32
      %12518 = vsyncadd [#allocation3], %s12517
      %s12520 = sshll.u32 [#allocation2], 4
      %s12521 = int_to_ptr.vmem [resolvable:$true] %s12520
      %12523 = dma.vmem_to_hbm [thread:$0]  %s12521, 32, %s5, [#allocation3]
    $region25: #{dueling_dqn_forward.7} parent=1 // pred_fallthru
      _
    // Predicated region
    $region26: #{dueling_dqn_forward.7} parent=1 // pred_check
      _
    $region27: #{dueling_dqn_forward.7} parent=1 // pred_check_branch
      %12525 = sbr.rel (0) target = $region29
    $region28: #{dueling_dqn_forward.7} parent=1 // pred_region
      %12526 = dma.done [#allocation3], 32
    $region29: #{dueling_dqn_forward.7} parent=1 // pred_fallthru
      _
    %12527 = vsyncpa [#allocation3], 1

</llo_original>
